<compile_context>
chip_gen: v7x
topology: tpu7x:2x2x1
jax: 0.10.0
libtpu: 0.0.40
codegen_flags: <defaults>
</compile_context>

<pallas_src>
import numpy as np
import jax
import jax.numpy as jnp
from jax.experimental import pallas as pl
from jax.experimental.pallas import tpu as pltpu


# ----------------------------- config ---------------------------------------
class Cfg:
    num_fc = 2          # -> num_layers = 3
    fc_dim = 32         # hidden channels
    num_classes = 4
    input_channels = 8  # image-level fine-grained feature channels


def head_dims(cfg):
    """Replicates ImplicitPointHead_origin.__init__ bookkeeping."""
    num_layers = cfg.num_fc + 1
    channels = cfg.fc_dim
    in_channels = cfg.input_channels + 256  # image feats + positional encoding
    num_weight_params, num_bias_params = [], []
    for l in range(num_layers):
        if l == 0:
            num_weight_params.append(in_channels * channels)
            num_bias_params.append(channels)
        elif l == num_layers - 1:
            num_weight_params.append(channels * cfg.num_classes)
            num_bias_params.append(cfg.num_classes)
        else:
            num_weight_params.append(channels * channels)
            num_bias_params.append(channels)
    return num_layers, channels, in_channels, num_weight_params, num_bias_params


# ----------------------- parameter parsing (reference glue) ------------------
def parse_params(params, cfg):
    """Equivalent of _parse_params: split flat per-instance params into W/b."""
    num_layers, channels, in_ch, nwp, nbp = head_dims(cfg)
    n = params.shape[0]
    sizes = nwp + nbp
    offsets = np.cumsum([0] + sizes)
    splits = [params[:, offsets[i]:offsets[i + 1]] for i in range(len(sizes))]
    w_splits, b_splits = splits[:num_layers], splits[num_layers:]
    weights, biases = [], []
    for l in range(num_layers):
        if l == 0:
            w = w_splits[l].reshape(n, channels, in_ch)
            b = b_splits[l].reshape(n, channels)
        elif l < num_layers - 1:
            w = w_splits[l].reshape(n, channels, channels)
            b = b_splits[l].reshape(n, channels)
        else:
            w = w_splits[l].reshape(n, cfg.num_classes, channels)
            b = b_splits[l].reshape(n, cfg.num_classes)
        weights.append(w)
        biases.append(b)
    return weights, biases


# ------------------------------ Pallas kernel --------------------------------
def make_kernel(num_layers, channels, num_classes, in_ch, tn, total_bias):
    """One grid step processes `tn` instances.

    refs (in order):
      coords (tn, P, 2), gauss (2, 128), fgf (tn, C_img, P),
      W_l (tn, out_l, in_l) for each layer l, biases_packed (tn, total_bias, 1),
      out (tn, num_classes, P), pe_scratch (tn, P, 256)
    """
    assert num_layers >= 2
    pe_dim = 256

    def kernel(coords_ref, gauss_ref, fgf_ref, *rest):
        w_refs = rest[:num_layers]
        b_ref = rest[num_layers]
        out_ref = rest[num_layers + 1]
        pe_ref = rest[num_layers + 2]

        # ---- batched positional encoding for all tn*P points of this step ----
        loc = coords_ref[...] * 2.0 - 1.0                      # (tn, P, 2)
        g = gauss_ref[...]                                      # (2, 128)
        g0 = g[0:1, :].reshape(1, 1, 128)
        g1 = g[1:2, :].reshape(1, 1, 128)
        proj = (2.0 * np.pi) * (loc[:, :, 0:1] * g0 + loc[:, :, 1:2] * g1)
        pe_ref[:, :, 0:128] = jnp.sin(proj)                     # (tn, P, 128)
        pe_ref[:, :, 128:256] = jnp.cos(proj)

        # ---- per-instance dynamic MLP, channel-major: x is (out, P) ----------
        def body(t, carry):
            pe_t = pe_ref[t]                                    # (P, 256)
            w0_t = w_refs[0][t]                                 # (ch, in_ch)
            b_t = b_ref[t]                                      # (total_bias, 1)

            # layer 0: W0_pe @ pe^T  +  W0_img @ fgf   (no 264-wide concat)
            h = jax.lax.dot_general(
                w0_t[:, 0:pe_dim], pe_t,
                (((1,), (1,)), ((), ())),                       # A @ B^T
                preferred_element_type=jnp.float32)             # (ch, P)
            h = h + jnp.dot(w0_t[:, pe_dim:in_ch], fgf_ref[t],
                            preferred_element_type=jnp.float32)
            h = jnp.maximum(h + b_t[0:channels], 0.0)

            off = channels
            for l in range(1, num_layers):
                w_t = w_refs[l][t]                              # (out_l, in_l)
                h = jnp.dot(w_t, h, preferred_element_type=jnp.float32)
                if l < num_layers - 1:
                    h = jnp.maximum(h + b_t[off:off + channels], 0.0)
                    off += channels
                else:
                    h = h + b_t[off:off + num_classes]
            out_ref[t] = h.astype(out_ref.dtype)                # (num_classes, P)
            return carry

        jax.lax.fori_loop(0, tn, body, 0, unroll=(tn <= 8))

    return kernel


# ------------------------------ wrapper --------------------------------------
def implicit_point_head_forward(fine_grained_features, point_coords, parameters,
                                gaussian_matrix, cfg, instances_per_step=32):
    """fine_grained_features: (N, C_img, P); point_coords: (N, P, 2);
    parameters: (N, num_params); gaussian_matrix: (2, 128).
    Returns (N, num_classes, P), matching the PyTorch module."""
    num_layers, channels, in_ch, nwp, nbp = head_dims(cfg)
    n, c_img, p = fine_grained_features.shape
    ncls = cfg.num_classes
    assert gaussian_matrix.shape == (2, 128)

    if n == 0:
        # mirror the PyTorch quirk: torch.zeros((0, 1, num_points))
        return jnp.zeros((0, 1, p), dtype=jnp.float32)

    # -- parse flat params: weights kept in natural (out, in) layout (no
    #    transposes anywhere); biases are contiguous at the tail -> one reshape.
    w_total = sum(nwp)
    total_bias = sum(nbp)
    offs = np.cumsum([0] + nwp)
    weights = []
    for l in range(num_layers):
        chunk = parameters[:, offs[l]:offs[l + 1]]
        if l == 0:
            weights.append(chunk.reshape(n, channels, in_ch))
        elif l < num_layers - 1:
            weights.append(chunk.reshape(n, channels, channels))
        else:
            weights.append(chunk.reshape(n, ncls, channels))
    biases = parameters[:, w_total:w_total + total_bias].reshape(n, total_bias, 1)

    # -- batching: TN instances per grid step (pad N up if needed) -------------
    tn = max(1, min(instances_per_step, n))
    n_blocks = (n + tn - 1) // tn
    n_pad = n_blocks * tn
    if n_pad != n:
        def pad0(x):
            return jnp.pad(x, [(0, n_pad - n)] + [(0, 0)] * (x.ndim - 1))
        point_coords = pad0(point_coords)
        fine_grained_features = pad0(fine_grained_features)
        weights = [pad0(w) for w in weights]
        biases = pad0(biases)

    in_specs = [
        pl.BlockSpec((tn, p, 2), lambda i: (i, 0, 0)),        # point coords
        pl.BlockSpec((2, 128), lambda i: (0, 0)),             # gaussian matrix (shared)
        pl.BlockSpec((tn, c_img, p), lambda i: (i, 0, 0)),    # image features (channel-major)
    ]
    for w in weights:
        in_specs.append(pl.BlockSpec((tn,) + w.shape[1:], lambda i: (i, 0, 0)))
    in_specs.append(pl.BlockSpec((tn, total_bias, 1), lambda i: (i, 0, 0)))

    out = pl.pallas_call(
        make_kernel(num_layers, channels, ncls, in_ch, tn, total_bias),
        out_shape=jax.ShapeDtypeStruct((n_pad, ncls, p), jnp.float32),
        grid_spec=pltpu.PrefetchScalarGridSpec(
            num_scalar_prefetch=0,
            grid=(n_blocks,),
            in_specs=in_specs,
            out_specs=pl.BlockSpec((tn, ncls, p), lambda i: (i, 0, 0)),
            scratch_shapes=[pltpu.VMEM((tn, p, 256), jnp.float32)],
        ),
        compiler_params=pltpu.CompilerParams(
            dimension_semantics=("parallel",),          # megacore sharding on v7x
            vmem_limit_bytes=32 * 1024 * 1024,          # safe on v5e/v6e/v7x at TN<=32
        ),
    )(point_coords, gaussian_matrix, fine_grained_features, *weights, biases)

    return out[:n] if n_pad != n else out


# --------------------------- pure-JAX reference -------------------------------
def reference_forward(fgf, coords, params, gaussian_matrix, cfg):
    num_layers, channels, in_ch, _, _ = head_dims(cfg)
    n, c_img, p = fgf.shape
    loc = 2.0 * coords.reshape(n * p, 2) - 1.0
    loc = jnp.matmul(loc, gaussian_matrix, precision=jax.lax.Precision.HIGHEST)
    loc = 2.0 * np.pi * loc
    loc = jnp.concatenate([jnp.sin(loc), jnp.cos(loc)], axis=1)
    loc = loc.reshape(n, p, 256).transpose(0, 2, 1)                  # (N, 256, P)
    feats = jnp.concatenate([loc, fgf], axis=1)                      # (N, in_ch, P)
    weights, biases = parse_params(params, cfg)
    x = feats
    for l in range(num_layers):
        w, b = weights[l], biases[l][:, :, None]
        x = jnp.einsum('nck,ndc->ndk', x, w,
                       precision=jax.lax.Precision.HIGHEST) + b
        if l < num_layers - 1:
            x = jnp.maximum(x, 0.0)
    return x.reshape(-1, cfg.num_classes, p)


# ------------------------------- main -----------------------------------------
if __name__ == "__main__":
    cfg = Cfg()
    num_layers, channels, in_ch, nwp, nbp = head_dims(cfg)
    num_params = sum(nwp) + sum(nbp)

    N, P = 16, 8
    key = jax.random.PRNGKey(0)
    k1, k2, k3, k4 = jax.random.split(key, 4)

    fine_grained_features = jax.random.normal(
        k1, (N, cfg.input_channels, P), dtype=jnp.float32)
    point_coords = jax.random.uniform(k2, (N, P, 2), dtype=jnp.float32)
    parameters = 0.1 * jax.random.normal(k3, (N, num_params), dtype=jnp.float32)
    # buffer: positional_encoding_gaussian_matrix ~ randn((2, 128))
    gaussian_matrix = jax.random.normal(k4, (2, 128), dtype=jnp.float32)

    out = implicit_point_head_forward(
        fine_grained_features, point_coords, parameters, gaussian_matrix, cfg,
        instances_per_step=8)        # 16 instances -> 2 grid steps
    out = jax.block_until_ready(out)

    ref = jax.block_until_ready(reference_forward(
        fine_grained_features, point_coords, parameters, gaussian_matrix, cfg))

    assert out.shape == (N, cfg.num_classes, P), out.shape
    np.testing.assert_allclose(np.asarray(out), np.asarray(ref),
                               rtol=2e-2, atol=2e-2)
    print("KERNEL_OK")
</pallas_src>

<mosaic_0001>
module attributes {stable_mosaic.version = 11 : i64} {
  func.func @kernel(%arg0: i32, %arg1: memref<8x8x2xf32, #tpu.memory_space<vmem>>, %arg2: memref<2x128xf32, #tpu.memory_space<vmem>>, %arg3: memref<8x8x8xf32, #tpu.memory_space<vmem>>, %arg4: memref<8x32x264xf32, #tpu.memory_space<vmem>>, %arg5: memref<8x32x32xf32, #tpu.memory_space<vmem>>, %arg6: memref<8x4x32xf32, #tpu.memory_space<vmem>>, %arg7: memref<8x68x1xf32, #tpu.memory_space<vmem>>, %arg8: memref<8x4x8xf32, #tpu.memory_space<vmem>>, %arg9: memref<8x8x256xf32, #tpu.memory_space<vmem>>) attributes {dimension_semantics = [#tpu.dimension_semantics<parallel>], iteration_bounds = array<i64: 2>, scalar_prefetch = 0 : i64, scratch_operands = 1 : i64, tpu.core_type = #tpu.core_type<tc>, window_params = [{transform_indices = @transform_0, window_bounds = array<i64: 8, 8, 2>}, {pipeline_mode = #tpu.pipeline_mode<synchronous>, transform_indices = @transform_1, window_bounds = array<i64: 2, 128>}, {transform_indices = @transform_2, window_bounds = array<i64: 8, 8, 8>}, {transform_indices = @transform_3, window_bounds = array<i64: 8, 32, 264>}, {transform_indices = @transform_4, window_bounds = array<i64: 8, 32, 32>}, {transform_indices = @transform_5, window_bounds = array<i64: 8, 4, 32>}, {transform_indices = @transform_6, window_bounds = array<i64: 8, 68, 1>}, {transform_indices = @transform_7, window_bounds = array<i64: 8, 4, 8>}]} {
    %c0 = arith.constant 0 : index
    %c0_0 = arith.constant 0 : index
    %c0_1 = arith.constant 0 : index
    %0 = vector.load %arg1[%c0, %c0_0, %c0_1] : memref<8x8x2xf32, #tpu.memory_space<vmem>>, vector<8x8x2xf32>
    %cst = arith.constant 2.000000e+00 : f32
    %1 = vector.broadcast %cst : f32 to vector<8x8x2xf32>
    %2 = arith.mulf %0, %1 : vector<8x8x2xf32>
    %cst_2 = arith.constant 1.000000e+00 : f32
    %3 = vector.broadcast %cst_2 : f32 to vector<8x8x2xf32>
    %4 = arith.subf %2, %3 : vector<8x8x2xf32>
    %c0_3 = arith.constant 0 : index
    %c0_4 = arith.constant 0 : index
    %5 = vector.load %arg2[%c0_3, %c0_4] : memref<2x128xf32, #tpu.memory_space<vmem>>, vector<2x128xf32>
    %6 = vector.extract_strided_slice %5 {offsets = [0, 0], sizes = [1, 128], strides = [1, 1]} : vector<2x128xf32> to vector<1x128xf32>
    %7 = vector.shape_cast %6 : vector<1x128xf32> to vector<1x1x128xf32>
    %8 = vector.extract_strided_slice %5 {offsets = [1, 0], sizes = [1, 128], strides = [1, 1]} : vector<2x128xf32> to vector<1x128xf32>
    %9 = vector.shape_cast %8 : vector<1x128xf32> to vector<1x1x128xf32>
    %10 = vector.extract_strided_slice %4 {offsets = [0, 0, 0], sizes = [8, 8, 1], strides = [1, 1, 1]} : vector<8x8x2xf32> to vector<8x8x1xf32>
    %11 = vector.broadcast %10 : vector<8x8x1xf32> to vector<8x8x128xf32>
    %12 = vector.broadcast %7 : vector<1x1x128xf32> to vector<8x8x128xf32>
    %13 = arith.mulf %11, %12 : vector<8x8x128xf32>
    %14 = vector.extract_strided_slice %4 {offsets = [0, 0, 1], sizes = [8, 8, 1], strides = [1, 1, 1]} : vector<8x8x2xf32> to vector<8x8x1xf32>
    %15 = vector.broadcast %14 : vector<8x8x1xf32> to vector<8x8x128xf32>
    %16 = vector.broadcast %9 : vector<1x1x128xf32> to vector<8x8x128xf32>
    %17 = arith.mulf %15, %16 : vector<8x8x128xf32>
    %18 = arith.addf %13, %17 : vector<8x8x128xf32>
    %cst_5 = arith.constant 6.28318548 : f32
    %19 = vector.broadcast %cst_5 : f32 to vector<8x8x128xf32>
    %20 = arith.mulf %19, %18 : vector<8x8x128xf32>
    %21 = math.sin %20 : vector<8x8x128xf32>
    %c0_6 = arith.constant 0 : index
    %c0_7 = arith.constant 0 : index
    %c0_8 = arith.constant 0 : index
    %22 = vector.load %arg9[%c0_6, %c0_7, %c0_8] : memref<8x8x256xf32, #tpu.memory_space<vmem>>, vector<8x8x128xf32>
    tpu.vector_store %arg9[%c0_6, %c0_7, %c0_8], %21 {strides = array<i32>} : memref<8x8x256xf32, #tpu.memory_space<vmem>>, vector<8x8x128xf32>,
    %23 = math.cos %20 : vector<8x8x128xf32>
    %c0_9 = arith.constant 0 : index
    %c0_10 = arith.constant 0 : index
    %c128 = arith.constant 128 : index
    %24 = vector.load %arg9[%c0_9, %c0_10, %c128] : memref<8x8x256xf32, #tpu.memory_space<vmem>>, vector<8x8x128xf32>
    tpu.vector_store %arg9[%c0_9, %c0_10, %c128], %23 {strides = array<i32>} : memref<8x8x256xf32, #tpu.memory_space<vmem>>, vector<8x8x128xf32>,
    %c0_i32 = arith.constant 0 : i32
    %25 = arith.index_cast %c0_i32 : i32 to index
    %c0_11 = arith.constant 0 : index
    %c0_12 = arith.constant 0 : index
    %26 = vector.load %arg9[%25, %c0_11, %c0_12] : memref<8x8x256xf32, #tpu.memory_space<vmem>>, vector<1x8x256xf32>
    %27 = vector.shape_cast %26 : vector<1x8x256xf32> to vector<8x256xf32>
    %28 = arith.index_cast %c0_i32 : i32 to index
    %c0_13 = arith.constant 0 : index
    %c0_14 = arith.constant 0 : index
    %29 = vector.load %arg4[%28, %c0_13, %c0_14] : memref<8x32x264xf32, #tpu.memory_space<vmem>>, vector<1x32x264xf32>
    %30 = vector.shape_cast %29 : vector<1x32x264xf32> to vector<32x264xf32>
    %31 = arith.index_cast %c0_i32 : i32 to index
    %c0_15 = arith.constant 0 : index
    %c0_16 = arith.constant 0 : index
    %32 = vector.load %arg7[%31, %c0_15, %c0_16] : memref<8x68x1xf32, #tpu.memory_space<vmem>>, vector<1x68x1xf32>
    %33 = vector.shape_cast %32 : vector<1x68x1xf32> to vector<68x1xf32>
    %34 = vector.extract_strided_slice %30 {offsets = [0, 0], sizes = [32, 256], strides = [1, 1]} : vector<32x264xf32> to vector<32x256xf32>
    %cst_17 = arith.constant dense<0.000000e+00> : vector<32x8xf32>
    %35 = tpu.matmul %34, %27, %cst_17 {dimension_numbers = #tpu.dot_dimension_numbers<[1], [1], [0], [0], [0, 0, 1, 0], [], []>} : vector<32x256xf32>, vector<8x256xf32>, vector<32x8xf32> -> vector<32x8xf32>
    %36 = vector.extract_strided_slice %30 {offsets = [0, 256], sizes = [32, 8], strides = [1, 1]} : vector<32x264xf32> to vector<32x8xf32>
    %37 = arith.index_cast %c0_i32 : i32 to index
    %c0_18 = arith.constant 0 : index
    %c0_19 = arith.constant 0 : index
    %38 = vector.load %arg3[%37, %c0_18, %c0_19] : memref<8x8x8xf32, #tpu.memory_space<vmem>>, vector<1x8x8xf32>
    %39 = vector.shape_cast %38 : vector<1x8x8xf32> to vector<8x8xf32>
    %cst_20 = arith.constant dense<0.000000e+00> : vector<32x8xf32>
    %40 = tpu.matmul %36, %39, %cst_20 {dimension_numbers = #tpu.dot_dimension_numbers<[1], [0], [0], [1], [0, 0, 1, 1], [], []>} : vector<32x8xf32>, vector<8x8xf32>, vector<32x8xf32> -> vector<32x8xf32>
    %41 = arith.addf %35, %40 : vector<32x8xf32>
    %42 = vector.extract_strided_slice %33 {offsets = [0, 0], sizes = [32, 1], strides = [1, 1]} : vector<68x1xf32> to vector<32x1xf32>
    %43 = vector.broadcast %42 : vector<32x1xf32> to vector<32x8xf32>
    %44 = arith.addf %41, %43 : vector<32x8xf32>
    %cst_21 = arith.constant 0.000000e+00 : f32
    %45 = vector.broadcast %cst_21 : f32 to vector<32x8xf32>
    %46 = arith.maximumf %44, %45 : vector<32x8xf32>
    %47 = arith.index_cast %c0_i32 : i32 to index
    %c0_22 = arith.constant 0 : index
    %c0_23 = arith.constant 0 : index
    %48 = vector.load %arg5[%47, %c0_22, %c0_23] : memref<8x32x32xf32, #tpu.memory_space<vmem>>, vector<1x32x32xf32>
    %49 = vector.shape_cast %48 : vector<1x32x32xf32> to vector<32x32xf32>
    %cst_24 = arith.constant dense<0.000000e+00> : vector<32x8xf32>
    %50 = tpu.matmul %49, %46, %cst_24 {dimension_numbers = #tpu.dot_dimension_numbers<[1], [0], [0], [1], [0, 0, 1, 1], [], []>} : vector<32x32xf32>, vector<32x8xf32>, vector<32x8xf32> -> vector<32x8xf32>
    %51 = vector.extract_strided_slice %33 {offsets = [32, 0], sizes = [32, 1], strides = [1, 1]} : vector<68x1xf32> to vector<32x1xf32>
    %52 = vector.broadcast %51 : vector<32x1xf32> to vector<32x8xf32>
    %53 = arith.addf %50, %52 : vector<32x8xf32>
    %cst_25 = arith.constant 0.000000e+00 : f32
    %54 = vector.broadcast %cst_25 : f32 to vector<32x8xf32>
    %55 = arith.maximumf %53, %54 : vector<32x8xf32>
    %56 = arith.index_cast %c0_i32 : i32 to index
    %c0_26 = arith.constant 0 : index
    %c0_27 = arith.constant 0 : index
    %57 = vector.load %arg6[%56, %c0_26, %c0_27] : memref<8x4x32xf32, #tpu.memory_space<vmem>>, vector<1x4x32xf32>
    %58 = vector.shape_cast %57 : vector<1x4x32xf32> to vector<4x32xf32>
    %cst_28 = arith.constant dense<0.000000e+00> : vector<4x8xf32>
    %59 = tpu.matmul %58, %55, %cst_28 {dimension_numbers = #tpu.dot_dimension_numbers<[1], [0], [0], [1], [0, 0, 1, 1], [], []>} : vector<4x32xf32>, vector<32x8xf32>, vector<4x8xf32> -> vector<4x8xf32>
    %60 = vector.extract_strided_slice %33 {offsets = [64, 0], sizes = [4, 1], strides = [1, 1]} : vector<68x1xf32> to vector<4x1xf32>
    %61 = vector.broadcast %60 : vector<4x1xf32> to vector<4x8xf32>
    %62 = arith.addf %59, %61 : vector<4x8xf32>
    %63 = arith.index_cast %c0_i32 : i32 to index
    %c0_29 = arith.constant 0 : index
    %c0_30 = arith.constant 0 : index
    %64 = vector.load %arg8[%63, %c0_29, %c0_30] : memref<8x4x8xf32, #tpu.memory_space<vmem>>, vector<1x4x8xf32>
    %65 = vector.shape_cast %64 : vector<1x4x8xf32> to vector<4x8xf32>
    %66 = vector.shape_cast %62 : vector<4x8xf32> to vector<1x4x8xf32>
    tpu.vector_store %arg8[%63, %c0_29, %c0_30], %66 {strides = array<i32>} : memref<8x4x8xf32, #tpu.memory_space<vmem>>, vector<1x4x8xf32>,
    %c1_i32 = arith.constant 1 : i32
    %67 = arith.index_cast %c1_i32 : i32 to index
    %c0_31 = arith.constant 0 : index
    %c0_32 = arith.constant 0 : index
    %68 = vector.load %arg9[%67, %c0_31, %c0_32] : memref<8x8x256xf32, #tpu.memory_space<vmem>>, vector<1x8x256xf32>
    %69 = vector.shape_cast %68 : vector<1x8x256xf32> to vector<8x256xf32>
    %70 = arith.index_cast %c1_i32 : i32 to index
    %c0_33 = arith.constant 0 : index
    %c0_34 = arith.constant 0 : index
    %71 = vector.load %arg4[%70, %c0_33, %c0_34] : memref<8x32x264xf32, #tpu.memory_space<vmem>>, vector<1x32x264xf32>
    %72 = vector.shape_cast %71 : vector<1x32x264xf32> to vector<32x264xf32>
    %73 = arith.index_cast %c1_i32 : i32 to index
    %c0_35 = arith.constant 0 : index
    %c0_36 = arith.constant 0 : index
    %74 = vector.load %arg7[%73, %c0_35, %c0_36] : memref<8x68x1xf32, #tpu.memory_space<vmem>>, vector<1x68x1xf32>
    %75 = vector.shape_cast %74 : vector<1x68x1xf32> to vector<68x1xf32>
    %76 = vector.extract_strided_slice %72 {offsets = [0, 0], sizes = [32, 256], strides = [1, 1]} : vector<32x264xf32> to vector<32x256xf32>
    %cst_37 = arith.constant dense<0.000000e+00> : vector<32x8xf32>
    %77 = tpu.matmul %76, %69, %cst_37 {dimension_numbers = #tpu.dot_dimension_numbers<[1], [1], [0], [0], [0, 0, 1, 0], [], []>} : vector<32x256xf32>, vector<8x256xf32>, vector<32x8xf32> -> vector<32x8xf32>
    %78 = vector.extract_strided_slice %72 {offsets = [0, 256], sizes = [32, 8], strides = [1, 1]} : vector<32x264xf32> to vector<32x8xf32>
    %79 = arith.index_cast %c1_i32 : i32 to index
    %c0_38 = arith.constant 0 : index
    %c0_39 = arith.constant 0 : index
    %80 = vector.load %arg3[%79, %c0_38, %c0_39] : memref<8x8x8xf32, #tpu.memory_space<vmem>>, vector<1x8x8xf32>
    %81 = vector.shape_cast %80 : vector<1x8x8xf32> to vector<8x8xf32>
    %cst_40 = arith.constant dense<0.000000e+00> : vector<32x8xf32>
    %82 = tpu.matmul %78, %81, %cst_40 {dimension_numbers = #tpu.dot_dimension_numbers<[1], [0], [0], [1], [0, 0, 1, 1], [], []>} : vector<32x8xf32>, vector<8x8xf32>, vector<32x8xf32> -> vector<32x8xf32>
    %83 = arith.addf %77, %82 : vector<32x8xf32>
    %84 = vector.extract_strided_slice %75 {offsets = [0, 0], sizes = [32, 1], strides = [1, 1]} : vector<68x1xf32> to vector<32x1xf32>
    %85 = vector.broadcast %84 : vector<32x1xf32> to vector<32x8xf32>
    %86 = arith.addf %83, %85 : vector<32x8xf32>
    %cst_41 = arith.constant 0.000000e+00 : f32
    %87 = vector.broadcast %cst_41 : f32 to vector<32x8xf32>
    %88 = arith.maximumf %86, %87 : vector<32x8xf32>
    %89 = arith.index_cast %c1_i32 : i32 to index
    %c0_42 = arith.constant 0 : index
    %c0_43 = arith.constant 0 : index
    %90 = vector.load %arg5[%89, %c0_42, %c0_43] : memref<8x32x32xf32, #tpu.memory_space<vmem>>, vector<1x32x32xf32>
    %91 = vector.shape_cast %90 : vector<1x32x32xf32> to vector<32x32xf32>
    %cst_44 = arith.constant dense<0.000000e+00> : vector<32x8xf32>
    %92 = tpu.matmul %91, %88, %cst_44 {dimension_numbers = #tpu.dot_dimension_numbers<[1], [0], [0], [1], [0, 0, 1, 1], [], []>} : vector<32x32xf32>, vector<32x8xf32>, vector<32x8xf32> -> vector<32x8xf32>
    %93 = vector.extract_strided_slice %75 {offsets = [32, 0], sizes = [32, 1], strides = [1, 1]} : vector<68x1xf32> to vector<32x1xf32>
    %94 = vector.broadcast %93 : vector<32x1xf32> to vector<32x8xf32>
    %95 = arith.addf %92, %94 : vector<32x8xf32>
    %cst_45 = arith.constant 0.000000e+00 : f32
    %96 = vector.broadcast %cst_45 : f32 to vector<32x8xf32>
    %97 = arith.maximumf %95, %96 : vector<32x8xf32>
    %98 = arith.index_cast %c1_i32 : i32 to index
    %c0_46 = arith.constant 0 : index
    %c0_47 = arith.constant 0 : index
    %99 = vector.load %arg6[%98, %c0_46, %c0_47] : memref<8x4x32xf32, #tpu.memory_space<vmem>>, vector<1x4x32xf32>
    %100 = vector.shape_cast %99 : vector<1x4x32xf32> to vector<4x32xf32>
    %cst_48 = arith.constant dense<0.000000e+00> : vector<4x8xf32>
    %101 = tpu.matmul %100, %97, %cst_48 {dimension_numbers = #tpu.dot_dimension_numbers<[1], [0], [0], [1], [0, 0, 1, 1], [], []>} : vector<4x32xf32>, vector<32x8xf32>, vector<4x8xf32> -> vector<4x8xf32>
    %102 = vector.extract_strided_slice %75 {offsets = [64, 0], sizes = [4, 1], strides = [1, 1]} : vector<68x1xf32> to vector<4x1xf32>
    %103 = vector.broadcast %102 : vector<4x1xf32> to vector<4x8xf32>
    %104 = arith.addf %101, %103 : vector<4x8xf32>
    %105 = arith.index_cast %c1_i32 : i32 to index
    %c0_49 = arith.constant 0 : index
    %c0_50 = arith.constant 0 : index
    %106 = vector.load %arg8[%105, %c0_49, %c0_50] : memref<8x4x8xf32, #tpu.memory_space<vmem>>, vector<1x4x8xf32>
    %107 = vector.shape_cast %106 : vector<1x4x8xf32> to vector<4x8xf32>
    %108 = vector.shape_cast %104 : vector<4x8xf32> to vector<1x4x8xf32>
    tpu.vector_store %arg8[%105, %c0_49, %c0_50], %108 {strides = array<i32>} : memref<8x4x8xf32, #tpu.memory_space<vmem>>, vector<1x4x8xf32>,
    %c2_i32 = arith.constant 2 : i32
    %109 = arith.index_cast %c2_i32 : i32 to index
    %c0_51 = arith.constant 0 : index
    %c0_52 = arith.constant 0 : index
    %110 = vector.load %arg9[%109, %c0_51, %c0_52] : memref<8x8x256xf32, #tpu.memory_space<vmem>>, vector<1x8x256xf32>
    %111 = vector.shape_cast %110 : vector<1x8x256xf32> to vector<8x256xf32>
    %112 = arith.index_cast %c2_i32 : i32 to index
    %c0_53 = arith.constant 0 : index
    %c0_54 = arith.constant 0 : index
    %113 = vector.load %arg4[%112, %c0_53, %c0_54] : memref<8x32x264xf32, #tpu.memory_space<vmem>>, vector<1x32x264xf32>
    %114 = vector.shape_cast %113 : vector<1x32x264xf32> to vector<32x264xf32>
    %115 = arith.index_cast %c2_i32 : i32 to index
    %c0_55 = arith.constant 0 : index
    %c0_56 = arith.constant 0 : index
    %116 = vector.load %arg7[%115, %c0_55, %c0_56] : memref<8x68x1xf32, #tpu.memory_space<vmem>>, vector<1x68x1xf32>
    %117 = vector.shape_cast %116 : vector<1x68x1xf32> to vector<68x1xf32>
    %118 = vector.extract_strided_slice %114 {offsets = [0, 0], sizes = [32, 256], strides = [1, 1]} : vector<32x264xf32> to vector<32x256xf32>
    %cst_57 = arith.constant dense<0.000000e+00> : vector<32x8xf32>
    %119 = tpu.matmul %118, %111, %cst_57 {dimension_numbers = #tpu.dot_dimension_numbers<[1], [1], [0], [0], [0, 0, 1, 0], [], []>} : vector<32x256xf32>, vector<8x256xf32>, vector<32x8xf32> -> vector<32x8xf32>
    %120 = vector.extract_strided_slice %114 {offsets = [0, 256], sizes = [32, 8], strides = [1, 1]} : vector<32x264xf32> to vector<32x8xf32>
    %121 = arith.index_cast %c2_i32 : i32 to index
    %c0_58 = arith.constant 0 : index
    %c0_59 = arith.constant 0 : index
    %122 = vector.load %arg3[%121, %c0_58, %c0_59] : memref<8x8x8xf32, #tpu.memory_space<vmem>>, vector<1x8x8xf32>
    %123 = vector.shape_cast %122 : vector<1x8x8xf32> to vector<8x8xf32>
    %cst_60 = arith.constant dense<0.000000e+00> : vector<32x8xf32>
    %124 = tpu.matmul %120, %123, %cst_60 {dimension_numbers = #tpu.dot_dimension_numbers<[1], [0], [0], [1], [0, 0, 1, 1], [], []>} : vector<32x8xf32>, vector<8x8xf32>, vector<32x8xf32> -> vector<32x8xf32>
    %125 = arith.addf %119, %124 : vector<32x8xf32>
    %126 = vector.extract_strided_slice %117 {offsets = [0, 0], sizes = [32, 1], strides = [1, 1]} : vector<68x1xf32> to vector<32x1xf32>
    %127 = vector.broadcast %126 : vector<32x1xf32> to vector<32x8xf32>
    %128 = arith.addf %125, %127 : vector<32x8xf32>
    %cst_61 = arith.constant 0.000000e+00 : f32
    %129 = vector.broadcast %cst_61 : f32 to vector<32x8xf32>
    %130 = arith.maximumf %128, %129 : vector<32x8xf32>
    %131 = arith.index_cast %c2_i32 : i32 to index
    %c0_62 = arith.constant 0 : index
    %c0_63 = arith.constant 0 : index
    %132 = vector.load %arg5[%131, %c0_62, %c0_63] : memref<8x32x32xf32, #tpu.memory_space<vmem>>, vector<1x32x32xf32>
    %133 = vector.shape_cast %132 : vector<1x32x32xf32> to vector<32x32xf32>
    %cst_64 = arith.constant dense<0.000000e+00> : vector<32x8xf32>
    %134 = tpu.matmul %133, %130, %cst_64 {dimension_numbers = #tpu.dot_dimension_numbers<[1], [0], [0], [1], [0, 0, 1, 1], [], []>} : vector<32x32xf32>, vector<32x8xf32>, vector<32x8xf32> -> vector<32x8xf32>
    %135 = vector.extract_strided_slice %117 {offsets = [32, 0], sizes = [32, 1], strides = [1, 1]} : vector<68x1xf32> to vector<32x1xf32>
    %136 = vector.broadcast %135 : vector<32x1xf32> to vector<32x8xf32>
    %137 = arith.addf %134, %136 : vector<32x8xf32>
    %cst_65 = arith.constant 0.000000e+00 : f32
    %138 = vector.broadcast %cst_65 : f32 to vector<32x8xf32>
    %139 = arith.maximumf %137, %138 : vector<32x8xf32>
    %140 = arith.index_cast %c2_i32 : i32 to index
    %c0_66 = arith.constant 0 : index
    %c0_67 = arith.constant 0 : index
    %141 = vector.load %arg6[%140, %c0_66, %c0_67] : memref<8x4x32xf32, #tpu.memory_space<vmem>>, vector<1x4x32xf32>
    %142 = vector.shape_cast %141 : vector<1x4x32xf32> to vector<4x32xf32>
    %cst_68 = arith.constant dense<0.000000e+00> : vector<4x8xf32>
    %143 = tpu.matmul %142, %139, %cst_68 {dimension_numbers = #tpu.dot_dimension_numbers<[1], [0], [0], [1], [0, 0, 1, 1], [], []>} : vector<4x32xf32>, vector<32x8xf32>, vector<4x8xf32> -> vector<4x8xf32>
    %144 = vector.extract_strided_slice %117 {offsets = [64, 0], sizes = [4, 1], strides = [1, 1]} : vector<68x1xf32> to vector<4x1xf32>
    %145 = vector.broadcast %144 : vector<4x1xf32> to vector<4x8xf32>
    %146 = arith.addf %143, %145 : vector<4x8xf32>
    %147 = arith.index_cast %c2_i32 : i32 to index
    %c0_69 = arith.constant 0 : index
    %c0_70 = arith.constant 0 : index
    %148 = vector.load %arg8[%147, %c0_69, %c0_70] : memref<8x4x8xf32, #tpu.memory_space<vmem>>, vector<1x4x8xf32>
    %149 = vector.shape_cast %148 : vector<1x4x8xf32> to vector<4x8xf32>
    %150 = vector.shape_cast %146 : vector<4x8xf32> to vector<1x4x8xf32>
    tpu.vector_store %arg8[%147, %c0_69, %c0_70], %150 {strides = array<i32>} : memref<8x4x8xf32, #tpu.memory_space<vmem>>, vector<1x4x8xf32>,
    %c3_i32 = arith.constant 3 : i32
    %151 = arith.index_cast %c3_i32 : i32 to index
    %c0_71 = arith.constant 0 : index
    %c0_72 = arith.constant 0 : index
    %152 = vector.load %arg9[%151, %c0_71, %c0_72] : memref<8x8x256xf32, #tpu.memory_space<vmem>>, vector<1x8x256xf32>
    %153 = vector.shape_cast %152 : vector<1x8x256xf32> to vector<8x256xf32>
    %154 = arith.index_cast %c3_i32 : i32 to index
    %c0_73 = arith.constant 0 : index
    %c0_74 = arith.constant 0 : index
    %155 = vector.load %arg4[%154, %c0_73, %c0_74] : memref<8x32x264xf32, #tpu.memory_space<vmem>>, vector<1x32x264xf32>
    %156 = vector.shape_cast %155 : vector<1x32x264xf32> to vector<32x264xf32>
    %157 = arith.index_cast %c3_i32 : i32 to index
    %c0_75 = arith.constant 0 : index
    %c0_76 = arith.constant 0 : index
    %158 = vector.load %arg7[%157, %c0_75, %c0_76] : memref<8x68x1xf32, #tpu.memory_space<vmem>>, vector<1x68x1xf32>
    %159 = vector.shape_cast %158 : vector<1x68x1xf32> to vector<68x1xf32>
    %160 = vector.extract_strided_slice %156 {offsets = [0, 0], sizes = [32, 256], strides = [1, 1]} : vector<32x264xf32> to vector<32x256xf32>
    %cst_77 = arith.constant dense<0.000000e+00> : vector<32x8xf32>
    %161 = tpu.matmul %160, %153, %cst_77 {dimension_numbers = #tpu.dot_dimension_numbers<[1], [1], [0], [0], [0, 0, 1, 0], [], []>} : vector<32x256xf32>, vector<8x256xf32>, vector<32x8xf32> -> vector<32x8xf32>
    %162 = vector.extract_strided_slice %156 {offsets = [0, 256], sizes = [32, 8], strides = [1, 1]} : vector<32x264xf32> to vector<32x8xf32>
    %163 = arith.index_cast %c3_i32 : i32 to index
    %c0_78 = arith.constant 0 : index
    %c0_79 = arith.constant 0 : index
    %164 = vector.load %arg3[%163, %c0_78, %c0_79] : memref<8x8x8xf32, #tpu.memory_space<vmem>>, vector<1x8x8xf32>
    %165 = vector.shape_cast %164 : vector<1x8x8xf32> to vector<8x8xf32>
    %cst_80 = arith.constant dense<0.000000e+00> : vector<32x8xf32>
    %166 = tpu.matmul %162, %165, %cst_80 {dimension_numbers = #tpu.dot_dimension_numbers<[1], [0], [0], [1], [0, 0, 1, 1], [], []>} : vector<32x8xf32>, vector<8x8xf32>, vector<32x8xf32> -> vector<32x8xf32>
    %167 = arith.addf %161, %166 : vector<32x8xf32>
    %168 = vector.extract_strided_slice %159 {offsets = [0, 0], sizes = [32, 1], strides = [1, 1]} : vector<68x1xf32> to vector<32x1xf32>
    %169 = vector.broadcast %168 : vector<32x1xf32> to vector<32x8xf32>
    %170 = arith.addf %167, %169 : vector<32x8xf32>
    %cst_81 = arith.constant 0.000000e+00 : f32
    %171 = vector.broadcast %cst_81 : f32 to vector<32x8xf32>
    %172 = arith.maximumf %170, %171 : vector<32x8xf32>
    %173 = arith.index_cast %c3_i32 : i32 to index
    %c0_82 = arith.constant 0 : index
    %c0_83 = arith.constant 0 : index
    %174 = vector.load %arg5[%173, %c0_82, %c0_83] : memref<8x32x32xf32, #tpu.memory_space<vmem>>, vector<1x32x32xf32>
    %175 = vector.shape_cast %174 : vector<1x32x32xf32> to vector<32x32xf32>
    %cst_84 = arith.constant dense<0.000000e+00> : vector<32x8xf32>
    %176 = tpu.matmul %175, %172, %cst_84 {dimension_numbers = #tpu.dot_dimension_numbers<[1], [0], [0], [1], [0, 0, 1, 1], [], []>} : vector<32x32xf32>, vector<32x8xf32>, vector<32x8xf32> -> vector<32x8xf32>
    %177 = vector.extract_strided_slice %159 {offsets = [32, 0], sizes = [32, 1], strides = [1, 1]} : vector<68x1xf32> to vector<32x1xf32>
    %178 = vector.broadcast %177 : vector<32x1xf32> to vector<32x8xf32>
    %179 = arith.addf %176, %178 : vector<32x8xf32>
    %cst_85 = arith.constant 0.000000e+00 : f32
    %180 = vector.broadcast %cst_85 : f32 to vector<32x8xf32>
    %181 = arith.maximumf %179, %180 : vector<32x8xf32>
    %182 = arith.index_cast %c3_i32 : i32 to index
    %c0_86 = arith.constant 0 : index
    %c0_87 = arith.constant 0 : index
    %183 = vector.load %arg6[%182, %c0_86, %c0_87] : memref<8x4x32xf32, #tpu.memory_space<vmem>>, vector<1x4x32xf32>
    %184 = vector.shape_cast %183 : vector<1x4x32xf32> to vector<4x32xf32>
    %cst_88 = arith.constant dense<0.000000e+00> : vector<4x8xf32>
    %185 = tpu.matmul %184, %181, %cst_88 {dimension_numbers = #tpu.dot_dimension_numbers<[1], [0], [0], [1], [0, 0, 1, 1], [], []>} : vector<4x32xf32>, vector<32x8xf32>, vector<4x8xf32> -> vector<4x8xf32>
    %186 = vector.extract_strided_slice %159 {offsets = [64, 0], sizes = [4, 1], strides = [1, 1]} : vector<68x1xf32> to vector<4x1xf32>
    %187 = vector.broadcast %186 : vector<4x1xf32> to vector<4x8xf32>
    %188 = arith.addf %185, %187 : vector<4x8xf32>
    %189 = arith.index_cast %c3_i32 : i32 to index
    %c0_89 = arith.constant 0 : index
    %c0_90 = arith.constant 0 : index
    %190 = vector.load %arg8[%189, %c0_89, %c0_90] : memref<8x4x8xf32, #tpu.memory_space<vmem>>, vector<1x4x8xf32>
    %191 = vector.shape_cast %190 : vector<1x4x8xf32> to vector<4x8xf32>
    %192 = vector.shape_cast %188 : vector<4x8xf32> to vector<1x4x8xf32>
    tpu.vector_store %arg8[%189, %c0_89, %c0_90], %192 {strides = array<i32>} : memref<8x4x8xf32, #tpu.memory_space<vmem>>, vector<1x4x8xf32>,
    %c4_i32 = arith.constant 4 : i32
    %193 = arith.index_cast %c4_i32 : i32 to index
    %c0_91 = arith.constant 0 : index
    %c0_92 = arith.constant 0 : index
    %194 = vector.load %arg9[%193, %c0_91, %c0_92] : memref<8x8x256xf32, #tpu.memory_space<vmem>>, vector<1x8x256xf32>
    %195 = vector.shape_cast %194 : vector<1x8x256xf32> to vector<8x256xf32>
    %196 = arith.index_cast %c4_i32 : i32 to index
    %c0_93 = arith.constant 0 : index
    %c0_94 = arith.constant 0 : index
    %197 = vector.load %arg4[%196, %c0_93, %c0_94] : memref<8x32x264xf32, #tpu.memory_space<vmem>>, vector<1x32x264xf32>
    %198 = vector.shape_cast %197 : vector<1x32x264xf32> to vector<32x264xf32>
    %199 = arith.index_cast %c4_i32 : i32 to index
    %c0_95 = arith.constant 0 : index
    %c0_96 = arith.constant 0 : index
    %200 = vector.load %arg7[%199, %c0_95, %c0_96] : memref<8x68x1xf32, #tpu.memory_space<vmem>>, vector<1x68x1xf32>
    %201 = vector.shape_cast %200 : vector<1x68x1xf32> to vector<68x1xf32>
    %202 = vector.extract_strided_slice %198 {offsets = [0, 0], sizes = [32, 256], strides = [1, 1]} : vector<32x264xf32> to vector<32x256xf32>
    %cst_97 = arith.constant dense<0.000000e+00> : vector<32x8xf32>
    %203 = tpu.matmul %202, %195, %cst_97 {dimension_numbers = #tpu.dot_dimension_numbers<[1], [1], [0], [0], [0, 0, 1, 0], [], []>} : vector<32x256xf32>, vector<8x256xf32>, vector<32x8xf32> -> vector<32x8xf32>
    %204 = vector.extract_strided_slice %198 {offsets = [0, 256], sizes = [32, 8], strides = [1, 1]} : vector<32x264xf32> to vector<32x8xf32>
    %205 = arith.index_cast %c4_i32 : i32 to index
    %c0_98 = arith.constant 0 : index
    %c0_99 = arith.constant 0 : index
    %206 = vector.load %arg3[%205, %c0_98, %c0_99] : memref<8x8x8xf32, #tpu.memory_space<vmem>>, vector<1x8x8xf32>
    %207 = vector.shape_cast %206 : vector<1x8x8xf32> to vector<8x8xf32>
    %cst_100 = arith.constant dense<0.000000e+00> : vector<32x8xf32>
    %208 = tpu.matmul %204, %207, %cst_100 {dimension_numbers = #tpu.dot_dimension_numbers<[1], [0], [0], [1], [0, 0, 1, 1], [], []>} : vector<32x8xf32>, vector<8x8xf32>, vector<32x8xf32> -> vector<32x8xf32>
    %209 = arith.addf %203, %208 : vector<32x8xf32>
    %210 = vector.extract_strided_slice %201 {offsets = [0, 0], sizes = [32, 1], strides = [1, 1]} : vector<68x1xf32> to vector<32x1xf32>
    %211 = vector.broadcast %210 : vector<32x1xf32> to vector<32x8xf32>
    %212 = arith.addf %209, %211 : vector<32x8xf32>
    %cst_101 = arith.constant 0.000000e+00 : f32
    %213 = vector.broadcast %cst_101 : f32 to vector<32x8xf32>
    %214 = arith.maximumf %212, %213 : vector<32x8xf32>
    %215 = arith.index_cast %c4_i32 : i32 to index
    %c0_102 = arith.constant 0 : index
    %c0_103 = arith.constant 0 : index
    %216 = vector.load %arg5[%215, %c0_102, %c0_103] : memref<8x32x32xf32, #tpu.memory_space<vmem>>, vector<1x32x32xf32>
    %217 = vector.shape_cast %216 : vector<1x32x32xf32> to vector<32x32xf32>
    %cst_104 = arith.constant dense<0.000000e+00> : vector<32x8xf32>
    %218 = tpu.matmul %217, %214, %cst_104 {dimension_numbers = #tpu.dot_dimension_numbers<[1], [0], [0], [1], [0, 0, 1, 1], [], []>} : vector<32x32xf32>, vector<32x8xf32>, vector<32x8xf32> -> vector<32x8xf32>
    %219 = vector.extract_strided_slice %201 {offsets = [32, 0], sizes = [32, 1], strides = [1, 1]} : vector<68x1xf32> to vector<32x1xf32>
    %220 = vector.broadcast %219 : vector<32x1xf32> to vector<32x8xf32>
    %221 = arith.addf %218, %220 : vector<32x8xf32>
    %cst_105 = arith.constant 0.000000e+00 : f32
    %222 = vector.broadcast %cst_105 : f32 to vector<32x8xf32>
    %223 = arith.maximumf %221, %222 : vector<32x8xf32>
    %224 = arith.index_cast %c4_i32 : i32 to index
    %c0_106 = arith.constant 0 : index
    %c0_107 = arith.constant 0 : index
    %225 = vector.load %arg6[%224, %c0_106, %c0_107] : memref<8x4x32xf32, #tpu.memory_space<vmem>>, vector<1x4x32xf32>
    %226 = vector.shape_cast %225 : vector<1x4x32xf32> to vector<4x32xf32>
    %cst_108 = arith.constant dense<0.000000e+00> : vector<4x8xf32>
    %227 = tpu.matmul %226, %223, %cst_108 {dimension_numbers = #tpu.dot_dimension_numbers<[1], [0], [0], [1], [0, 0, 1, 1], [], []>} : vector<4x32xf32>, vector<32x8xf32>, vector<4x8xf32> -> vector<4x8xf32>
    %228 = vector.extract_strided_slice %201 {offsets = [64, 0], sizes = [4, 1], strides = [1, 1]} : vector<68x1xf32> to vector<4x1xf32>
    %229 = vector.broadcast %228 : vector<4x1xf32> to vector<4x8xf32>
    %230 = arith.addf %227, %229 : vector<4x8xf32>
    %231 = arith.index_cast %c4_i32 : i32 to index
    %c0_109 = arith.constant 0 : index
    %c0_110 = arith.constant 0 : index
    %232 = vector.load %arg8[%231, %c0_109, %c0_110] : memref<8x4x8xf32, #tpu.memory_space<vmem>>, vector<1x4x8xf32>
    %233 = vector.shape_cast %232 : vector<1x4x8xf32> to vector<4x8xf32>
    %234 = vector.shape_cast %230 : vector<4x8xf32> to vector<1x4x8xf32>
    tpu.vector_store %arg8[%231, %c0_109, %c0_110], %234 {strides = array<i32>} : memref<8x4x8xf32, #tpu.memory_space<vmem>>, vector<1x4x8xf32>,
    %c5_i32 = arith.constant 5 : i32
    %235 = arith.index_cast %c5_i32 : i32 to index
    %c0_111 = arith.constant 0 : index
    %c0_112 = arith.constant 0 : index
    %236 = vector.load %arg9[%235, %c0_111, %c0_112] : memref<8x8x256xf32, #tpu.memory_space<vmem>>, vector<1x8x256xf32>
    %237 = vector.shape_cast %236 : vector<1x8x256xf32> to vector<8x256xf32>
    %238 = arith.index_cast %c5_i32 : i32 to index
    %c0_113 = arith.constant 0 : index
    %c0_114 = arith.constant 0 : index
    %239 = vector.load %arg4[%238, %c0_113, %c0_114] : memref<8x32x264xf32, #tpu.memory_space<vmem>>, vector<1x32x264xf32>
    %240 = vector.shape_cast %239 : vector<1x32x264xf32> to vector<32x264xf32>
    %241 = arith.index_cast %c5_i32 : i32 to index
    %c0_115 = arith.constant 0 : index
    %c0_116 = arith.constant 0 : index
    %242 = vector.load %arg7[%241, %c0_115, %c0_116] : memref<8x68x1xf32, #tpu.memory_space<vmem>>, vector<1x68x1xf32>
    %243 = vector.shape_cast %242 : vector<1x68x1xf32> to vector<68x1xf32>
    %244 = vector.extract_strided_slice %240 {offsets = [0, 0], sizes = [32, 256], strides = [1, 1]} : vector<32x264xf32> to vector<32x256xf32>
    %cst_117 = arith.constant dense<0.000000e+00> : vector<32x8xf32>
    %245 = tpu.matmul %244, %237, %cst_117 {dimension_numbers = #tpu.dot_dimension_numbers<[1], [1], [0], [0], [0, 0, 1, 0], [], []>} : vector<32x256xf32>, vector<8x256xf32>, vector<32x8xf32> -> vector<32x8xf32>
    %246 = vector.extract_strided_slice %240 {offsets = [0, 256], sizes = [32, 8], strides = [1, 1]} : vector<32x264xf32> to vector<32x8xf32>
    %247 = arith.index_cast %c5_i32 : i32 to index
    %c0_118 = arith.constant 0 : index
    %c0_119 = arith.constant 0 : index
    %248 = vector.load %arg3[%247, %c0_118, %c0_119] : memref<8x8x8xf32, #tpu.memory_space<vmem>>, vector<1x8x8xf32>
    %249 = vector.shape_cast %248 : vector<1x8x8xf32> to vector<8x8xf32>
    %cst_120 = arith.constant dense<0.000000e+00> : vector<32x8xf32>
    %250 = tpu.matmul %246, %249, %cst_120 {dimension_numbers = #tpu.dot_dimension_numbers<[1], [0], [0], [1], [0, 0, 1, 1], [], []>} : vector<32x8xf32>, vector<8x8xf32>, vector<32x8xf32> -> vector<32x8xf32>
    %251 = arith.addf %245, %250 : vector<32x8xf32>
    %252 = vector.extract_strided_slice %243 {offsets = [0, 0], sizes = [32, 1], strides = [1, 1]} : vector<68x1xf32> to vector<32x1xf32>
    %253 = vector.broadcast %252 : vector<32x1xf32> to vector<32x8xf32>
    %254 = arith.addf %251, %253 : vector<32x8xf32>
    %cst_121 = arith.constant 0.000000e+00 : f32
    %255 = vector.broadcast %cst_121 : f32 to vector<32x8xf32>
    %256 = arith.maximumf %254, %255 : vector<32x8xf32>
    %257 = arith.index_cast %c5_i32 : i32 to index
    %c0_122 = arith.constant 0 : index
    %c0_123 = arith.constant 0 : index
    %258 = vector.load %arg5[%257, %c0_122, %c0_123] : memref<8x32x32xf32, #tpu.memory_space<vmem>>, vector<1x32x32xf32>
    %259 = vector.shape_cast %258 : vector<1x32x32xf32> to vector<32x32xf32>
    %cst_124 = arith.constant dense<0.000000e+00> : vector<32x8xf32>
    %260 = tpu.matmul %259, %256, %cst_124 {dimension_numbers = #tpu.dot_dimension_numbers<[1], [0], [0], [1], [0, 0, 1, 1], [], []>} : vector<32x32xf32>, vector<32x8xf32>, vector<32x8xf32> -> vector<32x8xf32>
    %261 = vector.extract_strided_slice %243 {offsets = [32, 0], sizes = [32, 1], strides = [1, 1]} : vector<68x1xf32> to vector<32x1xf32>
    %262 = vector.broadcast %261 : vector<32x1xf32> to vector<32x8xf32>
    %263 = arith.addf %260, %262 : vector<32x8xf32>
    %cst_125 = arith.constant 0.000000e+00 : f32
    %264 = vector.broadcast %cst_125 : f32 to vector<32x8xf32>
    %265 = arith.maximumf %263, %264 : vector<32x8xf32>
    %266 = arith.index_cast %c5_i32 : i32 to index
    %c0_126 = arith.constant 0 : index
    %c0_127 = arith.constant 0 : index
    %267 = vector.load %arg6[%266, %c0_126, %c0_127] : memref<8x4x32xf32, #tpu.memory_space<vmem>>, vector<1x4x32xf32>
    %268 = vector.shape_cast %267 : vector<1x4x32xf32> to vector<4x32xf32>
    %cst_128 = arith.constant dense<0.000000e+00> : vector<4x8xf32>
    %269 = tpu.matmul %268, %265, %cst_128 {dimension_numbers = #tpu.dot_dimension_numbers<[1], [0], [0], [1], [0, 0, 1, 1], [], []>} : vector<4x32xf32>, vector<32x8xf32>, vector<4x8xf32> -> vector<4x8xf32>
    %270 = vector.extract_strided_slice %243 {offsets = [64, 0], sizes = [4, 1], strides = [1, 1]} : vector<68x1xf32> to vector<4x1xf32>
    %271 = vector.broadcast %270 : vector<4x1xf32> to vector<4x8xf32>
    %272 = arith.addf %269, %271 : vector<4x8xf32>
    %273 = arith.index_cast %c5_i32 : i32 to index
    %c0_129 = arith.constant 0 : index
    %c0_130 = arith.constant 0 : index
    %274 = vector.load %arg8[%273, %c0_129, %c0_130] : memref<8x4x8xf32, #tpu.memory_space<vmem>>, vector<1x4x8xf32>
    %275 = vector.shape_cast %274 : vector<1x4x8xf32> to vector<4x8xf32>
    %276 = vector.shape_cast %272 : vector<4x8xf32> to vector<1x4x8xf32>
    tpu.vector_store %arg8[%273, %c0_129, %c0_130], %276 {strides = array<i32>} : memref<8x4x8xf32, #tpu.memory_space<vmem>>, vector<1x4x8xf32>,
    %c6_i32 = arith.constant 6 : i32
    %277 = arith.index_cast %c6_i32 : i32 to index
    %c0_131 = arith.constant 0 : index
    %c0_132 = arith.constant 0 : index
    %278 = vector.load %arg9[%277, %c0_131, %c0_132] : memref<8x8x256xf32, #tpu.memory_space<vmem>>, vector<1x8x256xf32>
    %279 = vector.shape_cast %278 : vector<1x8x256xf32> to vector<8x256xf32>
    %280 = arith.index_cast %c6_i32 : i32 to index
    %c0_133 = arith.constant 0 : index
    %c0_134 = arith.constant 0 : index
    %281 = vector.load %arg4[%280, %c0_133, %c0_134] : memref<8x32x264xf32, #tpu.memory_space<vmem>>, vector<1x32x264xf32>
    %282 = vector.shape_cast %281 : vector<1x32x264xf32> to vector<32x264xf32>
    %283 = arith.index_cast %c6_i32 : i32 to index
    %c0_135 = arith.constant 0 : index
    %c0_136 = arith.constant 0 : index
    %284 = vector.load %arg7[%283, %c0_135, %c0_136] : memref<8x68x1xf32, #tpu.memory_space<vmem>>, vector<1x68x1xf32>
    %285 = vector.shape_cast %284 : vector<1x68x1xf32> to vector<68x1xf32>
    %286 = vector.extract_strided_slice %282 {offsets = [0, 0], sizes = [32, 256], strides = [1, 1]} : vector<32x264xf32> to vector<32x256xf32>
    %cst_137 = arith.constant dense<0.000000e+00> : vector<32x8xf32>
    %287 = tpu.matmul %286, %279, %cst_137 {dimension_numbers = #tpu.dot_dimension_numbers<[1], [1], [0], [0], [0, 0, 1, 0], [], []>} : vector<32x256xf32>, vector<8x256xf32>, vector<32x8xf32> -> vector<32x8xf32>
    %288 = vector.extract_strided_slice %282 {offsets = [0, 256], sizes = [32, 8], strides = [1, 1]} : vector<32x264xf32> to vector<32x8xf32>
    %289 = arith.index_cast %c6_i32 : i32 to index
    %c0_138 = arith.constant 0 : index
    %c0_139 = arith.constant 0 : index
    %290 = vector.load %arg3[%289, %c0_138, %c0_139] : memref<8x8x8xf32, #tpu.memory_space<vmem>>, vector<1x8x8xf32>
    %291 = vector.shape_cast %290 : vector<1x8x8xf32> to vector<8x8xf32>
    %cst_140 = arith.constant dense<0.000000e+00> : vector<32x8xf32>
    %292 = tpu.matmul %288, %291, %cst_140 {dimension_numbers = #tpu.dot_dimension_numbers<[1], [0], [0], [1], [0, 0, 1, 1], [], []>} : vector<32x8xf32>, vector<8x8xf32>, vector<32x8xf32> -> vector<32x8xf32>
    %293 = arith.addf %287, %292 : vector<32x8xf32>
    %294 = vector.extract_strided_slice %285 {offsets = [0, 0], sizes = [32, 1], strides = [1, 1]} : vector<68x1xf32> to vector<32x1xf32>
    %295 = vector.broadcast %294 : vector<32x1xf32> to vector<32x8xf32>
    %296 = arith.addf %293, %295 : vector<32x8xf32>
    %cst_141 = arith.constant 0.000000e+00 : f32
    %297 = vector.broadcast %cst_141 : f32 to vector<32x8xf32>
    %298 = arith.maximumf %296, %297 : vector<32x8xf32>
    %299 = arith.index_cast %c6_i32 : i32 to index
    %c0_142 = arith.constant 0 : index
    %c0_143 = arith.constant 0 : index
    %300 = vector.load %arg5[%299, %c0_142, %c0_143] : memref<8x32x32xf32, #tpu.memory_space<vmem>>, vector<1x32x32xf32>
    %301 = vector.shape_cast %300 : vector<1x32x32xf32> to vector<32x32xf32>
    %cst_144 = arith.constant dense<0.000000e+00> : vector<32x8xf32>
    %302 = tpu.matmul %301, %298, %cst_144 {dimension_numbers = #tpu.dot_dimension_numbers<[1], [0], [0], [1], [0, 0, 1, 1], [], []>} : vector<32x32xf32>, vector<32x8xf32>, vector<32x8xf32> -> vector<32x8xf32>
    %303 = vector.extract_strided_slice %285 {offsets = [32, 0], sizes = [32, 1], strides = [1, 1]} : vector<68x1xf32> to vector<32x1xf32>
    %304 = vector.broadcast %303 : vector<32x1xf32> to vector<32x8xf32>
    %305 = arith.addf %302, %304 : vector<32x8xf32>
    %cst_145 = arith.constant 0.000000e+00 : f32
    %306 = vector.broadcast %cst_145 : f32 to vector<32x8xf32>
    %307 = arith.maximumf %305, %306 : vector<32x8xf32>
    %308 = arith.index_cast %c6_i32 : i32 to index
    %c0_146 = arith.constant 0 : index
    %c0_147 = arith.constant 0 : index
    %309 = vector.load %arg6[%308, %c0_146, %c0_147] : memref<8x4x32xf32, #tpu.memory_space<vmem>>, vector<1x4x32xf32>
    %310 = vector.shape_cast %309 : vector<1x4x32xf32> to vector<4x32xf32>
    %cst_148 = arith.constant dense<0.000000e+00> : vector<4x8xf32>
    %311 = tpu.matmul %310, %307, %cst_148 {dimension_numbers = #tpu.dot_dimension_numbers<[1], [0], [0], [1], [0, 0, 1, 1], [], []>} : vector<4x32xf32>, vector<32x8xf32>, vector<4x8xf32> -> vector<4x8xf32>
    %312 = vector.extract_strided_slice %285 {offsets = [64, 0], sizes = [4, 1], strides = [1, 1]} : vector<68x1xf32> to vector<4x1xf32>
    %313 = vector.broadcast %312 : vector<4x1xf32> to vector<4x8xf32>
    %314 = arith.addf %311, %313 : vector<4x8xf32>
    %315 = arith.index_cast %c6_i32 : i32 to index
    %c0_149 = arith.constant 0 : index
    %c0_150 = arith.constant 0 : index
    %316 = vector.load %arg8[%315, %c0_149, %c0_150] : memref<8x4x8xf32, #tpu.memory_space<vmem>>, vector<1x4x8xf32>
    %317 = vector.shape_cast %316 : vector<1x4x8xf32> to vector<4x8xf32>
    %318 = vector.shape_cast %314 : vector<4x8xf32> to vector<1x4x8xf32>
    tpu.vector_store %arg8[%315, %c0_149, %c0_150], %318 {strides = array<i32>} : memref<8x4x8xf32, #tpu.memory_space<vmem>>, vector<1x4x8xf32>,
    %c7_i32 = arith.constant 7 : i32
    %319 = arith.index_cast %c7_i32 : i32 to index
    %c0_151 = arith.constant 0 : index
    %c0_152 = arith.constant 0 : index
    %320 = vector.load %arg9[%319, %c0_151, %c0_152] : memref<8x8x256xf32, #tpu.memory_space<vmem>>, vector<1x8x256xf32>
    %321 = vector.shape_cast %320 : vector<1x8x256xf32> to vector<8x256xf32>
    %322 = arith.index_cast %c7_i32 : i32 to index
    %c0_153 = arith.constant 0 : index
    %c0_154 = arith.constant 0 : index
    %323 = vector.load %arg4[%322, %c0_153, %c0_154] : memref<8x32x264xf32, #tpu.memory_space<vmem>>, vector<1x32x264xf32>
    %324 = vector.shape_cast %323 : vector<1x32x264xf32> to vector<32x264xf32>
    %325 = arith.index_cast %c7_i32 : i32 to index
    %c0_155 = arith.constant 0 : index
    %c0_156 = arith.constant 0 : index
    %326 = vector.load %arg7[%325, %c0_155, %c0_156] : memref<8x68x1xf32, #tpu.memory_space<vmem>>, vector<1x68x1xf32>
    %327 = vector.shape_cast %326 : vector<1x68x1xf32> to vector<68x1xf32>
    %328 = vector.extract_strided_slice %324 {offsets = [0, 0], sizes = [32, 256], strides = [1, 1]} : vector<32x264xf32> to vector<32x256xf32>
    %cst_157 = arith.constant dense<0.000000e+00> : vector<32x8xf32>
    %329 = tpu.matmul %328, %321, %cst_157 {dimension_numbers = #tpu.dot_dimension_numbers<[1], [1], [0], [0], [0, 0, 1, 0], [], []>} : vector<32x256xf32>, vector<8x256xf32>, vector<32x8xf32> -> vector<32x8xf32>
    %330 = vector.extract_strided_slice %324 {offsets = [0, 256], sizes = [32, 8], strides = [1, 1]} : vector<32x264xf32> to vector<32x8xf32>
    %331 = arith.index_cast %c7_i32 : i32 to index
    %c0_158 = arith.constant 0 : index
    %c0_159 = arith.constant 0 : index
    %332 = vector.load %arg3[%331, %c0_158, %c0_159] : memref<8x8x8xf32, #tpu.memory_space<vmem>>, vector<1x8x8xf32>
    %333 = vector.shape_cast %332 : vector<1x8x8xf32> to vector<8x8xf32>
    %cst_160 = arith.constant dense<0.000000e+00> : vector<32x8xf32>
    %334 = tpu.matmul %330, %333, %cst_160 {dimension_numbers = #tpu.dot_dimension_numbers<[1], [0], [0], [1], [0, 0, 1, 1], [], []>} : vector<32x8xf32>, vector<8x8xf32>, vector<32x8xf32> -> vector<32x8xf32>
    %335 = arith.addf %329, %334 : vector<32x8xf32>
    %336 = vector.extract_strided_slice %327 {offsets = [0, 0], sizes = [32, 1], strides = [1, 1]} : vector<68x1xf32> to vector<32x1xf32>
    %337 = vector.broadcast %336 : vector<32x1xf32> to vector<32x8xf32>
    %338 = arith.addf %335, %337 : vector<32x8xf32>
    %cst_161 = arith.constant 0.000000e+00 : f32
    %339 = vector.broadcast %cst_161 : f32 to vector<32x8xf32>
    %340 = arith.maximumf %338, %339 : vector<32x8xf32>
    %341 = arith.index_cast %c7_i32 : i32 to index
    %c0_162 = arith.constant 0 : index
    %c0_163 = arith.constant 0 : index
    %342 = vector.load %arg5[%341, %c0_162, %c0_163] : memref<8x32x32xf32, #tpu.memory_space<vmem>>, vector<1x32x32xf32>
    %343 = vector.shape_cast %342 : vector<1x32x32xf32> to vector<32x32xf32>
    %cst_164 = arith.constant dense<0.000000e+00> : vector<32x8xf32>
    %344 = tpu.matmul %343, %340, %cst_164 {dimension_numbers = #tpu.dot_dimension_numbers<[1], [0], [0], [1], [0, 0, 1, 1], [], []>} : vector<32x32xf32>, vector<32x8xf32>, vector<32x8xf32> -> vector<32x8xf32>
    %345 = vector.extract_strided_slice %327 {offsets = [32, 0], sizes = [32, 1], strides = [1, 1]} : vector<68x1xf32> to vector<32x1xf32>
    %346 = vector.broadcast %345 : vector<32x1xf32> to vector<32x8xf32>
    %347 = arith.addf %344, %346 : vector<32x8xf32>
    %cst_165 = arith.constant 0.000000e+00 : f32
    %348 = vector.broadcast %cst_165 : f32 to vector<32x8xf32>
    %349 = arith.maximumf %347, %348 : vector<32x8xf32>
    %350 = arith.index_cast %c7_i32 : i32 to index
    %c0_166 = arith.constant 0 : index
    %c0_167 = arith.constant 0 : index
    %351 = vector.load %arg6[%350, %c0_166, %c0_167] : memref<8x4x32xf32, #tpu.memory_space<vmem>>, vector<1x4x32xf32>
    %352 = vector.shape_cast %351 : vector<1x4x32xf32> to vector<4x32xf32>
    %cst_168 = arith.constant dense<0.000000e+00> : vector<4x8xf32>
    %353 = tpu.matmul %352, %349, %cst_168 {dimension_numbers = #tpu.dot_dimension_numbers<[1], [0], [0], [1], [0, 0, 1, 1], [], []>} : vector<4x32xf32>, vector<32x8xf32>, vector<4x8xf32> -> vector<4x8xf32>
    %354 = vector.extract_strided_slice %327 {offsets = [64, 0], sizes = [4, 1], strides = [1, 1]} : vector<68x1xf32> to vector<4x1xf32>
    %355 = vector.broadcast %354 : vector<4x1xf32> to vector<4x8xf32>
    %356 = arith.addf %353, %355 : vector<4x8xf32>
    %357 = arith.index_cast %c7_i32 : i32 to index
    %c0_169 = arith.constant 0 : index
    %c0_170 = arith.constant 0 : index
    %358 = vector.load %arg8[%357, %c0_169, %c0_170] : memref<8x4x8xf32, #tpu.memory_space<vmem>>, vector<1x4x8xf32>
    %359 = vector.shape_cast %358 : vector<1x4x8xf32> to vector<4x8xf32>
    %360 = vector.shape_cast %356 : vector<4x8xf32> to vector<1x4x8xf32>
    tpu.vector_store %arg8[%357, %c0_169, %c0_170], %360 {strides = array<i32>} : memref<8x4x8xf32, #tpu.memory_space<vmem>>, vector<1x4x8xf32>,
    %c8_i32 = arith.constant 8 : i32
    return
  }
  func.func @transform_0(%arg0: i32) -> (i32, i32, i32) {
    %c0_i32 = arith.constant 0 : i32
    %c0_i32_0 = arith.constant 0 : i32
    %c0_i32_1 = arith.constant 0 : i32
    return %arg0, %c0_i32, %c0_i32_0 : i32, i32, i32
  }
  func.func @transform_1(%arg0: i32) -> (i32, i32) {
    %c0_i32 = arith.constant 0 : i32
    %c0_i32_0 = arith.constant 0 : i32
    %c0_i32_1 = arith.constant 0 : i32
    return %c0_i32, %c0_i32_0 : i32, i32
  }
  func.func @transform_2(%arg0: i32) -> (i32, i32, i32) {
    %c0_i32 = arith.constant 0 : i32
    %c0_i32_0 = arith.constant 0 : i32
    %c0_i32_1 = arith.constant 0 : i32
    return %arg0, %c0_i32, %c0_i32_0 : i32, i32, i32
  }
  func.func @transform_3(%arg0: i32) -> (i32, i32, i32) {
    %c0_i32 = arith.constant 0 : i32
    %c0_i32_0 = arith.constant 0 : i32
    %c0_i32_1 = arith.constant 0 : i32
    return %arg0, %c0_i32, %c0_i32_0 : i32, i32, i32
  }
  func.func @transform_4(%arg0: i32) -> (i32, i32, i32) {
    %c0_i32 = arith.constant 0 : i32
    %c0_i32_0 = arith.constant 0 : i32
    %c0_i32_1 = arith.constant 0 : i32
    return %arg0, %c0_i32, %c0_i32_0 : i32, i32, i32
  }
  func.func @transform_5(%arg0: i32) -> (i32, i32, i32) {
    %c0_i32 = arith.constant 0 : i32
    %c0_i32_0 = arith.constant 0 : i32
    %c0_i32_1 = arith.constant 0 : i32
    return %arg0, %c0_i32, %c0_i32_0 : i32, i32, i32
  }
  func.func @transform_6(%arg0: i32) -> (i32, i32, i32) {
    %c0_i32 = arith.constant 0 : i32
    %c0_i32_0 = arith.constant 0 : i32
    %c0_i32_1 = arith.constant 0 : i32
    return %arg0, %c0_i32, %c0_i32_0 : i32, i32, i32
  }
  func.func @transform_7(%arg0: i32) -> (i32, i32, i32) {
    %c0_i32 = arith.constant 0 : i32
    %c0_i32_0 = arith.constant 0 : i32
    %c0_i32_1 = arith.constant 0 : i32
    return %arg0, %c0_i32, %c0_i32_0 : i32, i32, i32
  }
}

</mosaic_0001>

<llo_original>
// kernel: tpu_custom_call.1
$region0: #{tpu_custom_call.1}
  #allocation0 [shape = 'u32[]', space=smem, size = 0x4, offset = 0x4, fixed_abs, tag = 'smem constant byte address 0x4 - core index']
  #allocation1 [shape = 'u32[144,128]{1,0:T(1,128)}', space=vmem, size = 0x12000, scoped, tag = 'internal scratch']
  #allocation2 [shape = 'f32[8,8,256]{2,1,0:T(8,128)}', space=vmem, size = 0x10000, scoped, tag = 'scratch operand']
  %s0 = inlined_call_operand.vmem [shape: f32[16,8,2], index: 0, kind: input, shape index: {}]
  %s1 = inlined_call_operand.vmem [shape: f32[2,128], index: 1, kind: input, shape index: {}]
  %s2 = inlined_call_operand.vmem [shape: f32[16,8,8], index: 2, kind: input, shape index: {}]
  %s3 = inlined_call_operand.hbm [shape: f32[16,32,264], index: 3, kind: input, shape index: {}]
  %s4 = inlined_call_operand.vmem [shape: f32[16,32,32], index: 4, kind: input, shape index: {}]
  %s5 = inlined_call_operand.vmem [shape: f32[16,4,32], index: 5, kind: input, shape index: {}]
  %s6 = inlined_call_operand.vmem [shape: f32[16,68,1], index: 6, kind: input, shape index: {}]
  %s7 = inlined_call_operand.vmem [shape: f32[16,4,8], index: 7, kind: output, shape index: {}]
  %s8 = sld [smem:[#allocation0]]
  $region65: #{tpu_custom_call.1} parent=0
    _
  %s10 = ssub.s32 1, %s8
  %s11 = scalar_select 0, %s10, %s8
  $region1: #{tpu_custom_call.1} parent=0
    #allocation3 [shape = 'u8[786432]{0}', space=vmem, size = 0xc0000, scoped, tag = 'input window, operand 3']
    #allocation4 [shape = 's32[2]{0}', space=sflag, size = 0x8, scoped, tag = 'scoped memory for tpu_custom_call.1']
    %12 = vsyncpa [#allocation4], 0
    %s13 = scalar_lea.sflag [#allocation4], 1
    %14 = vsyncpa %s13, 0
    loop: start=0, step=1, limit=4
    $region2: #{tpu_custom_call.1} parent=1 // loop_pre_header
      _
    $region3: #{tpu_custom_call.1} parent=1 // loop_header
      %s16 = sphi 0, %s20
      %p17 = scmp.ge.s32.totalorder %s16, 4
      %s26 = sphi 0, %s28
      %s29 = sphi 0, %s26
      %s30 = sphi 0, %s29
      %s46 = sphi 0, %s30
      %s50 = sphi 0, %s50
      %s52 = sphi 0, %s50
      %s53 = sphi 0, %s52
      %s67 = sphi 0, %s53
      %s73 = sphi 0, %s75
      %s76 = sphi 0, %s73
      %s77 = sphi 0, %s76
      %s93 = sphi 0, %s77
      %s99 = sphi 0, %s101
      %s102 = sphi 0, %s99
      %s103 = sphi 0, %s102
      %s119 = sphi 0, %s103
      %s125 = sphi 0, %s127
      %s128 = sphi 0, %s125
      %s129 = sphi 0, %s128
      %s145 = sphi 0, %s129
      %s151 = sphi 0, %s153
      %s154 = sphi 0, %s151
      %s155 = sphi 0, %s154
      %s171 = sphi 0, %s155
      %s177 = sphi 0, %s179
      %s180 = sphi 0, %s177
      %s181 = sphi 0, %s180
      %s197 = sphi 0, %s181
      %s203 = sphi 0, %s205
      %s206 = sphi 0, %s203
      %s207 = sphi 0, %s206
      %s223 = sphi 0, %s207
    $region4: #{tpu_custom_call.1} parent=1 // loop_header_branch
      %19 = sbr.rel (%p17) target = $region8
    $region5: #{tpu_custom_call.1} parent=1 // loop_body
      %s21 = ssub.s32 %s16, 1
      %s22 = ssub.s32 %s16, 2
      %s23 = sadd.s32 %s16, 1
      %s24 = ssub.s32 %s16, %s23
      %p25 = scmp.eq.s32.totalorder %s24, 0
      %s27 = sadd.s32 %s26, 1
      %s28 = scalar_select %p25, %s26, %s27
      %p31 = pneg %p25
      %p32 = scmp.eq.s32.totalorder %s16, 1
      %p33 = por %p31, %p32
      %p34 = scmp.ne.s32.totalorder %s26, %s29
      %p35 = scmp.eq.s32.totalorder %s16, 0
      %p36 = por %p34, %p35
      %p37 = scmp.ne.s32.totalorder %s26, %s29
      %p38 = scmp.eq.s32.totalorder %s21, 1
      %p39 = por %p37, %p38
      %p40 = scmp.ne.s32.totalorder %s29, %s30
      %p41 = scmp.eq.s32.totalorder %s21, 0
      %p42 = por %p40, %p41
      %p43 = scmp.ne.s32.totalorder %s29, %s30
      %p44 = scmp.eq.s32.totalorder %s22, 1
      %p45 = por %p43, %p44
      %p47 = scmp.ne.s32.totalorder %s30, %s46
      %p48 = scmp.eq.s32.totalorder %s22, 0
      %p49 = por %p47, %p48
      %s51 = sadd.s32 %s50, 1
      %p54 = scmp.eq.s32.totalorder %s16, 1
      %p55 = scmp.ne.s32.totalorder %s50, %s52
      %p56 = scmp.eq.s32.totalorder %s16, 0
      %p57 = por %p55, %p56
      %p58 = scmp.ne.s32.totalorder %s50, %s52
      %p59 = scmp.eq.s32.totalorder %s21, 1
      %p60 = por %p58, %p59
      %p61 = scmp.ne.s32.totalorder %s52, %s53
      %p62 = scmp.eq.s32.totalorder %s21, 0
      %p63 = por %p61, %p62
      %p64 = scmp.ne.s32.totalorder %s52, %s53
      %p65 = scmp.eq.s32.totalorder %s22, 1
      %p66 = por %p64, %p65
      %p68 = scmp.ne.s32.totalorder %s53, %s67
      %p69 = scmp.eq.s32.totalorder %s22, 0
      %p70 = por %p68, %p69
      %s71 = ssub.s32 %s16, %s23
      %p72 = scmp.eq.s32.totalorder %s71, 0
      %s74 = sadd.s32 %s73, 1
      %s75 = scalar_select %p72, %s73, %s74
      %p78 = pneg %p72
      %p79 = scmp.eq.s32.totalorder %s16, 1
      %p80 = por %p78, %p79
      %p81 = scmp.ne.s32.totalorder %s73, %s76
      %p82 = scmp.eq.s32.totalorder %s16, 0
      %p83 = por %p81, %p82
      %p84 = scmp.ne.s32.totalorder %s73, %s76
      %p85 = scmp.eq.s32.totalorder %s21, 1
      %p86 = por %p84, %p85
      %p87 = scmp.ne.s32.totalorder %s76, %s77
      %p88 = scmp.eq.s32.totalorder %s21, 0
      %p89 = por %p87, %p88
      %p90 = scmp.ne.s32.totalorder %s76, %s77
      %p91 = scmp.eq.s32.totalorder %s22, 1
      %p92 = por %p90, %p91
      %p94 = scmp.ne.s32.totalorder %s77, %s93
      %p95 = scmp.eq.s32.totalorder %s22, 0
      %p96 = por %p94, %p95
      %s97 = ssub.s32 %s16, %s23
      %p98 = scmp.eq.s32.totalorder %s97, 0
      %s100 = sadd.s32 %s99, 1
      %s101 = scalar_select %p98, %s99, %s100
      %p104 = pneg %p98
      %p105 = scmp.eq.s32.totalorder %s16, 1
      %p106 = por %p104, %p105
      %p107 = scmp.ne.s32.totalorder %s99, %s102
      %p108 = scmp.eq.s32.totalorder %s16, 0
      %p109 = por %p107, %p108
      %p110 = scmp.ne.s32.totalorder %s99, %s102
      %p111 = scmp.eq.s32.totalorder %s21, 1
      %p112 = por %p110, %p111
      %p113 = scmp.ne.s32.totalorder %s102, %s103
      %p114 = scmp.eq.s32.totalorder %s21, 0
      %p115 = por %p113, %p114
      %p116 = scmp.ne.s32.totalorder %s102, %s103
      %p117 = scmp.eq.s32.totalorder %s22, 1
      %p118 = por %p116, %p117
      %p120 = scmp.ne.s32.totalorder %s103, %s119
      %p121 = scmp.eq.s32.totalorder %s22, 0
      %p122 = por %p120, %p121
      %s123 = ssub.s32 %s16, %s23
      %p124 = scmp.eq.s32.totalorder %s123, 0
      %s126 = sadd.s32 %s125, 1
      %s127 = scalar_select %p124, %s125, %s126
      %p130 = pneg %p124
      %p131 = scmp.eq.s32.totalorder %s16, 1
      %p132 = por %p130, %p131
      %p133 = scmp.ne.s32.totalorder %s125, %s128
      %p134 = scmp.eq.s32.totalorder %s16, 0
      %p135 = por %p133, %p134
      %p136 = scmp.ne.s32.totalorder %s125, %s128
      %p137 = scmp.eq.s32.totalorder %s21, 1
      %p138 = por %p136, %p137
      %p139 = scmp.ne.s32.totalorder %s128, %s129
      %p140 = scmp.eq.s32.totalorder %s21, 0
      %p141 = por %p139, %p140
      %p142 = scmp.ne.s32.totalorder %s128, %s129
      %p143 = scmp.eq.s32.totalorder %s22, 1
      %p144 = por %p142, %p143
      %p146 = scmp.ne.s32.totalorder %s129, %s145
      %p147 = scmp.eq.s32.totalorder %s22, 0
      %p148 = por %p146, %p147
      %s149 = ssub.s32 %s16, %s23
      %p150 = scmp.eq.s32.totalorder %s149, 0
      %s152 = sadd.s32 %s151, 1
      %s153 = scalar_select %p150, %s151, %s152
      %p156 = pneg %p150
      %p157 = scmp.eq.s32.totalorder %s16, 1
      %p158 = por %p156, %p157
      %p159 = scmp.ne.s32.totalorder %s151, %s154
      %p160 = scmp.eq.s32.totalorder %s16, 0
      %p161 = por %p159, %p160
      %p162 = scmp.ne.s32.totalorder %s151, %s154
      %p163 = scmp.eq.s32.totalorder %s21, 1
      %p164 = por %p162, %p163
      %p165 = scmp.ne.s32.totalorder %s154, %s155
      %p166 = scmp.eq.s32.totalorder %s21, 0
      %p167 = por %p165, %p166
      %p168 = scmp.ne.s32.totalorder %s154, %s155
      %p169 = scmp.eq.s32.totalorder %s22, 1
      %p170 = por %p168, %p169
      %p172 = scmp.ne.s32.totalorder %s155, %s171
      %p173 = scmp.eq.s32.totalorder %s22, 0
      %p174 = por %p172, %p173
      %s175 = ssub.s32 %s16, %s23
      %p176 = scmp.eq.s32.totalorder %s175, 0
      %s178 = sadd.s32 %s177, 1
      %s179 = scalar_select %p176, %s177, %s178
      %p182 = pneg %p176
      %p183 = scmp.eq.s32.totalorder %s16, 1
      %p184 = por %p182, %p183
      %p185 = scmp.ne.s32.totalorder %s177, %s180
      %p186 = scmp.eq.s32.totalorder %s16, 0
      %p187 = por %p185, %p186
      %p188 = scmp.ne.s32.totalorder %s177, %s180
      %p189 = scmp.eq.s32.totalorder %s21, 1
      %p190 = por %p188, %p189
      %p191 = scmp.ne.s32.totalorder %s180, %s181
      %p192 = scmp.eq.s32.totalorder %s21, 0
      %p193 = por %p191, %p192
      %p194 = scmp.ne.s32.totalorder %s180, %s181
      %p195 = scmp.eq.s32.totalorder %s22, 1
      %p196 = por %p194, %p195
      %p198 = scmp.ne.s32.totalorder %s181, %s197
      %p199 = scmp.eq.s32.totalorder %s22, 0
      %p200 = por %p198, %p199
      %s201 = ssub.s32 %s16, %s23
      %p202 = scmp.eq.s32.totalorder %s201, 0
      %s204 = sadd.s32 %s203, 1
      %s205 = scalar_select %p202, %s203, %s204
      %p208 = pneg %p202
      %p209 = scmp.eq.s32.totalorder %s16, 1
      %p210 = por %p208, %p209
      %p211 = scmp.ne.s32.totalorder %s203, %s206
      %p212 = scmp.eq.s32.totalorder %s16, 0
      %p213 = por %p211, %p212
      %p214 = scmp.ne.s32.totalorder %s203, %s206
      %p215 = scmp.eq.s32.totalorder %s21, 1
      %p216 = por %p214, %p215
      %p217 = scmp.ne.s32.totalorder %s206, %s207
      %p218 = scmp.eq.s32.totalorder %s21, 0
      %p219 = por %p217, %p218
      %p220 = scmp.ne.s32.totalorder %s206, %s207
      %p221 = scmp.eq.s32.totalorder %s22, 1
      %p222 = por %p220, %p221
      %p224 = scmp.ne.s32.totalorder %s207, %s223
      %p225 = scmp.eq.s32.totalorder %s22, 0
      %p226 = por %p224, %p225
      %p227 = scmp.le.s32.totalorder 1, %s16
      %p228 = scmp.lt.s32.totalorder %s16, 3
      %p229 = pnand %p227, %p228
      %p230 = pneg %p229
      // Predicated region
      $region9: #{tpu_custom_call.1} parent=5 // pred_check
        _
      $region10: #{tpu_custom_call.1} parent=5 // pred_check_branch
        %232 = sbr.rel (%p229) target = $region12
      $region11: #{tpu_custom_call.1} parent=5 // pred_region
        %s233 = ssub.s32 %s16, 1
        // Predicated region
        $region13: #{tpu_custom_call.1} parent=11 // pred_check
          %p234 = pneg %p63
        $region14: #{tpu_custom_call.1} parent=11 // pred_check_branch
          %236 = sbr.rel (%p234) target = $region16
        $region15: #{tpu_custom_call.1} parent=11 // pred_region
          _
        $region16: #{tpu_custom_call.1} parent=11 // pred_fallthru
          _
      $region12: #{tpu_custom_call.1} parent=5 // pred_fallthru
        _
      %p237 = scmp.lt.s32.totalorder %s16, 2
      // Predicated region
      $region17: #{tpu_custom_call.1} parent=5 // pred_check
        %p238 = pneg %p237
      $region18: #{tpu_custom_call.1} parent=5 // pred_check_branch
        %240 = sbr.rel (%p238) target = $region20
      $region19: #{tpu_custom_call.1} parent=5 // pred_region
        // Predicated region
        $region21: #{tpu_custom_call.1} parent=19 // pred_check
          %p241 = pneg %p36
        $region22: #{tpu_custom_call.1} parent=19 // pred_check_branch
          %243 = sbr.rel (%p241) target = $region24
        $region23: #{tpu_custom_call.1} parent=19 // pred_region
          %s244 = smul.u32 8, %s16
          %p245 = scmp.lt.s32.totalorder %s244, 15
          %s246 = scalar_select %p245, %s244, 15
          %s247 = smul.addr %s246, 8
          %s248 = scalar_lea.vmem %s0, %s247
          %s249 = smul.u32 8, %s16
        $region24: #{tpu_custom_call.1} parent=19 // pred_fallthru
          _
        // Predicated region
        $region25: #{tpu_custom_call.1} parent=19 // pred_check
          %p250 = pneg %p83
        $region26: #{tpu_custom_call.1} parent=19 // pred_check_branch
          %252 = sbr.rel (%p250) target = $region28
        $region27: #{tpu_custom_call.1} parent=19 // pred_region
          %s253 = smul.u32 8, %s16
          %p254 = scmp.lt.s32.totalorder %s253, 15
          %s255 = scalar_select %p254, %s253, 15
          %s256 = smul.addr %s255, 8
          %s257 = scalar_lea.vmem %s2, %s256
          %s258 = smul.u32 8, %s16
        $region28: #{tpu_custom_call.1} parent=19 // pred_fallthru
          _
        // Predicated region
        $region29: #{tpu_custom_call.1} parent=19 // pred_check
          %p259 = pneg %p109
        $region30: #{tpu_custom_call.1} parent=19 // pred_check_branch
          %261 = sbr.rel (%p259) target = $region32
        $region31: #{tpu_custom_call.1} parent=19 // pred_region
          %s262 = sand.u32 %s99, 1
          %s263 = scalar_lea.sflag [#allocation4], %s262
          %s264 = sand.u32 %s99, 1
          %s265 = smul.addr %s264, 768
          %s266 = scalar_lea.vmem [#allocation3], %s265
          %s267 = smul.u32 8, %s16
          %s269 = ssub.s32 12288, 12288
          %270 = vsyncadd %s263, %s269
          %s271 = smul.addr %s267, 12
          %s272 = smul.addr %s271, 128
          %s273 = scalar_lea.hbm %s3, %s272
          %s274 = sshll.u32 %s266, 4
          %s275 = int_to_ptr.vmem [resolvable:$true] %s274
          %280 = dma.hbm_to_vmem [thread:$0]  %s273, 12288, %s275, %s263, 384, 384, 24
        $region32: #{tpu_custom_call.1} parent=19 // pred_fallthru
          _
        // Predicated region
        $region33: #{tpu_custom_call.1} parent=19 // pred_check
          %p281 = pneg %p135
        $region34: #{tpu_custom_call.1} parent=19 // pred_check_branch
          %283 = sbr.rel (%p281) target = $region36
        $region35: #{tpu_custom_call.1} parent=19 // pred_region
          %s284 = smul.u32 8, %s16
          %p285 = scmp.lt.s32.totalorder %s284, 15
          %s286 = scalar_select %p285, %s284, 15
          %s287 = smul.addr %s286, 4
          %s288 = smul.addr %s287, 8
          %s289 = scalar_lea.vmem %s4, %s288
          %s290 = smul.u32 8, %s16
        $region36: #{tpu_custom_call.1} parent=19 // pred_fallthru
          _
        // Predicated region
        $region37: #{tpu_custom_call.1} parent=19 // pred_check
          %p291 = pneg %p161
        $region38: #{tpu_custom_call.1} parent=19 // pred_check_branch
          %293 = sbr.rel (%p291) target = $region40
        $region39: #{tpu_custom_call.1} parent=19 // pred_region
          %s294 = smul.u32 8, %s16
          %p295 = scmp.lt.s32.totalorder %s294, 15
          %s296 = scalar_select %p295, %s294, 15
          %s297 = smul.addr %s296, 4
          %s298 = scalar_lea.vmem %s5, %s297
          %s299 = smul.u32 8, %s16
        $region40: #{tpu_custom_call.1} parent=19 // pred_fallthru
          _
        // Predicated region
        $region41: #{tpu_custom_call.1} parent=19 // pred_check
          %p300 = pneg %p187
        $region42: #{tpu_custom_call.1} parent=19 // pred_check_branch
          %302 = sbr.rel (%p300) target = $region44
        $region43: #{tpu_custom_call.1} parent=19 // pred_region
          %s303 = smul.u32 8, %s16
          %p304 = scmp.lt.s32.totalorder %s303, 15
          %s305 = scalar_select %p304, %s303, 15
          %s306 = smul.addr %s305, 9
          %s307 = smul.addr %s306, 8
          %s308 = scalar_lea.vmem %s6, %s307
          %s309 = smul.u32 8, %s16
        $region44: #{tpu_custom_call.1} parent=19 // pred_fallthru
          _
      $region20: #{tpu_custom_call.1} parent=5 // pred_fallthru
        _
      %p310 = scmp.le.s32.totalorder 1, %s16
      %p311 = scmp.lt.s32.totalorder %s16, 3
      %p312 = pnand %p310, %p311
      %p313 = pneg %p312
      // Predicated region
      $region45: #{tpu_custom_call.1} parent=5 // pred_check
        _
      $region46: #{tpu_custom_call.1} parent=5 // pred_check_branch
        %315 = sbr.rel (%p312) target = $region48
      $region47: #{tpu_custom_call.1} parent=5 // pred_region
        %s316 = ssub.s32 %s16, 1
        %s317 = sand.u32 %s102, 1
        %s318 = scalar_lea.sflag [#allocation4], %s317
        %s319 = sand.u32 %s102, 1
        %s320 = smul.addr %s319, 768
        %s321 = scalar_lea.vmem [#allocation3], %s320
        // Predicated region
        $region49: #{tpu_custom_call.1} parent=47 // pred_check
          %p322 = pneg %p115
        $region50: #{tpu_custom_call.1} parent=47 // pred_check_branch
          %324 = sbr.rel (%p322) target = $region52
        $region51: #{tpu_custom_call.1} parent=47 // pred_region
          %325 = dma.done %s318, 12288
        $region52: #{tpu_custom_call.1} parent=47 // pred_fallthru
          _
        %s326 = smul.u32 8, %s21
        %p327 = scmp.lt.s32.totalorder %s326, 15
        %s328 = scalar_select %p327, %s326, 15
        %s329 = smul.addr %s328, 8
        %s330 = scalar_lea.vmem %s0, %s329
        %p331 = pneg %p42
        %p332 = pneg %p39
        %p333 = pneg %p63
        %p334 = pneg %p60
        %s335 = smul.u32 8, %s21
        %p336 = scmp.lt.s32.totalorder %s335, 15
        %s337 = scalar_select %p336, %s335, 15
        %s338 = smul.addr %s337, 8
        %s339 = scalar_lea.vmem %s2, %s338
        %p340 = pneg %p89
        %p341 = pneg %p86
        %s342 = sand.u32 %s102, 1
        %s343 = scalar_lea.sflag [#allocation4], %s342
        %s344 = sand.u32 %s102, 1
        %s345 = smul.addr %s344, 768
        %s346 = scalar_lea.vmem [#allocation3], %s345
        %p347 = pneg %p115
        %p348 = pneg %p112
        %s349 = smul.u32 8, %s21
        %p350 = scmp.lt.s32.totalorder %s349, 15
        %s351 = scalar_select %p350, %s349, 15
        %s352 = smul.addr %s351, 4
        %s353 = smul.addr %s352, 8
        %s354 = scalar_lea.vmem %s4, %s353
        %p355 = pneg %p141
        %p356 = pneg %p138
        %s357 = smul.u32 8, %s21
        %p358 = scmp.lt.s32.totalorder %s357, 15
        %s359 = scalar_select %p358, %s357, 15
        %s360 = smul.addr %s359, 4
        %s361 = scalar_lea.vmem %s5, %s360
        %p362 = pneg %p167
        %p363 = pneg %p164
        %s364 = smul.u32 8, %s21
        %p365 = scmp.lt.s32.totalorder %s364, 15
        %s366 = scalar_select %p365, %s364, 15
        %s367 = smul.addr %s366, 9
        %s368 = smul.addr %s367, 8
        %s369 = scalar_lea.vmem %s6, %s368
        %p370 = pneg %p193
        %p371 = pneg %p190
        %p372 = pneg %p219
        %p373 = pneg %p216
        %s374 = smul.u32 8, %s21
        %p375 = scmp.lt.s32.totalorder %s374, 15
        %s376 = scalar_select %p375, %s374, 15
        %s377 = smul.addr %s376, 4
        %s378 = scalar_lea.vmem %s7, %s377
        %s379 = smul.u32 8, %s21
        %p380 = scmp.lt.s32.totalorder %s379, 15
        %s381 = scalar_select %p380, %s379, 15
        %s382 = smul.addr %s381, 8
        %s383 = scalar_lea.vmem %s0, %s382
        %s384 = smul.u32 8, %s21
        %s385 = smul.u32 8, %s21
        %p386 = scmp.lt.s32.totalorder %s385, 15
        %s387 = scalar_select %p386, %s385, 15
        %s388 = smul.addr %s387, 8
        %s389 = scalar_lea.vmem %s2, %s388
        %s390 = smul.u32 8, %s21
        %s391 = smul.u32 8, %s21
        %s392 = smul.u32 8, %s21
        %p393 = scmp.lt.s32.totalorder %s392, 15
        %s394 = scalar_select %p393, %s392, 15
        %s395 = smul.addr %s394, 4
        %s396 = smul.addr %s395, 8
        %s397 = scalar_lea.vmem %s4, %s396
        %s398 = smul.u32 8, %s21
        %s399 = smul.u32 8, %s21
        %p400 = scmp.lt.s32.totalorder %s399, 15
        %s401 = scalar_select %p400, %s399, 15
        %s402 = smul.addr %s401, 4
        %s403 = scalar_lea.vmem %s5, %s402
        %s404 = smul.u32 8, %s21
        %s405 = smul.u32 8, %s21
        %p406 = scmp.lt.s32.totalorder %s405, 15
        %s407 = scalar_select %p406, %s405, 15
        %s408 = smul.addr %s407, 9
        %s409 = smul.addr %s408, 8
        %s410 = scalar_lea.vmem %s6, %s409
        %s411 = smul.u32 8, %s21
        %s412 = smul.u32 8, %s21
        %p413 = scmp.lt.s32.totalorder %s412, 15
        %s414 = scalar_select %p413, %s412, 15
        %s415 = smul.addr %s414, 4
        %s416 = scalar_lea.vmem %s7, %s415
        %s417 = smul.u32 8, %s21
        %v418 = vld [vmem:[%s383] sm:$0xff]
        %v419 = vld [vmem:[%s383 + $0x8] sm:$0xff]
        %v420 = vld [vmem:[%s383 + $0x10] sm:$0xff]
        %v421 = vld [vmem:[%s383 + $0x18] sm:$0xff]
        %v422 = vld [vmem:[%s383 + $0x20] sm:$0xff]
        %v423 = vld [vmem:[%s383 + $0x28] sm:$0xff]
        %v424 = vld [vmem:[%s383 + $0x30] sm:$0xff]
        %v425 = vld [vmem:[%s383 + $0x38] sm:$0xff]
        %v426 = vmul.f32 %v418, 2.0
        %v427 = vmul.f32 %v419, 2.0
        %v428 = vmul.f32 %v420, 2.0
        %v429 = vmul.f32 %v421, 2.0
        %v430 = vmul.f32 %v422, 2.0
        %v431 = vmul.f32 %v423, 2.0
        %v432 = vmul.f32 %v424, 2.0
        %v433 = vmul.f32 %v425, 2.0
        %v434 = vsub.f32 %v426, 1.0
        %v435 = vsub.f32 %v427, 1.0
        %v436 = vsub.f32 %v428, 1.0
        %v437 = vsub.f32 %v429, 1.0
        %v438 = vsub.f32 %v430, 1.0
        %v439 = vsub.f32 %v431, 1.0
        %v440 = vsub.f32 %v432, 1.0
        %v441 = vsub.f32 %v433, 1.0
        %v442 = vld [vmem:[%s1] sm:$0x3]
        %444 = vset.pattern.permute.xlu0 0
        %445 = vperm.xlu0 %444, %v434
        %v446 = vpop.permute.xlu0 %445
        %449 = vset.pattern.permute.xlu0 0
        %450 = vperm.xlu0 %449, %v435
        %v451 = vpop.permute.xlu0 %450
        %454 = vset.pattern.permute.xlu0 0
        %455 = vperm.xlu0 %454, %v436
        %v456 = vpop.permute.xlu0 %455
        %459 = vset.pattern.permute.xlu0 0
        %460 = vperm.xlu0 %459, %v437
        %v461 = vpop.permute.xlu0 %460
        %464 = vset.pattern.permute.xlu0 0
        %465 = vperm.xlu0 %464, %v438
        %v466 = vpop.permute.xlu0 %465
        %469 = vset.pattern.permute.xlu0 0
        %470 = vperm.xlu0 %469, %v439
        %v471 = vpop.permute.xlu0 %470
        %474 = vset.pattern.permute.xlu0 0
        %475 = vperm.xlu0 %474, %v440
        %v476 = vpop.permute.xlu0 %475
        %479 = vset.pattern.permute.xlu0 0
        %480 = vperm.xlu0 %479, %v441
        %v481 = vpop.permute.xlu0 %480
        %v483 = vlaneseq
        %v484 = vshrl.u32 %v483, 7
        %v485 = vsub.s32 0, %v484
        %v486 = vrot.slane %v442, %v485
        %v487 = vmul.f32 %v446, %v486
        %v488 = vmul.f32 %v451, %v486
        %v489 = vmul.f32 %v456, %v486
        %v490 = vmul.f32 %v461, %v486
        %v491 = vmul.f32 %v466, %v486
        %v492 = vmul.f32 %v471, %v486
        %v493 = vmul.f32 %v476, %v486
        %v494 = vmul.f32 %v481, %v486
        %495 = vset.pattern.permute.xlu0 1
        %496 = vperm.xlu0 %495, %v434
        %v497 = vpop.permute.xlu0 %496
        %499 = vset.pattern.permute.xlu0 1
        %500 = vperm.xlu0 %499, %v435
        %v501 = vpop.permute.xlu0 %500
        %503 = vset.pattern.permute.xlu0 1
        %504 = vperm.xlu0 %503, %v436
        %v505 = vpop.permute.xlu0 %504
        %507 = vset.pattern.permute.xlu0 1
        %508 = vperm.xlu0 %507, %v437
        %v509 = vpop.permute.xlu0 %508
        %511 = vset.pattern.permute.xlu0 1
        %512 = vperm.xlu0 %511, %v438
        %v513 = vpop.permute.xlu0 %512
        %515 = vset.pattern.permute.xlu0 1
        %516 = vperm.xlu0 %515, %v439
        %v517 = vpop.permute.xlu0 %516
        %519 = vset.pattern.permute.xlu0 1
        %520 = vperm.xlu0 %519, %v440
        %v521 = vpop.permute.xlu0 %520
        %523 = vset.pattern.permute.xlu0 1
        %524 = vperm.xlu0 %523, %v441
        %v525 = vpop.permute.xlu0 %524
        %v527 = vlaneseq
        %v528 = vshrl.u32 %v527, 7
        %v529 = vsub.s32 1, %v528
        %v530 = vrot.slane %v442, %v529
        %v531 = vmul.f32 %v497, %v530
        %v532 = vmul.f32 %v501, %v530
        %v533 = vmul.f32 %v505, %v530
        %v534 = vmul.f32 %v509, %v530
        %v535 = vmul.f32 %v513, %v530
        %v536 = vmul.f32 %v517, %v530
        %v537 = vmul.f32 %v521, %v530
        %v538 = vmul.f32 %v525, %v530
        %v539 = vadd.f32 %v487, %v531
        %v540 = vadd.f32 %v488, %v532
        %v541 = vadd.f32 %v489, %v533
        %v542 = vadd.f32 %v490, %v534
        %v543 = vadd.f32 %v491, %v535
        %v544 = vadd.f32 %v492, %v536
        %v545 = vadd.f32 %v493, %v537
        %v546 = vadd.f32 %v494, %v538
        %v547 = vmul.f32 %v539, 6.2831855
        %v548 = vmul.f32 %v540, 6.2831855
        %v549 = vmul.f32 %v541, 6.2831855
        %v550 = vmul.f32 %v542, 6.2831855
        %v551 = vmul.f32 %v543, 6.2831855
        %v552 = vmul.f32 %v544, 6.2831855
        %v553 = vmul.f32 %v545, 6.2831855
        %v554 = vmul.f32 %v546, 6.2831855
        %v555 = vand.u32 2147483647, %v547
        %vm556 = vcmp.le.f32.partialorder %v555, 0.7853982
        %vm557 = vcmp.lt.s32.totalorder %v547, 0
        %v558 = vand.u32 %v547, 2139095040
        %v559 = vshrl.u32 %v558, 23
        %v560 = vsub.s32 %v559, 127
        %v561 = vand.u32 2147483647, %v547
        %v562 = vand.u32 %v561, 8388607
        %v563 = vor.u32 %v562, 8388608
        %v564 = vsub.s32 0, %v563
        %v565 = vadd.s32 %v560, 1
        %vm566 = vcmp.gt.s32.totalorder %v565, 0
        %v567 = vsel %vm566, %v565, 0
        %v568 = vshrl.u32 %v567, 5
        %v569 = vand.u32 %v567, 31
        %v570 = vsub.s32 32, %v569
        %v571 = vshrl.u32 683565275, %v570
        %v572 = vshll.u32 683565275, %v569
        %v573 = vshrl.u32 2475754826, %v570
        %v574 = vor.u32 %v572, %v573
        %v575 = vshll.u32 2475754826, %v569
        %v576 = vshrl.u32 2131351028, %v570
        %v577 = vor.u32 %v575, %v576
        %v578 = vshll.u32 2131351028, %v569
        %v579 = vshrl.u32 2102212464, %v570
        %v580 = vor.u32 %v578, %v579
        %v581 = vshll.u32 2102212464, %v569
        %v582 = vshrl.u32 920167782, %v570
        %v583 = vor.u32 %v581, %v582
        %v584 = vshll.u32 920167782, %v569
        %v585 = vshrl.u32 1326507024, %v570
        %v586 = vor.u32 %v584, %v585
        %vm587 = vcmp.lt.s32.totalorder %v568, 1
        %vm588 = vcmp.lt.s32.totalorder %v568, 2
        %vm589 = vcmp.lt.s32.totalorder %v568, 3
        %vm590 = vcmp.lt.s32.totalorder %v568, 4
        %v591 = vsel %vm587, %v571, %v574
        %v592 = vsel %vm590, %v580, 2102212464
        %v593 = vsel %vm589, %v577, %v592
        %v594 = vsel %vm588, %v591, %v593
        %v595 = vsel %vm587, %v574, %v577
        %v596 = vsel %vm590, %v583, 920167782
        %v597 = vsel %vm589, %v580, %v596
        %v598 = vsel %vm588, %v595, %v597
        %v599 = vsel %vm587, %v577, %v580
        %v600 = vsel %vm590, %v586, 1326507024
        %v601 = vsel %vm589, %v583, %v600
        %v602 = vsel %vm588, %v599, %v601
        %v603 = vshll.u32 %v563, 8
        %v604 = vmul.u32.u64.compose %v603, %v602
        %v605 = vextract.low.u32 %v604
        %v606 = vextract.high.u32 %v604
        %v607 = vmul.u32.u64.compose %v603, %v598
        %v608 = vextract.low.u32 %v607
        %v609 = vextract.high.u32 %v607
        %v610 = vmul.u32 %v603, %v594
        %v611 = vadd.s32 %v606, %v608
        %vm612 = vc.u32 %v606, %v608
        %v613 = vadd.s32 %v609, 1
        %v614 = vsel %vm612, %v613, %v609
        %v615 = vadd.s32 %v610, %v614
        %v616 = vadd.s32 %v615, 536870912
        %v617 = vshrl.u32 %v616, 30
        %v618 = vshll.u32 %v617, 30
        %v619 = vsub.s32 %v615, %v618
        %vm620 = vcmp.lt.s32.totalorder %v619, 0
        %v621 = vsub.s32 0, %v619
        %v622 = vsel %vm620, %v621, %v619
        %v623 = vclz %v622
        %v624 = vsub.s32 %v623, 2
        %vm625 = vcmp.gt.s32.totalorder 0, %v624
        %v626 = vsel %vm625, 0, %v624
        %v627 = vsub.s32 32, %v626
        %v628 = vshll.u32 %v619, %v626
        %v629 = vshrl.u32 %v611, %v627
        %v630 = vor.u32 %v628, %v629
        %v631 = vsub.s32 4294967266, %v626
        %v632 = vadd.s32 %v631, 127
        %v633 = vshll.u32 %v632, 23
        %v634 = vor.u32 4788187, %v633
        %v635 = vand.u32 2147483647, %v634
        %v637 = vcvt.s32.f32 %v630
        %v638 = vmul.f32 %v637, %v635
        %v639 = vxor.u32 %v638, 2147483648
        %v640 = vsel %vm557, %v639, %v638
        %v641 = vsub.s32 4, %v617
        %v642 = vsel %vm557, %v641, %v617
        %v643 = vsel %vm556, %v547, %v640
        %v644 = vsel %vm556, 0, %v642
        %v645 = vcosq.f32.pop %v643
        %v646 = vsinq.f32.pop %v643
        %vm647 = vweird.f32 %v547
        %v648 = vadd.s32 %v644, 3
        %v649 = vand.u32 %v648, 3
        %vm650 = vcmp.lt.s32.totalorder %v649, 2
        %vm651 = vcmp.eq.s32.totalorder %v649, 0
        %v652 = vxor.u32 %v646, 2147483648
        %v653 = vsel %vm651, %v645, %v652
        %vm654 = vcmp.eq.s32.totalorder %v649, 2
        %v655 = vxor.u32 %v645, 2147483648
        %v656 = vsel %vm654, %v655, %v646
        %v657 = vsel %vm650, %v653, %v656
        %v658 = vsel %vm647, nan, %v657
        %v659 = vand.u32 2147483647, %v548
        %vm660 = vcmp.le.f32.partialorder %v659, 0.7853982
        %vm661 = vcmp.lt.s32.totalorder %v548, 0
        %v662 = vand.u32 %v548, 2139095040
        %v663 = vshrl.u32 %v662, 23
        %v664 = vsub.s32 %v663, 127
        %v665 = vand.u32 2147483647, %v548
        %v666 = vand.u32 %v665, 8388607
        %v667 = vor.u32 %v666, 8388608
        %v668 = vsub.s32 0, %v667
        %v669 = vadd.s32 %v664, 1
        %vm670 = vcmp.gt.s32.totalorder %v669, 0
        %v671 = vsel %vm670, %v669, 0
        %v672 = vshrl.u32 %v671, 5
        %v673 = vand.u32 %v671, 31
        %v674 = vsub.s32 32, %v673
        %v675 = vshrl.u32 683565275, %v674
        %v676 = vshll.u32 683565275, %v673
        %v677 = vshrl.u32 2475754826, %v674
        %v678 = vor.u32 %v676, %v677
        %v679 = vshll.u32 2475754826, %v673
        %v680 = vshrl.u32 2131351028, %v674
        %v681 = vor.u32 %v679, %v680
        %v682 = vshll.u32 2131351028, %v673
        %v683 = vshrl.u32 2102212464, %v674
        %v684 = vor.u32 %v682, %v683
        %v685 = vshll.u32 2102212464, %v673
        %v686 = vshrl.u32 920167782, %v674
        %v687 = vor.u32 %v685, %v686
        %v688 = vshll.u32 920167782, %v673
        %v689 = vshrl.u32 1326507024, %v674
        %v690 = vor.u32 %v688, %v689
        %vm691 = vcmp.lt.s32.totalorder %v672, 1
        %vm692 = vcmp.lt.s32.totalorder %v672, 2
        %vm693 = vcmp.lt.s32.totalorder %v672, 3
        %vm694 = vcmp.lt.s32.totalorder %v672, 4
        %v695 = vsel %vm691, %v675, %v678
        %v696 = vsel %vm694, %v684, 2102212464
        %v697 = vsel %vm693, %v681, %v696
        %v698 = vsel %vm692, %v695, %v697
        %v699 = vsel %vm691, %v678, %v681
        %v700 = vsel %vm694, %v687, 920167782
        %v701 = vsel %vm693, %v684, %v700
        %v702 = vsel %vm692, %v699, %v701
        %v703 = vsel %vm691, %v681, %v684
        %v704 = vsel %vm694, %v690, 1326507024
        %v705 = vsel %vm693, %v687, %v704
        %v706 = vsel %vm692, %v703, %v705
        %v707 = vshll.u32 %v667, 8
        %v708 = vmul.u32.u64.compose %v707, %v706
        %v709 = vextract.low.u32 %v708
        %v710 = vextract.high.u32 %v708
        %v711 = vmul.u32.u64.compose %v707, %v702
        %v712 = vextract.low.u32 %v711
        %v713 = vextract.high.u32 %v711
        %v714 = vmul.u32 %v707, %v698
        %v715 = vadd.s32 %v710, %v712
        %vm716 = vc.u32 %v710, %v712
        %v717 = vadd.s32 %v713, 1
        %v718 = vsel %vm716, %v717, %v713
        %v719 = vadd.s32 %v714, %v718
        %v720 = vadd.s32 %v719, 536870912
        %v721 = vshrl.u32 %v720, 30
        %v722 = vshll.u32 %v721, 30
        %v723 = vsub.s32 %v719, %v722
        %vm724 = vcmp.lt.s32.totalorder %v723, 0
        %v725 = vsub.s32 0, %v723
        %v726 = vsel %vm724, %v725, %v723
        %v727 = vclz %v726
        %v728 = vsub.s32 %v727, 2
        %vm729 = vcmp.gt.s32.totalorder 0, %v728
        %v730 = vsel %vm729, 0, %v728
        %v731 = vsub.s32 32, %v730
        %v732 = vshll.u32 %v723, %v730
        %v733 = vshrl.u32 %v715, %v731
        %v734 = vor.u32 %v732, %v733
        %v735 = vsub.s32 4294967266, %v730
        %v736 = vadd.s32 %v735, 127
        %v737 = vshll.u32 %v736, 23
        %v738 = vor.u32 4788187, %v737
        %v739 = vand.u32 2147483647, %v738
        %v741 = vcvt.s32.f32 %v734
        %v742 = vmul.f32 %v741, %v739
        %v743 = vxor.u32 %v742, 2147483648
        %v744 = vsel %vm661, %v743, %v742
        %v745 = vsub.s32 4, %v721
        %v746 = vsel %vm661, %v745, %v721
        %v747 = vsel %vm660, %v548, %v744
        %v748 = vsel %vm660, 0, %v746
        %v749 = vcosq.f32.pop %v747
        %v750 = vsinq.f32.pop %v747
        %vm751 = vweird.f32 %v548
        %v752 = vadd.s32 %v748, 3
        %v753 = vand.u32 %v752, 3
        %vm754 = vcmp.lt.s32.totalorder %v753, 2
        %vm755 = vcmp.eq.s32.totalorder %v753, 0
        %v756 = vxor.u32 %v750, 2147483648
        %v757 = vsel %vm755, %v749, %v756
        %vm758 = vcmp.eq.s32.totalorder %v753, 2
        %v759 = vxor.u32 %v749, 2147483648
        %v760 = vsel %vm758, %v759, %v750
        %v761 = vsel %vm754, %v757, %v760
        %v762 = vsel %vm751, nan, %v761
        %v763 = vand.u32 2147483647, %v549
        %vm764 = vcmp.le.f32.partialorder %v763, 0.7853982
        %vm765 = vcmp.lt.s32.totalorder %v549, 0
        %v766 = vand.u32 %v549, 2139095040
        %v767 = vshrl.u32 %v766, 23
        %v768 = vsub.s32 %v767, 127
        %v769 = vand.u32 2147483647, %v549
        %v770 = vand.u32 %v769, 8388607
        %v771 = vor.u32 %v770, 8388608
        %v772 = vsub.s32 0, %v771
        %v773 = vadd.s32 %v768, 1
        %vm774 = vcmp.gt.s32.totalorder %v773, 0
        %v775 = vsel %vm774, %v773, 0
        %v776 = vshrl.u32 %v775, 5
        %v777 = vand.u32 %v775, 31
        %v778 = vsub.s32 32, %v777
        %v779 = vshrl.u32 683565275, %v778
        %v780 = vshll.u32 683565275, %v777
        %v781 = vshrl.u32 2475754826, %v778
        %v782 = vor.u32 %v780, %v781
        %v783 = vshll.u32 2475754826, %v777
        %v784 = vshrl.u32 2131351028, %v778
        %v785 = vor.u32 %v783, %v784
        %v786 = vshll.u32 2131351028, %v777
        %v787 = vshrl.u32 2102212464, %v778
        %v788 = vor.u32 %v786, %v787
        %v789 = vshll.u32 2102212464, %v777
        %v790 = vshrl.u32 920167782, %v778
        %v791 = vor.u32 %v789, %v790
        %v792 = vshll.u32 920167782, %v777
        %v793 = vshrl.u32 1326507024, %v778
        %v794 = vor.u32 %v792, %v793
        %vm795 = vcmp.lt.s32.totalorder %v776, 1
        %vm796 = vcmp.lt.s32.totalorder %v776, 2
        %vm797 = vcmp.lt.s32.totalorder %v776, 3
        %vm798 = vcmp.lt.s32.totalorder %v776, 4
        %v799 = vsel %vm795, %v779, %v782
        %v800 = vsel %vm798, %v788, 2102212464
        %v801 = vsel %vm797, %v785, %v800
        %v802 = vsel %vm796, %v799, %v801
        %v803 = vsel %vm795, %v782, %v785
        %v804 = vsel %vm798, %v791, 920167782
        %v805 = vsel %vm797, %v788, %v804
        %v806 = vsel %vm796, %v803, %v805
        %v807 = vsel %vm795, %v785, %v788
        %v808 = vsel %vm798, %v794, 1326507024
        %v809 = vsel %vm797, %v791, %v808
        %v810 = vsel %vm796, %v807, %v809
        %v811 = vshll.u32 %v771, 8
        %v812 = vmul.u32.u64.compose %v811, %v810
        %v813 = vextract.low.u32 %v812
        %v814 = vextract.high.u32 %v812
        %v815 = vmul.u32.u64.compose %v811, %v806
        %v816 = vextract.low.u32 %v815
        %v817 = vextract.high.u32 %v815
        %v818 = vmul.u32 %v811, %v802
        %v819 = vadd.s32 %v814, %v816
        %vm820 = vc.u32 %v814, %v816
        %v821 = vadd.s32 %v817, 1
        %v822 = vsel %vm820, %v821, %v817
        %v823 = vadd.s32 %v818, %v822
        %v824 = vadd.s32 %v823, 536870912
        %v825 = vshrl.u32 %v824, 30
        %v826 = vshll.u32 %v825, 30
        %v827 = vsub.s32 %v823, %v826
        %vm828 = vcmp.lt.s32.totalorder %v827, 0
        %v829 = vsub.s32 0, %v827
        %v830 = vsel %vm828, %v829, %v827
        %v831 = vclz %v830
        %v832 = vsub.s32 %v831, 2
        %vm833 = vcmp.gt.s32.totalorder 0, %v832
        %v834 = vsel %vm833, 0, %v832
        %v835 = vsub.s32 32, %v834
        %v836 = vshll.u32 %v827, %v834
        %v837 = vshrl.u32 %v819, %v835
        %v838 = vor.u32 %v836, %v837
        %v839 = vsub.s32 4294967266, %v834
        %v840 = vadd.s32 %v839, 127
        %v841 = vshll.u32 %v840, 23
        %v842 = vor.u32 4788187, %v841
        %v843 = vand.u32 2147483647, %v842
        %v845 = vcvt.s32.f32 %v838
        %v846 = vmul.f32 %v845, %v843
        %v847 = vxor.u32 %v846, 2147483648
        %v848 = vsel %vm765, %v847, %v846
        %v849 = vsub.s32 4, %v825
        %v850 = vsel %vm765, %v849, %v825
        %v851 = vsel %vm764, %v549, %v848
        %v852 = vsel %vm764, 0, %v850
        %v853 = vcosq.f32.pop %v851
        %v854 = vsinq.f32.pop %v851
        %vm855 = vweird.f32 %v549
        %v856 = vadd.s32 %v852, 3
        %v857 = vand.u32 %v856, 3
        %vm858 = vcmp.lt.s32.totalorder %v857, 2
        %vm859 = vcmp.eq.s32.totalorder %v857, 0
        %v860 = vxor.u32 %v854, 2147483648
        %v861 = vsel %vm859, %v853, %v860
        %vm862 = vcmp.eq.s32.totalorder %v857, 2
        %v863 = vxor.u32 %v853, 2147483648
        %v864 = vsel %vm862, %v863, %v854
        %v865 = vsel %vm858, %v861, %v864
        %v866 = vsel %vm855, nan, %v865
        %v867 = vand.u32 2147483647, %v550
        %vm868 = vcmp.le.f32.partialorder %v867, 0.7853982
        %vm869 = vcmp.lt.s32.totalorder %v550, 0
        %v870 = vand.u32 %v550, 2139095040
        %v871 = vshrl.u32 %v870, 23
        %v872 = vsub.s32 %v871, 127
        %v873 = vand.u32 2147483647, %v550
        %v874 = vand.u32 %v873, 8388607
        %v875 = vor.u32 %v874, 8388608
        %v876 = vsub.s32 0, %v875
        %v877 = vadd.s32 %v872, 1
        %vm878 = vcmp.gt.s32.totalorder %v877, 0
        %v879 = vsel %vm878, %v877, 0
        %v880 = vshrl.u32 %v879, 5
        %v881 = vand.u32 %v879, 31
        %v882 = vsub.s32 32, %v881
        %v883 = vshrl.u32 683565275, %v882
        %v884 = vshll.u32 683565275, %v881
        %v885 = vshrl.u32 2475754826, %v882
        %v886 = vor.u32 %v884, %v885
        %v887 = vshll.u32 2475754826, %v881
        %v888 = vshrl.u32 2131351028, %v882
        %v889 = vor.u32 %v887, %v888
        %v890 = vshll.u32 2131351028, %v881
        %v891 = vshrl.u32 2102212464, %v882
        %v892 = vor.u32 %v890, %v891
        %v893 = vshll.u32 2102212464, %v881
        %v894 = vshrl.u32 920167782, %v882
        %v895 = vor.u32 %v893, %v894
        %v896 = vshll.u32 920167782, %v881
        %v897 = vshrl.u32 1326507024, %v882
        %v898 = vor.u32 %v896, %v897
        %vm899 = vcmp.lt.s32.totalorder %v880, 1
        %vm900 = vcmp.lt.s32.totalorder %v880, 2
        %vm901 = vcmp.lt.s32.totalorder %v880, 3
        %vm902 = vcmp.lt.s32.totalorder %v880, 4
        %v903 = vsel %vm899, %v883, %v886
        %v904 = vsel %vm902, %v892, 2102212464
        %v905 = vsel %vm901, %v889, %v904
        %v906 = vsel %vm900, %v903, %v905
        %v907 = vsel %vm899, %v886, %v889
        %v908 = vsel %vm902, %v895, 920167782
        %v909 = vsel %vm901, %v892, %v908
        %v910 = vsel %vm900, %v907, %v909
        %v911 = vsel %vm899, %v889, %v892
        %v912 = vsel %vm902, %v898, 1326507024
        %v913 = vsel %vm901, %v895, %v912
        %v914 = vsel %vm900, %v911, %v913
        %v915 = vshll.u32 %v875, 8
        %v916 = vmul.u32.u64.compose %v915, %v914
        %v917 = vextract.low.u32 %v916
        %v918 = vextract.high.u32 %v916
        %v919 = vmul.u32.u64.compose %v915, %v910
        %v920 = vextract.low.u32 %v919
        %v921 = vextract.high.u32 %v919
        %v922 = vmul.u32 %v915, %v906
        %v923 = vadd.s32 %v918, %v920
        %vm924 = vc.u32 %v918, %v920
        %v925 = vadd.s32 %v921, 1
        %v926 = vsel %vm924, %v925, %v921
        %v927 = vadd.s32 %v922, %v926
        %v928 = vadd.s32 %v927, 536870912
        %v929 = vshrl.u32 %v928, 30
        %v930 = vshll.u32 %v929, 30
        %v931 = vsub.s32 %v927, %v930
        %vm932 = vcmp.lt.s32.totalorder %v931, 0
        %v933 = vsub.s32 0, %v931
        %v934 = vsel %vm932, %v933, %v931
        %v935 = vclz %v934
        %v936 = vsub.s32 %v935, 2
        %vm937 = vcmp.gt.s32.totalorder 0, %v936
        %v938 = vsel %vm937, 0, %v936
        %v939 = vsub.s32 32, %v938
        %v940 = vshll.u32 %v931, %v938
        %v941 = vshrl.u32 %v923, %v939
        %v942 = vor.u32 %v940, %v941
        %v943 = vsub.s32 4294967266, %v938
        %v944 = vadd.s32 %v943, 127
        %v945 = vshll.u32 %v944, 23
        %v946 = vor.u32 4788187, %v945
        %v947 = vand.u32 2147483647, %v946
        %v949 = vcvt.s32.f32 %v942
        %v950 = vmul.f32 %v949, %v947
        %v951 = vxor.u32 %v950, 2147483648
        %v952 = vsel %vm869, %v951, %v950
        %v953 = vsub.s32 4, %v929
        %v954 = vsel %vm869, %v953, %v929
        %v955 = vsel %vm868, %v550, %v952
        %v956 = vsel %vm868, 0, %v954
        %v957 = vcosq.f32.pop %v955
        %v958 = vsinq.f32.pop %v955
        %vm959 = vweird.f32 %v550
        %v960 = vadd.s32 %v956, 3
        %v961 = vand.u32 %v960, 3
        %vm962 = vcmp.lt.s32.totalorder %v961, 2
        %vm963 = vcmp.eq.s32.totalorder %v961, 0
        %v964 = vxor.u32 %v958, 2147483648
        %v965 = vsel %vm963, %v957, %v964
        %vm966 = vcmp.eq.s32.totalorder %v961, 2
        %v967 = vxor.u32 %v957, 2147483648
        %v968 = vsel %vm966, %v967, %v958
        %v969 = vsel %vm962, %v965, %v968
        %v970 = vsel %vm959, nan, %v969
        %v971 = vand.u32 2147483647, %v551
        %vm972 = vcmp.le.f32.partialorder %v971, 0.7853982
        %vm973 = vcmp.lt.s32.totalorder %v551, 0
        %v974 = vand.u32 %v551, 2139095040
        %v975 = vshrl.u32 %v974, 23
        %v976 = vsub.s32 %v975, 127
        %v977 = vand.u32 2147483647, %v551
        %v978 = vand.u32 %v977, 8388607
        %v979 = vor.u32 %v978, 8388608
        %v980 = vsub.s32 0, %v979
        %v981 = vadd.s32 %v976, 1
        %vm982 = vcmp.gt.s32.totalorder %v981, 0
        %v983 = vsel %vm982, %v981, 0
        %v984 = vshrl.u32 %v983, 5
        %v985 = vand.u32 %v983, 31
        %v986 = vsub.s32 32, %v985
        %v987 = vshrl.u32 683565275, %v986
        %v988 = vshll.u32 683565275, %v985
        %v989 = vshrl.u32 2475754826, %v986
        %v990 = vor.u32 %v988, %v989
        %v991 = vshll.u32 2475754826, %v985
        %v992 = vshrl.u32 2131351028, %v986
        %v993 = vor.u32 %v991, %v992
        %v994 = vshll.u32 2131351028, %v985
        %v995 = vshrl.u32 2102212464, %v986
        %v996 = vor.u32 %v994, %v995
        %v997 = vshll.u32 2102212464, %v985
        %v998 = vshrl.u32 920167782, %v986
        %v999 = vor.u32 %v997, %v998
        %v1000 = vshll.u32 920167782, %v985
        %v1001 = vshrl.u32 1326507024, %v986
        %v1002 = vor.u32 %v1000, %v1001
        %vm1003 = vcmp.lt.s32.totalorder %v984, 1
        %vm1004 = vcmp.lt.s32.totalorder %v984, 2
        %vm1005 = vcmp.lt.s32.totalorder %v984, 3
        %vm1006 = vcmp.lt.s32.totalorder %v984, 4
        %v1007 = vsel %vm1003, %v987, %v990
        %v1008 = vsel %vm1006, %v996, 2102212464
        %v1009 = vsel %vm1005, %v993, %v1008
        %v1010 = vsel %vm1004, %v1007, %v1009
        %v1011 = vsel %vm1003, %v990, %v993
        %v1012 = vsel %vm1006, %v999, 920167782
        %v1013 = vsel %vm1005, %v996, %v1012
        %v1014 = vsel %vm1004, %v1011, %v1013
        %v1015 = vsel %vm1003, %v993, %v996
        %v1016 = vsel %vm1006, %v1002, 1326507024
        %v1017 = vsel %vm1005, %v999, %v1016
        %v1018 = vsel %vm1004, %v1015, %v1017
        %v1019 = vshll.u32 %v979, 8
        %v1020 = vmul.u32.u64.compose %v1019, %v1018
        %v1021 = vextract.low.u32 %v1020
        %v1022 = vextract.high.u32 %v1020
        %v1023 = vmul.u32.u64.compose %v1019, %v1014
        %v1024 = vextract.low.u32 %v1023
        %v1025 = vextract.high.u32 %v1023
        %v1026 = vmul.u32 %v1019, %v1010
        %v1027 = vadd.s32 %v1022, %v1024
        %vm1028 = vc.u32 %v1022, %v1024
        %v1029 = vadd.s32 %v1025, 1
        %v1030 = vsel %vm1028, %v1029, %v1025
        %v1031 = vadd.s32 %v1026, %v1030
        %v1032 = vadd.s32 %v1031, 536870912
        %v1033 = vshrl.u32 %v1032, 30
        %v1034 = vshll.u32 %v1033, 30
        %v1035 = vsub.s32 %v1031, %v1034
        %vm1036 = vcmp.lt.s32.totalorder %v1035, 0
        %v1037 = vsub.s32 0, %v1035
        %v1038 = vsel %vm1036, %v1037, %v1035
        %v1039 = vclz %v1038
        %v1040 = vsub.s32 %v1039, 2
        %vm1041 = vcmp.gt.s32.totalorder 0, %v1040
        %v1042 = vsel %vm1041, 0, %v1040
        %v1043 = vsub.s32 32, %v1042
        %v1044 = vshll.u32 %v1035, %v1042
        %v1045 = vshrl.u32 %v1027, %v1043
        %v1046 = vor.u32 %v1044, %v1045
        %v1047 = vsub.s32 4294967266, %v1042
        %v1048 = vadd.s32 %v1047, 127
        %v1049 = vshll.u32 %v1048, 23
        %v1050 = vor.u32 4788187, %v1049
        %v1051 = vand.u32 2147483647, %v1050
        %v1053 = vcvt.s32.f32 %v1046
        %v1054 = vmul.f32 %v1053, %v1051
        %v1055 = vxor.u32 %v1054, 2147483648
        %v1056 = vsel %vm973, %v1055, %v1054
        %v1057 = vsub.s32 4, %v1033
        %v1058 = vsel %vm973, %v1057, %v1033
        %v1059 = vsel %vm972, %v551, %v1056
        %v1060 = vsel %vm972, 0, %v1058
        %v1061 = vcosq.f32.pop %v1059
        %v1062 = vsinq.f32.pop %v1059
        %vm1063 = vweird.f32 %v551
        %v1064 = vadd.s32 %v1060, 3
        %v1065 = vand.u32 %v1064, 3
        %vm1066 = vcmp.lt.s32.totalorder %v1065, 2
        %vm1067 = vcmp.eq.s32.totalorder %v1065, 0
        %v1068 = vxor.u32 %v1062, 2147483648
        %v1069 = vsel %vm1067, %v1061, %v1068
        %vm1070 = vcmp.eq.s32.totalorder %v1065, 2
        %v1071 = vxor.u32 %v1061, 2147483648
        %v1072 = vsel %vm1070, %v1071, %v1062
        %v1073 = vsel %vm1066, %v1069, %v1072
        %v1074 = vsel %vm1063, nan, %v1073
        %v1075 = vand.u32 2147483647, %v552
        %vm1076 = vcmp.le.f32.partialorder %v1075, 0.7853982
        %vm1077 = vcmp.lt.s32.totalorder %v552, 0
        %v1078 = vand.u32 %v552, 2139095040
        %v1079 = vshrl.u32 %v1078, 23
        %v1080 = vsub.s32 %v1079, 127
        %v1081 = vand.u32 2147483647, %v552
        %v1082 = vand.u32 %v1081, 8388607
        %v1083 = vor.u32 %v1082, 8388608
        %v1084 = vsub.s32 0, %v1083
        %v1085 = vadd.s32 %v1080, 1
        %vm1086 = vcmp.gt.s32.totalorder %v1085, 0
        %v1087 = vsel %vm1086, %v1085, 0
        %v1088 = vshrl.u32 %v1087, 5
        %v1089 = vand.u32 %v1087, 31
        %v1090 = vsub.s32 32, %v1089
        %v1091 = vshrl.u32 683565275, %v1090
        %v1092 = vshll.u32 683565275, %v1089
        %v1093 = vshrl.u32 2475754826, %v1090
        %v1094 = vor.u32 %v1092, %v1093
        %v1095 = vshll.u32 2475754826, %v1089
        %v1096 = vshrl.u32 2131351028, %v1090
        %v1097 = vor.u32 %v1095, %v1096
        %v1098 = vshll.u32 2131351028, %v1089
        %v1099 = vshrl.u32 2102212464, %v1090
        %v1100 = vor.u32 %v1098, %v1099
        %v1101 = vshll.u32 2102212464, %v1089
        %v1102 = vshrl.u32 920167782, %v1090
        %v1103 = vor.u32 %v1101, %v1102
        %v1104 = vshll.u32 920167782, %v1089
        %v1105 = vshrl.u32 1326507024, %v1090
        %v1106 = vor.u32 %v1104, %v1105
        %vm1107 = vcmp.lt.s32.totalorder %v1088, 1
        %vm1108 = vcmp.lt.s32.totalorder %v1088, 2
        %vm1109 = vcmp.lt.s32.totalorder %v1088, 3
        %vm1110 = vcmp.lt.s32.totalorder %v1088, 4
        %v1111 = vsel %vm1107, %v1091, %v1094
        %v1112 = vsel %vm1110, %v1100, 2102212464
        %v1113 = vsel %vm1109, %v1097, %v1112
        %v1114 = vsel %vm1108, %v1111, %v1113
        %v1115 = vsel %vm1107, %v1094, %v1097
        %v1116 = vsel %vm1110, %v1103, 920167782
        %v1117 = vsel %vm1109, %v1100, %v1116
        %v1118 = vsel %vm1108, %v1115, %v1117
        %v1119 = vsel %vm1107, %v1097, %v1100
        %v1120 = vsel %vm1110, %v1106, 1326507024
        %v1121 = vsel %vm1109, %v1103, %v1120
        %v1122 = vsel %vm1108, %v1119, %v1121
        %v1123 = vshll.u32 %v1083, 8
        %v1124 = vmul.u32.u64.compose %v1123, %v1122
        %v1125 = vextract.low.u32 %v1124
        %v1126 = vextract.high.u32 %v1124
        %v1127 = vmul.u32.u64.compose %v1123, %v1118
        %v1128 = vextract.low.u32 %v1127
        %v1129 = vextract.high.u32 %v1127
        %v1130 = vmul.u32 %v1123, %v1114
        %v1131 = vadd.s32 %v1126, %v1128
        %vm1132 = vc.u32 %v1126, %v1128
        %v1133 = vadd.s32 %v1129, 1
        %v1134 = vsel %vm1132, %v1133, %v1129
        %v1135 = vadd.s32 %v1130, %v1134
        %v1136 = vadd.s32 %v1135, 536870912
        %v1137 = vshrl.u32 %v1136, 30
        %v1138 = vshll.u32 %v1137, 30
        %v1139 = vsub.s32 %v1135, %v1138
        %vm1140 = vcmp.lt.s32.totalorder %v1139, 0
        %v1141 = vsub.s32 0, %v1139
        %v1142 = vsel %vm1140, %v1141, %v1139
        %v1143 = vclz %v1142
        %v1144 = vsub.s32 %v1143, 2
        %vm1145 = vcmp.gt.s32.totalorder 0, %v1144
        %v1146 = vsel %vm1145, 0, %v1144
        %v1147 = vsub.s32 32, %v1146
        %v1148 = vshll.u32 %v1139, %v1146
        %v1149 = vshrl.u32 %v1131, %v1147
        %v1150 = vor.u32 %v1148, %v1149
        %v1151 = vsub.s32 4294967266, %v1146
        %v1152 = vadd.s32 %v1151, 127
        %v1153 = vshll.u32 %v1152, 23
        %v1154 = vor.u32 4788187, %v1153
        %v1155 = vand.u32 2147483647, %v1154
        %v1157 = vcvt.s32.f32 %v1150
        %v1158 = vmul.f32 %v1157, %v1155
        %v1159 = vxor.u32 %v1158, 2147483648
        %v1160 = vsel %vm1077, %v1159, %v1158
        %v1161 = vsub.s32 4, %v1137
        %v1162 = vsel %vm1077, %v1161, %v1137
        %v1163 = vsel %vm1076, %v552, %v1160
        %v1164 = vsel %vm1076, 0, %v1162
        %v1165 = vcosq.f32.pop %v1163
        %v1166 = vsinq.f32.pop %v1163
        %vm1167 = vweird.f32 %v552
        %v1168 = vadd.s32 %v1164, 3
        %v1169 = vand.u32 %v1168, 3
        %vm1170 = vcmp.lt.s32.totalorder %v1169, 2
        %vm1171 = vcmp.eq.s32.totalorder %v1169, 0
        %v1172 = vxor.u32 %v1166, 2147483648
        %v1173 = vsel %vm1171, %v1165, %v1172
        %vm1174 = vcmp.eq.s32.totalorder %v1169, 2
        %v1175 = vxor.u32 %v1165, 2147483648
        %v1176 = vsel %vm1174, %v1175, %v1166
        %v1177 = vsel %vm1170, %v1173, %v1176
        %v1178 = vsel %vm1167, nan, %v1177
        %v1179 = vand.u32 2147483647, %v553
        %vm1180 = vcmp.le.f32.partialorder %v1179, 0.7853982
        %vm1181 = vcmp.lt.s32.totalorder %v553, 0
        %v1182 = vand.u32 %v553, 2139095040
        %v1183 = vshrl.u32 %v1182, 23
        %v1184 = vsub.s32 %v1183, 127
        %v1185 = vand.u32 2147483647, %v553
        %v1186 = vand.u32 %v1185, 8388607
        %v1187 = vor.u32 %v1186, 8388608
        %v1188 = vsub.s32 0, %v1187
        %v1189 = vadd.s32 %v1184, 1
        %vm1190 = vcmp.gt.s32.totalorder %v1189, 0
        %v1191 = vsel %vm1190, %v1189, 0
        %v1192 = vshrl.u32 %v1191, 5
        %v1193 = vand.u32 %v1191, 31
        %v1194 = vsub.s32 32, %v1193
        %v1195 = vshrl.u32 683565275, %v1194
        %v1196 = vshll.u32 683565275, %v1193
        %v1197 = vshrl.u32 2475754826, %v1194
        %v1198 = vor.u32 %v1196, %v1197
        %v1199 = vshll.u32 2475754826, %v1193
        %v1200 = vshrl.u32 2131351028, %v1194
        %v1201 = vor.u32 %v1199, %v1200
        %v1202 = vshll.u32 2131351028, %v1193
        %v1203 = vshrl.u32 2102212464, %v1194
        %v1204 = vor.u32 %v1202, %v1203
        %v1205 = vshll.u32 2102212464, %v1193
        %v1206 = vshrl.u32 920167782, %v1194
        %v1207 = vor.u32 %v1205, %v1206
        %v1208 = vshll.u32 920167782, %v1193
        %v1209 = vshrl.u32 1326507024, %v1194
        %v1210 = vor.u32 %v1208, %v1209
        %vm1211 = vcmp.lt.s32.totalorder %v1192, 1
        %vm1212 = vcmp.lt.s32.totalorder %v1192, 2
        %vm1213 = vcmp.lt.s32.totalorder %v1192, 3
        %vm1214 = vcmp.lt.s32.totalorder %v1192, 4
        %v1215 = vsel %vm1211, %v1195, %v1198
        %v1216 = vsel %vm1214, %v1204, 2102212464
        %v1217 = vsel %vm1213, %v1201, %v1216
        %v1218 = vsel %vm1212, %v1215, %v1217
        %v1219 = vsel %vm1211, %v1198, %v1201
        %v1220 = vsel %vm1214, %v1207, 920167782
        %v1221 = vsel %vm1213, %v1204, %v1220
        %v1222 = vsel %vm1212, %v1219, %v1221
        %v1223 = vsel %vm1211, %v1201, %v1204
        %v1224 = vsel %vm1214, %v1210, 1326507024
        %v1225 = vsel %vm1213, %v1207, %v1224
        %v1226 = vsel %vm1212, %v1223, %v1225
        %v1227 = vshll.u32 %v1187, 8
        %v1228 = vmul.u32.u64.compose %v1227, %v1226
        %v1229 = vextract.low.u32 %v1228
        %v1230 = vextract.high.u32 %v1228
        %v1231 = vmul.u32.u64.compose %v1227, %v1222
        %v1232 = vextract.low.u32 %v1231
        %v1233 = vextract.high.u32 %v1231
        %v1234 = vmul.u32 %v1227, %v1218
        %v1235 = vadd.s32 %v1230, %v1232
        %vm1236 = vc.u32 %v1230, %v1232
        %v1237 = vadd.s32 %v1233, 1
        %v1238 = vsel %vm1236, %v1237, %v1233
        %v1239 = vadd.s32 %v1234, %v1238
        %v1240 = vadd.s32 %v1239, 536870912
        %v1241 = vshrl.u32 %v1240, 30
        %v1242 = vshll.u32 %v1241, 30
        %v1243 = vsub.s32 %v1239, %v1242
        %vm1244 = vcmp.lt.s32.totalorder %v1243, 0
        %v1245 = vsub.s32 0, %v1243
        %v1246 = vsel %vm1244, %v1245, %v1243
        %v1247 = vclz %v1246
        %v1248 = vsub.s32 %v1247, 2
        %vm1249 = vcmp.gt.s32.totalorder 0, %v1248
        %v1250 = vsel %vm1249, 0, %v1248
        %v1251 = vsub.s32 32, %v1250
        %v1252 = vshll.u32 %v1243, %v1250
        %v1253 = vshrl.u32 %v1235, %v1251
        %v1254 = vor.u32 %v1252, %v1253
        %v1255 = vsub.s32 4294967266, %v1250
        %v1256 = vadd.s32 %v1255, 127
        %v1257 = vshll.u32 %v1256, 23
        %v1258 = vor.u32 4788187, %v1257
        %v1259 = vand.u32 2147483647, %v1258
        %v1261 = vcvt.s32.f32 %v1254
        %v1262 = vmul.f32 %v1261, %v1259
        %v1263 = vxor.u32 %v1262, 2147483648
        %v1264 = vsel %vm1181, %v1263, %v1262
        %v1265 = vsub.s32 4, %v1241
        %v1266 = vsel %vm1181, %v1265, %v1241
        %v1267 = vsel %vm1180, %v553, %v1264
        %v1268 = vsel %vm1180, 0, %v1266
        %v1269 = vcosq.f32.pop %v1267
        %v1270 = vsinq.f32.pop %v1267
        %vm1271 = vweird.f32 %v553
        %v1272 = vadd.s32 %v1268, 3
        %v1273 = vand.u32 %v1272, 3
        %vm1274 = vcmp.lt.s32.totalorder %v1273, 2
        %vm1275 = vcmp.eq.s32.totalorder %v1273, 0
        %v1276 = vxor.u32 %v1270, 2147483648
        %v1277 = vsel %vm1275, %v1269, %v1276
        %vm1278 = vcmp.eq.s32.totalorder %v1273, 2
        %v1279 = vxor.u32 %v1269, 2147483648
        %v1280 = vsel %vm1278, %v1279, %v1270
        %v1281 = vsel %vm1274, %v1277, %v1280
        %v1282 = vsel %vm1271, nan, %v1281
        %v1283 = vand.u32 2147483647, %v554
        %vm1284 = vcmp.le.f32.partialorder %v1283, 0.7853982
        %vm1285 = vcmp.lt.s32.totalorder %v554, 0
        %v1286 = vand.u32 %v554, 2139095040
        %v1287 = vshrl.u32 %v1286, 23
        %v1288 = vsub.s32 %v1287, 127
        %v1289 = vand.u32 2147483647, %v554
        %v1290 = vand.u32 %v1289, 8388607
        %v1291 = vor.u32 %v1290, 8388608
        %v1292 = vsub.s32 0, %v1291
        %v1293 = vadd.s32 %v1288, 1
        %vm1294 = vcmp.gt.s32.totalorder %v1293, 0
        %v1295 = vsel %vm1294, %v1293, 0
        %v1296 = vshrl.u32 %v1295, 5
        %v1297 = vand.u32 %v1295, 31
        %v1298 = vsub.s32 32, %v1297
        %v1299 = vshrl.u32 683565275, %v1298
        %v1300 = vshll.u32 683565275, %v1297
        %v1301 = vshrl.u32 2475754826, %v1298
        %v1302 = vor.u32 %v1300, %v1301
        %v1303 = vshll.u32 2475754826, %v1297
        %v1304 = vshrl.u32 2131351028, %v1298
        %v1305 = vor.u32 %v1303, %v1304
        %v1306 = vshll.u32 2131351028, %v1297
        %v1307 = vshrl.u32 2102212464, %v1298
        %v1308 = vor.u32 %v1306, %v1307
        %v1309 = vshll.u32 2102212464, %v1297
        %v1310 = vshrl.u32 920167782, %v1298
        %v1311 = vor.u32 %v1309, %v1310
        %v1312 = vshll.u32 920167782, %v1297
        %v1313 = vshrl.u32 1326507024, %v1298
        %v1314 = vor.u32 %v1312, %v1313
        %vm1315 = vcmp.lt.s32.totalorder %v1296, 1
        %vm1316 = vcmp.lt.s32.totalorder %v1296, 2
        %vm1317 = vcmp.lt.s32.totalorder %v1296, 3
        %vm1318 = vcmp.lt.s32.totalorder %v1296, 4
        %v1319 = vsel %vm1315, %v1299, %v1302
        %v1320 = vsel %vm1318, %v1308, 2102212464
        %v1321 = vsel %vm1317, %v1305, %v1320
        %v1322 = vsel %vm1316, %v1319, %v1321
        %v1323 = vsel %vm1315, %v1302, %v1305
        %v1324 = vsel %vm1318, %v1311, 920167782
        %v1325 = vsel %vm1317, %v1308, %v1324
        %v1326 = vsel %vm1316, %v1323, %v1325
        %v1327 = vsel %vm1315, %v1305, %v1308
        %v1328 = vsel %vm1318, %v1314, 1326507024
        %v1329 = vsel %vm1317, %v1311, %v1328
        %v1330 = vsel %vm1316, %v1327, %v1329
        %v1331 = vshll.u32 %v1291, 8
        %v1332 = vmul.u32.u64.compose %v1331, %v1330
        %v1333 = vextract.low.u32 %v1332
        %v1334 = vextract.high.u32 %v1332
        %v1335 = vmul.u32.u64.compose %v1331, %v1326
        %v1336 = vextract.low.u32 %v1335
        %v1337 = vextract.high.u32 %v1335
        %v1338 = vmul.u32 %v1331, %v1322
        %v1339 = vadd.s32 %v1334, %v1336
        %vm1340 = vc.u32 %v1334, %v1336
        %v1341 = vadd.s32 %v1337, 1
        %v1342 = vsel %vm1340, %v1341, %v1337
        %v1343 = vadd.s32 %v1338, %v1342
        %v1344 = vadd.s32 %v1343, 536870912
        %v1345 = vshrl.u32 %v1344, 30
        %v1346 = vshll.u32 %v1345, 30
        %v1347 = vsub.s32 %v1343, %v1346
        %vm1348 = vcmp.lt.s32.totalorder %v1347, 0
        %v1349 = vsub.s32 0, %v1347
        %v1350 = vsel %vm1348, %v1349, %v1347
        %v1351 = vclz %v1350
        %v1352 = vsub.s32 %v1351, 2
        %vm1353 = vcmp.gt.s32.totalorder 0, %v1352
        %v1354 = vsel %vm1353, 0, %v1352
        %v1355 = vsub.s32 32, %v1354
        %v1356 = vshll.u32 %v1347, %v1354
        %v1357 = vshrl.u32 %v1339, %v1355
        %v1358 = vor.u32 %v1356, %v1357
        %v1359 = vsub.s32 4294967266, %v1354
        %v1360 = vadd.s32 %v1359, 127
        %v1361 = vshll.u32 %v1360, 23
        %v1362 = vor.u32 4788187, %v1361
        %v1363 = vand.u32 2147483647, %v1362
        %v1365 = vcvt.s32.f32 %v1358
        %v1366 = vmul.f32 %v1365, %v1363
        %v1367 = vxor.u32 %v1366, 2147483648
        %v1368 = vsel %vm1285, %v1367, %v1366
        %v1369 = vsub.s32 4, %v1345
        %v1370 = vsel %vm1285, %v1369, %v1345
        %v1371 = vsel %vm1284, %v554, %v1368
        %v1372 = vsel %vm1284, 0, %v1370
        %v1373 = vcosq.f32.pop %v1371
        %v1374 = vsinq.f32.pop %v1371
        %vm1375 = vweird.f32 %v554
        %v1376 = vadd.s32 %v1372, 3
        %v1377 = vand.u32 %v1376, 3
        %vm1378 = vcmp.lt.s32.totalorder %v1377, 2
        %vm1379 = vcmp.eq.s32.totalorder %v1377, 0
        %v1380 = vxor.u32 %v1374, 2147483648
        %v1381 = vsel %vm1379, %v1373, %v1380
        %vm1382 = vcmp.eq.s32.totalorder %v1377, 2
        %v1383 = vxor.u32 %v1373, 2147483648
        %v1384 = vsel %vm1382, %v1383, %v1374
        %v1385 = vsel %vm1378, %v1381, %v1384
        %v1386 = vsel %vm1375, nan, %v1385
        %1387 = vst [vmem:[#allocation2] sm:$0xff] %v658
        %1388 = vst [vmem:[#allocation2 + $0x10] sm:$0xff] %v762
        %1389 = vst [vmem:[#allocation2 + $0x20] sm:$0xff] %v866
        %1390 = vst [vmem:[#allocation2 + $0x30] sm:$0xff] %v970
        %1391 = vst [vmem:[#allocation2 + $0x40] sm:$0xff] %v1074
        %1392 = vst [vmem:[#allocation2 + $0x50] sm:$0xff] %v1178
        %1393 = vst [vmem:[#allocation2 + $0x60] sm:$0xff] %v1282
        %1394 = vst [vmem:[#allocation2 + $0x70] sm:$0xff] %v1386
        %v1395 = vand.u32 2147483647, %v547
        %vm1396 = vcmp.le.f32.partialorder %v1395, 0.7853982
        %vm1397 = vcmp.lt.s32.totalorder %v547, 0
        %v1398 = vand.u32 %v547, 2139095040
        %v1399 = vshrl.u32 %v1398, 23
        %v1400 = vsub.s32 %v1399, 127
        %v1401 = vand.u32 2147483647, %v547
        %v1402 = vand.u32 %v1401, 8388607
        %v1403 = vor.u32 %v1402, 8388608
        %v1404 = vsub.s32 0, %v1403
        %v1405 = vadd.s32 %v1400, 1
        %vm1406 = vcmp.gt.s32.totalorder %v1405, 0
        %v1407 = vsel %vm1406, %v1405, 0
        %v1408 = vshrl.u32 %v1407, 5
        %v1409 = vand.u32 %v1407, 31
        %v1410 = vsub.s32 32, %v1409
        %v1411 = vshrl.u32 683565275, %v1410
        %v1412 = vshll.u32 683565275, %v1409
        %v1413 = vshrl.u32 2475754826, %v1410
        %v1414 = vor.u32 %v1412, %v1413
        %v1415 = vshll.u32 2475754826, %v1409
        %v1416 = vshrl.u32 2131351028, %v1410
        %v1417 = vor.u32 %v1415, %v1416
        %v1418 = vshll.u32 2131351028, %v1409
        %v1419 = vshrl.u32 2102212464, %v1410
        %v1420 = vor.u32 %v1418, %v1419
        %v1421 = vshll.u32 2102212464, %v1409
        %v1422 = vshrl.u32 920167782, %v1410
        %v1423 = vor.u32 %v1421, %v1422
        %v1424 = vshll.u32 920167782, %v1409
        %v1425 = vshrl.u32 1326507024, %v1410
        %v1426 = vor.u32 %v1424, %v1425
        %vm1427 = vcmp.lt.s32.totalorder %v1408, 1
        %vm1428 = vcmp.lt.s32.totalorder %v1408, 2
        %vm1429 = vcmp.lt.s32.totalorder %v1408, 3
        %vm1430 = vcmp.lt.s32.totalorder %v1408, 4
        %v1431 = vsel %vm1427, %v1411, %v1414
        %v1432 = vsel %vm1430, %v1420, 2102212464
        %v1433 = vsel %vm1429, %v1417, %v1432
        %v1434 = vsel %vm1428, %v1431, %v1433
        %v1435 = vsel %vm1427, %v1414, %v1417
        %v1436 = vsel %vm1430, %v1423, 920167782
        %v1437 = vsel %vm1429, %v1420, %v1436
        %v1438 = vsel %vm1428, %v1435, %v1437
        %v1439 = vsel %vm1427, %v1417, %v1420
        %v1440 = vsel %vm1430, %v1426, 1326507024
        %v1441 = vsel %vm1429, %v1423, %v1440
        %v1442 = vsel %vm1428, %v1439, %v1441
        %v1443 = vshll.u32 %v1403, 8
        %v1444 = vmul.u32.u64.compose %v1443, %v1442
        %v1445 = vextract.low.u32 %v1444
        %v1446 = vextract.high.u32 %v1444
        %v1447 = vmul.u32.u64.compose %v1443, %v1438
        %v1448 = vextract.low.u32 %v1447
        %v1449 = vextract.high.u32 %v1447
        %v1450 = vmul.u32 %v1443, %v1434
        %v1451 = vadd.s32 %v1446, %v1448
        %vm1452 = vc.u32 %v1446, %v1448
        %v1453 = vadd.s32 %v1449, 1
        %v1454 = vsel %vm1452, %v1453, %v1449
        %v1455 = vadd.s32 %v1450, %v1454
        %v1456 = vadd.s32 %v1455, 536870912
        %v1457 = vshrl.u32 %v1456, 30
        %v1458 = vshll.u32 %v1457, 30
        %v1459 = vsub.s32 %v1455, %v1458
        %vm1460 = vcmp.lt.s32.totalorder %v1459, 0
        %v1461 = vsub.s32 0, %v1459
        %v1462 = vsel %vm1460, %v1461, %v1459
        %v1463 = vclz %v1462
        %v1464 = vsub.s32 %v1463, 2
        %vm1465 = vcmp.gt.s32.totalorder 0, %v1464
        %v1466 = vsel %vm1465, 0, %v1464
        %v1467 = vsub.s32 32, %v1466
        %v1468 = vshll.u32 %v1459, %v1466
        %v1469 = vshrl.u32 %v1451, %v1467
        %v1470 = vor.u32 %v1468, %v1469
        %v1471 = vsub.s32 4294967266, %v1466
        %v1472 = vadd.s32 %v1471, 127
        %v1473 = vshll.u32 %v1472, 23
        %v1474 = vor.u32 4788187, %v1473
        %v1475 = vand.u32 2147483647, %v1474
        %v1477 = vcvt.s32.f32 %v1470
        %v1478 = vmul.f32 %v1477, %v1475
        %v1479 = vxor.u32 %v1478, 2147483648
        %v1480 = vsel %vm1397, %v1479, %v1478
        %v1481 = vsub.s32 4, %v1457
        %v1482 = vsel %vm1397, %v1481, %v1457
        %v1483 = vsel %vm1396, %v547, %v1480
        %v1484 = vsel %vm1396, 0, %v1482
        %v1485 = vcosq.f32.pop %v1483
        %v1486 = vsinq.f32.pop %v1483
        %vm1487 = vweird.f32 %v547
        %v1488 = vand.u32 %v1484, 3
        %vm1489 = vcmp.lt.s32.totalorder %v1488, 2
        %vm1490 = vcmp.eq.s32.totalorder %v1488, 0
        %v1491 = vxor.u32 %v1486, 2147483648
        %v1492 = vsel %vm1490, %v1485, %v1491
        %vm1493 = vcmp.eq.s32.totalorder %v1488, 2
        %v1494 = vxor.u32 %v1485, 2147483648
        %v1495 = vsel %vm1493, %v1494, %v1486
        %v1496 = vsel %vm1489, %v1492, %v1495
        %v1497 = vsel %vm1487, nan, %v1496
        %v1498 = vand.u32 2147483647, %v548
        %vm1499 = vcmp.le.f32.partialorder %v1498, 0.7853982
        %vm1500 = vcmp.lt.s32.totalorder %v548, 0
        %v1501 = vand.u32 %v548, 2139095040
        %v1502 = vshrl.u32 %v1501, 23
        %v1503 = vsub.s32 %v1502, 127
        %v1504 = vand.u32 2147483647, %v548
        %v1505 = vand.u32 %v1504, 8388607
        %v1506 = vor.u32 %v1505, 8388608
        %v1507 = vsub.s32 0, %v1506
        %v1508 = vadd.s32 %v1503, 1
        %vm1509 = vcmp.gt.s32.totalorder %v1508, 0
        %v1510 = vsel %vm1509, %v1508, 0
        %v1511 = vshrl.u32 %v1510, 5
        %v1512 = vand.u32 %v1510, 31
        %v1513 = vsub.s32 32, %v1512
        %v1514 = vshrl.u32 683565275, %v1513
        %v1515 = vshll.u32 683565275, %v1512
        %v1516 = vshrl.u32 2475754826, %v1513
        %v1517 = vor.u32 %v1515, %v1516
        %v1518 = vshll.u32 2475754826, %v1512
        %v1519 = vshrl.u32 2131351028, %v1513
        %v1520 = vor.u32 %v1518, %v1519
        %v1521 = vshll.u32 2131351028, %v1512
        %v1522 = vshrl.u32 2102212464, %v1513
        %v1523 = vor.u32 %v1521, %v1522
        %v1524 = vshll.u32 2102212464, %v1512
        %v1525 = vshrl.u32 920167782, %v1513
        %v1526 = vor.u32 %v1524, %v1525
        %v1527 = vshll.u32 920167782, %v1512
        %v1528 = vshrl.u32 1326507024, %v1513
        %v1529 = vor.u32 %v1527, %v1528
        %vm1530 = vcmp.lt.s32.totalorder %v1511, 1
        %vm1531 = vcmp.lt.s32.totalorder %v1511, 2
        %vm1532 = vcmp.lt.s32.totalorder %v1511, 3
        %vm1533 = vcmp.lt.s32.totalorder %v1511, 4
        %v1534 = vsel %vm1530, %v1514, %v1517
        %v1535 = vsel %vm1533, %v1523, 2102212464
        %v1536 = vsel %vm1532, %v1520, %v1535
        %v1537 = vsel %vm1531, %v1534, %v1536
        %v1538 = vsel %vm1530, %v1517, %v1520
        %v1539 = vsel %vm1533, %v1526, 920167782
        %v1540 = vsel %vm1532, %v1523, %v1539
        %v1541 = vsel %vm1531, %v1538, %v1540
        %v1542 = vsel %vm1530, %v1520, %v1523
        %v1543 = vsel %vm1533, %v1529, 1326507024
        %v1544 = vsel %vm1532, %v1526, %v1543
        %v1545 = vsel %vm1531, %v1542, %v1544
        %v1546 = vshll.u32 %v1506, 8
        %v1547 = vmul.u32.u64.compose %v1546, %v1545
        %v1548 = vextract.low.u32 %v1547
        %v1549 = vextract.high.u32 %v1547
        %v1550 = vmul.u32.u64.compose %v1546, %v1541
        %v1551 = vextract.low.u32 %v1550
        %v1552 = vextract.high.u32 %v1550
        %v1553 = vmul.u32 %v1546, %v1537
        %v1554 = vadd.s32 %v1549, %v1551
        %vm1555 = vc.u32 %v1549, %v1551
        %v1556 = vadd.s32 %v1552, 1
        %v1557 = vsel %vm1555, %v1556, %v1552
        %v1558 = vadd.s32 %v1553, %v1557
        %v1559 = vadd.s32 %v1558, 536870912
        %v1560 = vshrl.u32 %v1559, 30
        %v1561 = vshll.u32 %v1560, 30
        %v1562 = vsub.s32 %v1558, %v1561
        %vm1563 = vcmp.lt.s32.totalorder %v1562, 0
        %v1564 = vsub.s32 0, %v1562
        %v1565 = vsel %vm1563, %v1564, %v1562
        %v1566 = vclz %v1565
        %v1567 = vsub.s32 %v1566, 2
        %vm1568 = vcmp.gt.s32.totalorder 0, %v1567
        %v1569 = vsel %vm1568, 0, %v1567
        %v1570 = vsub.s32 32, %v1569
        %v1571 = vshll.u32 %v1562, %v1569
        %v1572 = vshrl.u32 %v1554, %v1570
        %v1573 = vor.u32 %v1571, %v1572
        %v1574 = vsub.s32 4294967266, %v1569
        %v1575 = vadd.s32 %v1574, 127
        %v1576 = vshll.u32 %v1575, 23
        %v1577 = vor.u32 4788187, %v1576
        %v1578 = vand.u32 2147483647, %v1577
        %v1580 = vcvt.s32.f32 %v1573
        %v1581 = vmul.f32 %v1580, %v1578
        %v1582 = vxor.u32 %v1581, 2147483648
        %v1583 = vsel %vm1500, %v1582, %v1581
        %v1584 = vsub.s32 4, %v1560
        %v1585 = vsel %vm1500, %v1584, %v1560
        %v1586 = vsel %vm1499, %v548, %v1583
        %v1587 = vsel %vm1499, 0, %v1585
        %v1588 = vcosq.f32.pop %v1586
        %v1589 = vsinq.f32.pop %v1586
        %vm1590 = vweird.f32 %v548
        %v1591 = vand.u32 %v1587, 3
        %vm1592 = vcmp.lt.s32.totalorder %v1591, 2
        %vm1593 = vcmp.eq.s32.totalorder %v1591, 0
        %v1594 = vxor.u32 %v1589, 2147483648
        %v1595 = vsel %vm1593, %v1588, %v1594
        %vm1596 = vcmp.eq.s32.totalorder %v1591, 2
        %v1597 = vxor.u32 %v1588, 2147483648
        %v1598 = vsel %vm1596, %v1597, %v1589
        %v1599 = vsel %vm1592, %v1595, %v1598
        %v1600 = vsel %vm1590, nan, %v1599
        %v1601 = vand.u32 2147483647, %v549
        %vm1602 = vcmp.le.f32.partialorder %v1601, 0.7853982
        %vm1603 = vcmp.lt.s32.totalorder %v549, 0
        %v1604 = vand.u32 %v549, 2139095040
        %v1605 = vshrl.u32 %v1604, 23
        %v1606 = vsub.s32 %v1605, 127
        %v1607 = vand.u32 2147483647, %v549
        %v1608 = vand.u32 %v1607, 8388607
        %v1609 = vor.u32 %v1608, 8388608
        %v1610 = vsub.s32 0, %v1609
        %v1611 = vadd.s32 %v1606, 1
        %vm1612 = vcmp.gt.s32.totalorder %v1611, 0
        %v1613 = vsel %vm1612, %v1611, 0
        %v1614 = vshrl.u32 %v1613, 5
        %v1615 = vand.u32 %v1613, 31
        %v1616 = vsub.s32 32, %v1615
        %v1617 = vshrl.u32 683565275, %v1616
        %v1618 = vshll.u32 683565275, %v1615
        %v1619 = vshrl.u32 2475754826, %v1616
        %v1620 = vor.u32 %v1618, %v1619
        %v1621 = vshll.u32 2475754826, %v1615
        %v1622 = vshrl.u32 2131351028, %v1616
        %v1623 = vor.u32 %v1621, %v1622
        %v1624 = vshll.u32 2131351028, %v1615
        %v1625 = vshrl.u32 2102212464, %v1616
        %v1626 = vor.u32 %v1624, %v1625
        %v1627 = vshll.u32 2102212464, %v1615
        %v1628 = vshrl.u32 920167782, %v1616
        %v1629 = vor.u32 %v1627, %v1628
        %v1630 = vshll.u32 920167782, %v1615
        %v1631 = vshrl.u32 1326507024, %v1616
        %v1632 = vor.u32 %v1630, %v1631
        %vm1633 = vcmp.lt.s32.totalorder %v1614, 1
        %vm1634 = vcmp.lt.s32.totalorder %v1614, 2
        %vm1635 = vcmp.lt.s32.totalorder %v1614, 3
        %vm1636 = vcmp.lt.s32.totalorder %v1614, 4
        %v1637 = vsel %vm1633, %v1617, %v1620
        %v1638 = vsel %vm1636, %v1626, 2102212464
        %v1639 = vsel %vm1635, %v1623, %v1638
        %v1640 = vsel %vm1634, %v1637, %v1639
        %v1641 = vsel %vm1633, %v1620, %v1623
        %v1642 = vsel %vm1636, %v1629, 920167782
        %v1643 = vsel %vm1635, %v1626, %v1642
        %v1644 = vsel %vm1634, %v1641, %v1643
        %v1645 = vsel %vm1633, %v1623, %v1626
        %v1646 = vsel %vm1636, %v1632, 1326507024
        %v1647 = vsel %vm1635, %v1629, %v1646
        %v1648 = vsel %vm1634, %v1645, %v1647
        %v1649 = vshll.u32 %v1609, 8
        %v1650 = vmul.u32.u64.compose %v1649, %v1648
        %v1651 = vextract.low.u32 %v1650
        %v1652 = vextract.high.u32 %v1650
        %v1653 = vmul.u32.u64.compose %v1649, %v1644
        %v1654 = vextract.low.u32 %v1653
        %v1655 = vextract.high.u32 %v1653
        %v1656 = vmul.u32 %v1649, %v1640
        %v1657 = vadd.s32 %v1652, %v1654
        %vm1658 = vc.u32 %v1652, %v1654
        %v1659 = vadd.s32 %v1655, 1
        %v1660 = vsel %vm1658, %v1659, %v1655
        %v1661 = vadd.s32 %v1656, %v1660
        %v1662 = vadd.s32 %v1661, 536870912
        %v1663 = vshrl.u32 %v1662, 30
        %v1664 = vshll.u32 %v1663, 30
        %v1665 = vsub.s32 %v1661, %v1664
        %vm1666 = vcmp.lt.s32.totalorder %v1665, 0
        %v1667 = vsub.s32 0, %v1665
        %v1668 = vsel %vm1666, %v1667, %v1665
        %v1669 = vclz %v1668
        %v1670 = vsub.s32 %v1669, 2
        %vm1671 = vcmp.gt.s32.totalorder 0, %v1670
        %v1672 = vsel %vm1671, 0, %v1670
        %v1673 = vsub.s32 32, %v1672
        %v1674 = vshll.u32 %v1665, %v1672
        %v1675 = vshrl.u32 %v1657, %v1673
        %v1676 = vor.u32 %v1674, %v1675
        %v1677 = vsub.s32 4294967266, %v1672
        %v1678 = vadd.s32 %v1677, 127
        %v1679 = vshll.u32 %v1678, 23
        %v1680 = vor.u32 4788187, %v1679
        %v1681 = vand.u32 2147483647, %v1680
        %v1683 = vcvt.s32.f32 %v1676
        %v1684 = vmul.f32 %v1683, %v1681
        %v1685 = vxor.u32 %v1684, 2147483648
        %v1686 = vsel %vm1603, %v1685, %v1684
        %v1687 = vsub.s32 4, %v1663
        %v1688 = vsel %vm1603, %v1687, %v1663
        %v1689 = vsel %vm1602, %v549, %v1686
        %v1690 = vsel %vm1602, 0, %v1688
        %v1691 = vcosq.f32.pop %v1689
        %v1692 = vsinq.f32.pop %v1689
        %vm1693 = vweird.f32 %v549
        %v1694 = vand.u32 %v1690, 3
        %vm1695 = vcmp.lt.s32.totalorder %v1694, 2
        %vm1696 = vcmp.eq.s32.totalorder %v1694, 0
        %v1697 = vxor.u32 %v1692, 2147483648
        %v1698 = vsel %vm1696, %v1691, %v1697
        %vm1699 = vcmp.eq.s32.totalorder %v1694, 2
        %v1700 = vxor.u32 %v1691, 2147483648
        %v1701 = vsel %vm1699, %v1700, %v1692
        %v1702 = vsel %vm1695, %v1698, %v1701
        %v1703 = vsel %vm1693, nan, %v1702
        %v1704 = vand.u32 2147483647, %v550
        %vm1705 = vcmp.le.f32.partialorder %v1704, 0.7853982
        %vm1706 = vcmp.lt.s32.totalorder %v550, 0
        %v1707 = vand.u32 %v550, 2139095040
        %v1708 = vshrl.u32 %v1707, 23
        %v1709 = vsub.s32 %v1708, 127
        %v1710 = vand.u32 2147483647, %v550
        %v1711 = vand.u32 %v1710, 8388607
        %v1712 = vor.u32 %v1711, 8388608
        %v1713 = vsub.s32 0, %v1712
        %v1714 = vadd.s32 %v1709, 1
        %vm1715 = vcmp.gt.s32.totalorder %v1714, 0
        %v1716 = vsel %vm1715, %v1714, 0
        %v1717 = vshrl.u32 %v1716, 5
        %v1718 = vand.u32 %v1716, 31
        %v1719 = vsub.s32 32, %v1718
        %v1720 = vshrl.u32 683565275, %v1719
        %v1721 = vshll.u32 683565275, %v1718
        %v1722 = vshrl.u32 2475754826, %v1719
        %v1723 = vor.u32 %v1721, %v1722
        %v1724 = vshll.u32 2475754826, %v1718
        %v1725 = vshrl.u32 2131351028, %v1719
        %v1726 = vor.u32 %v1724, %v1725
        %v1727 = vshll.u32 2131351028, %v1718
        %v1728 = vshrl.u32 2102212464, %v1719
        %v1729 = vor.u32 %v1727, %v1728
        %v1730 = vshll.u32 2102212464, %v1718
        %v1731 = vshrl.u32 920167782, %v1719
        %v1732 = vor.u32 %v1730, %v1731
        %v1733 = vshll.u32 920167782, %v1718
        %v1734 = vshrl.u32 1326507024, %v1719
        %v1735 = vor.u32 %v1733, %v1734
        %vm1736 = vcmp.lt.s32.totalorder %v1717, 1
        %vm1737 = vcmp.lt.s32.totalorder %v1717, 2
        %vm1738 = vcmp.lt.s32.totalorder %v1717, 3
        %vm1739 = vcmp.lt.s32.totalorder %v1717, 4
        %v1740 = vsel %vm1736, %v1720, %v1723
        %v1741 = vsel %vm1739, %v1729, 2102212464
        %v1742 = vsel %vm1738, %v1726, %v1741
        %v1743 = vsel %vm1737, %v1740, %v1742
        %v1744 = vsel %vm1736, %v1723, %v1726
        %v1745 = vsel %vm1739, %v1732, 920167782
        %v1746 = vsel %vm1738, %v1729, %v1745
        %v1747 = vsel %vm1737, %v1744, %v1746
        %v1748 = vsel %vm1736, %v1726, %v1729
        %v1749 = vsel %vm1739, %v1735, 1326507024
        %v1750 = vsel %vm1738, %v1732, %v1749
        %v1751 = vsel %vm1737, %v1748, %v1750
        %v1752 = vshll.u32 %v1712, 8
        %v1753 = vmul.u32.u64.compose %v1752, %v1751
        %v1754 = vextract.low.u32 %v1753
        %v1755 = vextract.high.u32 %v1753
        %v1756 = vmul.u32.u64.compose %v1752, %v1747
        %v1757 = vextract.low.u32 %v1756
        %v1758 = vextract.high.u32 %v1756
        %v1759 = vmul.u32 %v1752, %v1743
        %v1760 = vadd.s32 %v1755, %v1757
        %vm1761 = vc.u32 %v1755, %v1757
        %v1762 = vadd.s32 %v1758, 1
        %v1763 = vsel %vm1761, %v1762, %v1758
        %v1764 = vadd.s32 %v1759, %v1763
        %v1765 = vadd.s32 %v1764, 536870912
        %v1766 = vshrl.u32 %v1765, 30
        %v1767 = vshll.u32 %v1766, 30
        %v1768 = vsub.s32 %v1764, %v1767
        %vm1769 = vcmp.lt.s32.totalorder %v1768, 0
        %v1770 = vsub.s32 0, %v1768
        %v1771 = vsel %vm1769, %v1770, %v1768
        %v1772 = vclz %v1771
        %v1773 = vsub.s32 %v1772, 2
        %vm1774 = vcmp.gt.s32.totalorder 0, %v1773
        %v1775 = vsel %vm1774, 0, %v1773
        %v1776 = vsub.s32 32, %v1775
        %v1777 = vshll.u32 %v1768, %v1775
        %v1778 = vshrl.u32 %v1760, %v1776
        %v1779 = vor.u32 %v1777, %v1778
        %v1780 = vsub.s32 4294967266, %v1775
        %v1781 = vadd.s32 %v1780, 127
        %v1782 = vshll.u32 %v1781, 23
        %v1783 = vor.u32 4788187, %v1782
        %v1784 = vand.u32 2147483647, %v1783
        %v1786 = vcvt.s32.f32 %v1779
        %v1787 = vmul.f32 %v1786, %v1784
        %v1788 = vxor.u32 %v1787, 2147483648
        %v1789 = vsel %vm1706, %v1788, %v1787
        %v1790 = vsub.s32 4, %v1766
        %v1791 = vsel %vm1706, %v1790, %v1766
        %v1792 = vsel %vm1705, %v550, %v1789
        %v1793 = vsel %vm1705, 0, %v1791
        %v1794 = vcosq.f32.pop %v1792
        %v1795 = vsinq.f32.pop %v1792
        %vm1796 = vweird.f32 %v550
        %v1797 = vand.u32 %v1793, 3
        %vm1798 = vcmp.lt.s32.totalorder %v1797, 2
        %vm1799 = vcmp.eq.s32.totalorder %v1797, 0
        %v1800 = vxor.u32 %v1795, 2147483648
        %v1801 = vsel %vm1799, %v1794, %v1800
        %vm1802 = vcmp.eq.s32.totalorder %v1797, 2
        %v1803 = vxor.u32 %v1794, 2147483648
        %v1804 = vsel %vm1802, %v1803, %v1795
        %v1805 = vsel %vm1798, %v1801, %v1804
        %v1806 = vsel %vm1796, nan, %v1805
        %v1807 = vand.u32 2147483647, %v551
        %vm1808 = vcmp.le.f32.partialorder %v1807, 0.7853982
        %vm1809 = vcmp.lt.s32.totalorder %v551, 0
        %v1810 = vand.u32 %v551, 2139095040
        %v1811 = vshrl.u32 %v1810, 23
        %v1812 = vsub.s32 %v1811, 127
        %v1813 = vand.u32 2147483647, %v551
        %v1814 = vand.u32 %v1813, 8388607
        %v1815 = vor.u32 %v1814, 8388608
        %v1816 = vsub.s32 0, %v1815
        %v1817 = vadd.s32 %v1812, 1
        %vm1818 = vcmp.gt.s32.totalorder %v1817, 0
        %v1819 = vsel %vm1818, %v1817, 0
        %v1820 = vshrl.u32 %v1819, 5
        %v1821 = vand.u32 %v1819, 31
        %v1822 = vsub.s32 32, %v1821
        %v1823 = vshrl.u32 683565275, %v1822
        %v1824 = vshll.u32 683565275, %v1821
        %v1825 = vshrl.u32 2475754826, %v1822
        %v1826 = vor.u32 %v1824, %v1825
        %v1827 = vshll.u32 2475754826, %v1821
        %v1828 = vshrl.u32 2131351028, %v1822
        %v1829 = vor.u32 %v1827, %v1828
        %v1830 = vshll.u32 2131351028, %v1821
        %v1831 = vshrl.u32 2102212464, %v1822
        %v1832 = vor.u32 %v1830, %v1831
        %v1833 = vshll.u32 2102212464, %v1821
        %v1834 = vshrl.u32 920167782, %v1822
        %v1835 = vor.u32 %v1833, %v1834
        %v1836 = vshll.u32 920167782, %v1821
        %v1837 = vshrl.u32 1326507024, %v1822
        %v1838 = vor.u32 %v1836, %v1837
        %vm1839 = vcmp.lt.s32.totalorder %v1820, 1
        %vm1840 = vcmp.lt.s32.totalorder %v1820, 2
        %vm1841 = vcmp.lt.s32.totalorder %v1820, 3
        %vm1842 = vcmp.lt.s32.totalorder %v1820, 4
        %v1843 = vsel %vm1839, %v1823, %v1826
        %v1844 = vsel %vm1842, %v1832, 2102212464
        %v1845 = vsel %vm1841, %v1829, %v1844
        %v1846 = vsel %vm1840, %v1843, %v1845
        %v1847 = vsel %vm1839, %v1826, %v1829
        %v1848 = vsel %vm1842, %v1835, 920167782
        %v1849 = vsel %vm1841, %v1832, %v1848
        %v1850 = vsel %vm1840, %v1847, %v1849
        %v1851 = vsel %vm1839, %v1829, %v1832
        %v1852 = vsel %vm1842, %v1838, 1326507024
        %v1853 = vsel %vm1841, %v1835, %v1852
        %v1854 = vsel %vm1840, %v1851, %v1853
        %v1855 = vshll.u32 %v1815, 8
        %v1856 = vmul.u32.u64.compose %v1855, %v1854
        %v1857 = vextract.low.u32 %v1856
        %v1858 = vextract.high.u32 %v1856
        %v1859 = vmul.u32.u64.compose %v1855, %v1850
        %v1860 = vextract.low.u32 %v1859
        %v1861 = vextract.high.u32 %v1859
        %v1862 = vmul.u32 %v1855, %v1846
        %v1863 = vadd.s32 %v1858, %v1860
        %vm1864 = vc.u32 %v1858, %v1860
        %v1865 = vadd.s32 %v1861, 1
        %v1866 = vsel %vm1864, %v1865, %v1861
        %v1867 = vadd.s32 %v1862, %v1866
        %v1868 = vadd.s32 %v1867, 536870912
        %v1869 = vshrl.u32 %v1868, 30
        %v1870 = vshll.u32 %v1869, 30
        %v1871 = vsub.s32 %v1867, %v1870
        %vm1872 = vcmp.lt.s32.totalorder %v1871, 0
        %v1873 = vsub.s32 0, %v1871
        %v1874 = vsel %vm1872, %v1873, %v1871
        %v1875 = vclz %v1874
        %v1876 = vsub.s32 %v1875, 2
        %vm1877 = vcmp.gt.s32.totalorder 0, %v1876
        %v1878 = vsel %vm1877, 0, %v1876
        %v1879 = vsub.s32 32, %v1878
        %v1880 = vshll.u32 %v1871, %v1878
        %v1881 = vshrl.u32 %v1863, %v1879
        %v1882 = vor.u32 %v1880, %v1881
        %v1883 = vsub.s32 4294967266, %v1878
        %v1884 = vadd.s32 %v1883, 127
        %v1885 = vshll.u32 %v1884, 23
        %v1886 = vor.u32 4788187, %v1885
        %v1887 = vand.u32 2147483647, %v1886
        %v1889 = vcvt.s32.f32 %v1882
        %v1890 = vmul.f32 %v1889, %v1887
        %v1891 = vxor.u32 %v1890, 2147483648
        %v1892 = vsel %vm1809, %v1891, %v1890
        %v1893 = vsub.s32 4, %v1869
        %v1894 = vsel %vm1809, %v1893, %v1869
        %v1895 = vsel %vm1808, %v551, %v1892
        %v1896 = vsel %vm1808, 0, %v1894
        %v1897 = vcosq.f32.pop %v1895
        %v1898 = vsinq.f32.pop %v1895
        %vm1899 = vweird.f32 %v551
        %v1900 = vand.u32 %v1896, 3
        %vm1901 = vcmp.lt.s32.totalorder %v1900, 2
        %vm1902 = vcmp.eq.s32.totalorder %v1900, 0
        %v1903 = vxor.u32 %v1898, 2147483648
        %v1904 = vsel %vm1902, %v1897, %v1903
        %vm1905 = vcmp.eq.s32.totalorder %v1900, 2
        %v1906 = vxor.u32 %v1897, 2147483648
        %v1907 = vsel %vm1905, %v1906, %v1898
        %v1908 = vsel %vm1901, %v1904, %v1907
        %v1909 = vsel %vm1899, nan, %v1908
        %v1910 = vand.u32 2147483647, %v552
        %vm1911 = vcmp.le.f32.partialorder %v1910, 0.7853982
        %vm1912 = vcmp.lt.s32.totalorder %v552, 0
        %v1913 = vand.u32 %v552, 2139095040
        %v1914 = vshrl.u32 %v1913, 23
        %v1915 = vsub.s32 %v1914, 127
        %v1916 = vand.u32 2147483647, %v552
        %v1917 = vand.u32 %v1916, 8388607
        %v1918 = vor.u32 %v1917, 8388608
        %v1919 = vsub.s32 0, %v1918
        %v1920 = vadd.s32 %v1915, 1
        %vm1921 = vcmp.gt.s32.totalorder %v1920, 0
        %v1922 = vsel %vm1921, %v1920, 0
        %v1923 = vshrl.u32 %v1922, 5
        %v1924 = vand.u32 %v1922, 31
        %v1925 = vsub.s32 32, %v1924
        %v1926 = vshrl.u32 683565275, %v1925
        %v1927 = vshll.u32 683565275, %v1924
        %v1928 = vshrl.u32 2475754826, %v1925
        %v1929 = vor.u32 %v1927, %v1928
        %v1930 = vshll.u32 2475754826, %v1924
        %v1931 = vshrl.u32 2131351028, %v1925
        %v1932 = vor.u32 %v1930, %v1931
        %v1933 = vshll.u32 2131351028, %v1924
        %v1934 = vshrl.u32 2102212464, %v1925
        %v1935 = vor.u32 %v1933, %v1934
        %v1936 = vshll.u32 2102212464, %v1924
        %v1937 = vshrl.u32 920167782, %v1925
        %v1938 = vor.u32 %v1936, %v1937
        %v1939 = vshll.u32 920167782, %v1924
        %v1940 = vshrl.u32 1326507024, %v1925
        %v1941 = vor.u32 %v1939, %v1940
        %vm1942 = vcmp.lt.s32.totalorder %v1923, 1
        %vm1943 = vcmp.lt.s32.totalorder %v1923, 2
        %vm1944 = vcmp.lt.s32.totalorder %v1923, 3
        %vm1945 = vcmp.lt.s32.totalorder %v1923, 4
        %v1946 = vsel %vm1942, %v1926, %v1929
        %v1947 = vsel %vm1945, %v1935, 2102212464
        %v1948 = vsel %vm1944, %v1932, %v1947
        %v1949 = vsel %vm1943, %v1946, %v1948
        %v1950 = vsel %vm1942, %v1929, %v1932
        %v1951 = vsel %vm1945, %v1938, 920167782
        %v1952 = vsel %vm1944, %v1935, %v1951
        %v1953 = vsel %vm1943, %v1950, %v1952
        %v1954 = vsel %vm1942, %v1932, %v1935
        %v1955 = vsel %vm1945, %v1941, 1326507024
        %v1956 = vsel %vm1944, %v1938, %v1955
        %v1957 = vsel %vm1943, %v1954, %v1956
        %v1958 = vshll.u32 %v1918, 8
        %v1959 = vmul.u32.u64.compose %v1958, %v1957
        %v1960 = vextract.low.u32 %v1959
        %v1961 = vextract.high.u32 %v1959
        %v1962 = vmul.u32.u64.compose %v1958, %v1953
        %v1963 = vextract.low.u32 %v1962
        %v1964 = vextract.high.u32 %v1962
        %v1965 = vmul.u32 %v1958, %v1949
        %v1966 = vadd.s32 %v1961, %v1963
        %vm1967 = vc.u32 %v1961, %v1963
        %v1968 = vadd.s32 %v1964, 1
        %v1969 = vsel %vm1967, %v1968, %v1964
        %v1970 = vadd.s32 %v1965, %v1969
        %v1971 = vadd.s32 %v1970, 536870912
        %v1972 = vshrl.u32 %v1971, 30
        %v1973 = vshll.u32 %v1972, 30
        %v1974 = vsub.s32 %v1970, %v1973
        %vm1975 = vcmp.lt.s32.totalorder %v1974, 0
        %v1976 = vsub.s32 0, %v1974
        %v1977 = vsel %vm1975, %v1976, %v1974
        %v1978 = vclz %v1977
        %v1979 = vsub.s32 %v1978, 2
        %vm1980 = vcmp.gt.s32.totalorder 0, %v1979
        %v1981 = vsel %vm1980, 0, %v1979
        %v1982 = vsub.s32 32, %v1981
        %v1983 = vshll.u32 %v1974, %v1981
        %v1984 = vshrl.u32 %v1966, %v1982
        %v1985 = vor.u32 %v1983, %v1984
        %v1986 = vsub.s32 4294967266, %v1981
        %v1987 = vadd.s32 %v1986, 127
        %v1988 = vshll.u32 %v1987, 23
        %v1989 = vor.u32 4788187, %v1988
        %v1990 = vand.u32 2147483647, %v1989
        %v1992 = vcvt.s32.f32 %v1985
        %v1993 = vmul.f32 %v1992, %v1990
        %v1994 = vxor.u32 %v1993, 2147483648
        %v1995 = vsel %vm1912, %v1994, %v1993
        %v1996 = vsub.s32 4, %v1972
        %v1997 = vsel %vm1912, %v1996, %v1972
        %v1998 = vsel %vm1911, %v552, %v1995
        %v1999 = vsel %vm1911, 0, %v1997
        %v2000 = vcosq.f32.pop %v1998
        %v2001 = vsinq.f32.pop %v1998
        %vm2002 = vweird.f32 %v552
        %v2003 = vand.u32 %v1999, 3
        %vm2004 = vcmp.lt.s32.totalorder %v2003, 2
        %vm2005 = vcmp.eq.s32.totalorder %v2003, 0
        %v2006 = vxor.u32 %v2001, 2147483648
        %v2007 = vsel %vm2005, %v2000, %v2006
        %vm2008 = vcmp.eq.s32.totalorder %v2003, 2
        %v2009 = vxor.u32 %v2000, 2147483648
        %v2010 = vsel %vm2008, %v2009, %v2001
        %v2011 = vsel %vm2004, %v2007, %v2010
        %v2012 = vsel %vm2002, nan, %v2011
        %v2013 = vand.u32 2147483647, %v553
        %vm2014 = vcmp.le.f32.partialorder %v2013, 0.7853982
        %vm2015 = vcmp.lt.s32.totalorder %v553, 0
        %v2016 = vand.u32 %v553, 2139095040
        %v2017 = vshrl.u32 %v2016, 23
        %v2018 = vsub.s32 %v2017, 127
        %v2019 = vand.u32 2147483647, %v553
        %v2020 = vand.u32 %v2019, 8388607
        %v2021 = vor.u32 %v2020, 8388608
        %v2022 = vsub.s32 0, %v2021
        %v2023 = vadd.s32 %v2018, 1
        %vm2024 = vcmp.gt.s32.totalorder %v2023, 0
        %v2025 = vsel %vm2024, %v2023, 0
        %v2026 = vshrl.u32 %v2025, 5
        %v2027 = vand.u32 %v2025, 31
        %v2028 = vsub.s32 32, %v2027
        %v2029 = vshrl.u32 683565275, %v2028
        %v2030 = vshll.u32 683565275, %v2027
        %v2031 = vshrl.u32 2475754826, %v2028
        %v2032 = vor.u32 %v2030, %v2031
        %v2033 = vshll.u32 2475754826, %v2027
        %v2034 = vshrl.u32 2131351028, %v2028
        %v2035 = vor.u32 %v2033, %v2034
        %v2036 = vshll.u32 2131351028, %v2027
        %v2037 = vshrl.u32 2102212464, %v2028
        %v2038 = vor.u32 %v2036, %v2037
        %v2039 = vshll.u32 2102212464, %v2027
        %v2040 = vshrl.u32 920167782, %v2028
        %v2041 = vor.u32 %v2039, %v2040
        %v2042 = vshll.u32 920167782, %v2027
        %v2043 = vshrl.u32 1326507024, %v2028
        %v2044 = vor.u32 %v2042, %v2043
        %vm2045 = vcmp.lt.s32.totalorder %v2026, 1
        %vm2046 = vcmp.lt.s32.totalorder %v2026, 2
        %vm2047 = vcmp.lt.s32.totalorder %v2026, 3
        %vm2048 = vcmp.lt.s32.totalorder %v2026, 4
        %v2049 = vsel %vm2045, %v2029, %v2032
        %v2050 = vsel %vm2048, %v2038, 2102212464
        %v2051 = vsel %vm2047, %v2035, %v2050
        %v2052 = vsel %vm2046, %v2049, %v2051
        %v2053 = vsel %vm2045, %v2032, %v2035
        %v2054 = vsel %vm2048, %v2041, 920167782
        %v2055 = vsel %vm2047, %v2038, %v2054
        %v2056 = vsel %vm2046, %v2053, %v2055
        %v2057 = vsel %vm2045, %v2035, %v2038
        %v2058 = vsel %vm2048, %v2044, 1326507024
        %v2059 = vsel %vm2047, %v2041, %v2058
        %v2060 = vsel %vm2046, %v2057, %v2059
        %v2061 = vshll.u32 %v2021, 8
        %v2062 = vmul.u32.u64.compose %v2061, %v2060
        %v2063 = vextract.low.u32 %v2062
        %v2064 = vextract.high.u32 %v2062
        %v2065 = vmul.u32.u64.compose %v2061, %v2056
        %v2066 = vextract.low.u32 %v2065
        %v2067 = vextract.high.u32 %v2065
        %v2068 = vmul.u32 %v2061, %v2052
        %v2069 = vadd.s32 %v2064, %v2066
        %vm2070 = vc.u32 %v2064, %v2066
        %v2071 = vadd.s32 %v2067, 1
        %v2072 = vsel %vm2070, %v2071, %v2067
        %v2073 = vadd.s32 %v2068, %v2072
        %v2074 = vadd.s32 %v2073, 536870912
        %v2075 = vshrl.u32 %v2074, 30
        %v2076 = vshll.u32 %v2075, 30
        %v2077 = vsub.s32 %v2073, %v2076
        %vm2078 = vcmp.lt.s32.totalorder %v2077, 0
        %v2079 = vsub.s32 0, %v2077
        %v2080 = vsel %vm2078, %v2079, %v2077
        %v2081 = vclz %v2080
        %v2082 = vsub.s32 %v2081, 2
        %vm2083 = vcmp.gt.s32.totalorder 0, %v2082
        %v2084 = vsel %vm2083, 0, %v2082
        %v2085 = vsub.s32 32, %v2084
        %v2086 = vshll.u32 %v2077, %v2084
        %v2087 = vshrl.u32 %v2069, %v2085
        %v2088 = vor.u32 %v2086, %v2087
        %v2089 = vsub.s32 4294967266, %v2084
        %v2090 = vadd.s32 %v2089, 127
        %v2091 = vshll.u32 %v2090, 23
        %v2092 = vor.u32 4788187, %v2091
        %v2093 = vand.u32 2147483647, %v2092
        %v2095 = vcvt.s32.f32 %v2088
        %v2096 = vmul.f32 %v2095, %v2093
        %v2097 = vxor.u32 %v2096, 2147483648
        %v2098 = vsel %vm2015, %v2097, %v2096
        %v2099 = vsub.s32 4, %v2075
        %v2100 = vsel %vm2015, %v2099, %v2075
        %v2101 = vsel %vm2014, %v553, %v2098
        %v2102 = vsel %vm2014, 0, %v2100
        %v2103 = vcosq.f32.pop %v2101
        %v2104 = vsinq.f32.pop %v2101
        %vm2105 = vweird.f32 %v553
        %v2106 = vand.u32 %v2102, 3
        %vm2107 = vcmp.lt.s32.totalorder %v2106, 2
        %vm2108 = vcmp.eq.s32.totalorder %v2106, 0
        %v2109 = vxor.u32 %v2104, 2147483648
        %v2110 = vsel %vm2108, %v2103, %v2109
        %vm2111 = vcmp.eq.s32.totalorder %v2106, 2
        %v2112 = vxor.u32 %v2103, 2147483648
        %v2113 = vsel %vm2111, %v2112, %v2104
        %v2114 = vsel %vm2107, %v2110, %v2113
        %v2115 = vsel %vm2105, nan, %v2114
        %v2116 = vand.u32 2147483647, %v554
        %vm2117 = vcmp.le.f32.partialorder %v2116, 0.7853982
        %vm2118 = vcmp.lt.s32.totalorder %v554, 0
        %v2119 = vand.u32 %v554, 2139095040
        %v2120 = vshrl.u32 %v2119, 23
        %v2121 = vsub.s32 %v2120, 127
        %v2122 = vand.u32 2147483647, %v554
        %v2123 = vand.u32 %v2122, 8388607
        %v2124 = vor.u32 %v2123, 8388608
        %v2125 = vsub.s32 0, %v2124
        %v2126 = vadd.s32 %v2121, 1
        %vm2127 = vcmp.gt.s32.totalorder %v2126, 0
        %v2128 = vsel %vm2127, %v2126, 0
        %v2129 = vshrl.u32 %v2128, 5
        %v2130 = vand.u32 %v2128, 31
        %v2131 = vsub.s32 32, %v2130
        %v2132 = vshrl.u32 683565275, %v2131
        %v2133 = vshll.u32 683565275, %v2130
        %v2134 = vshrl.u32 2475754826, %v2131
        %v2135 = vor.u32 %v2133, %v2134
        %v2136 = vshll.u32 2475754826, %v2130
        %v2137 = vshrl.u32 2131351028, %v2131
        %v2138 = vor.u32 %v2136, %v2137
        %v2139 = vshll.u32 2131351028, %v2130
        %v2140 = vshrl.u32 2102212464, %v2131
        %v2141 = vor.u32 %v2139, %v2140
        %v2142 = vshll.u32 2102212464, %v2130
        %v2143 = vshrl.u32 920167782, %v2131
        %v2144 = vor.u32 %v2142, %v2143
        %v2145 = vshll.u32 920167782, %v2130
        %v2146 = vshrl.u32 1326507024, %v2131
        %v2147 = vor.u32 %v2145, %v2146
        %vm2148 = vcmp.lt.s32.totalorder %v2129, 1
        %vm2149 = vcmp.lt.s32.totalorder %v2129, 2
        %vm2150 = vcmp.lt.s32.totalorder %v2129, 3
        %vm2151 = vcmp.lt.s32.totalorder %v2129, 4
        %v2152 = vsel %vm2148, %v2132, %v2135
        %v2153 = vsel %vm2151, %v2141, 2102212464
        %v2154 = vsel %vm2150, %v2138, %v2153
        %v2155 = vsel %vm2149, %v2152, %v2154
        %v2156 = vsel %vm2148, %v2135, %v2138
        %v2157 = vsel %vm2151, %v2144, 920167782
        %v2158 = vsel %vm2150, %v2141, %v2157
        %v2159 = vsel %vm2149, %v2156, %v2158
        %v2160 = vsel %vm2148, %v2138, %v2141
        %v2161 = vsel %vm2151, %v2147, 1326507024
        %v2162 = vsel %vm2150, %v2144, %v2161
        %v2163 = vsel %vm2149, %v2160, %v2162
        %v2164 = vshll.u32 %v2124, 8
        %v2165 = vmul.u32.u64.compose %v2164, %v2163
        %v2166 = vextract.low.u32 %v2165
        %v2167 = vextract.high.u32 %v2165
        %v2168 = vmul.u32.u64.compose %v2164, %v2159
        %v2169 = vextract.low.u32 %v2168
        %v2170 = vextract.high.u32 %v2168
        %v2171 = vmul.u32 %v2164, %v2155
        %v2172 = vadd.s32 %v2167, %v2169
        %vm2173 = vc.u32 %v2167, %v2169
        %v2174 = vadd.s32 %v2170, 1
        %v2175 = vsel %vm2173, %v2174, %v2170
        %v2176 = vadd.s32 %v2171, %v2175
        %v2177 = vadd.s32 %v2176, 536870912
        %v2178 = vshrl.u32 %v2177, 30
        %v2179 = vshll.u32 %v2178, 30
        %v2180 = vsub.s32 %v2176, %v2179
        %vm2181 = vcmp.lt.s32.totalorder %v2180, 0
        %v2182 = vsub.s32 0, %v2180
        %v2183 = vsel %vm2181, %v2182, %v2180
        %v2184 = vclz %v2183
        %v2185 = vsub.s32 %v2184, 2
        %vm2186 = vcmp.gt.s32.totalorder 0, %v2185
        %v2187 = vsel %vm2186, 0, %v2185
        %v2188 = vsub.s32 32, %v2187
        %v2189 = vshll.u32 %v2180, %v2187
        %v2190 = vshrl.u32 %v2172, %v2188
        %v2191 = vor.u32 %v2189, %v2190
        %v2192 = vsub.s32 4294967266, %v2187
        %v2193 = vadd.s32 %v2192, 127
        %v2194 = vshll.u32 %v2193, 23
        %v2195 = vor.u32 4788187, %v2194
        %v2196 = vand.u32 2147483647, %v2195
        %v2198 = vcvt.s32.f32 %v2191
        %v2199 = vmul.f32 %v2198, %v2196
        %v2200 = vxor.u32 %v2199, 2147483648
        %v2201 = vsel %vm2118, %v2200, %v2199
        %v2202 = vsub.s32 4, %v2178
        %v2203 = vsel %vm2118, %v2202, %v2178
        %v2204 = vsel %vm2117, %v554, %v2201
        %v2205 = vsel %vm2117, 0, %v2203
        %v2206 = vcosq.f32.pop %v2204
        %v2207 = vsinq.f32.pop %v2204
        %vm2208 = vweird.f32 %v554
        %v2209 = vand.u32 %v2205, 3
        %vm2210 = vcmp.lt.s32.totalorder %v2209, 2
        %vm2211 = vcmp.eq.s32.totalorder %v2209, 0
        %v2212 = vxor.u32 %v2207, 2147483648
        %v2213 = vsel %vm2211, %v2206, %v2212
        %vm2214 = vcmp.eq.s32.totalorder %v2209, 2
        %v2215 = vxor.u32 %v2206, 2147483648
        %v2216 = vsel %vm2214, %v2215, %v2207
        %v2217 = vsel %vm2210, %v2213, %v2216
        %v2218 = vsel %vm2208, nan, %v2217
        %2219 = vst [vmem:[#allocation2 + $0x8] sm:$0xff] %v1497
        %2220 = vst [vmem:[#allocation2 + $0x18] sm:$0xff] %v1600
        %2221 = vst [vmem:[#allocation2 + $0x28] sm:$0xff] %v1703
        %2222 = vst [vmem:[#allocation2 + $0x38] sm:$0xff] %v1806
        %2223 = vst [vmem:[#allocation2 + $0x48] sm:$0xff] %v1909
        %2224 = vst [vmem:[#allocation2 + $0x58] sm:$0xff] %v2012
        %2225 = vst [vmem:[#allocation2 + $0x68] sm:$0xff] %v2115
        %2226 = vst [vmem:[#allocation2 + $0x78] sm:$0xff] %v2218
        %v2227 = vld [vmem:[#allocation2] sm:$0xff]
        %v2228 = vld [vmem:[#allocation2 + $0x8] sm:$0xff]
        %v2229 = vld [vmem:[%s321] sm:$0xff]
        %v2230 = vld [vmem:[%s321 + $0x8] sm:$0xff]
        %v2231 = vld [vmem:[%s321 + $0x10] sm:$0xff]
        %v2232 = vld [vmem:[%s321 + $0x18] sm:$0xff]
        %v2233 = vld [vmem:[%s321 + $0x20] sm:$0xff]
        %v2234 = vld [vmem:[%s321 + $0x28] sm:$0xff]
        %v2235 = vld [vmem:[%s321 + $0x30] sm:$0xff]
        %v2236 = vld [vmem:[%s321 + $0x38] sm:$0xff]
        %v2237 = vld [vmem:[%s321 + $0x40] sm:$0xff]
        %v2238 = vld [vmem:[%s321 + $0x48] sm:$0xff]
        %v2239 = vld [vmem:[%s321 + $0x50] sm:$0xff]
        %v2240 = vld [vmem:[%s321 + $0x58] sm:$0xff]
        %v2241 = vld [vmem:[%s410] sm:$0xff]
        %v2242 = vld [vmem:[%s410 + $0x8] sm:$0xff]
        %v2243 = vld [vmem:[%s410 + $0x10] sm:$0xff]
        %v2244 = vld [vmem:[%s410 + $0x18] sm:$0xff]
        %v2245 = vld [vmem:[%s410 + $0x20] sm:$0xff]
        %v2246 = vld [vmem:[%s410 + $0x28] sm:$0xff]
        %v2247 = vld [vmem:[%s410 + $0x30] sm:$0xff]
        %v2248 = vld [vmem:[%s410 + $0x38] sm:$0xff]
        %v2249 = vld [vmem:[%s410 + $0x40] sm:$0xf]
        %v2250 = vld [vmem:[%s389] sm:$0xff]
        %vm2251 = vcmask 64512
        %v2253 = vsel %vm2251, %v2231, 0
        %v2256 = vsel %vm2251, %v2234, 0
        %v2259 = vsel %vm2251, %v2237, 0
        %v2262 = vsel %vm2251, %v2240, 0
        %2264 = vmatprep.subr.mxu0 0.0
        %2265 = vmatpush1.msra.mxu0 %v2250
        %2266 = vmatprep.subr.mxu0 0.0
        %2267 = vmatpush1.msra.mxu0 0.0
        %2268 = vmatprep.subr.mxu0 0.0
        %2269 = vmatpush1.msra.mxu0 0.0
        %2270 = vmatprep.subr.mxu0 0.0
        %2271 = vmatpush1.msra.mxu0 0.0
        %2272 = vmatprep.subr.mxu0 0.0
        %2273 = vmatpush1.msra.mxu0 0.0
        %2274 = vmatprep.subr.mxu0 0.0
        %2275 = vmatpush1.msra.mxu0 0.0
        %2276 = vmatprep.subr.mxu0 0.0
        %2277 = vmatpush1.msra.mxu0 0.0
        %2278 = vmatprep.subr.mxu0 0.0
        %2279 = vmatpush1.msra.mxu0 0.0
        %2280 = vmatprep.subr.mxu0 0.0
        %2281 = vmatpush1.msra.mxu0 0.0
        %2282 = vmatprep.subr.mxu0 0.0
        %2283 = vmatpush1.msra.mxu0 0.0
        %2284 = vmatprep.subr.mxu0 0.0
        %2285 = vmatpush1.msra.mxu0 0.0
        %2286 = vmatprep.subr.mxu0 0.0
        %2287 = vmatpush1.msra.mxu0 0.0
        %2288 = vmatprep.subr.mxu0 0.0
        %2289 = vmatpush1.msra.mxu0 0.0
        %2290 = vmatprep.subr.mxu0 0.0
        %2291 = vmatpush1.msra.mxu0 0.0
        %2292 = vmatprep.subr.mxu0 0.0
        %2293 = vmatpush1.msra.mxu0 0.0
        %2294 = vmatprep.subr.mxu0 0.0
        %2295 = vmatpush1.msra.mxu0 0.0
        %2296 = vmatprep.subr.mxu0 0.0
        %2297 = vmatpush1.msra.mxu0 0.0
        %2298 = vmatprep.subr.mxu0 0.0
        %2299 = vmatpush1.msra.mxu0 0.0
        %2300 = vmatprep.subr.mxu0 0.0
        %2301 = vmatpush1.msra.mxu0 0.0
        %2302 = vmatprep.subr.mxu0 0.0
        %2303 = vmatpush1.msra.mxu0 0.0
        %2304 = vmatprep.subr.mxu0 0.0
        %2305 = vmatpush1.msra.mxu0 0.0
        %2306 = vmatprep.subr.mxu0 0.0
        %2307 = vmatpush1.msra.mxu0 0.0
        %2308 = vmatprep.subr.mxu0 0.0
        %2309 = vmatpush1.msra.mxu0 0.0
        %2310 = vmatprep.subr.mxu0 0.0
        %2311 = vmatpush1.msra.mxu0 0.0
        %2312 = vmatprep.subr.mxu0 0.0
        %2313 = vmatpush1.msra.mxu0 0.0
        %2314 = vmatprep.subr.mxu0 0.0
        %2315 = vmatpush1.msra.mxu0 0.0
        %2316 = vmatprep.subr.mxu0 0.0
        %2317 = vmatpush1.msra.mxu0 0.0
        %2318 = vmatprep.subr.mxu0 0.0
        %2319 = vmatpush1.msra.mxu0 0.0
        %2320 = vmatprep.subr.mxu0 0.0
        %2321 = vmatpush1.msra.mxu0 0.0
        %2322 = vmatprep.subr.mxu0 0.0
        %2323 = vmatpush1.msra.mxu0 0.0
        %2324 = vmatprep.subr.mxu0 0.0
        %2325 = vmatpush1.msra.mxu0 0.0
        %2326 = vmatprep.subr.mxu0 0.0
        %2327 = vmatpush1.msra.mxu0 0.0
        %2328 = vmatprep.mubr.f32.mxu0 0.0
        %2329 = vmatmul.mubr.f32.gmra.mrb[0].mxu0 %v2253
        %v2330 = vpop.f32.mrb[0].mxu0
        %v2331 = vadd.f32 0.0, %v2330
        %v2332 = vpop.f32.mrb[0].mxu0
        %2333 = vmatprep.mubr.f32.mxu0 0.0
        %2334 = vmatmul.mubr.f32.gmra.mrb[0].mxu0 %v2256
        %v2335 = vpop.f32.mrb[0].mxu0
        %v2336 = vadd.f32 0.0, %v2335
        %v2337 = vpop.f32.mrb[0].mxu0
        %2338 = vmatprep.mubr.f32.mxu0 0.0
        %2339 = vmatmul.mubr.f32.gmra.mrb[0].mxu0 %v2259
        %v2340 = vpop.f32.mrb[0].mxu0
        %v2341 = vadd.f32 0.0, %v2340
        %v2342 = vpop.f32.mrb[0].mxu0
        %2343 = vmatprep.mubr.f32.mxu0 0.0
        %2344 = vmatmul.mubr.f32.gmra.mrb[0].mxu0 %v2262
        %v2345 = vpop.f32.mrb[0].mxu0
        %v2346 = vadd.f32 0.0, %v2345
        %v2347 = vpop.f32.mrb[0].mxu0
        %2348 = vdwg.mxu0
        %2349 = vmatprep.subr.mxu0 %v2228
        %2350 = vmatpush1.xpose.msra.mxu0 %v2227
        %2351 = vmatprep.subr.mxu0 0.0
        %2352 = vmatpush1.xpose.msra.mxu0 0.0
        %2353 = vmatprep.subr.mxu0 0.0
        %2354 = vmatpush1.xpose.msra.mxu0 0.0
        %2355 = vmatprep.subr.mxu0 0.0
        %2356 = vmatpush1.xpose.msra.mxu0 0.0
        %2357 = vmatprep.subr.mxu0 0.0
        %2358 = vmatpush1.xpose.msra.mxu0 0.0
        %2359 = vmatprep.subr.mxu0 0.0
        %2360 = vmatpush1.xpose.msra.mxu0 0.0
        %2361 = vmatprep.subr.mxu0 0.0
        %2362 = vmatpush1.xpose.msra.mxu0 0.0
        %2363 = vmatprep.subr.mxu0 0.0
        %2364 = vmatpush1.xpose.msra.mxu0 0.0
        %2365 = vmatprep.subr.mxu0 0.0
        %2366 = vmatpush1.xpose.msra.mxu0 0.0
        %2367 = vmatprep.subr.mxu0 0.0
        %2368 = vmatpush1.xpose.msra.mxu0 0.0
        %2369 = vmatprep.subr.mxu0 0.0
        %2370 = vmatpush1.xpose.msra.mxu0 0.0
        %2371 = vmatprep.subr.mxu0 0.0
        %2372 = vmatpush1.xpose.msra.mxu0 0.0
        %2373 = vmatprep.subr.mxu0 0.0
        %2374 = vmatpush1.xpose.msra.mxu0 0.0
        %2375 = vmatprep.subr.mxu0 0.0
        %2376 = vmatpush1.xpose.msra.mxu0 0.0
        %2377 = vmatprep.subr.mxu0 0.0
        %2378 = vmatpush1.xpose.msra.mxu0 0.0
        %2379 = vmatprep.subr.mxu0 0.0
        %2380 = vmatpush1.xpose.msra.mxu0 0.0
        %2381 = vmatprep.subr.mxu0 0.0
        %2382 = vmatpush1.xpose.msra.mxu0 0.0
        %2383 = vmatprep.subr.mxu0 0.0
        %2384 = vmatpush1.xpose.msra.mxu0 0.0
        %2385 = vmatprep.subr.mxu0 0.0
        %2386 = vmatpush1.xpose.msra.mxu0 0.0
        %2387 = vmatprep.subr.mxu0 0.0
        %2388 = vmatpush1.xpose.msra.mxu0 0.0
        %2389 = vmatprep.subr.mxu0 0.0
        %2390 = vmatpush1.xpose.msra.mxu0 0.0
        %2391 = vmatprep.subr.mxu0 0.0
        %2392 = vmatpush1.xpose.msra.mxu0 0.0
        %2393 = vmatprep.subr.mxu0 0.0
        %2394 = vmatpush1.xpose.msra.mxu0 0.0
        %2395 = vmatprep.subr.mxu0 0.0
        %2396 = vmatpush1.xpose.msra.mxu0 0.0
        %2397 = vmatprep.subr.mxu0 0.0
        %2398 = vmatpush1.xpose.msra.mxu0 0.0
        %2399 = vmatprep.subr.mxu0 0.0
        %2400 = vmatpush1.xpose.msra.mxu0 0.0
        %2401 = vmatprep.subr.mxu0 0.0
        %2402 = vmatpush1.xpose.msra.mxu0 0.0
        %2403 = vmatprep.subr.mxu0 0.0
        %2404 = vmatpush1.xpose.msra.mxu0 0.0
        %2405 = vmatprep.subr.mxu0 0.0
        %2406 = vmatpush1.xpose.msra.mxu0 0.0
        %2407 = vmatprep.subr.mxu0 0.0
        %2408 = vmatpush1.xpose.msra.mxu0 0.0
        %2409 = vmatprep.subr.mxu0 0.0
        %2410 = vmatpush1.xpose.msra.mxu0 0.0
        %2411 = vmatprep.subr.mxu0 0.0
        %2412 = vmatpush1.xpose.msra.mxu0 0.0
        %2413 = vmatprep.mubr.f32.mxu0 %v2230
        %2414 = vmatmul.mubr.f32.gmra.mrb[0].mxu0 %v2229
        %v2415 = vpop.f32.mrb[0].mxu0
        %v2416 = vadd.f32 %v2331, %v2415
        %v2417 = vpop.f32.mrb[0].mxu0
        %2418 = vmatprep.mubr.f32.mxu0 %v2233
        %2419 = vmatmul.mubr.f32.gmra.mrb[0].mxu0 %v2232
        %v2420 = vpop.f32.mrb[0].mxu0
        %v2421 = vadd.f32 %v2336, %v2420
        %v2422 = vpop.f32.mrb[0].mxu0
        %2423 = vmatprep.mubr.f32.mxu0 %v2236
        %2424 = vmatmul.mubr.f32.gmra.mrb[0].mxu0 %v2235
        %v2425 = vpop.f32.mrb[0].mxu0
        %v2426 = vadd.f32 %v2341, %v2425
        %v2427 = vpop.f32.mrb[0].mxu0
        %2428 = vmatprep.mubr.f32.mxu0 %v2239
        %2429 = vmatmul.mubr.f32.gmra.mrb[0].mxu0 %v2238
        %v2430 = vpop.f32.mrb[0].mxu0
        %v2431 = vadd.f32 %v2346, %v2430
        %v2432 = vpop.f32.mrb[0].mxu0
        %2433 = vdwg.mxu0
        %2435 = vset.pattern.permute.xlu0 0
        %2436 = vperm.xlu0 %2435, %v2241
        %v2437 = vpop.permute.xlu0 %2436
        %2440 = vset.pattern.permute.xlu0 0
        %2441 = vperm.xlu0 %2440, %v2242
        %v2442 = vpop.permute.xlu0 %2441
        %2445 = vset.pattern.permute.xlu0 0
        %2446 = vperm.xlu0 %2445, %v2243
        %v2447 = vpop.permute.xlu0 %2446
        %2450 = vset.pattern.permute.xlu0 0
        %2451 = vperm.xlu0 %2450, %v2244
        %v2452 = vpop.permute.xlu0 %2451
        %v2454 = vadd.f32 %v2416, %v2437
        %v2455 = vadd.f32 %v2421, %v2442
        %v2456 = vadd.f32 %v2426, %v2447
        %v2457 = vadd.f32 %v2431, %v2452
        %v2458 = vmax.f32 %v2454, 0.0
        %v2459 = vmax.f32 %v2455, 0.0
        %v2460 = vmax.f32 %v2456, 0.0
        %v2461 = vmax.f32 %v2457, 0.0
        %v2462 = vld [vmem:[%s397] sm:$0xff]
        %v2463 = vld [vmem:[%s397 + $0x8] sm:$0xff]
        %v2464 = vld [vmem:[%s397 + $0x10] sm:$0xff]
        %v2465 = vld [vmem:[%s397 + $0x18] sm:$0xff]
        %2467 = vset.pattern.permute.xlu0 0
        %2468 = vperm.xlu0 %2467, %v2245
        %v2469 = vpop.permute.xlu0 %2468
        %2472 = vset.pattern.permute.xlu0 0
        %2473 = vperm.xlu0 %2472, %v2246
        %v2474 = vpop.permute.xlu0 %2473
        %2477 = vset.pattern.permute.xlu0 0
        %2478 = vperm.xlu0 %2477, %v2247
        %v2479 = vpop.permute.xlu0 %2478
        %2482 = vset.pattern.permute.xlu0 0
        %2483 = vperm.xlu0 %2482, %v2248
        %v2484 = vpop.permute.xlu0 %2483
        %vm2486 = vcmask 261120
        %v2488 = vsel %vm2486, %v2462, 0
        %v2491 = vsel %vm2486, %v2463, 0
        %v2494 = vsel %vm2486, %v2464, 0
        %v2497 = vsel %vm2486, %v2465, 0
        %2499 = vmatprep.subr.mxu0 0.0
        %2500 = vmatpush1.msra.mxu0 %v2458
        %2501 = vmatprep.subr.mxu0 0.0
        %2502 = vmatpush1.msra.mxu0 %v2459
        %2503 = vmatprep.subr.mxu0 0.0
        %2504 = vmatpush1.msra.mxu0 %v2460
        %2505 = vmatprep.subr.mxu0 0.0
        %2506 = vmatpush1.msra.mxu0 %v2461
        %2507 = vmatprep.subr.mxu0 0.0
        %2508 = vmatpush1.msra.mxu0 0.0
        %2509 = vmatprep.subr.mxu0 0.0
        %2510 = vmatpush1.msra.mxu0 0.0
        %2511 = vmatprep.subr.mxu0 0.0
        %2512 = vmatpush1.msra.mxu0 0.0
        %2513 = vmatprep.subr.mxu0 0.0
        %2514 = vmatpush1.msra.mxu0 0.0
        %2515 = vmatprep.subr.mxu0 0.0
        %2516 = vmatpush1.msra.mxu0 0.0
        %2517 = vmatprep.subr.mxu0 0.0
        %2518 = vmatpush1.msra.mxu0 0.0
        %2519 = vmatprep.subr.mxu0 0.0
        %2520 = vmatpush1.msra.mxu0 0.0
        %2521 = vmatprep.subr.mxu0 0.0
        %2522 = vmatpush1.msra.mxu0 0.0
        %2523 = vmatprep.subr.mxu0 0.0
        %2524 = vmatpush1.msra.mxu0 0.0
        %2525 = vmatprep.subr.mxu0 0.0
        %2526 = vmatpush1.msra.mxu0 0.0
        %2527 = vmatprep.subr.mxu0 0.0
        %2528 = vmatpush1.msra.mxu0 0.0
        %2529 = vmatprep.subr.mxu0 0.0
        %2530 = vmatpush1.msra.mxu0 0.0
        %2531 = vmatprep.subr.mxu0 0.0
        %2532 = vmatpush1.msra.mxu0 0.0
        %2533 = vmatprep.subr.mxu0 0.0
        %2534 = vmatpush1.msra.mxu0 0.0
        %2535 = vmatprep.subr.mxu0 0.0
        %2536 = vmatpush1.msra.mxu0 0.0
        %2537 = vmatprep.subr.mxu0 0.0
        %2538 = vmatpush1.msra.mxu0 0.0
        %2539 = vmatprep.subr.mxu0 0.0
        %2540 = vmatpush1.msra.mxu0 0.0
        %2541 = vmatprep.subr.mxu0 0.0
        %2542 = vmatpush1.msra.mxu0 0.0
        %2543 = vmatprep.subr.mxu0 0.0
        %2544 = vmatpush1.msra.mxu0 0.0
        %2545 = vmatprep.subr.mxu0 0.0
        %2546 = vmatpush1.msra.mxu0 0.0
        %2547 = vmatprep.subr.mxu0 0.0
        %2548 = vmatpush1.msra.mxu0 0.0
        %2549 = vmatprep.subr.mxu0 0.0
        %2550 = vmatpush1.msra.mxu0 0.0
        %2551 = vmatprep.subr.mxu0 0.0
        %2552 = vmatpush1.msra.mxu0 0.0
        %2553 = vmatprep.subr.mxu0 0.0
        %2554 = vmatpush1.msra.mxu0 0.0
        %2555 = vmatprep.subr.mxu0 0.0
        %2556 = vmatpush1.msra.mxu0 0.0
        %2557 = vmatprep.subr.mxu0 0.0
        %2558 = vmatpush1.msra.mxu0 0.0
        %2559 = vmatprep.subr.mxu0 0.0
        %2560 = vmatpush1.msra.mxu0 0.0
        %2561 = vmatprep.subr.mxu0 0.0
        %2562 = vmatpush1.msra.mxu0 0.0
        %2563 = vmatprep.mubr.f32.mxu0 0.0
        %2564 = vmatmul.mubr.f32.gmra.mrb[0].mxu0 %v2488
        %v2565 = vpop.f32.mrb[0].mxu0
        %v2566 = vadd.f32 %v2469, %v2565
        %v2567 = vpop.f32.mrb[0].mxu0
        %2568 = vmatprep.mubr.f32.mxu0 0.0
        %2569 = vmatmul.mubr.f32.gmra.mrb[0].mxu0 %v2491
        %v2570 = vpop.f32.mrb[0].mxu0
        %v2571 = vadd.f32 %v2474, %v2570
        %v2572 = vpop.f32.mrb[0].mxu0
        %2573 = vmatprep.mubr.f32.mxu0 0.0
        %2574 = vmatmul.mubr.f32.gmra.mrb[0].mxu0 %v2494
        %v2575 = vpop.f32.mrb[0].mxu0
        %v2576 = vadd.f32 %v2479, %v2575
        %v2577 = vpop.f32.mrb[0].mxu0
        %2578 = vmatprep.mubr.f32.mxu0 0.0
        %2579 = vmatmul.mubr.f32.gmra.mrb[0].mxu0 %v2497
        %v2580 = vpop.f32.mrb[0].mxu0
        %v2581 = vadd.f32 %v2484, %v2580
        %v2582 = vpop.f32.mrb[0].mxu0
        %2583 = vdwg.mxu0
        %v2584 = vmax.f32 %v2566, 0.0
        %v2585 = vmax.f32 %v2571, 0.0
        %v2586 = vmax.f32 %v2576, 0.0
        %v2587 = vmax.f32 %v2581, 0.0
        %v2588 = vld [vmem:[%s403] sm:$0xf]
        %2590 = vset.pattern.permute.xlu0 0
        %2591 = vperm.xlu0 %2590, %v2249
        %v2592 = vpop.permute.xlu0 %2591
        %v2595 = vsel %vm2486, %v2588, 0
        %2597 = vmatprep.subr.mxu0 0.0
        %2598 = vmatpush1.msra.mxu0 %v2584
        %2599 = vmatprep.subr.mxu0 0.0
        %2600 = vmatpush1.msra.mxu0 %v2585
        %2601 = vmatprep.subr.mxu0 0.0
        %2602 = vmatpush1.msra.mxu0 %v2586
        %2603 = vmatprep.subr.mxu0 0.0
        %2604 = vmatpush1.msra.mxu0 %v2587
        %2605 = vmatprep.subr.mxu0 0.0
        %2606 = vmatpush1.msra.mxu0 0.0
        %2607 = vmatprep.subr.mxu0 0.0
        %2608 = vmatpush1.msra.mxu0 0.0
        %2609 = vmatprep.subr.mxu0 0.0
        %2610 = vmatpush1.msra.mxu0 0.0
        %2611 = vmatprep.subr.mxu0 0.0
        %2612 = vmatpush1.msra.mxu0 0.0
        %2613 = vmatprep.subr.mxu0 0.0
        %2614 = vmatpush1.msra.mxu0 0.0
        %2615 = vmatprep.subr.mxu0 0.0
        %2616 = vmatpush1.msra.mxu0 0.0
        %2617 = vmatprep.subr.mxu0 0.0
        %2618 = vmatpush1.msra.mxu0 0.0
        %2619 = vmatprep.subr.mxu0 0.0
        %2620 = vmatpush1.msra.mxu0 0.0
        %2621 = vmatprep.subr.mxu0 0.0
        %2622 = vmatpush1.msra.mxu0 0.0
        %2623 = vmatprep.subr.mxu0 0.0
        %2624 = vmatpush1.msra.mxu0 0.0
        %2625 = vmatprep.subr.mxu0 0.0
        %2626 = vmatpush1.msra.mxu0 0.0
        %2627 = vmatprep.subr.mxu0 0.0
        %2628 = vmatpush1.msra.mxu0 0.0
        %2629 = vmatprep.subr.mxu0 0.0
        %2630 = vmatpush1.msra.mxu0 0.0
        %2631 = vmatprep.subr.mxu0 0.0
        %2632 = vmatpush1.msra.mxu0 0.0
        %2633 = vmatprep.subr.mxu0 0.0
        %2634 = vmatpush1.msra.mxu0 0.0
        %2635 = vmatprep.subr.mxu0 0.0
        %2636 = vmatpush1.msra.mxu0 0.0
        %2637 = vmatprep.subr.mxu0 0.0
        %2638 = vmatpush1.msra.mxu0 0.0
        %2639 = vmatprep.subr.mxu0 0.0
        %2640 = vmatpush1.msra.mxu0 0.0
        %2641 = vmatprep.subr.mxu0 0.0
        %2642 = vmatpush1.msra.mxu0 0.0
        %2643 = vmatprep.subr.mxu0 0.0
        %2644 = vmatpush1.msra.mxu0 0.0
        %2645 = vmatprep.subr.mxu0 0.0
        %2646 = vmatpush1.msra.mxu0 0.0
        %2647 = vmatprep.subr.mxu0 0.0
        %2648 = vmatpush1.msra.mxu0 0.0
        %2649 = vmatprep.subr.mxu0 0.0
        %2650 = vmatpush1.msra.mxu0 0.0
        %2651 = vmatprep.subr.mxu0 0.0
        %2652 = vmatpush1.msra.mxu0 0.0
        %2653 = vmatprep.subr.mxu0 0.0
        %2654 = vmatpush1.msra.mxu0 0.0
        %2655 = vmatprep.subr.mxu0 0.0
        %2656 = vmatpush1.msra.mxu0 0.0
        %2657 = vmatprep.subr.mxu0 0.0
        %2658 = vmatpush1.msra.mxu0 0.0
        %2659 = vmatprep.subr.mxu0 0.0
        %2660 = vmatpush1.msra.mxu0 0.0
        %2661 = vmatprep.mubr.f32.mxu0 0.0
        %2662 = vmatmul.mubr.f32.gmra.mrb[0].mxu0 %v2595
        %v2663 = vpop.f32.mrb[0].mxu0
        %v2664 = vadd.f32 %v2592, %v2663
        %v2665 = vpop.f32.mrb[0].mxu0
        %2666 = vdwg.mxu0
        %vm2667 = vcmask 60416
        %2668 = vst.msk [vmem:[%s416] sm:$0xf] %vm2667, %v2664
        %s2669 = scalar_lea.vmem [#allocation2], 16
        %v2670 = vld [vmem:[%s2669] sm:$0xff]
        %v2671 = vld [vmem:[%s2669 + $0x8] sm:$0xff]
        %s2672 = scalar_lea.vmem %s321, 96 [#allocation3]
        %v2673 = vld [vmem:[%s2672] sm:$0xff]
        %v2674 = vld [vmem:[%s2672 + $0x8] sm:$0xff]
        %v2675 = vld [vmem:[%s2672 + $0x10] sm:$0xff]
        %v2676 = vld [vmem:[%s2672 + $0x18] sm:$0xff]
        %v2677 = vld [vmem:[%s2672 + $0x20] sm:$0xff]
        %v2678 = vld [vmem:[%s2672 + $0x28] sm:$0xff]
        %v2679 = vld [vmem:[%s2672 + $0x30] sm:$0xff]
        %v2680 = vld [vmem:[%s2672 + $0x38] sm:$0xff]
        %v2681 = vld [vmem:[%s2672 + $0x40] sm:$0xff]
        %v2682 = vld [vmem:[%s2672 + $0x48] sm:$0xff]
        %v2683 = vld [vmem:[%s2672 + $0x50] sm:$0xff]
        %v2684 = vld [vmem:[%s2672 + $0x58] sm:$0xff]
        %s2685 = scalar_lea.vmem %s410, 72
        %v2686 = vld [vmem:[%s2685] sm:$0xff]
        %v2687 = vld [vmem:[%s2685 + $0x8] sm:$0xff]
        %v2688 = vld [vmem:[%s2685 + $0x10] sm:$0xff]
        %v2689 = vld [vmem:[%s2685 + $0x18] sm:$0xff]
        %v2690 = vld [vmem:[%s2685 + $0x20] sm:$0xff]
        %v2691 = vld [vmem:[%s2685 + $0x28] sm:$0xff]
        %v2692 = vld [vmem:[%s2685 + $0x30] sm:$0xff]
        %v2693 = vld [vmem:[%s2685 + $0x38] sm:$0xff]
        %v2694 = vld [vmem:[%s2685 + $0x40] sm:$0xf]
        %s2695 = scalar_lea.vmem %s389, 8
        %v2696 = vld [vmem:[%s2695] sm:$0xff]
        %v2698 = vsel %vm2251, %v2675, 0
        %v2701 = vsel %vm2251, %v2678, 0
        %v2704 = vsel %vm2251, %v2681, 0
        %v2707 = vsel %vm2251, %v2684, 0
        %2709 = vmatprep.subr.mxu0 0.0
        %2710 = vmatpush1.msra.mxu0 %v2696
        %2711 = vmatprep.subr.mxu0 0.0
        %2712 = vmatpush1.msra.mxu0 0.0
        %2713 = vmatprep.subr.mxu0 0.0
        %2714 = vmatpush1.msra.mxu0 0.0
        %2715 = vmatprep.subr.mxu0 0.0
        %2716 = vmatpush1.msra.mxu0 0.0
        %2717 = vmatprep.subr.mxu0 0.0
        %2718 = vmatpush1.msra.mxu0 0.0
        %2719 = vmatprep.subr.mxu0 0.0
        %2720 = vmatpush1.msra.mxu0 0.0
        %2721 = vmatprep.subr.mxu0 0.0
        %2722 = vmatpush1.msra.mxu0 0.0
        %2723 = vmatprep.subr.mxu0 0.0
        %2724 = vmatpush1.msra.mxu0 0.0
        %2725 = vmatprep.subr.mxu0 0.0
        %2726 = vmatpush1.msra.mxu0 0.0
        %2727 = vmatprep.subr.mxu0 0.0
        %2728 = vmatpush1.msra.mxu0 0.0
        %2729 = vmatprep.subr.mxu0 0.0
        %2730 = vmatpush1.msra.mxu0 0.0
        %2731 = vmatprep.subr.mxu0 0.0
        %2732 = vmatpush1.msra.mxu0 0.0
        %2733 = vmatprep.subr.mxu0 0.0
        %2734 = vmatpush1.msra.mxu0 0.0
        %2735 = vmatprep.subr.mxu0 0.0
        %2736 = vmatpush1.msra.mxu0 0.0
        %2737 = vmatprep.subr.mxu0 0.0
        %2738 = vmatpush1.msra.mxu0 0.0
        %2739 = vmatprep.subr.mxu0 0.0
        %2740 = vmatpush1.msra.mxu0 0.0
        %2741 = vmatprep.subr.mxu0 0.0
        %2742 = vmatpush1.msra.mxu0 0.0
        %2743 = vmatprep.subr.mxu0 0.0
        %2744 = vmatpush1.msra.mxu0 0.0
        %2745 = vmatprep.subr.mxu0 0.0
        %2746 = vmatpush1.msra.mxu0 0.0
        %2747 = vmatprep.subr.mxu0 0.0
        %2748 = vmatpush1.msra.mxu0 0.0
        %2749 = vmatprep.subr.mxu0 0.0
        %2750 = vmatpush1.msra.mxu0 0.0
        %2751 = vmatprep.subr.mxu0 0.0
        %2752 = vmatpush1.msra.mxu0 0.0
        %2753 = vmatprep.subr.mxu0 0.0
        %2754 = vmatpush1.msra.mxu0 0.0
        %2755 = vmatprep.subr.mxu0 0.0
        %2756 = vmatpush1.msra.mxu0 0.0
        %2757 = vmatprep.subr.mxu0 0.0
        %2758 = vmatpush1.msra.mxu0 0.0
        %2759 = vmatprep.subr.mxu0 0.0
        %2760 = vmatpush1.msra.mxu0 0.0
        %2761 = vmatprep.subr.mxu0 0.0
        %2762 = vmatpush1.msra.mxu0 0.0
        %2763 = vmatprep.subr.mxu0 0.0
        %2764 = vmatpush1.msra.mxu0 0.0
        %2765 = vmatprep.subr.mxu0 0.0
        %2766 = vmatpush1.msra.mxu0 0.0
        %2767 = vmatprep.subr.mxu0 0.0
        %2768 = vmatpush1.msra.mxu0 0.0
        %2769 = vmatprep.subr.mxu0 0.0
        %2770 = vmatpush1.msra.mxu0 0.0
        %2771 = vmatprep.subr.mxu0 0.0
        %2772 = vmatpush1.msra.mxu0 0.0
        %2773 = vmatprep.mubr.f32.mxu0 0.0
        %2774 = vmatmul.mubr.f32.gmra.mrb[0].mxu0 %v2698
        %v2775 = vpop.f32.mrb[0].mxu0
        %v2776 = vadd.f32 0.0, %v2775
        %v2777 = vpop.f32.mrb[0].mxu0
        %2778 = vmatprep.mubr.f32.mxu0 0.0
        %2779 = vmatmul.mubr.f32.gmra.mrb[0].mxu0 %v2701
        %v2780 = vpop.f32.mrb[0].mxu0
        %v2781 = vadd.f32 0.0, %v2780
        %v2782 = vpop.f32.mrb[0].mxu0
        %2783 = vmatprep.mubr.f32.mxu0 0.0
        %2784 = vmatmul.mubr.f32.gmra.mrb[0].mxu0 %v2704
        %v2785 = vpop.f32.mrb[0].mxu0
        %v2786 = vadd.f32 0.0, %v2785
        %v2787 = vpop.f32.mrb[0].mxu0
        %2788 = vmatprep.mubr.f32.mxu0 0.0
        %2789 = vmatmul.mubr.f32.gmra.mrb[0].mxu0 %v2707
        %v2790 = vpop.f32.mrb[0].mxu0
        %v2791 = vadd.f32 0.0, %v2790
        %v2792 = vpop.f32.mrb[0].mxu0
        %2793 = vdwg.mxu0
        %2794 = vmatprep.subr.mxu0 %v2671
        %2795 = vmatpush1.xpose.msra.mxu0 %v2670
        %2796 = vmatprep.subr.mxu0 0.0
        %2797 = vmatpush1.xpose.msra.mxu0 0.0
        %2798 = vmatprep.subr.mxu0 0.0
        %2799 = vmatpush1.xpose.msra.mxu0 0.0
        %2800 = vmatprep.subr.mxu0 0.0
        %2801 = vmatpush1.xpose.msra.mxu0 0.0
        %2802 = vmatprep.subr.mxu0 0.0
        %2803 = vmatpush1.xpose.msra.mxu0 0.0
        %2804 = vmatprep.subr.mxu0 0.0
        %2805 = vmatpush1.xpose.msra.mxu0 0.0
        %2806 = vmatprep.subr.mxu0 0.0
        %2807 = vmatpush1.xpose.msra.mxu0 0.0
        %2808 = vmatprep.subr.mxu0 0.0
        %2809 = vmatpush1.xpose.msra.mxu0 0.0
        %2810 = vmatprep.subr.mxu0 0.0
        %2811 = vmatpush1.xpose.msra.mxu0 0.0
        %2812 = vmatprep.subr.mxu0 0.0
        %2813 = vmatpush1.xpose.msra.mxu0 0.0
        %2814 = vmatprep.subr.mxu0 0.0
        %2815 = vmatpush1.xpose.msra.mxu0 0.0
        %2816 = vmatprep.subr.mxu0 0.0
        %2817 = vmatpush1.xpose.msra.mxu0 0.0
        %2818 = vmatprep.subr.mxu0 0.0
        %2819 = vmatpush1.xpose.msra.mxu0 0.0
        %2820 = vmatprep.subr.mxu0 0.0
        %2821 = vmatpush1.xpose.msra.mxu0 0.0
        %2822 = vmatprep.subr.mxu0 0.0
        %2823 = vmatpush1.xpose.msra.mxu0 0.0
        %2824 = vmatprep.subr.mxu0 0.0
        %2825 = vmatpush1.xpose.msra.mxu0 0.0
        %2826 = vmatprep.subr.mxu0 0.0
        %2827 = vmatpush1.xpose.msra.mxu0 0.0
        %2828 = vmatprep.subr.mxu0 0.0
        %2829 = vmatpush1.xpose.msra.mxu0 0.0
        %2830 = vmatprep.subr.mxu0 0.0
        %2831 = vmatpush1.xpose.msra.mxu0 0.0
        %2832 = vmatprep.subr.mxu0 0.0
        %2833 = vmatpush1.xpose.msra.mxu0 0.0
        %2834 = vmatprep.subr.mxu0 0.0
        %2835 = vmatpush1.xpose.msra.mxu0 0.0
        %2836 = vmatprep.subr.mxu0 0.0
        %2837 = vmatpush1.xpose.msra.mxu0 0.0
        %2838 = vmatprep.subr.mxu0 0.0
        %2839 = vmatpush1.xpose.msra.mxu0 0.0
        %2840 = vmatprep.subr.mxu0 0.0
        %2841 = vmatpush1.xpose.msra.mxu0 0.0
        %2842 = vmatprep.subr.mxu0 0.0
        %2843 = vmatpush1.xpose.msra.mxu0 0.0
        %2844 = vmatprep.subr.mxu0 0.0
        %2845 = vmatpush1.xpose.msra.mxu0 0.0
        %2846 = vmatprep.subr.mxu0 0.0
        %2847 = vmatpush1.xpose.msra.mxu0 0.0
        %2848 = vmatprep.subr.mxu0 0.0
        %2849 = vmatpush1.xpose.msra.mxu0 0.0
        %2850 = vmatprep.subr.mxu0 0.0
        %2851 = vmatpush1.xpose.msra.mxu0 0.0
        %2852 = vmatprep.subr.mxu0 0.0
        %2853 = vmatpush1.xpose.msra.mxu0 0.0
        %2854 = vmatprep.subr.mxu0 0.0
        %2855 = vmatpush1.xpose.msra.mxu0 0.0
        %2856 = vmatprep.subr.mxu0 0.0
        %2857 = vmatpush1.xpose.msra.mxu0 0.0
        %2858 = vmatprep.mubr.f32.mxu0 %v2674
        %2859 = vmatmul.mubr.f32.gmra.mrb[0].mxu0 %v2673
        %v2860 = vpop.f32.mrb[0].mxu0
        %v2861 = vadd.f32 %v2776, %v2860
        %v2862 = vpop.f32.mrb[0].mxu0
        %2863 = vmatprep.mubr.f32.mxu0 %v2677
        %2864 = vmatmul.mubr.f32.gmra.mrb[0].mxu0 %v2676
        %v2865 = vpop.f32.mrb[0].mxu0
        %v2866 = vadd.f32 %v2781, %v2865
        %v2867 = vpop.f32.mrb[0].mxu0
        %2868 = vmatprep.mubr.f32.mxu0 %v2680
        %2869 = vmatmul.mubr.f32.gmra.mrb[0].mxu0 %v2679
        %v2870 = vpop.f32.mrb[0].mxu0
        %v2871 = vadd.f32 %v2786, %v2870
        %v2872 = vpop.f32.mrb[0].mxu0
        %2873 = vmatprep.mubr.f32.mxu0 %v2683
        %2874 = vmatmul.mubr.f32.gmra.mrb[0].mxu0 %v2682
        %v2875 = vpop.f32.mrb[0].mxu0
        %v2876 = vadd.f32 %v2791, %v2875
        %v2877 = vpop.f32.mrb[0].mxu0
        %2878 = vdwg.mxu0
        %2880 = vset.pattern.permute.xlu0 0
        %2881 = vperm.xlu0 %2880, %v2686
        %v2882 = vpop.permute.xlu0 %2881
        %2885 = vset.pattern.permute.xlu0 0
        %2886 = vperm.xlu0 %2885, %v2687
        %v2887 = vpop.permute.xlu0 %2886
        %2890 = vset.pattern.permute.xlu0 0
        %2891 = vperm.xlu0 %2890, %v2688
        %v2892 = vpop.permute.xlu0 %2891
        %2895 = vset.pattern.permute.xlu0 0
        %2896 = vperm.xlu0 %2895, %v2689
        %v2897 = vpop.permute.xlu0 %2896
        %v2899 = vadd.f32 %v2861, %v2882
        %v2900 = vadd.f32 %v2866, %v2887
        %v2901 = vadd.f32 %v2871, %v2892
        %v2902 = vadd.f32 %v2876, %v2897
        %v2903 = vmax.f32 %v2899, 0.0
        %v2904 = vmax.f32 %v2900, 0.0
        %v2905 = vmax.f32 %v2901, 0.0
        %v2906 = vmax.f32 %v2902, 0.0
        %s2907 = scalar_lea.vmem %s397, 32
        %v2908 = vld [vmem:[%s2907] sm:$0xff]
        %v2909 = vld [vmem:[%s2907 + $0x8] sm:$0xff]
        %v2910 = vld [vmem:[%s2907 + $0x10] sm:$0xff]
        %v2911 = vld [vmem:[%s2907 + $0x18] sm:$0xff]
        %2913 = vset.pattern.permute.xlu0 0
        %2914 = vperm.xlu0 %2913, %v2690
        %v2915 = vpop.permute.xlu0 %2914
        %2918 = vset.pattern.permute.xlu0 0
        %2919 = vperm.xlu0 %2918, %v2691
        %v2920 = vpop.permute.xlu0 %2919
        %2923 = vset.pattern.permute.xlu0 0
        %2924 = vperm.xlu0 %2923, %v2692
        %v2925 = vpop.permute.xlu0 %2924
        %2928 = vset.pattern.permute.xlu0 0
        %2929 = vperm.xlu0 %2928, %v2693
        %v2930 = vpop.permute.xlu0 %2929
        %v2933 = vsel %vm2486, %v2908, 0
        %v2936 = vsel %vm2486, %v2909, 0
        %v2939 = vsel %vm2486, %v2910, 0
        %v2942 = vsel %vm2486, %v2911, 0
        %2944 = vmatprep.subr.mxu0 0.0
        %2945 = vmatpush1.msra.mxu0 %v2903
        %2946 = vmatprep.subr.mxu0 0.0
        %2947 = vmatpush1.msra.mxu0 %v2904
        %2948 = vmatprep.subr.mxu0 0.0
        %2949 = vmatpush1.msra.mxu0 %v2905
        %2950 = vmatprep.subr.mxu0 0.0
        %2951 = vmatpush1.msra.mxu0 %v2906
        %2952 = vmatprep.subr.mxu0 0.0
        %2953 = vmatpush1.msra.mxu0 0.0
        %2954 = vmatprep.subr.mxu0 0.0
        %2955 = vmatpush1.msra.mxu0 0.0
        %2956 = vmatprep.subr.mxu0 0.0
        %2957 = vmatpush1.msra.mxu0 0.0
        %2958 = vmatprep.subr.mxu0 0.0
        %2959 = vmatpush1.msra.mxu0 0.0
        %2960 = vmatprep.subr.mxu0 0.0
        %2961 = vmatpush1.msra.mxu0 0.0
        %2962 = vmatprep.subr.mxu0 0.0
        %2963 = vmatpush1.msra.mxu0 0.0
        %2964 = vmatprep.subr.mxu0 0.0
        %2965 = vmatpush1.msra.mxu0 0.0
        %2966 = vmatprep.subr.mxu0 0.0
        %2967 = vmatpush1.msra.mxu0 0.0
        %2968 = vmatprep.subr.mxu0 0.0
        %2969 = vmatpush1.msra.mxu0 0.0
        %2970 = vmatprep.subr.mxu0 0.0
        %2971 = vmatpush1.msra.mxu0 0.0
        %2972 = vmatprep.subr.mxu0 0.0
        %2973 = vmatpush1.msra.mxu0 0.0
        %2974 = vmatprep.subr.mxu0 0.0
        %2975 = vmatpush1.msra.mxu0 0.0
        %2976 = vmatprep.subr.mxu0 0.0
        %2977 = vmatpush1.msra.mxu0 0.0
        %2978 = vmatprep.subr.mxu0 0.0
        %2979 = vmatpush1.msra.mxu0 0.0
        %2980 = vmatprep.subr.mxu0 0.0
        %2981 = vmatpush1.msra.mxu0 0.0
        %2982 = vmatprep.subr.mxu0 0.0
        %2983 = vmatpush1.msra.mxu0 0.0
        %2984 = vmatprep.subr.mxu0 0.0
        %2985 = vmatpush1.msra.mxu0 0.0
        %2986 = vmatprep.subr.mxu0 0.0
        %2987 = vmatpush1.msra.mxu0 0.0
        %2988 = vmatprep.subr.mxu0 0.0
        %2989 = vmatpush1.msra.mxu0 0.0
        %2990 = vmatprep.subr.mxu0 0.0
        %2991 = vmatpush1.msra.mxu0 0.0
        %2992 = vmatprep.subr.mxu0 0.0
        %2993 = vmatpush1.msra.mxu0 0.0
        %2994 = vmatprep.subr.mxu0 0.0
        %2995 = vmatpush1.msra.mxu0 0.0
        %2996 = vmatprep.subr.mxu0 0.0
        %2997 = vmatpush1.msra.mxu0 0.0
        %2998 = vmatprep.subr.mxu0 0.0
        %2999 = vmatpush1.msra.mxu0 0.0
        %3000 = vmatprep.subr.mxu0 0.0
        %3001 = vmatpush1.msra.mxu0 0.0
        %3002 = vmatprep.subr.mxu0 0.0
        %3003 = vmatpush1.msra.mxu0 0.0
        %3004 = vmatprep.subr.mxu0 0.0
        %3005 = vmatpush1.msra.mxu0 0.0
        %3006 = vmatprep.subr.mxu0 0.0
        %3007 = vmatpush1.msra.mxu0 0.0
        %3008 = vmatprep.mubr.f32.mxu0 0.0
        %3009 = vmatmul.mubr.f32.gmra.mrb[0].mxu0 %v2933
        %v3010 = vpop.f32.mrb[0].mxu0
        %v3011 = vadd.f32 %v2915, %v3010
        %v3012 = vpop.f32.mrb[0].mxu0
        %3013 = vmatprep.mubr.f32.mxu0 0.0
        %3014 = vmatmul.mubr.f32.gmra.mrb[0].mxu0 %v2936
        %v3015 = vpop.f32.mrb[0].mxu0
        %v3016 = vadd.f32 %v2920, %v3015
        %v3017 = vpop.f32.mrb[0].mxu0
        %3018 = vmatprep.mubr.f32.mxu0 0.0
        %3019 = vmatmul.mubr.f32.gmra.mrb[0].mxu0 %v2939
        %v3020 = vpop.f32.mrb[0].mxu0
        %v3021 = vadd.f32 %v2925, %v3020
        %v3022 = vpop.f32.mrb[0].mxu0
        %3023 = vmatprep.mubr.f32.mxu0 0.0
        %3024 = vmatmul.mubr.f32.gmra.mrb[0].mxu0 %v2942
        %v3025 = vpop.f32.mrb[0].mxu0
        %v3026 = vadd.f32 %v2930, %v3025
        %v3027 = vpop.f32.mrb[0].mxu0
        %3028 = vdwg.mxu0
        %v3029 = vmax.f32 %v3011, 0.0
        %v3030 = vmax.f32 %v3016, 0.0
        %v3031 = vmax.f32 %v3021, 0.0
        %v3032 = vmax.f32 %v3026, 0.0
        %s3033 = scalar_lea.vmem %s403, 4
        %v3034 = vld [vmem:[%s3033] sm:$0xf]
        %3036 = vset.pattern.permute.xlu0 0
        %3037 = vperm.xlu0 %3036, %v2694
        %v3038 = vpop.permute.xlu0 %3037
        %v3041 = vsel %vm2486, %v3034, 0
        %3043 = vmatprep.subr.mxu0 0.0
        %3044 = vmatpush1.msra.mxu0 %v3029
        %3045 = vmatprep.subr.mxu0 0.0
        %3046 = vmatpush1.msra.mxu0 %v3030
        %3047 = vmatprep.subr.mxu0 0.0
        %3048 = vmatpush1.msra.mxu0 %v3031
        %3049 = vmatprep.subr.mxu0 0.0
        %3050 = vmatpush1.msra.mxu0 %v3032
        %3051 = vmatprep.subr.mxu0 0.0
        %3052 = vmatpush1.msra.mxu0 0.0
        %3053 = vmatprep.subr.mxu0 0.0
        %3054 = vmatpush1.msra.mxu0 0.0
        %3055 = vmatprep.subr.mxu0 0.0
        %3056 = vmatpush1.msra.mxu0 0.0
        %3057 = vmatprep.subr.mxu0 0.0
        %3058 = vmatpush1.msra.mxu0 0.0
        %3059 = vmatprep.subr.mxu0 0.0
        %3060 = vmatpush1.msra.mxu0 0.0
        %3061 = vmatprep.subr.mxu0 0.0
        %3062 = vmatpush1.msra.mxu0 0.0
        %3063 = vmatprep.subr.mxu0 0.0
        %3064 = vmatpush1.msra.mxu0 0.0
        %3065 = vmatprep.subr.mxu0 0.0
        %3066 = vmatpush1.msra.mxu0 0.0
        %3067 = vmatprep.subr.mxu0 0.0
        %3068 = vmatpush1.msra.mxu0 0.0
        %3069 = vmatprep.subr.mxu0 0.0
        %3070 = vmatpush1.msra.mxu0 0.0
        %3071 = vmatprep.subr.mxu0 0.0
        %3072 = vmatpush1.msra.mxu0 0.0
        %3073 = vmatprep.subr.mxu0 0.0
        %3074 = vmatpush1.msra.mxu0 0.0
        %3075 = vmatprep.subr.mxu0 0.0
        %3076 = vmatpush1.msra.mxu0 0.0
        %3077 = vmatprep.subr.mxu0 0.0
        %3078 = vmatpush1.msra.mxu0 0.0
        %3079 = vmatprep.subr.mxu0 0.0
        %3080 = vmatpush1.msra.mxu0 0.0
        %3081 = vmatprep.subr.mxu0 0.0
        %3082 = vmatpush1.msra.mxu0 0.0
        %3083 = vmatprep.subr.mxu0 0.0
        %3084 = vmatpush1.msra.mxu0 0.0
        %3085 = vmatprep.subr.mxu0 0.0
        %3086 = vmatpush1.msra.mxu0 0.0
        %3087 = vmatprep.subr.mxu0 0.0
        %3088 = vmatpush1.msra.mxu0 0.0
        %3089 = vmatprep.subr.mxu0 0.0
        %3090 = vmatpush1.msra.mxu0 0.0
        %3091 = vmatprep.subr.mxu0 0.0
        %3092 = vmatpush1.msra.mxu0 0.0
        %3093 = vmatprep.subr.mxu0 0.0
        %3094 = vmatpush1.msra.mxu0 0.0
        %3095 = vmatprep.subr.mxu0 0.0
        %3096 = vmatpush1.msra.mxu0 0.0
        %3097 = vmatprep.subr.mxu0 0.0
        %3098 = vmatpush1.msra.mxu0 0.0
        %3099 = vmatprep.subr.mxu0 0.0
        %3100 = vmatpush1.msra.mxu0 0.0
        %3101 = vmatprep.subr.mxu0 0.0
        %3102 = vmatpush1.msra.mxu0 0.0
        %3103 = vmatprep.subr.mxu0 0.0
        %3104 = vmatpush1.msra.mxu0 0.0
        %3105 = vmatprep.subr.mxu0 0.0
        %3106 = vmatpush1.msra.mxu0 0.0
        %3107 = vmatprep.mubr.f32.mxu0 0.0
        %3108 = vmatmul.mubr.f32.gmra.mrb[0].mxu0 %v3041
        %v3109 = vpop.f32.mrb[0].mxu0
        %v3110 = vadd.f32 %v3038, %v3109
        %v3111 = vpop.f32.mrb[0].mxu0
        %3112 = vdwg.mxu0
        %s3113 = scalar_lea.vmem %s416, 4
        %3114 = vst.msk [vmem:[%s3113] sm:$0xf] %vm2667, %v3110
        %s3115 = scalar_lea.vmem [#allocation2], 32
        %v3116 = vld [vmem:[%s3115] sm:$0xff]
        %v3117 = vld [vmem:[%s3115 + $0x8] sm:$0xff]
        %s3118 = scalar_lea.vmem %s321, 192 [#allocation3]
        %v3119 = vld [vmem:[%s3118] sm:$0xff]
        %v3120 = vld [vmem:[%s3118 + $0x8] sm:$0xff]
        %v3121 = vld [vmem:[%s3118 + $0x10] sm:$0xff]
        %v3122 = vld [vmem:[%s3118 + $0x18] sm:$0xff]
        %v3123 = vld [vmem:[%s3118 + $0x20] sm:$0xff]
        %v3124 = vld [vmem:[%s3118 + $0x28] sm:$0xff]
        %v3125 = vld [vmem:[%s3118 + $0x30] sm:$0xff]
        %v3126 = vld [vmem:[%s3118 + $0x38] sm:$0xff]
        %v3127 = vld [vmem:[%s3118 + $0x40] sm:$0xff]
        %v3128 = vld [vmem:[%s3118 + $0x48] sm:$0xff]
        %v3129 = vld [vmem:[%s3118 + $0x50] sm:$0xff]
        %v3130 = vld [vmem:[%s3118 + $0x58] sm:$0xff]
        %s3131 = scalar_lea.vmem %s410, 144
        %v3132 = vld [vmem:[%s3131] sm:$0xff]
        %v3133 = vld [vmem:[%s3131 + $0x8] sm:$0xff]
        %v3134 = vld [vmem:[%s3131 + $0x10] sm:$0xff]
        %v3135 = vld [vmem:[%s3131 + $0x18] sm:$0xff]
        %v3136 = vld [vmem:[%s3131 + $0x20] sm:$0xff]
        %v3137 = vld [vmem:[%s3131 + $0x28] sm:$0xff]
        %v3138 = vld [vmem:[%s3131 + $0x30] sm:$0xff]
        %v3139 = vld [vmem:[%s3131 + $0x38] sm:$0xff]
        %v3140 = vld [vmem:[%s3131 + $0x40] sm:$0xf]
        %s3141 = scalar_lea.vmem %s389, 16
        %v3142 = vld [vmem:[%s3141] sm:$0xff]
        %v3144 = vsel %vm2251, %v3121, 0
        %v3147 = vsel %vm2251, %v3124, 0
        %v3150 = vsel %vm2251, %v3127, 0
        %v3153 = vsel %vm2251, %v3130, 0
        %3155 = vmatprep.subr.mxu0 0.0
        %3156 = vmatpush1.msra.mxu0 %v3142
        %3157 = vmatprep.subr.mxu0 0.0
        %3158 = vmatpush1.msra.mxu0 0.0
        %3159 = vmatprep.subr.mxu0 0.0
        %3160 = vmatpush1.msra.mxu0 0.0
        %3161 = vmatprep.subr.mxu0 0.0
        %3162 = vmatpush1.msra.mxu0 0.0
        %3163 = vmatprep.subr.mxu0 0.0
        %3164 = vmatpush1.msra.mxu0 0.0
        %3165 = vmatprep.subr.mxu0 0.0
        %3166 = vmatpush1.msra.mxu0 0.0
        %3167 = vmatprep.subr.mxu0 0.0
        %3168 = vmatpush1.msra.mxu0 0.0
        %3169 = vmatprep.subr.mxu0 0.0
        %3170 = vmatpush1.msra.mxu0 0.0
        %3171 = vmatprep.subr.mxu0 0.0
        %3172 = vmatpush1.msra.mxu0 0.0
        %3173 = vmatprep.subr.mxu0 0.0
        %3174 = vmatpush1.msra.mxu0 0.0
        %3175 = vmatprep.subr.mxu0 0.0
        %3176 = vmatpush1.msra.mxu0 0.0
        %3177 = vmatprep.subr.mxu0 0.0
        %3178 = vmatpush1.msra.mxu0 0.0
        %3179 = vmatprep.subr.mxu0 0.0
        %3180 = vmatpush1.msra.mxu0 0.0
        %3181 = vmatprep.subr.mxu0 0.0
        %3182 = vmatpush1.msra.mxu0 0.0
        %3183 = vmatprep.subr.mxu0 0.0
        %3184 = vmatpush1.msra.mxu0 0.0
        %3185 = vmatprep.subr.mxu0 0.0
        %3186 = vmatpush1.msra.mxu0 0.0
        %3187 = vmatprep.subr.mxu0 0.0
        %3188 = vmatpush1.msra.mxu0 0.0
        %3189 = vmatprep.subr.mxu0 0.0
        %3190 = vmatpush1.msra.mxu0 0.0
        %3191 = vmatprep.subr.mxu0 0.0
        %3192 = vmatpush1.msra.mxu0 0.0
        %3193 = vmatprep.subr.mxu0 0.0
        %3194 = vmatpush1.msra.mxu0 0.0
        %3195 = vmatprep.subr.mxu0 0.0
        %3196 = vmatpush1.msra.mxu0 0.0
        %3197 = vmatprep.subr.mxu0 0.0
        %3198 = vmatpush1.msra.mxu0 0.0
        %3199 = vmatprep.subr.mxu0 0.0
        %3200 = vmatpush1.msra.mxu0 0.0
        %3201 = vmatprep.subr.mxu0 0.0
        %3202 = vmatpush1.msra.mxu0 0.0
        %3203 = vmatprep.subr.mxu0 0.0
        %3204 = vmatpush1.msra.mxu0 0.0
        %3205 = vmatprep.subr.mxu0 0.0
        %3206 = vmatpush1.msra.mxu0 0.0
        %3207 = vmatprep.subr.mxu0 0.0
        %3208 = vmatpush1.msra.mxu0 0.0
        %3209 = vmatprep.subr.mxu0 0.0
        %3210 = vmatpush1.msra.mxu0 0.0
        %3211 = vmatprep.subr.mxu0 0.0
        %3212 = vmatpush1.msra.mxu0 0.0
        %3213 = vmatprep.subr.mxu0 0.0
        %3214 = vmatpush1.msra.mxu0 0.0
        %3215 = vmatprep.subr.mxu0 0.0
        %3216 = vmatpush1.msra.mxu0 0.0
        %3217 = vmatprep.subr.mxu0 0.0
        %3218 = vmatpush1.msra.mxu0 0.0
        %3219 = vmatprep.mubr.f32.mxu0 0.0
        %3220 = vmatmul.mubr.f32.gmra.mrb[0].mxu0 %v3144
        %v3221 = vpop.f32.mrb[0].mxu0
        %v3222 = vadd.f32 0.0, %v3221
        %v3223 = vpop.f32.mrb[0].mxu0
        %3224 = vmatprep.mubr.f32.mxu0 0.0
        %3225 = vmatmul.mubr.f32.gmra.mrb[0].mxu0 %v3147
        %v3226 = vpop.f32.mrb[0].mxu0
        %v3227 = vadd.f32 0.0, %v3226
        %v3228 = vpop.f32.mrb[0].mxu0
        %3229 = vmatprep.mubr.f32.mxu0 0.0
        %3230 = vmatmul.mubr.f32.gmra.mrb[0].mxu0 %v3150
        %v3231 = vpop.f32.mrb[0].mxu0
        %v3232 = vadd.f32 0.0, %v3231
        %v3233 = vpop.f32.mrb[0].mxu0
        %3234 = vmatprep.mubr.f32.mxu0 0.0
        %3235 = vmatmul.mubr.f32.gmra.mrb[0].mxu0 %v3153
        %v3236 = vpop.f32.mrb[0].mxu0
        %v3237 = vadd.f32 0.0, %v3236
        %v3238 = vpop.f32.mrb[0].mxu0
        %3239 = vdwg.mxu0
        %3240 = vmatprep.subr.mxu0 %v3117
        %3241 = vmatpush1.xpose.msra.mxu0 %v3116
        %3242 = vmatprep.subr.mxu0 0.0
        %3243 = vmatpush1.xpose.msra.mxu0 0.0
        %3244 = vmatprep.subr.mxu0 0.0
        %3245 = vmatpush1.xpose.msra.mxu0 0.0
        %3246 = vmatprep.subr.mxu0 0.0
        %3247 = vmatpush1.xpose.msra.mxu0 0.0
        %3248 = vmatprep.subr.mxu0 0.0
        %3249 = vmatpush1.xpose.msra.mxu0 0.0
        %3250 = vmatprep.subr.mxu0 0.0
        %3251 = vmatpush1.xpose.msra.mxu0 0.0
        %3252 = vmatprep.subr.mxu0 0.0
        %3253 = vmatpush1.xpose.msra.mxu0 0.0
        %3254 = vmatprep.subr.mxu0 0.0
        %3255 = vmatpush1.xpose.msra.mxu0 0.0
        %3256 = vmatprep.subr.mxu0 0.0
        %3257 = vmatpush1.xpose.msra.mxu0 0.0
        %3258 = vmatprep.subr.mxu0 0.0
        %3259 = vmatpush1.xpose.msra.mxu0 0.0
        %3260 = vmatprep.subr.mxu0 0.0
        %3261 = vmatpush1.xpose.msra.mxu0 0.0
        %3262 = vmatprep.subr.mxu0 0.0
        %3263 = vmatpush1.xpose.msra.mxu0 0.0
        %3264 = vmatprep.subr.mxu0 0.0
        %3265 = vmatpush1.xpose.msra.mxu0 0.0
        %3266 = vmatprep.subr.mxu0 0.0
        %3267 = vmatpush1.xpose.msra.mxu0 0.0
        %3268 = vmatprep.subr.mxu0 0.0
        %3269 = vmatpush1.xpose.msra.mxu0 0.0
        %3270 = vmatprep.subr.mxu0 0.0
        %3271 = vmatpush1.xpose.msra.mxu0 0.0
        %3272 = vmatprep.subr.mxu0 0.0
        %3273 = vmatpush1.xpose.msra.mxu0 0.0
        %3274 = vmatprep.subr.mxu0 0.0
        %3275 = vmatpush1.xpose.msra.mxu0 0.0
        %3276 = vmatprep.subr.mxu0 0.0
        %3277 = vmatpush1.xpose.msra.mxu0 0.0
        %3278 = vmatprep.subr.mxu0 0.0
        %3279 = vmatpush1.xpose.msra.mxu0 0.0
        %3280 = vmatprep.subr.mxu0 0.0
        %3281 = vmatpush1.xpose.msra.mxu0 0.0
        %3282 = vmatprep.subr.mxu0 0.0
        %3283 = vmatpush1.xpose.msra.mxu0 0.0
        %3284 = vmatprep.subr.mxu0 0.0
        %3285 = vmatpush1.xpose.msra.mxu0 0.0
        %3286 = vmatprep.subr.mxu0 0.0
        %3287 = vmatpush1.xpose.msra.mxu0 0.0
        %3288 = vmatprep.subr.mxu0 0.0
        %3289 = vmatpush1.xpose.msra.mxu0 0.0
        %3290 = vmatprep.subr.mxu0 0.0
        %3291 = vmatpush1.xpose.msra.mxu0 0.0
        %3292 = vmatprep.subr.mxu0 0.0
        %3293 = vmatpush1.xpose.msra.mxu0 0.0
        %3294 = vmatprep.subr.mxu0 0.0
        %3295 = vmatpush1.xpose.msra.mxu0 0.0
        %3296 = vmatprep.subr.mxu0 0.0
        %3297 = vmatpush1.xpose.msra.mxu0 0.0
        %3298 = vmatprep.subr.mxu0 0.0
        %3299 = vmatpush1.xpose.msra.mxu0 0.0
        %3300 = vmatprep.subr.mxu0 0.0
        %3301 = vmatpush1.xpose.msra.mxu0 0.0
        %3302 = vmatprep.subr.mxu0 0.0
        %3303 = vmatpush1.xpose.msra.mxu0 0.0
        %3304 = vmatprep.mubr.f32.mxu0 %v3120
        %3305 = vmatmul.mubr.f32.gmra.mrb[0].mxu0 %v3119
        %v3306 = vpop.f32.mrb[0].mxu0
        %v3307 = vadd.f32 %v3222, %v3306
        %v3308 = vpop.f32.mrb[0].mxu0
        %3309 = vmatprep.mubr.f32.mxu0 %v3123
        %3310 = vmatmul.mubr.f32.gmra.mrb[0].mxu0 %v3122
        %v3311 = vpop.f32.mrb[0].mxu0
        %v3312 = vadd.f32 %v3227, %v3311
        %v3313 = vpop.f32.mrb[0].mxu0
        %3314 = vmatprep.mubr.f32.mxu0 %v3126
        %3315 = vmatmul.mubr.f32.gmra.mrb[0].mxu0 %v3125
        %v3316 = vpop.f32.mrb[0].mxu0
        %v3317 = vadd.f32 %v3232, %v3316
        %v3318 = vpop.f32.mrb[0].mxu0
        %3319 = vmatprep.mubr.f32.mxu0 %v3129
        %3320 = vmatmul.mubr.f32.gmra.mrb[0].mxu0 %v3128
        %v3321 = vpop.f32.mrb[0].mxu0
        %v3322 = vadd.f32 %v3237, %v3321
        %v3323 = vpop.f32.mrb[0].mxu0
        %3324 = vdwg.mxu0
        %3326 = vset.pattern.permute.xlu0 0
        %3327 = vperm.xlu0 %3326, %v3132
        %v3328 = vpop.permute.xlu0 %3327
        %3331 = vset.pattern.permute.xlu0 0
        %3332 = vperm.xlu0 %3331, %v3133
        %v3333 = vpop.permute.xlu0 %3332
        %3336 = vset.pattern.permute.xlu0 0
        %3337 = vperm.xlu0 %3336, %v3134
        %v3338 = vpop.permute.xlu0 %3337
        %3341 = vset.pattern.permute.xlu0 0
        %3342 = vperm.xlu0 %3341, %v3135
        %v3343 = vpop.permute.xlu0 %3342
        %v3345 = vadd.f32 %v3307, %v3328
        %v3346 = vadd.f32 %v3312, %v3333
        %v3347 = vadd.f32 %v3317, %v3338
        %v3348 = vadd.f32 %v3322, %v3343
        %v3349 = vmax.f32 %v3345, 0.0
        %v3350 = vmax.f32 %v3346, 0.0
        %v3351 = vmax.f32 %v3347, 0.0
        %v3352 = vmax.f32 %v3348, 0.0
        %s3353 = scalar_lea.vmem %s397, 64
        %v3354 = vld [vmem:[%s3353] sm:$0xff]
        %v3355 = vld [vmem:[%s3353 + $0x8] sm:$0xff]
        %v3356 = vld [vmem:[%s3353 + $0x10] sm:$0xff]
        %v3357 = vld [vmem:[%s3353 + $0x18] sm:$0xff]
        %3359 = vset.pattern.permute.xlu0 0
        %3360 = vperm.xlu0 %3359, %v3136
        %v3361 = vpop.permute.xlu0 %3360
        %3364 = vset.pattern.permute.xlu0 0
        %3365 = vperm.xlu0 %3364, %v3137
        %v3366 = vpop.permute.xlu0 %3365
        %3369 = vset.pattern.permute.xlu0 0
        %3370 = vperm.xlu0 %3369, %v3138
        %v3371 = vpop.permute.xlu0 %3370
        %3374 = vset.pattern.permute.xlu0 0
        %3375 = vperm.xlu0 %3374, %v3139
        %v3376 = vpop.permute.xlu0 %3375
        %v3379 = vsel %vm2486, %v3354, 0
        %v3382 = vsel %vm2486, %v3355, 0
        %v3385 = vsel %vm2486, %v3356, 0
        %v3388 = vsel %vm2486, %v3357, 0
        %3390 = vmatprep.subr.mxu0 0.0
        %3391 = vmatpush1.msra.mxu0 %v3349
        %3392 = vmatprep.subr.mxu0 0.0
        %3393 = vmatpush1.msra.mxu0 %v3350
        %3394 = vmatprep.subr.mxu0 0.0
        %3395 = vmatpush1.msra.mxu0 %v3351
        %3396 = vmatprep.subr.mxu0 0.0
        %3397 = vmatpush1.msra.mxu0 %v3352
        %3398 = vmatprep.subr.mxu0 0.0
        %3399 = vmatpush1.msra.mxu0 0.0
        %3400 = vmatprep.subr.mxu0 0.0
        %3401 = vmatpush1.msra.mxu0 0.0
        %3402 = vmatprep.subr.mxu0 0.0
        %3403 = vmatpush1.msra.mxu0 0.0
        %3404 = vmatprep.subr.mxu0 0.0
        %3405 = vmatpush1.msra.mxu0 0.0
        %3406 = vmatprep.subr.mxu0 0.0
        %3407 = vmatpush1.msra.mxu0 0.0
        %3408 = vmatprep.subr.mxu0 0.0
        %3409 = vmatpush1.msra.mxu0 0.0
        %3410 = vmatprep.subr.mxu0 0.0
        %3411 = vmatpush1.msra.mxu0 0.0
        %3412 = vmatprep.subr.mxu0 0.0
        %3413 = vmatpush1.msra.mxu0 0.0
        %3414 = vmatprep.subr.mxu0 0.0
        %3415 = vmatpush1.msra.mxu0 0.0
        %3416 = vmatprep.subr.mxu0 0.0
        %3417 = vmatpush1.msra.mxu0 0.0
        %3418 = vmatprep.subr.mxu0 0.0
        %3419 = vmatpush1.msra.mxu0 0.0
        %3420 = vmatprep.subr.mxu0 0.0
        %3421 = vmatpush1.msra.mxu0 0.0
        %3422 = vmatprep.subr.mxu0 0.0
        %3423 = vmatpush1.msra.mxu0 0.0
        %3424 = vmatprep.subr.mxu0 0.0
        %3425 = vmatpush1.msra.mxu0 0.0
        %3426 = vmatprep.subr.mxu0 0.0
        %3427 = vmatpush1.msra.mxu0 0.0
        %3428 = vmatprep.subr.mxu0 0.0
        %3429 = vmatpush1.msra.mxu0 0.0
        %3430 = vmatprep.subr.mxu0 0.0
        %3431 = vmatpush1.msra.mxu0 0.0
        %3432 = vmatprep.subr.mxu0 0.0
        %3433 = vmatpush1.msra.mxu0 0.0
        %3434 = vmatprep.subr.mxu0 0.0
        %3435 = vmatpush1.msra.mxu0 0.0
        %3436 = vmatprep.subr.mxu0 0.0
        %3437 = vmatpush1.msra.mxu0 0.0
        %3438 = vmatprep.subr.mxu0 0.0
        %3439 = vmatpush1.msra.mxu0 0.0
        %3440 = vmatprep.subr.mxu0 0.0
        %3441 = vmatpush1.msra.mxu0 0.0
        %3442 = vmatprep.subr.mxu0 0.0
        %3443 = vmatpush1.msra.mxu0 0.0
        %3444 = vmatprep.subr.mxu0 0.0
        %3445 = vmatpush1.msra.mxu0 0.0
        %3446 = vmatprep.subr.mxu0 0.0
        %3447 = vmatpush1.msra.mxu0 0.0
        %3448 = vmatprep.subr.mxu0 0.0
        %3449 = vmatpush1.msra.mxu0 0.0
        %3450 = vmatprep.subr.mxu0 0.0
        %3451 = vmatpush1.msra.mxu0 0.0
        %3452 = vmatprep.subr.mxu0 0.0
        %3453 = vmatpush1.msra.mxu0 0.0
        %3454 = vmatprep.mubr.f32.mxu0 0.0
        %3455 = vmatmul.mubr.f32.gmra.mrb[0].mxu0 %v3379
        %v3456 = vpop.f32.mrb[0].mxu0
        %v3457 = vadd.f32 %v3361, %v3456
        %v3458 = vpop.f32.mrb[0].mxu0
        %3459 = vmatprep.mubr.f32.mxu0 0.0
        %3460 = vmatmul.mubr.f32.gmra.mrb[0].mxu0 %v3382
        %v3461 = vpop.f32.mrb[0].mxu0
        %v3462 = vadd.f32 %v3366, %v3461
        %v3463 = vpop.f32.mrb[0].mxu0
        %3464 = vmatprep.mubr.f32.mxu0 0.0
        %3465 = vmatmul.mubr.f32.gmra.mrb[0].mxu0 %v3385
        %v3466 = vpop.f32.mrb[0].mxu0
        %v3467 = vadd.f32 %v3371, %v3466
        %v3468 = vpop.f32.mrb[0].mxu0
        %3469 = vmatprep.mubr.f32.mxu0 0.0
        %3470 = vmatmul.mubr.f32.gmra.mrb[0].mxu0 %v3388
        %v3471 = vpop.f32.mrb[0].mxu0
        %v3472 = vadd.f32 %v3376, %v3471
        %v3473 = vpop.f32.mrb[0].mxu0
        %3474 = vdwg.mxu0
        %v3475 = vmax.f32 %v3457, 0.0
        %v3476 = vmax.f32 %v3462, 0.0
        %v3477 = vmax.f32 %v3467, 0.0
        %v3478 = vmax.f32 %v3472, 0.0
        %s3479 = scalar_lea.vmem %s403, 8
        %v3480 = vld [vmem:[%s3479] sm:$0xf]
        %3482 = vset.pattern.permute.xlu0 0
        %3483 = vperm.xlu0 %3482, %v3140
        %v3484 = vpop.permute.xlu0 %3483
        %v3487 = vsel %vm2486, %v3480, 0
        %3489 = vmatprep.subr.mxu0 0.0
        %3490 = vmatpush1.msra.mxu0 %v3475
        %3491 = vmatprep.subr.mxu0 0.0
        %3492 = vmatpush1.msra.mxu0 %v3476
        %3493 = vmatprep.subr.mxu0 0.0
        %3494 = vmatpush1.msra.mxu0 %v3477
        %3495 = vmatprep.subr.mxu0 0.0
        %3496 = vmatpush1.msra.mxu0 %v3478
        %3497 = vmatprep.subr.mxu0 0.0
        %3498 = vmatpush1.msra.mxu0 0.0
        %3499 = vmatprep.subr.mxu0 0.0
        %3500 = vmatpush1.msra.mxu0 0.0
        %3501 = vmatprep.subr.mxu0 0.0
        %3502 = vmatpush1.msra.mxu0 0.0
        %3503 = vmatprep.subr.mxu0 0.0
        %3504 = vmatpush1.msra.mxu0 0.0
        %3505 = vmatprep.subr.mxu0 0.0
        %3506 = vmatpush1.msra.mxu0 0.0
        %3507 = vmatprep.subr.mxu0 0.0
        %3508 = vmatpush1.msra.mxu0 0.0
        %3509 = vmatprep.subr.mxu0 0.0
        %3510 = vmatpush1.msra.mxu0 0.0
        %3511 = vmatprep.subr.mxu0 0.0
        %3512 = vmatpush1.msra.mxu0 0.0
        %3513 = vmatprep.subr.mxu0 0.0
        %3514 = vmatpush1.msra.mxu0 0.0
        %3515 = vmatprep.subr.mxu0 0.0
        %3516 = vmatpush1.msra.mxu0 0.0
        %3517 = vmatprep.subr.mxu0 0.0
        %3518 = vmatpush1.msra.mxu0 0.0
        %3519 = vmatprep.subr.mxu0 0.0
        %3520 = vmatpush1.msra.mxu0 0.0
        %3521 = vmatprep.subr.mxu0 0.0
        %3522 = vmatpush1.msra.mxu0 0.0
        %3523 = vmatprep.subr.mxu0 0.0
        %3524 = vmatpush1.msra.mxu0 0.0
        %3525 = vmatprep.subr.mxu0 0.0
        %3526 = vmatpush1.msra.mxu0 0.0
        %3527 = vmatprep.subr.mxu0 0.0
        %3528 = vmatpush1.msra.mxu0 0.0
        %3529 = vmatprep.subr.mxu0 0.0
        %3530 = vmatpush1.msra.mxu0 0.0
        %3531 = vmatprep.subr.mxu0 0.0
        %3532 = vmatpush1.msra.mxu0 0.0
        %3533 = vmatprep.subr.mxu0 0.0
        %3534 = vmatpush1.msra.mxu0 0.0
        %3535 = vmatprep.subr.mxu0 0.0
        %3536 = vmatpush1.msra.mxu0 0.0
        %3537 = vmatprep.subr.mxu0 0.0
        %3538 = vmatpush1.msra.mxu0 0.0
        %3539 = vmatprep.subr.mxu0 0.0
        %3540 = vmatpush1.msra.mxu0 0.0
        %3541 = vmatprep.subr.mxu0 0.0
        %3542 = vmatpush1.msra.mxu0 0.0
        %3543 = vmatprep.subr.mxu0 0.0
        %3544 = vmatpush1.msra.mxu0 0.0
        %3545 = vmatprep.subr.mxu0 0.0
        %3546 = vmatpush1.msra.mxu0 0.0
        %3547 = vmatprep.subr.mxu0 0.0
        %3548 = vmatpush1.msra.mxu0 0.0
        %3549 = vmatprep.subr.mxu0 0.0
        %3550 = vmatpush1.msra.mxu0 0.0
        %3551 = vmatprep.subr.mxu0 0.0
        %3552 = vmatpush1.msra.mxu0 0.0
        %3553 = vmatprep.mubr.f32.mxu0 0.0
        %3554 = vmatmul.mubr.f32.gmra.mrb[0].mxu0 %v3487
        %v3555 = vpop.f32.mrb[0].mxu0
        %v3556 = vadd.f32 %v3484, %v3555
        %v3557 = vpop.f32.mrb[0].mxu0
        %3558 = vdwg.mxu0
        %s3559 = scalar_lea.vmem %s416, 8
        %3560 = vst.msk [vmem:[%s3559] sm:$0xf] %vm2667, %v3556
        %s3561 = scalar_lea.vmem [#allocation2], 48
        %v3562 = vld [vmem:[%s3561] sm:$0xff]
        %v3563 = vld [vmem:[%s3561 + $0x8] sm:$0xff]
        %s3564 = scalar_lea.vmem %s321, 288 [#allocation3]
        %v3565 = vld [vmem:[%s3564] sm:$0xff]
        %v3566 = vld [vmem:[%s3564 + $0x8] sm:$0xff]
        %v3567 = vld [vmem:[%s3564 + $0x10] sm:$0xff]
        %v3568 = vld [vmem:[%s3564 + $0x18] sm:$0xff]
        %v3569 = vld [vmem:[%s3564 + $0x20] sm:$0xff]
        %v3570 = vld [vmem:[%s3564 + $0x28] sm:$0xff]
        %v3571 = vld [vmem:[%s3564 + $0x30] sm:$0xff]
        %v3572 = vld [vmem:[%s3564 + $0x38] sm:$0xff]
        %v3573 = vld [vmem:[%s3564 + $0x40] sm:$0xff]
        %v3574 = vld [vmem:[%s3564 + $0x48] sm:$0xff]
        %v3575 = vld [vmem:[%s3564 + $0x50] sm:$0xff]
        %v3576 = vld [vmem:[%s3564 + $0x58] sm:$0xff]
        %s3577 = scalar_lea.vmem %s410, 216
        %v3578 = vld [vmem:[%s3577] sm:$0xff]
        %v3579 = vld [vmem:[%s3577 + $0x8] sm:$0xff]
        %v3580 = vld [vmem:[%s3577 + $0x10] sm:$0xff]
        %v3581 = vld [vmem:[%s3577 + $0x18] sm:$0xff]
        %v3582 = vld [vmem:[%s3577 + $0x20] sm:$0xff]
        %v3583 = vld [vmem:[%s3577 + $0x28] sm:$0xff]
        %v3584 = vld [vmem:[%s3577 + $0x30] sm:$0xff]
        %v3585 = vld [vmem:[%s3577 + $0x38] sm:$0xff]
        %v3586 = vld [vmem:[%s3577 + $0x40] sm:$0xf]
        %s3587 = scalar_lea.vmem %s389, 24
        %v3588 = vld [vmem:[%s3587] sm:$0xff]
        %v3590 = vsel %vm2251, %v3567, 0
        %v3593 = vsel %vm2251, %v3570, 0
        %v3596 = vsel %vm2251, %v3573, 0
        %v3599 = vsel %vm2251, %v3576, 0
        %3601 = vmatprep.subr.mxu0 0.0
        %3602 = vmatpush1.msra.mxu0 %v3588
        %3603 = vmatprep.subr.mxu0 0.0
        %3604 = vmatpush1.msra.mxu0 0.0
        %3605 = vmatprep.subr.mxu0 0.0
        %3606 = vmatpush1.msra.mxu0 0.0
        %3607 = vmatprep.subr.mxu0 0.0
        %3608 = vmatpush1.msra.mxu0 0.0
        %3609 = vmatprep.subr.mxu0 0.0
        %3610 = vmatpush1.msra.mxu0 0.0
        %3611 = vmatprep.subr.mxu0 0.0
        %3612 = vmatpush1.msra.mxu0 0.0
        %3613 = vmatprep.subr.mxu0 0.0
        %3614 = vmatpush1.msra.mxu0 0.0
        %3615 = vmatprep.subr.mxu0 0.0
        %3616 = vmatpush1.msra.mxu0 0.0
        %3617 = vmatprep.subr.mxu0 0.0
        %3618 = vmatpush1.msra.mxu0 0.0
        %3619 = vmatprep.subr.mxu0 0.0
        %3620 = vmatpush1.msra.mxu0 0.0
        %3621 = vmatprep.subr.mxu0 0.0
        %3622 = vmatpush1.msra.mxu0 0.0
        %3623 = vmatprep.subr.mxu0 0.0
        %3624 = vmatpush1.msra.mxu0 0.0
        %3625 = vmatprep.subr.mxu0 0.0
        %3626 = vmatpush1.msra.mxu0 0.0
        %3627 = vmatprep.subr.mxu0 0.0
        %3628 = vmatpush1.msra.mxu0 0.0
        %3629 = vmatprep.subr.mxu0 0.0
        %3630 = vmatpush1.msra.mxu0 0.0
        %3631 = vmatprep.subr.mxu0 0.0
        %3632 = vmatpush1.msra.mxu0 0.0
        %3633 = vmatprep.subr.mxu0 0.0
        %3634 = vmatpush1.msra.mxu0 0.0
        %3635 = vmatprep.subr.mxu0 0.0
        %3636 = vmatpush1.msra.mxu0 0.0
        %3637 = vmatprep.subr.mxu0 0.0
        %3638 = vmatpush1.msra.mxu0 0.0
        %3639 = vmatprep.subr.mxu0 0.0
        %3640 = vmatpush1.msra.mxu0 0.0
        %3641 = vmatprep.subr.mxu0 0.0
        %3642 = vmatpush1.msra.mxu0 0.0
        %3643 = vmatprep.subr.mxu0 0.0
        %3644 = vmatpush1.msra.mxu0 0.0
        %3645 = vmatprep.subr.mxu0 0.0
        %3646 = vmatpush1.msra.mxu0 0.0
        %3647 = vmatprep.subr.mxu0 0.0
        %3648 = vmatpush1.msra.mxu0 0.0
        %3649 = vmatprep.subr.mxu0 0.0
        %3650 = vmatpush1.msra.mxu0 0.0
        %3651 = vmatprep.subr.mxu0 0.0
        %3652 = vmatpush1.msra.mxu0 0.0
        %3653 = vmatprep.subr.mxu0 0.0
        %3654 = vmatpush1.msra.mxu0 0.0
        %3655 = vmatprep.subr.mxu0 0.0
        %3656 = vmatpush1.msra.mxu0 0.0
        %3657 = vmatprep.subr.mxu0 0.0
        %3658 = vmatpush1.msra.mxu0 0.0
        %3659 = vmatprep.subr.mxu0 0.0
        %3660 = vmatpush1.msra.mxu0 0.0
        %3661 = vmatprep.subr.mxu0 0.0
        %3662 = vmatpush1.msra.mxu0 0.0
        %3663 = vmatprep.subr.mxu0 0.0
        %3664 = vmatpush1.msra.mxu0 0.0
        %3665 = vmatprep.mubr.f32.mxu0 0.0
        %3666 = vmatmul.mubr.f32.gmra.mrb[0].mxu0 %v3590
        %v3667 = vpop.f32.mrb[0].mxu0
        %v3668 = vadd.f32 0.0, %v3667
        %v3669 = vpop.f32.mrb[0].mxu0
        %3670 = vmatprep.mubr.f32.mxu0 0.0
        %3671 = vmatmul.mubr.f32.gmra.mrb[0].mxu0 %v3593
        %v3672 = vpop.f32.mrb[0].mxu0
        %v3673 = vadd.f32 0.0, %v3672
        %v3674 = vpop.f32.mrb[0].mxu0
        %3675 = vmatprep.mubr.f32.mxu0 0.0
        %3676 = vmatmul.mubr.f32.gmra.mrb[0].mxu0 %v3596
        %v3677 = vpop.f32.mrb[0].mxu0
        %v3678 = vadd.f32 0.0, %v3677
        %v3679 = vpop.f32.mrb[0].mxu0
        %3680 = vmatprep.mubr.f32.mxu0 0.0
        %3681 = vmatmul.mubr.f32.gmra.mrb[0].mxu0 %v3599
        %v3682 = vpop.f32.mrb[0].mxu0
        %v3683 = vadd.f32 0.0, %v3682
        %v3684 = vpop.f32.mrb[0].mxu0
        %3685 = vdwg.mxu0
        %3686 = vmatprep.subr.mxu0 %v3563
        %3687 = vmatpush1.xpose.msra.mxu0 %v3562
        %3688 = vmatprep.subr.mxu0 0.0
        %3689 = vmatpush1.xpose.msra.mxu0 0.0
        %3690 = vmatprep.subr.mxu0 0.0
        %3691 = vmatpush1.xpose.msra.mxu0 0.0
        %3692 = vmatprep.subr.mxu0 0.0
        %3693 = vmatpush1.xpose.msra.mxu0 0.0
        %3694 = vmatprep.subr.mxu0 0.0
        %3695 = vmatpush1.xpose.msra.mxu0 0.0
        %3696 = vmatprep.subr.mxu0 0.0
        %3697 = vmatpush1.xpose.msra.mxu0 0.0
        %3698 = vmatprep.subr.mxu0 0.0
        %3699 = vmatpush1.xpose.msra.mxu0 0.0
        %3700 = vmatprep.subr.mxu0 0.0
        %3701 = vmatpush1.xpose.msra.mxu0 0.0
        %3702 = vmatprep.subr.mxu0 0.0
        %3703 = vmatpush1.xpose.msra.mxu0 0.0
        %3704 = vmatprep.subr.mxu0 0.0
        %3705 = vmatpush1.xpose.msra.mxu0 0.0
        %3706 = vmatprep.subr.mxu0 0.0
        %3707 = vmatpush1.xpose.msra.mxu0 0.0
        %3708 = vmatprep.subr.mxu0 0.0
        %3709 = vmatpush1.xpose.msra.mxu0 0.0
        %3710 = vmatprep.subr.mxu0 0.0
        %3711 = vmatpush1.xpose.msra.mxu0 0.0
        %3712 = vmatprep.subr.mxu0 0.0
        %3713 = vmatpush1.xpose.msra.mxu0 0.0
        %3714 = vmatprep.subr.mxu0 0.0
        %3715 = vmatpush1.xpose.msra.mxu0 0.0
        %3716 = vmatprep.subr.mxu0 0.0
        %3717 = vmatpush1.xpose.msra.mxu0 0.0
        %3718 = vmatprep.subr.mxu0 0.0
        %3719 = vmatpush1.xpose.msra.mxu0 0.0
        %3720 = vmatprep.subr.mxu0 0.0
        %3721 = vmatpush1.xpose.msra.mxu0 0.0
        %3722 = vmatprep.subr.mxu0 0.0
        %3723 = vmatpush1.xpose.msra.mxu0 0.0
        %3724 = vmatprep.subr.mxu0 0.0
        %3725 = vmatpush1.xpose.msra.mxu0 0.0
        %3726 = vmatprep.subr.mxu0 0.0
        %3727 = vmatpush1.xpose.msra.mxu0 0.0
        %3728 = vmatprep.subr.mxu0 0.0
        %3729 = vmatpush1.xpose.msra.mxu0 0.0
        %3730 = vmatprep.subr.mxu0 0.0
        %3731 = vmatpush1.xpose.msra.mxu0 0.0
        %3732 = vmatprep.subr.mxu0 0.0
        %3733 = vmatpush1.xpose.msra.mxu0 0.0
        %3734 = vmatprep.subr.mxu0 0.0
        %3735 = vmatpush1.xpose.msra.mxu0 0.0
        %3736 = vmatprep.subr.mxu0 0.0
        %3737 = vmatpush1.xpose.msra.mxu0 0.0
        %3738 = vmatprep.subr.mxu0 0.0
        %3739 = vmatpush1.xpose.msra.mxu0 0.0
        %3740 = vmatprep.subr.mxu0 0.0
        %3741 = vmatpush1.xpose.msra.mxu0 0.0
        %3742 = vmatprep.subr.mxu0 0.0
        %3743 = vmatpush1.xpose.msra.mxu0 0.0
        %3744 = vmatprep.subr.mxu0 0.0
        %3745 = vmatpush1.xpose.msra.mxu0 0.0
        %3746 = vmatprep.subr.mxu0 0.0
        %3747 = vmatpush1.xpose.msra.mxu0 0.0
        %3748 = vmatprep.subr.mxu0 0.0
        %3749 = vmatpush1.xpose.msra.mxu0 0.0
        %3750 = vmatprep.mubr.f32.mxu0 %v3566
        %3751 = vmatmul.mubr.f32.gmra.mrb[0].mxu0 %v3565
        %v3752 = vpop.f32.mrb[0].mxu0
        %v3753 = vadd.f32 %v3668, %v3752
        %v3754 = vpop.f32.mrb[0].mxu0
        %3755 = vmatprep.mubr.f32.mxu0 %v3569
        %3756 = vmatmul.mubr.f32.gmra.mrb[0].mxu0 %v3568
        %v3757 = vpop.f32.mrb[0].mxu0
        %v3758 = vadd.f32 %v3673, %v3757
        %v3759 = vpop.f32.mrb[0].mxu0
        %3760 = vmatprep.mubr.f32.mxu0 %v3572
        %3761 = vmatmul.mubr.f32.gmra.mrb[0].mxu0 %v3571
        %v3762 = vpop.f32.mrb[0].mxu0
        %v3763 = vadd.f32 %v3678, %v3762
        %v3764 = vpop.f32.mrb[0].mxu0
        %3765 = vmatprep.mubr.f32.mxu0 %v3575
        %3766 = vmatmul.mubr.f32.gmra.mrb[0].mxu0 %v3574
        %v3767 = vpop.f32.mrb[0].mxu0
        %v3768 = vadd.f32 %v3683, %v3767
        %v3769 = vpop.f32.mrb[0].mxu0
        %3770 = vdwg.mxu0
        %3772 = vset.pattern.permute.xlu0 0
        %3773 = vperm.xlu0 %3772, %v3578
        %v3774 = vpop.permute.xlu0 %3773
        %3777 = vset.pattern.permute.xlu0 0
        %3778 = vperm.xlu0 %3777, %v3579
        %v3779 = vpop.permute.xlu0 %3778
        %3782 = vset.pattern.permute.xlu0 0
        %3783 = vperm.xlu0 %3782, %v3580
        %v3784 = vpop.permute.xlu0 %3783
        %3787 = vset.pattern.permute.xlu0 0
        %3788 = vperm.xlu0 %3787, %v3581
        %v3789 = vpop.permute.xlu0 %3788
        %v3791 = vadd.f32 %v3753, %v3774
        %v3792 = vadd.f32 %v3758, %v3779
        %v3793 = vadd.f32 %v3763, %v3784
        %v3794 = vadd.f32 %v3768, %v3789
        %v3795 = vmax.f32 %v3791, 0.0
        %v3796 = vmax.f32 %v3792, 0.0
        %v3797 = vmax.f32 %v3793, 0.0
        %v3798 = vmax.f32 %v3794, 0.0
        %s3799 = scalar_lea.vmem %s397, 96
        %v3800 = vld [vmem:[%s3799] sm:$0xff]
        %v3801 = vld [vmem:[%s3799 + $0x8] sm:$0xff]
        %v3802 = vld [vmem:[%s3799 + $0x10] sm:$0xff]
        %v3803 = vld [vmem:[%s3799 + $0x18] sm:$0xff]
        %3805 = vset.pattern.permute.xlu0 0
        %3806 = vperm.xlu0 %3805, %v3582
        %v3807 = vpop.permute.xlu0 %3806
        %3810 = vset.pattern.permute.xlu0 0
        %3811 = vperm.xlu0 %3810, %v3583
        %v3812 = vpop.permute.xlu0 %3811
        %3815 = vset.pattern.permute.xlu0 0
        %3816 = vperm.xlu0 %3815, %v3584
        %v3817 = vpop.permute.xlu0 %3816
        %3820 = vset.pattern.permute.xlu0 0
        %3821 = vperm.xlu0 %3820, %v3585
        %v3822 = vpop.permute.xlu0 %3821
        %v3825 = vsel %vm2486, %v3800, 0
        %v3828 = vsel %vm2486, %v3801, 0
        %v3831 = vsel %vm2486, %v3802, 0
        %v3834 = vsel %vm2486, %v3803, 0
        %3836 = vmatprep.subr.mxu0 0.0
        %3837 = vmatpush1.msra.mxu0 %v3795
        %3838 = vmatprep.subr.mxu0 0.0
        %3839 = vmatpush1.msra.mxu0 %v3796
        %3840 = vmatprep.subr.mxu0 0.0
        %3841 = vmatpush1.msra.mxu0 %v3797
        %3842 = vmatprep.subr.mxu0 0.0
        %3843 = vmatpush1.msra.mxu0 %v3798
        %3844 = vmatprep.subr.mxu0 0.0
        %3845 = vmatpush1.msra.mxu0 0.0
        %3846 = vmatprep.subr.mxu0 0.0
        %3847 = vmatpush1.msra.mxu0 0.0
        %3848 = vmatprep.subr.mxu0 0.0
        %3849 = vmatpush1.msra.mxu0 0.0
        %3850 = vmatprep.subr.mxu0 0.0
        %3851 = vmatpush1.msra.mxu0 0.0
        %3852 = vmatprep.subr.mxu0 0.0
        %3853 = vmatpush1.msra.mxu0 0.0
        %3854 = vmatprep.subr.mxu0 0.0
        %3855 = vmatpush1.msra.mxu0 0.0
        %3856 = vmatprep.subr.mxu0 0.0
        %3857 = vmatpush1.msra.mxu0 0.0
        %3858 = vmatprep.subr.mxu0 0.0
        %3859 = vmatpush1.msra.mxu0 0.0
        %3860 = vmatprep.subr.mxu0 0.0
        %3861 = vmatpush1.msra.mxu0 0.0
        %3862 = vmatprep.subr.mxu0 0.0
        %3863 = vmatpush1.msra.mxu0 0.0
        %3864 = vmatprep.subr.mxu0 0.0
        %3865 = vmatpush1.msra.mxu0 0.0
        %3866 = vmatprep.subr.mxu0 0.0
        %3867 = vmatpush1.msra.mxu0 0.0
        %3868 = vmatprep.subr.mxu0 0.0
        %3869 = vmatpush1.msra.mxu0 0.0
        %3870 = vmatprep.subr.mxu0 0.0
        %3871 = vmatpush1.msra.mxu0 0.0
        %3872 = vmatprep.subr.mxu0 0.0
        %3873 = vmatpush1.msra.mxu0 0.0
        %3874 = vmatprep.subr.mxu0 0.0
        %3875 = vmatpush1.msra.mxu0 0.0
        %3876 = vmatprep.subr.mxu0 0.0
        %3877 = vmatpush1.msra.mxu0 0.0
        %3878 = vmatprep.subr.mxu0 0.0
        %3879 = vmatpush1.msra.mxu0 0.0
        %3880 = vmatprep.subr.mxu0 0.0
        %3881 = vmatpush1.msra.mxu0 0.0
        %3882 = vmatprep.subr.mxu0 0.0
        %3883 = vmatpush1.msra.mxu0 0.0
        %3884 = vmatprep.subr.mxu0 0.0
        %3885 = vmatpush1.msra.mxu0 0.0
        %3886 = vmatprep.subr.mxu0 0.0
        %3887 = vmatpush1.msra.mxu0 0.0
        %3888 = vmatprep.subr.mxu0 0.0
        %3889 = vmatpush1.msra.mxu0 0.0
        %3890 = vmatprep.subr.mxu0 0.0
        %3891 = vmatpush1.msra.mxu0 0.0
        %3892 = vmatprep.subr.mxu0 0.0
        %3893 = vmatpush1.msra.mxu0 0.0
        %3894 = vmatprep.subr.mxu0 0.0
        %3895 = vmatpush1.msra.mxu0 0.0
        %3896 = vmatprep.subr.mxu0 0.0
        %3897 = vmatpush1.msra.mxu0 0.0
        %3898 = vmatprep.subr.mxu0 0.0
        %3899 = vmatpush1.msra.mxu0 0.0
        %3900 = vmatprep.mubr.f32.mxu0 0.0
        %3901 = vmatmul.mubr.f32.gmra.mrb[0].mxu0 %v3825
        %v3902 = vpop.f32.mrb[0].mxu0
        %v3903 = vadd.f32 %v3807, %v3902
        %v3904 = vpop.f32.mrb[0].mxu0
        %3905 = vmatprep.mubr.f32.mxu0 0.0
        %3906 = vmatmul.mubr.f32.gmra.mrb[0].mxu0 %v3828
        %v3907 = vpop.f32.mrb[0].mxu0
        %v3908 = vadd.f32 %v3812, %v3907
        %v3909 = vpop.f32.mrb[0].mxu0
        %3910 = vmatprep.mubr.f32.mxu0 0.0
        %3911 = vmatmul.mubr.f32.gmra.mrb[0].mxu0 %v3831
        %v3912 = vpop.f32.mrb[0].mxu0
        %v3913 = vadd.f32 %v3817, %v3912
        %v3914 = vpop.f32.mrb[0].mxu0
        %3915 = vmatprep.mubr.f32.mxu0 0.0
        %3916 = vmatmul.mubr.f32.gmra.mrb[0].mxu0 %v3834
        %v3917 = vpop.f32.mrb[0].mxu0
        %v3918 = vadd.f32 %v3822, %v3917
        %v3919 = vpop.f32.mrb[0].mxu0
        %3920 = vdwg.mxu0
        %v3921 = vmax.f32 %v3903, 0.0
        %v3922 = vmax.f32 %v3908, 0.0
        %v3923 = vmax.f32 %v3913, 0.0
        %v3924 = vmax.f32 %v3918, 0.0
        %s3925 = scalar_lea.vmem %s403, 12
        %v3926 = vld [vmem:[%s3925] sm:$0xf]
        %3928 = vset.pattern.permute.xlu0 0
        %3929 = vperm.xlu0 %3928, %v3586
        %v3930 = vpop.permute.xlu0 %3929
        %v3933 = vsel %vm2486, %v3926, 0
        %3935 = vmatprep.subr.mxu0 0.0
        %3936 = vmatpush1.msra.mxu0 %v3921
        %3937 = vmatprep.subr.mxu0 0.0
        %3938 = vmatpush1.msra.mxu0 %v3922
        %3939 = vmatprep.subr.mxu0 0.0
        %3940 = vmatpush1.msra.mxu0 %v3923
        %3941 = vmatprep.subr.mxu0 0.0
        %3942 = vmatpush1.msra.mxu0 %v3924
        %3943 = vmatprep.subr.mxu0 0.0
        %3944 = vmatpush1.msra.mxu0 0.0
        %3945 = vmatprep.subr.mxu0 0.0
        %3946 = vmatpush1.msra.mxu0 0.0
        %3947 = vmatprep.subr.mxu0 0.0
        %3948 = vmatpush1.msra.mxu0 0.0
        %3949 = vmatprep.subr.mxu0 0.0
        %3950 = vmatpush1.msra.mxu0 0.0
        %3951 = vmatprep.subr.mxu0 0.0
        %3952 = vmatpush1.msra.mxu0 0.0
        %3953 = vmatprep.subr.mxu0 0.0
        %3954 = vmatpush1.msra.mxu0 0.0
        %3955 = vmatprep.subr.mxu0 0.0
        %3956 = vmatpush1.msra.mxu0 0.0
        %3957 = vmatprep.subr.mxu0 0.0
        %3958 = vmatpush1.msra.mxu0 0.0
        %3959 = vmatprep.subr.mxu0 0.0
        %3960 = vmatpush1.msra.mxu0 0.0
        %3961 = vmatprep.subr.mxu0 0.0
        %3962 = vmatpush1.msra.mxu0 0.0
        %3963 = vmatprep.subr.mxu0 0.0
        %3964 = vmatpush1.msra.mxu0 0.0
        %3965 = vmatprep.subr.mxu0 0.0
        %3966 = vmatpush1.msra.mxu0 0.0
        %3967 = vmatprep.subr.mxu0 0.0
        %3968 = vmatpush1.msra.mxu0 0.0
        %3969 = vmatprep.subr.mxu0 0.0
        %3970 = vmatpush1.msra.mxu0 0.0
        %3971 = vmatprep.subr.mxu0 0.0
        %3972 = vmatpush1.msra.mxu0 0.0
        %3973 = vmatprep.subr.mxu0 0.0
        %3974 = vmatpush1.msra.mxu0 0.0
        %3975 = vmatprep.subr.mxu0 0.0
        %3976 = vmatpush1.msra.mxu0 0.0
        %3977 = vmatprep.subr.mxu0 0.0
        %3978 = vmatpush1.msra.mxu0 0.0
        %3979 = vmatprep.subr.mxu0 0.0
        %3980 = vmatpush1.msra.mxu0 0.0
        %3981 = vmatprep.subr.mxu0 0.0
        %3982 = vmatpush1.msra.mxu0 0.0
        %3983 = vmatprep.subr.mxu0 0.0
        %3984 = vmatpush1.msra.mxu0 0.0
        %3985 = vmatprep.subr.mxu0 0.0
        %3986 = vmatpush1.msra.mxu0 0.0
        %3987 = vmatprep.subr.mxu0 0.0
        %3988 = vmatpush1.msra.mxu0 0.0
        %3989 = vmatprep.subr.mxu0 0.0
        %3990 = vmatpush1.msra.mxu0 0.0
        %3991 = vmatprep.subr.mxu0 0.0
        %3992 = vmatpush1.msra.mxu0 0.0
        %3993 = vmatprep.subr.mxu0 0.0
        %3994 = vmatpush1.msra.mxu0 0.0
        %3995 = vmatprep.subr.mxu0 0.0
        %3996 = vmatpush1.msra.mxu0 0.0
        %3997 = vmatprep.subr.mxu0 0.0
        %3998 = vmatpush1.msra.mxu0 0.0
        %3999 = vmatprep.mubr.f32.mxu0 0.0
        %4000 = vmatmul.mubr.f32.gmra.mrb[0].mxu0 %v3933
        %v4001 = vpop.f32.mrb[0].mxu0
        %v4002 = vadd.f32 %v3930, %v4001
        %v4003 = vpop.f32.mrb[0].mxu0
        %4004 = vdwg.mxu0
        %s4005 = scalar_lea.vmem %s416, 12
        %4006 = vst.msk [vmem:[%s4005] sm:$0xf] %vm2667, %v4002
        %s4007 = scalar_lea.vmem [#allocation2], 64
        %v4008 = vld [vmem:[%s4007] sm:$0xff]
        %v4009 = vld [vmem:[%s4007 + $0x8] sm:$0xff]
        %s4010 = scalar_lea.vmem %s321, 384 [#allocation3]
        %v4011 = vld [vmem:[%s4010] sm:$0xff]
        %v4012 = vld [vmem:[%s4010 + $0x8] sm:$0xff]
        %v4013 = vld [vmem:[%s4010 + $0x10] sm:$0xff]
        %v4014 = vld [vmem:[%s4010 + $0x18] sm:$0xff]
        %v4015 = vld [vmem:[%s4010 + $0x20] sm:$0xff]
        %v4016 = vld [vmem:[%s4010 + $0x28] sm:$0xff]
        %v4017 = vld [vmem:[%s4010 + $0x30] sm:$0xff]
        %v4018 = vld [vmem:[%s4010 + $0x38] sm:$0xff]
        %v4019 = vld [vmem:[%s4010 + $0x40] sm:$0xff]
        %v4020 = vld [vmem:[%s4010 + $0x48] sm:$0xff]
        %v4021 = vld [vmem:[%s4010 + $0x50] sm:$0xff]
        %v4022 = vld [vmem:[%s4010 + $0x58] sm:$0xff]
        %s4023 = scalar_lea.vmem %s410, 288
        %v4024 = vld [vmem:[%s4023] sm:$0xff]
        %v4025 = vld [vmem:[%s4023 + $0x8] sm:$0xff]
        %v4026 = vld [vmem:[%s4023 + $0x10] sm:$0xff]
        %v4027 = vld [vmem:[%s4023 + $0x18] sm:$0xff]
        %v4028 = vld [vmem:[%s4023 + $0x20] sm:$0xff]
        %v4029 = vld [vmem:[%s4023 + $0x28] sm:$0xff]
        %v4030 = vld [vmem:[%s4023 + $0x30] sm:$0xff]
        %v4031 = vld [vmem:[%s4023 + $0x38] sm:$0xff]
        %v4032 = vld [vmem:[%s4023 + $0x40] sm:$0xf]
        %s4033 = scalar_lea.vmem %s389, 32
        %v4034 = vld [vmem:[%s4033] sm:$0xff]
        %v4036 = vsel %vm2251, %v4013, 0
        %v4039 = vsel %vm2251, %v4016, 0
        %v4042 = vsel %vm2251, %v4019, 0
        %v4045 = vsel %vm2251, %v4022, 0
        %4047 = vmatprep.subr.mxu0 0.0
        %4048 = vmatpush1.msra.mxu0 %v4034
        %4049 = vmatprep.subr.mxu0 0.0
        %4050 = vmatpush1.msra.mxu0 0.0
        %4051 = vmatprep.subr.mxu0 0.0
        %4052 = vmatpush1.msra.mxu0 0.0
        %4053 = vmatprep.subr.mxu0 0.0
        %4054 = vmatpush1.msra.mxu0 0.0
        %4055 = vmatprep.subr.mxu0 0.0
        %4056 = vmatpush1.msra.mxu0 0.0
        %4057 = vmatprep.subr.mxu0 0.0
        %4058 = vmatpush1.msra.mxu0 0.0
        %4059 = vmatprep.subr.mxu0 0.0
        %4060 = vmatpush1.msra.mxu0 0.0
        %4061 = vmatprep.subr.mxu0 0.0
        %4062 = vmatpush1.msra.mxu0 0.0
        %4063 = vmatprep.subr.mxu0 0.0
        %4064 = vmatpush1.msra.mxu0 0.0
        %4065 = vmatprep.subr.mxu0 0.0
        %4066 = vmatpush1.msra.mxu0 0.0
        %4067 = vmatprep.subr.mxu0 0.0
        %4068 = vmatpush1.msra.mxu0 0.0
        %4069 = vmatprep.subr.mxu0 0.0
        %4070 = vmatpush1.msra.mxu0 0.0
        %4071 = vmatprep.subr.mxu0 0.0
        %4072 = vmatpush1.msra.mxu0 0.0
        %4073 = vmatprep.subr.mxu0 0.0
        %4074 = vmatpush1.msra.mxu0 0.0
        %4075 = vmatprep.subr.mxu0 0.0
        %4076 = vmatpush1.msra.mxu0 0.0
        %4077 = vmatprep.subr.mxu0 0.0
        %4078 = vmatpush1.msra.mxu0 0.0
        %4079 = vmatprep.subr.mxu0 0.0
        %4080 = vmatpush1.msra.mxu0 0.0
        %4081 = vmatprep.subr.mxu0 0.0
        %4082 = vmatpush1.msra.mxu0 0.0
        %4083 = vmatprep.subr.mxu0 0.0
        %4084 = vmatpush1.msra.mxu0 0.0
        %4085 = vmatprep.subr.mxu0 0.0
        %4086 = vmatpush1.msra.mxu0 0.0
        %4087 = vmatprep.subr.mxu0 0.0
        %4088 = vmatpush1.msra.mxu0 0.0
        %4089 = vmatprep.subr.mxu0 0.0
        %4090 = vmatpush1.msra.mxu0 0.0
        %4091 = vmatprep.subr.mxu0 0.0
        %4092 = vmatpush1.msra.mxu0 0.0
        %4093 = vmatprep.subr.mxu0 0.0
        %4094 = vmatpush1.msra.mxu0 0.0
        %4095 = vmatprep.subr.mxu0 0.0
        %4096 = vmatpush1.msra.mxu0 0.0
        %4097 = vmatprep.subr.mxu0 0.0
        %4098 = vmatpush1.msra.mxu0 0.0
        %4099 = vmatprep.subr.mxu0 0.0
        %4100 = vmatpush1.msra.mxu0 0.0
        %4101 = vmatprep.subr.mxu0 0.0
        %4102 = vmatpush1.msra.mxu0 0.0
        %4103 = vmatprep.subr.mxu0 0.0
        %4104 = vmatpush1.msra.mxu0 0.0
        %4105 = vmatprep.subr.mxu0 0.0
        %4106 = vmatpush1.msra.mxu0 0.0
        %4107 = vmatprep.subr.mxu0 0.0
        %4108 = vmatpush1.msra.mxu0 0.0
        %4109 = vmatprep.subr.mxu0 0.0
        %4110 = vmatpush1.msra.mxu0 0.0
        %4111 = vmatprep.mubr.f32.mxu0 0.0
        %4112 = vmatmul.mubr.f32.gmra.mrb[0].mxu0 %v4036
        %v4113 = vpop.f32.mrb[0].mxu0
        %v4114 = vadd.f32 0.0, %v4113
        %v4115 = vpop.f32.mrb[0].mxu0
        %4116 = vmatprep.mubr.f32.mxu0 0.0
        %4117 = vmatmul.mubr.f32.gmra.mrb[0].mxu0 %v4039
        %v4118 = vpop.f32.mrb[0].mxu0
        %v4119 = vadd.f32 0.0, %v4118
        %v4120 = vpop.f32.mrb[0].mxu0
        %4121 = vmatprep.mubr.f32.mxu0 0.0
        %4122 = vmatmul.mubr.f32.gmra.mrb[0].mxu0 %v4042
        %v4123 = vpop.f32.mrb[0].mxu0
        %v4124 = vadd.f32 0.0, %v4123
        %v4125 = vpop.f32.mrb[0].mxu0
        %4126 = vmatprep.mubr.f32.mxu0 0.0
        %4127 = vmatmul.mubr.f32.gmra.mrb[0].mxu0 %v4045
        %v4128 = vpop.f32.mrb[0].mxu0
        %v4129 = vadd.f32 0.0, %v4128
        %v4130 = vpop.f32.mrb[0].mxu0
        %4131 = vdwg.mxu0
        %4132 = vmatprep.subr.mxu0 %v4009
        %4133 = vmatpush1.xpose.msra.mxu0 %v4008
        %4134 = vmatprep.subr.mxu0 0.0
        %4135 = vmatpush1.xpose.msra.mxu0 0.0
        %4136 = vmatprep.subr.mxu0 0.0
        %4137 = vmatpush1.xpose.msra.mxu0 0.0
        %4138 = vmatprep.subr.mxu0 0.0
        %4139 = vmatpush1.xpose.msra.mxu0 0.0
        %4140 = vmatprep.subr.mxu0 0.0
        %4141 = vmatpush1.xpose.msra.mxu0 0.0
        %4142 = vmatprep.subr.mxu0 0.0
        %4143 = vmatpush1.xpose.msra.mxu0 0.0
        %4144 = vmatprep.subr.mxu0 0.0
        %4145 = vmatpush1.xpose.msra.mxu0 0.0
        %4146 = vmatprep.subr.mxu0 0.0
        %4147 = vmatpush1.xpose.msra.mxu0 0.0
        %4148 = vmatprep.subr.mxu0 0.0
        %4149 = vmatpush1.xpose.msra.mxu0 0.0
        %4150 = vmatprep.subr.mxu0 0.0
        %4151 = vmatpush1.xpose.msra.mxu0 0.0
        %4152 = vmatprep.subr.mxu0 0.0
        %4153 = vmatpush1.xpose.msra.mxu0 0.0
        %4154 = vmatprep.subr.mxu0 0.0
        %4155 = vmatpush1.xpose.msra.mxu0 0.0
        %4156 = vmatprep.subr.mxu0 0.0
        %4157 = vmatpush1.xpose.msra.mxu0 0.0
        %4158 = vmatprep.subr.mxu0 0.0
        %4159 = vmatpush1.xpose.msra.mxu0 0.0
        %4160 = vmatprep.subr.mxu0 0.0
        %4161 = vmatpush1.xpose.msra.mxu0 0.0
        %4162 = vmatprep.subr.mxu0 0.0
        %4163 = vmatpush1.xpose.msra.mxu0 0.0
        %4164 = vmatprep.subr.mxu0 0.0
        %4165 = vmatpush1.xpose.msra.mxu0 0.0
        %4166 = vmatprep.subr.mxu0 0.0
        %4167 = vmatpush1.xpose.msra.mxu0 0.0
        %4168 = vmatprep.subr.mxu0 0.0
        %4169 = vmatpush1.xpose.msra.mxu0 0.0
        %4170 = vmatprep.subr.mxu0 0.0
        %4171 = vmatpush1.xpose.msra.mxu0 0.0
        %4172 = vmatprep.subr.mxu0 0.0
        %4173 = vmatpush1.xpose.msra.mxu0 0.0
        %4174 = vmatprep.subr.mxu0 0.0
        %4175 = vmatpush1.xpose.msra.mxu0 0.0
        %4176 = vmatprep.subr.mxu0 0.0
        %4177 = vmatpush1.xpose.msra.mxu0 0.0
        %4178 = vmatprep.subr.mxu0 0.0
        %4179 = vmatpush1.xpose.msra.mxu0 0.0
        %4180 = vmatprep.subr.mxu0 0.0
        %4181 = vmatpush1.xpose.msra.mxu0 0.0
        %4182 = vmatprep.subr.mxu0 0.0
        %4183 = vmatpush1.xpose.msra.mxu0 0.0
        %4184 = vmatprep.subr.mxu0 0.0
        %4185 = vmatpush1.xpose.msra.mxu0 0.0
        %4186 = vmatprep.subr.mxu0 0.0
        %4187 = vmatpush1.xpose.msra.mxu0 0.0
        %4188 = vmatprep.subr.mxu0 0.0
        %4189 = vmatpush1.xpose.msra.mxu0 0.0
        %4190 = vmatprep.subr.mxu0 0.0
        %4191 = vmatpush1.xpose.msra.mxu0 0.0
        %4192 = vmatprep.subr.mxu0 0.0
        %4193 = vmatpush1.xpose.msra.mxu0 0.0
        %4194 = vmatprep.subr.mxu0 0.0
        %4195 = vmatpush1.xpose.msra.mxu0 0.0
        %4196 = vmatprep.mubr.f32.mxu0 %v4012
        %4197 = vmatmul.mubr.f32.gmra.mrb[0].mxu0 %v4011
        %v4198 = vpop.f32.mrb[0].mxu0
        %v4199 = vadd.f32 %v4114, %v4198
        %v4200 = vpop.f32.mrb[0].mxu0
        %4201 = vmatprep.mubr.f32.mxu0 %v4015
        %4202 = vmatmul.mubr.f32.gmra.mrb[0].mxu0 %v4014
        %v4203 = vpop.f32.mrb[0].mxu0
        %v4204 = vadd.f32 %v4119, %v4203
        %v4205 = vpop.f32.mrb[0].mxu0
        %4206 = vmatprep.mubr.f32.mxu0 %v4018
        %4207 = vmatmul.mubr.f32.gmra.mrb[0].mxu0 %v4017
        %v4208 = vpop.f32.mrb[0].mxu0
        %v4209 = vadd.f32 %v4124, %v4208
        %v4210 = vpop.f32.mrb[0].mxu0
        %4211 = vmatprep.mubr.f32.mxu0 %v4021
        %4212 = vmatmul.mubr.f32.gmra.mrb[0].mxu0 %v4020
        %v4213 = vpop.f32.mrb[0].mxu0
        %v4214 = vadd.f32 %v4129, %v4213
        %v4215 = vpop.f32.mrb[0].mxu0
        %4216 = vdwg.mxu0
        %4218 = vset.pattern.permute.xlu0 0
        %4219 = vperm.xlu0 %4218, %v4024
        %v4220 = vpop.permute.xlu0 %4219
        %4223 = vset.pattern.permute.xlu0 0
        %4224 = vperm.xlu0 %4223, %v4025
        %v4225 = vpop.permute.xlu0 %4224
        %4228 = vset.pattern.permute.xlu0 0
        %4229 = vperm.xlu0 %4228, %v4026
        %v4230 = vpop.permute.xlu0 %4229
        %4233 = vset.pattern.permute.xlu0 0
        %4234 = vperm.xlu0 %4233, %v4027
        %v4235 = vpop.permute.xlu0 %4234
        %v4237 = vadd.f32 %v4199, %v4220
        %v4238 = vadd.f32 %v4204, %v4225
        %v4239 = vadd.f32 %v4209, %v4230
        %v4240 = vadd.f32 %v4214, %v4235
        %v4241 = vmax.f32 %v4237, 0.0
        %v4242 = vmax.f32 %v4238, 0.0
        %v4243 = vmax.f32 %v4239, 0.0
        %v4244 = vmax.f32 %v4240, 0.0
        %s4245 = scalar_lea.vmem %s397, 128
        %v4246 = vld [vmem:[%s4245] sm:$0xff]
        %v4247 = vld [vmem:[%s4245 + $0x8] sm:$0xff]
        %v4248 = vld [vmem:[%s4245 + $0x10] sm:$0xff]
        %v4249 = vld [vmem:[%s4245 + $0x18] sm:$0xff]
        %4251 = vset.pattern.permute.xlu0 0
        %4252 = vperm.xlu0 %4251, %v4028
        %v4253 = vpop.permute.xlu0 %4252
        %4256 = vset.pattern.permute.xlu0 0
        %4257 = vperm.xlu0 %4256, %v4029
        %v4258 = vpop.permute.xlu0 %4257
        %4261 = vset.pattern.permute.xlu0 0
        %4262 = vperm.xlu0 %4261, %v4030
        %v4263 = vpop.permute.xlu0 %4262
        %4266 = vset.pattern.permute.xlu0 0
        %4267 = vperm.xlu0 %4266, %v4031
        %v4268 = vpop.permute.xlu0 %4267
        %v4271 = vsel %vm2486, %v4246, 0
        %v4274 = vsel %vm2486, %v4247, 0
        %v4277 = vsel %vm2486, %v4248, 0
        %v4280 = vsel %vm2486, %v4249, 0
        %4282 = vmatprep.subr.mxu0 0.0
        %4283 = vmatpush1.msra.mxu0 %v4241
        %4284 = vmatprep.subr.mxu0 0.0
        %4285 = vmatpush1.msra.mxu0 %v4242
        %4286 = vmatprep.subr.mxu0 0.0
        %4287 = vmatpush1.msra.mxu0 %v4243
        %4288 = vmatprep.subr.mxu0 0.0
        %4289 = vmatpush1.msra.mxu0 %v4244
        %4290 = vmatprep.subr.mxu0 0.0
        %4291 = vmatpush1.msra.mxu0 0.0
        %4292 = vmatprep.subr.mxu0 0.0
        %4293 = vmatpush1.msra.mxu0 0.0
        %4294 = vmatprep.subr.mxu0 0.0
        %4295 = vmatpush1.msra.mxu0 0.0
        %4296 = vmatprep.subr.mxu0 0.0
        %4297 = vmatpush1.msra.mxu0 0.0
        %4298 = vmatprep.subr.mxu0 0.0
        %4299 = vmatpush1.msra.mxu0 0.0
        %4300 = vmatprep.subr.mxu0 0.0
        %4301 = vmatpush1.msra.mxu0 0.0
        %4302 = vmatprep.subr.mxu0 0.0
        %4303 = vmatpush1.msra.mxu0 0.0
        %4304 = vmatprep.subr.mxu0 0.0
        %4305 = vmatpush1.msra.mxu0 0.0
        %4306 = vmatprep.subr.mxu0 0.0
        %4307 = vmatpush1.msra.mxu0 0.0
        %4308 = vmatprep.subr.mxu0 0.0
        %4309 = vmatpush1.msra.mxu0 0.0
        %4310 = vmatprep.subr.mxu0 0.0
        %4311 = vmatpush1.msra.mxu0 0.0
        %4312 = vmatprep.subr.mxu0 0.0
        %4313 = vmatpush1.msra.mxu0 0.0
        %4314 = vmatprep.subr.mxu0 0.0
        %4315 = vmatpush1.msra.mxu0 0.0
        %4316 = vmatprep.subr.mxu0 0.0
        %4317 = vmatpush1.msra.mxu0 0.0
        %4318 = vmatprep.subr.mxu0 0.0
        %4319 = vmatpush1.msra.mxu0 0.0
        %4320 = vmatprep.subr.mxu0 0.0
        %4321 = vmatpush1.msra.mxu0 0.0
        %4322 = vmatprep.subr.mxu0 0.0
        %4323 = vmatpush1.msra.mxu0 0.0
        %4324 = vmatprep.subr.mxu0 0.0
        %4325 = vmatpush1.msra.mxu0 0.0
        %4326 = vmatprep.subr.mxu0 0.0
        %4327 = vmatpush1.msra.mxu0 0.0
        %4328 = vmatprep.subr.mxu0 0.0
        %4329 = vmatpush1.msra.mxu0 0.0
        %4330 = vmatprep.subr.mxu0 0.0
        %4331 = vmatpush1.msra.mxu0 0.0
        %4332 = vmatprep.subr.mxu0 0.0
        %4333 = vmatpush1.msra.mxu0 0.0
        %4334 = vmatprep.subr.mxu0 0.0
        %4335 = vmatpush1.msra.mxu0 0.0
        %4336 = vmatprep.subr.mxu0 0.0
        %4337 = vmatpush1.msra.mxu0 0.0
        %4338 = vmatprep.subr.mxu0 0.0
        %4339 = vmatpush1.msra.mxu0 0.0
        %4340 = vmatprep.subr.mxu0 0.0
        %4341 = vmatpush1.msra.mxu0 0.0
        %4342 = vmatprep.subr.mxu0 0.0
        %4343 = vmatpush1.msra.mxu0 0.0
        %4344 = vmatprep.subr.mxu0 0.0
        %4345 = vmatpush1.msra.mxu0 0.0
        %4346 = vmatprep.mubr.f32.mxu0 0.0
        %4347 = vmatmul.mubr.f32.gmra.mrb[0].mxu0 %v4271
        %v4348 = vpop.f32.mrb[0].mxu0
        %v4349 = vadd.f32 %v4253, %v4348
        %v4350 = vpop.f32.mrb[0].mxu0
        %4351 = vmatprep.mubr.f32.mxu0 0.0
        %4352 = vmatmul.mubr.f32.gmra.mrb[0].mxu0 %v4274
        %v4353 = vpop.f32.mrb[0].mxu0
        %v4354 = vadd.f32 %v4258, %v4353
        %v4355 = vpop.f32.mrb[0].mxu0
        %4356 = vmatprep.mubr.f32.mxu0 0.0
        %4357 = vmatmul.mubr.f32.gmra.mrb[0].mxu0 %v4277
        %v4358 = vpop.f32.mrb[0].mxu0
        %v4359 = vadd.f32 %v4263, %v4358
        %v4360 = vpop.f32.mrb[0].mxu0
        %4361 = vmatprep.mubr.f32.mxu0 0.0
        %4362 = vmatmul.mubr.f32.gmra.mrb[0].mxu0 %v4280
        %v4363 = vpop.f32.mrb[0].mxu0
        %v4364 = vadd.f32 %v4268, %v4363
        %v4365 = vpop.f32.mrb[0].mxu0
        %4366 = vdwg.mxu0
        %v4367 = vmax.f32 %v4349, 0.0
        %v4368 = vmax.f32 %v4354, 0.0
        %v4369 = vmax.f32 %v4359, 0.0
        %v4370 = vmax.f32 %v4364, 0.0
        %s4371 = scalar_lea.vmem %s403, 16
        %v4372 = vld [vmem:[%s4371] sm:$0xf]
        %4374 = vset.pattern.permute.xlu0 0
        %4375 = vperm.xlu0 %4374, %v4032
        %v4376 = vpop.permute.xlu0 %4375
        %v4379 = vsel %vm2486, %v4372, 0
        %4381 = vmatprep.subr.mxu0 0.0
        %4382 = vmatpush1.msra.mxu0 %v4367
        %4383 = vmatprep.subr.mxu0 0.0
        %4384 = vmatpush1.msra.mxu0 %v4368
        %4385 = vmatprep.subr.mxu0 0.0
        %4386 = vmatpush1.msra.mxu0 %v4369
        %4387 = vmatprep.subr.mxu0 0.0
        %4388 = vmatpush1.msra.mxu0 %v4370
        %4389 = vmatprep.subr.mxu0 0.0
        %4390 = vmatpush1.msra.mxu0 0.0
        %4391 = vmatprep.subr.mxu0 0.0
        %4392 = vmatpush1.msra.mxu0 0.0
        %4393 = vmatprep.subr.mxu0 0.0
        %4394 = vmatpush1.msra.mxu0 0.0
        %4395 = vmatprep.subr.mxu0 0.0
        %4396 = vmatpush1.msra.mxu0 0.0
        %4397 = vmatprep.subr.mxu0 0.0
        %4398 = vmatpush1.msra.mxu0 0.0
        %4399 = vmatprep.subr.mxu0 0.0
        %4400 = vmatpush1.msra.mxu0 0.0
        %4401 = vmatprep.subr.mxu0 0.0
        %4402 = vmatpush1.msra.mxu0 0.0
        %4403 = vmatprep.subr.mxu0 0.0
        %4404 = vmatpush1.msra.mxu0 0.0
        %4405 = vmatprep.subr.mxu0 0.0
        %4406 = vmatpush1.msra.mxu0 0.0
        %4407 = vmatprep.subr.mxu0 0.0
        %4408 = vmatpush1.msra.mxu0 0.0
        %4409 = vmatprep.subr.mxu0 0.0
        %4410 = vmatpush1.msra.mxu0 0.0
        %4411 = vmatprep.subr.mxu0 0.0
        %4412 = vmatpush1.msra.mxu0 0.0
        %4413 = vmatprep.subr.mxu0 0.0
        %4414 = vmatpush1.msra.mxu0 0.0
        %4415 = vmatprep.subr.mxu0 0.0
        %4416 = vmatpush1.msra.mxu0 0.0
        %4417 = vmatprep.subr.mxu0 0.0
        %4418 = vmatpush1.msra.mxu0 0.0
        %4419 = vmatprep.subr.mxu0 0.0
        %4420 = vmatpush1.msra.mxu0 0.0
        %4421 = vmatprep.subr.mxu0 0.0
        %4422 = vmatpush1.msra.mxu0 0.0
        %4423 = vmatprep.subr.mxu0 0.0
        %4424 = vmatpush1.msra.mxu0 0.0
        %4425 = vmatprep.subr.mxu0 0.0
        %4426 = vmatpush1.msra.mxu0 0.0
        %4427 = vmatprep.subr.mxu0 0.0
        %4428 = vmatpush1.msra.mxu0 0.0
        %4429 = vmatprep.subr.mxu0 0.0
        %4430 = vmatpush1.msra.mxu0 0.0
        %4431 = vmatprep.subr.mxu0 0.0
        %4432 = vmatpush1.msra.mxu0 0.0
        %4433 = vmatprep.subr.mxu0 0.0
        %4434 = vmatpush1.msra.mxu0 0.0
        %4435 = vmatprep.subr.mxu0 0.0
        %4436 = vmatpush1.msra.mxu0 0.0
        %4437 = vmatprep.subr.mxu0 0.0
        %4438 = vmatpush1.msra.mxu0 0.0
        %4439 = vmatprep.subr.mxu0 0.0
        %4440 = vmatpush1.msra.mxu0 0.0
        %4441 = vmatprep.subr.mxu0 0.0
        %4442 = vmatpush1.msra.mxu0 0.0
        %4443 = vmatprep.subr.mxu0 0.0
        %4444 = vmatpush1.msra.mxu0 0.0
        %4445 = vmatprep.mubr.f32.mxu0 0.0
        %4446 = vmatmul.mubr.f32.gmra.mrb[0].mxu0 %v4379
        %v4447 = vpop.f32.mrb[0].mxu0
        %v4448 = vadd.f32 %v4376, %v4447
        %v4449 = vpop.f32.mrb[0].mxu0
        %4450 = vdwg.mxu0
        %s4451 = scalar_lea.vmem %s416, 16
        %4452 = vst.msk [vmem:[%s4451] sm:$0xf] %vm2667, %v4448
        %s4453 = scalar_lea.vmem [#allocation2], 80
        %v4454 = vld [vmem:[%s4453] sm:$0xff]
        %v4455 = vld [vmem:[%s4453 + $0x8] sm:$0xff]
        %s4456 = scalar_lea.vmem %s321, 480 [#allocation3]
        %v4457 = vld [vmem:[%s4456] sm:$0xff]
        %v4458 = vld [vmem:[%s4456 + $0x8] sm:$0xff]
        %v4459 = vld [vmem:[%s4456 + $0x10] sm:$0xff]
        %v4460 = vld [vmem:[%s4456 + $0x18] sm:$0xff]
        %v4461 = vld [vmem:[%s4456 + $0x20] sm:$0xff]
        %v4462 = vld [vmem:[%s4456 + $0x28] sm:$0xff]
        %v4463 = vld [vmem:[%s4456 + $0x30] sm:$0xff]
        %v4464 = vld [vmem:[%s4456 + $0x38] sm:$0xff]
        %v4465 = vld [vmem:[%s4456 + $0x40] sm:$0xff]
        %v4466 = vld [vmem:[%s4456 + $0x48] sm:$0xff]
        %v4467 = vld [vmem:[%s4456 + $0x50] sm:$0xff]
        %v4468 = vld [vmem:[%s4456 + $0x58] sm:$0xff]
        %s4469 = scalar_lea.vmem %s410, 360
        %v4470 = vld [vmem:[%s4469] sm:$0xff]
        %v4471 = vld [vmem:[%s4469 + $0x8] sm:$0xff]
        %v4472 = vld [vmem:[%s4469 + $0x10] sm:$0xff]
        %v4473 = vld [vmem:[%s4469 + $0x18] sm:$0xff]
        %v4474 = vld [vmem:[%s4469 + $0x20] sm:$0xff]
        %v4475 = vld [vmem:[%s4469 + $0x28] sm:$0xff]
        %v4476 = vld [vmem:[%s4469 + $0x30] sm:$0xff]
        %v4477 = vld [vmem:[%s4469 + $0x38] sm:$0xff]
        %v4478 = vld [vmem:[%s4469 + $0x40] sm:$0xf]
        %s4479 = scalar_lea.vmem %s389, 40
        %v4480 = vld [vmem:[%s4479] sm:$0xff]
        %v4482 = vsel %vm2251, %v4459, 0
        %v4485 = vsel %vm2251, %v4462, 0
        %v4488 = vsel %vm2251, %v4465, 0
        %v4491 = vsel %vm2251, %v4468, 0
        %4493 = vmatprep.subr.mxu0 0.0
        %4494 = vmatpush1.msra.mxu0 %v4480
        %4495 = vmatprep.subr.mxu0 0.0
        %4496 = vmatpush1.msra.mxu0 0.0
        %4497 = vmatprep.subr.mxu0 0.0
        %4498 = vmatpush1.msra.mxu0 0.0
        %4499 = vmatprep.subr.mxu0 0.0
        %4500 = vmatpush1.msra.mxu0 0.0
        %4501 = vmatprep.subr.mxu0 0.0
        %4502 = vmatpush1.msra.mxu0 0.0
        %4503 = vmatprep.subr.mxu0 0.0
        %4504 = vmatpush1.msra.mxu0 0.0
        %4505 = vmatprep.subr.mxu0 0.0
        %4506 = vmatpush1.msra.mxu0 0.0
        %4507 = vmatprep.subr.mxu0 0.0
        %4508 = vmatpush1.msra.mxu0 0.0
        %4509 = vmatprep.subr.mxu0 0.0
        %4510 = vmatpush1.msra.mxu0 0.0
        %4511 = vmatprep.subr.mxu0 0.0
        %4512 = vmatpush1.msra.mxu0 0.0
        %4513 = vmatprep.subr.mxu0 0.0
        %4514 = vmatpush1.msra.mxu0 0.0
        %4515 = vmatprep.subr.mxu0 0.0
        %4516 = vmatpush1.msra.mxu0 0.0
        %4517 = vmatprep.subr.mxu0 0.0
        %4518 = vmatpush1.msra.mxu0 0.0
        %4519 = vmatprep.subr.mxu0 0.0
        %4520 = vmatpush1.msra.mxu0 0.0
        %4521 = vmatprep.subr.mxu0 0.0
        %4522 = vmatpush1.msra.mxu0 0.0
        %4523 = vmatprep.subr.mxu0 0.0
        %4524 = vmatpush1.msra.mxu0 0.0
        %4525 = vmatprep.subr.mxu0 0.0
        %4526 = vmatpush1.msra.mxu0 0.0
        %4527 = vmatprep.subr.mxu0 0.0
        %4528 = vmatpush1.msra.mxu0 0.0
        %4529 = vmatprep.subr.mxu0 0.0
        %4530 = vmatpush1.msra.mxu0 0.0
        %4531 = vmatprep.subr.mxu0 0.0
        %4532 = vmatpush1.msra.mxu0 0.0
        %4533 = vmatprep.subr.mxu0 0.0
        %4534 = vmatpush1.msra.mxu0 0.0
        %4535 = vmatprep.subr.mxu0 0.0
        %4536 = vmatpush1.msra.mxu0 0.0
        %4537 = vmatprep.subr.mxu0 0.0
        %4538 = vmatpush1.msra.mxu0 0.0
        %4539 = vmatprep.subr.mxu0 0.0
        %4540 = vmatpush1.msra.mxu0 0.0
        %4541 = vmatprep.subr.mxu0 0.0
        %4542 = vmatpush1.msra.mxu0 0.0
        %4543 = vmatprep.subr.mxu0 0.0
        %4544 = vmatpush1.msra.mxu0 0.0
        %4545 = vmatprep.subr.mxu0 0.0
        %4546 = vmatpush1.msra.mxu0 0.0
        %4547 = vmatprep.subr.mxu0 0.0
        %4548 = vmatpush1.msra.mxu0 0.0
        %4549 = vmatprep.subr.mxu0 0.0
        %4550 = vmatpush1.msra.mxu0 0.0
        %4551 = vmatprep.subr.mxu0 0.0
        %4552 = vmatpush1.msra.mxu0 0.0
        %4553 = vmatprep.subr.mxu0 0.0
        %4554 = vmatpush1.msra.mxu0 0.0
        %4555 = vmatprep.subr.mxu0 0.0
        %4556 = vmatpush1.msra.mxu0 0.0
        %4557 = vmatprep.mubr.f32.mxu0 0.0
        %4558 = vmatmul.mubr.f32.gmra.mrb[0].mxu0 %v4482
        %v4559 = vpop.f32.mrb[0].mxu0
        %v4560 = vadd.f32 0.0, %v4559
        %v4561 = vpop.f32.mrb[0].mxu0
        %4562 = vmatprep.mubr.f32.mxu0 0.0
        %4563 = vmatmul.mubr.f32.gmra.mrb[0].mxu0 %v4485
        %v4564 = vpop.f32.mrb[0].mxu0
        %v4565 = vadd.f32 0.0, %v4564
        %v4566 = vpop.f32.mrb[0].mxu0
        %4567 = vmatprep.mubr.f32.mxu0 0.0
        %4568 = vmatmul.mubr.f32.gmra.mrb[0].mxu0 %v4488
        %v4569 = vpop.f32.mrb[0].mxu0
        %v4570 = vadd.f32 0.0, %v4569
        %v4571 = vpop.f32.mrb[0].mxu0
        %4572 = vmatprep.mubr.f32.mxu0 0.0
        %4573 = vmatmul.mubr.f32.gmra.mrb[0].mxu0 %v4491
        %v4574 = vpop.f32.mrb[0].mxu0
        %v4575 = vadd.f32 0.0, %v4574
        %v4576 = vpop.f32.mrb[0].mxu0
        %4577 = vdwg.mxu0
        %4578 = vmatprep.subr.mxu0 %v4455
        %4579 = vmatpush1.xpose.msra.mxu0 %v4454
        %4580 = vmatprep.subr.mxu0 0.0
        %4581 = vmatpush1.xpose.msra.mxu0 0.0
        %4582 = vmatprep.subr.mxu0 0.0
        %4583 = vmatpush1.xpose.msra.mxu0 0.0
        %4584 = vmatprep.subr.mxu0 0.0
        %4585 = vmatpush1.xpose.msra.mxu0 0.0
        %4586 = vmatprep.subr.mxu0 0.0
        %4587 = vmatpush1.xpose.msra.mxu0 0.0
        %4588 = vmatprep.subr.mxu0 0.0
        %4589 = vmatpush1.xpose.msra.mxu0 0.0
        %4590 = vmatprep.subr.mxu0 0.0
        %4591 = vmatpush1.xpose.msra.mxu0 0.0
        %4592 = vmatprep.subr.mxu0 0.0
        %4593 = vmatpush1.xpose.msra.mxu0 0.0
        %4594 = vmatprep.subr.mxu0 0.0
        %4595 = vmatpush1.xpose.msra.mxu0 0.0
        %4596 = vmatprep.subr.mxu0 0.0
        %4597 = vmatpush1.xpose.msra.mxu0 0.0
        %4598 = vmatprep.subr.mxu0 0.0
        %4599 = vmatpush1.xpose.msra.mxu0 0.0
        %4600 = vmatprep.subr.mxu0 0.0
        %4601 = vmatpush1.xpose.msra.mxu0 0.0
        %4602 = vmatprep.subr.mxu0 0.0
        %4603 = vmatpush1.xpose.msra.mxu0 0.0
        %4604 = vmatprep.subr.mxu0 0.0
        %4605 = vmatpush1.xpose.msra.mxu0 0.0
        %4606 = vmatprep.subr.mxu0 0.0
        %4607 = vmatpush1.xpose.msra.mxu0 0.0
        %4608 = vmatprep.subr.mxu0 0.0
        %4609 = vmatpush1.xpose.msra.mxu0 0.0
        %4610 = vmatprep.subr.mxu0 0.0
        %4611 = vmatpush1.xpose.msra.mxu0 0.0
        %4612 = vmatprep.subr.mxu0 0.0
        %4613 = vmatpush1.xpose.msra.mxu0 0.0
        %4614 = vmatprep.subr.mxu0 0.0
        %4615 = vmatpush1.xpose.msra.mxu0 0.0
        %4616 = vmatprep.subr.mxu0 0.0
        %4617 = vmatpush1.xpose.msra.mxu0 0.0
        %4618 = vmatprep.subr.mxu0 0.0
        %4619 = vmatpush1.xpose.msra.mxu0 0.0
        %4620 = vmatprep.subr.mxu0 0.0
        %4621 = vmatpush1.xpose.msra.mxu0 0.0
        %4622 = vmatprep.subr.mxu0 0.0
        %4623 = vmatpush1.xpose.msra.mxu0 0.0
        %4624 = vmatprep.subr.mxu0 0.0
        %4625 = vmatpush1.xpose.msra.mxu0 0.0
        %4626 = vmatprep.subr.mxu0 0.0
        %4627 = vmatpush1.xpose.msra.mxu0 0.0
        %4628 = vmatprep.subr.mxu0 0.0
        %4629 = vmatpush1.xpose.msra.mxu0 0.0
        %4630 = vmatprep.subr.mxu0 0.0
        %4631 = vmatpush1.xpose.msra.mxu0 0.0
        %4632 = vmatprep.subr.mxu0 0.0
        %4633 = vmatpush1.xpose.msra.mxu0 0.0
        %4634 = vmatprep.subr.mxu0 0.0
        %4635 = vmatpush1.xpose.msra.mxu0 0.0
        %4636 = vmatprep.subr.mxu0 0.0
        %4637 = vmatpush1.xpose.msra.mxu0 0.0
        %4638 = vmatprep.subr.mxu0 0.0
        %4639 = vmatpush1.xpose.msra.mxu0 0.0
        %4640 = vmatprep.subr.mxu0 0.0
        %4641 = vmatpush1.xpose.msra.mxu0 0.0
        %4642 = vmatprep.mubr.f32.mxu0 %v4458
        %4643 = vmatmul.mubr.f32.gmra.mrb[0].mxu0 %v4457
        %v4644 = vpop.f32.mrb[0].mxu0
        %v4645 = vadd.f32 %v4560, %v4644
        %v4646 = vpop.f32.mrb[0].mxu0
        %4647 = vmatprep.mubr.f32.mxu0 %v4461
        %4648 = vmatmul.mubr.f32.gmra.mrb[0].mxu0 %v4460
        %v4649 = vpop.f32.mrb[0].mxu0
        %v4650 = vadd.f32 %v4565, %v4649
        %v4651 = vpop.f32.mrb[0].mxu0
        %4652 = vmatprep.mubr.f32.mxu0 %v4464
        %4653 = vmatmul.mubr.f32.gmra.mrb[0].mxu0 %v4463
        %v4654 = vpop.f32.mrb[0].mxu0
        %v4655 = vadd.f32 %v4570, %v4654
        %v4656 = vpop.f32.mrb[0].mxu0
        %4657 = vmatprep.mubr.f32.mxu0 %v4467
        %4658 = vmatmul.mubr.f32.gmra.mrb[0].mxu0 %v4466
        %v4659 = vpop.f32.mrb[0].mxu0
        %v4660 = vadd.f32 %v4575, %v4659
        %v4661 = vpop.f32.mrb[0].mxu0
        %4662 = vdwg.mxu0
        %4664 = vset.pattern.permute.xlu0 0
        %4665 = vperm.xlu0 %4664, %v4470
        %v4666 = vpop.permute.xlu0 %4665
        %4669 = vset.pattern.permute.xlu0 0
        %4670 = vperm.xlu0 %4669, %v4471
        %v4671 = vpop.permute.xlu0 %4670
        %4674 = vset.pattern.permute.xlu0 0
        %4675 = vperm.xlu0 %4674, %v4472
        %v4676 = vpop.permute.xlu0 %4675
        %4679 = vset.pattern.permute.xlu0 0
        %4680 = vperm.xlu0 %4679, %v4473
        %v4681 = vpop.permute.xlu0 %4680
        %v4683 = vadd.f32 %v4645, %v4666
        %v4684 = vadd.f32 %v4650, %v4671
        %v4685 = vadd.f32 %v4655, %v4676
        %v4686 = vadd.f32 %v4660, %v4681
        %v4687 = vmax.f32 %v4683, 0.0
        %v4688 = vmax.f32 %v4684, 0.0
        %v4689 = vmax.f32 %v4685, 0.0
        %v4690 = vmax.f32 %v4686, 0.0
        %s4691 = scalar_lea.vmem %s397, 160
        %v4692 = vld [vmem:[%s4691] sm:$0xff]
        %v4693 = vld [vmem:[%s4691 + $0x8] sm:$0xff]
        %v4694 = vld [vmem:[%s4691 + $0x10] sm:$0xff]
        %v4695 = vld [vmem:[%s4691 + $0x18] sm:$0xff]
        %4697 = vset.pattern.permute.xlu0 0
        %4698 = vperm.xlu0 %4697, %v4474
        %v4699 = vpop.permute.xlu0 %4698
        %4702 = vset.pattern.permute.xlu0 0
        %4703 = vperm.xlu0 %4702, %v4475
        %v4704 = vpop.permute.xlu0 %4703
        %4707 = vset.pattern.permute.xlu0 0
        %4708 = vperm.xlu0 %4707, %v4476
        %v4709 = vpop.permute.xlu0 %4708
        %4712 = vset.pattern.permute.xlu0 0
        %4713 = vperm.xlu0 %4712, %v4477
        %v4714 = vpop.permute.xlu0 %4713
        %v4717 = vsel %vm2486, %v4692, 0
        %v4720 = vsel %vm2486, %v4693, 0
        %v4723 = vsel %vm2486, %v4694, 0
        %v4726 = vsel %vm2486, %v4695, 0
        %4728 = vmatprep.subr.mxu0 0.0
        %4729 = vmatpush1.msra.mxu0 %v4687
        %4730 = vmatprep.subr.mxu0 0.0
        %4731 = vmatpush1.msra.mxu0 %v4688
        %4732 = vmatprep.subr.mxu0 0.0
        %4733 = vmatpush1.msra.mxu0 %v4689
        %4734 = vmatprep.subr.mxu0 0.0
        %4735 = vmatpush1.msra.mxu0 %v4690
        %4736 = vmatprep.subr.mxu0 0.0
        %4737 = vmatpush1.msra.mxu0 0.0
        %4738 = vmatprep.subr.mxu0 0.0
        %4739 = vmatpush1.msra.mxu0 0.0
        %4740 = vmatprep.subr.mxu0 0.0
        %4741 = vmatpush1.msra.mxu0 0.0
        %4742 = vmatprep.subr.mxu0 0.0
        %4743 = vmatpush1.msra.mxu0 0.0
        %4744 = vmatprep.subr.mxu0 0.0
        %4745 = vmatpush1.msra.mxu0 0.0
        %4746 = vmatprep.subr.mxu0 0.0
        %4747 = vmatpush1.msra.mxu0 0.0
        %4748 = vmatprep.subr.mxu0 0.0
        %4749 = vmatpush1.msra.mxu0 0.0
        %4750 = vmatprep.subr.mxu0 0.0
        %4751 = vmatpush1.msra.mxu0 0.0
        %4752 = vmatprep.subr.mxu0 0.0
        %4753 = vmatpush1.msra.mxu0 0.0
        %4754 = vmatprep.subr.mxu0 0.0
        %4755 = vmatpush1.msra.mxu0 0.0
        %4756 = vmatprep.subr.mxu0 0.0
        %4757 = vmatpush1.msra.mxu0 0.0
        %4758 = vmatprep.subr.mxu0 0.0
        %4759 = vmatpush1.msra.mxu0 0.0
        %4760 = vmatprep.subr.mxu0 0.0
        %4761 = vmatpush1.msra.mxu0 0.0
        %4762 = vmatprep.subr.mxu0 0.0
        %4763 = vmatpush1.msra.mxu0 0.0
        %4764 = vmatprep.subr.mxu0 0.0
        %4765 = vmatpush1.msra.mxu0 0.0
        %4766 = vmatprep.subr.mxu0 0.0
        %4767 = vmatpush1.msra.mxu0 0.0
        %4768 = vmatprep.subr.mxu0 0.0
        %4769 = vmatpush1.msra.mxu0 0.0
        %4770 = vmatprep.subr.mxu0 0.0
        %4771 = vmatpush1.msra.mxu0 0.0
        %4772 = vmatprep.subr.mxu0 0.0
        %4773 = vmatpush1.msra.mxu0 0.0
        %4774 = vmatprep.subr.mxu0 0.0
        %4775 = vmatpush1.msra.mxu0 0.0
        %4776 = vmatprep.subr.mxu0 0.0
        %4777 = vmatpush1.msra.mxu0 0.0
        %4778 = vmatprep.subr.mxu0 0.0
        %4779 = vmatpush1.msra.mxu0 0.0
        %4780 = vmatprep.subr.mxu0 0.0
        %4781 = vmatpush1.msra.mxu0 0.0
        %4782 = vmatprep.subr.mxu0 0.0
        %4783 = vmatpush1.msra.mxu0 0.0
        %4784 = vmatprep.subr.mxu0 0.0
        %4785 = vmatpush1.msra.mxu0 0.0
        %4786 = vmatprep.subr.mxu0 0.0
        %4787 = vmatpush1.msra.mxu0 0.0
        %4788 = vmatprep.subr.mxu0 0.0
        %4789 = vmatpush1.msra.mxu0 0.0
        %4790 = vmatprep.subr.mxu0 0.0
        %4791 = vmatpush1.msra.mxu0 0.0
        %4792 = vmatprep.mubr.f32.mxu0 0.0
        %4793 = vmatmul.mubr.f32.gmra.mrb[0].mxu0 %v4717
        %v4794 = vpop.f32.mrb[0].mxu0
        %v4795 = vadd.f32 %v4699, %v4794
        %v4796 = vpop.f32.mrb[0].mxu0
        %4797 = vmatprep.mubr.f32.mxu0 0.0
        %4798 = vmatmul.mubr.f32.gmra.mrb[0].mxu0 %v4720
        %v4799 = vpop.f32.mrb[0].mxu0
        %v4800 = vadd.f32 %v4704, %v4799
        %v4801 = vpop.f32.mrb[0].mxu0
        %4802 = vmatprep.mubr.f32.mxu0 0.0
        %4803 = vmatmul.mubr.f32.gmra.mrb[0].mxu0 %v4723
        %v4804 = vpop.f32.mrb[0].mxu0
        %v4805 = vadd.f32 %v4709, %v4804
        %v4806 = vpop.f32.mrb[0].mxu0
        %4807 = vmatprep.mubr.f32.mxu0 0.0
        %4808 = vmatmul.mubr.f32.gmra.mrb[0].mxu0 %v4726
        %v4809 = vpop.f32.mrb[0].mxu0
        %v4810 = vadd.f32 %v4714, %v4809
        %v4811 = vpop.f32.mrb[0].mxu0
        %4812 = vdwg.mxu0
        %v4813 = vmax.f32 %v4795, 0.0
        %v4814 = vmax.f32 %v4800, 0.0
        %v4815 = vmax.f32 %v4805, 0.0
        %v4816 = vmax.f32 %v4810, 0.0
        %s4817 = scalar_lea.vmem %s403, 20
        %v4818 = vld [vmem:[%s4817] sm:$0xf]
        %4820 = vset.pattern.permute.xlu0 0
        %4821 = vperm.xlu0 %4820, %v4478
        %v4822 = vpop.permute.xlu0 %4821
        %v4825 = vsel %vm2486, %v4818, 0
        %4827 = vmatprep.subr.mxu0 0.0
        %4828 = vmatpush1.msra.mxu0 %v4813
        %4829 = vmatprep.subr.mxu0 0.0
        %4830 = vmatpush1.msra.mxu0 %v4814
        %4831 = vmatprep.subr.mxu0 0.0
        %4832 = vmatpush1.msra.mxu0 %v4815
        %4833 = vmatprep.subr.mxu0 0.0
        %4834 = vmatpush1.msra.mxu0 %v4816
        %4835 = vmatprep.subr.mxu0 0.0
        %4836 = vmatpush1.msra.mxu0 0.0
        %4837 = vmatprep.subr.mxu0 0.0
        %4838 = vmatpush1.msra.mxu0 0.0
        %4839 = vmatprep.subr.mxu0 0.0
        %4840 = vmatpush1.msra.mxu0 0.0
        %4841 = vmatprep.subr.mxu0 0.0
        %4842 = vmatpush1.msra.mxu0 0.0
        %4843 = vmatprep.subr.mxu0 0.0
        %4844 = vmatpush1.msra.mxu0 0.0
        %4845 = vmatprep.subr.mxu0 0.0
        %4846 = vmatpush1.msra.mxu0 0.0
        %4847 = vmatprep.subr.mxu0 0.0
        %4848 = vmatpush1.msra.mxu0 0.0
        %4849 = vmatprep.subr.mxu0 0.0
        %4850 = vmatpush1.msra.mxu0 0.0
        %4851 = vmatprep.subr.mxu0 0.0
        %4852 = vmatpush1.msra.mxu0 0.0
        %4853 = vmatprep.subr.mxu0 0.0
        %4854 = vmatpush1.msra.mxu0 0.0
        %4855 = vmatprep.subr.mxu0 0.0
        %4856 = vmatpush1.msra.mxu0 0.0
        %4857 = vmatprep.subr.mxu0 0.0
        %4858 = vmatpush1.msra.mxu0 0.0
        %4859 = vmatprep.subr.mxu0 0.0
        %4860 = vmatpush1.msra.mxu0 0.0
        %4861 = vmatprep.subr.mxu0 0.0
        %4862 = vmatpush1.msra.mxu0 0.0
        %4863 = vmatprep.subr.mxu0 0.0
        %4864 = vmatpush1.msra.mxu0 0.0
        %4865 = vmatprep.subr.mxu0 0.0
        %4866 = vmatpush1.msra.mxu0 0.0
        %4867 = vmatprep.subr.mxu0 0.0
        %4868 = vmatpush1.msra.mxu0 0.0
        %4869 = vmatprep.subr.mxu0 0.0
        %4870 = vmatpush1.msra.mxu0 0.0
        %4871 = vmatprep.subr.mxu0 0.0
        %4872 = vmatpush1.msra.mxu0 0.0
        %4873 = vmatprep.subr.mxu0 0.0
        %4874 = vmatpush1.msra.mxu0 0.0
        %4875 = vmatprep.subr.mxu0 0.0
        %4876 = vmatpush1.msra.mxu0 0.0
        %4877 = vmatprep.subr.mxu0 0.0
        %4878 = vmatpush1.msra.mxu0 0.0
        %4879 = vmatprep.subr.mxu0 0.0
        %4880 = vmatpush1.msra.mxu0 0.0
        %4881 = vmatprep.subr.mxu0 0.0
        %4882 = vmatpush1.msra.mxu0 0.0
        %4883 = vmatprep.subr.mxu0 0.0
        %4884 = vmatpush1.msra.mxu0 0.0
        %4885 = vmatprep.subr.mxu0 0.0
        %4886 = vmatpush1.msra.mxu0 0.0
        %4887 = vmatprep.subr.mxu0 0.0
        %4888 = vmatpush1.msra.mxu0 0.0
        %4889 = vmatprep.subr.mxu0 0.0
        %4890 = vmatpush1.msra.mxu0 0.0
        %4891 = vmatprep.mubr.f32.mxu0 0.0
        %4892 = vmatmul.mubr.f32.gmra.mrb[0].mxu0 %v4825
        %v4893 = vpop.f32.mrb[0].mxu0
        %v4894 = vadd.f32 %v4822, %v4893
        %v4895 = vpop.f32.mrb[0].mxu0
        %4896 = vdwg.mxu0
        %s4897 = scalar_lea.vmem %s416, 20
        %4898 = vst.msk [vmem:[%s4897] sm:$0xf] %vm2667, %v4894
        %s4899 = scalar_lea.vmem [#allocation2], 96
        %v4900 = vld [vmem:[%s4899] sm:$0xff]
        %v4901 = vld [vmem:[%s4899 + $0x8] sm:$0xff]
        %s4902 = scalar_lea.vmem %s321, 576 [#allocation3]
        %v4903 = vld [vmem:[%s4902] sm:$0xff]
        %v4904 = vld [vmem:[%s4902 + $0x8] sm:$0xff]
        %v4905 = vld [vmem:[%s4902 + $0x10] sm:$0xff]
        %v4906 = vld [vmem:[%s4902 + $0x18] sm:$0xff]
        %v4907 = vld [vmem:[%s4902 + $0x20] sm:$0xff]
        %v4908 = vld [vmem:[%s4902 + $0x28] sm:$0xff]
        %v4909 = vld [vmem:[%s4902 + $0x30] sm:$0xff]
        %v4910 = vld [vmem:[%s4902 + $0x38] sm:$0xff]
        %v4911 = vld [vmem:[%s4902 + $0x40] sm:$0xff]
        %v4912 = vld [vmem:[%s4902 + $0x48] sm:$0xff]
        %v4913 = vld [vmem:[%s4902 + $0x50] sm:$0xff]
        %v4914 = vld [vmem:[%s4902 + $0x58] sm:$0xff]
        %s4915 = scalar_lea.vmem %s410, 432
        %v4916 = vld [vmem:[%s4915] sm:$0xff]
        %v4917 = vld [vmem:[%s4915 + $0x8] sm:$0xff]
        %v4918 = vld [vmem:[%s4915 + $0x10] sm:$0xff]
        %v4919 = vld [vmem:[%s4915 + $0x18] sm:$0xff]
        %v4920 = vld [vmem:[%s4915 + $0x20] sm:$0xff]
        %v4921 = vld [vmem:[%s4915 + $0x28] sm:$0xff]
        %v4922 = vld [vmem:[%s4915 + $0x30] sm:$0xff]
        %v4923 = vld [vmem:[%s4915 + $0x38] sm:$0xff]
        %v4924 = vld [vmem:[%s4915 + $0x40] sm:$0xf]
        %s4925 = scalar_lea.vmem %s389, 48
        %v4926 = vld [vmem:[%s4925] sm:$0xff]
        %v4928 = vsel %vm2251, %v4905, 0
        %v4931 = vsel %vm2251, %v4908, 0
        %v4934 = vsel %vm2251, %v4911, 0
        %v4937 = vsel %vm2251, %v4914, 0
        %4939 = vmatprep.subr.mxu0 0.0
        %4940 = vmatpush1.msra.mxu0 %v4926
        %4941 = vmatprep.subr.mxu0 0.0
        %4942 = vmatpush1.msra.mxu0 0.0
        %4943 = vmatprep.subr.mxu0 0.0
        %4944 = vmatpush1.msra.mxu0 0.0
        %4945 = vmatprep.subr.mxu0 0.0
        %4946 = vmatpush1.msra.mxu0 0.0
        %4947 = vmatprep.subr.mxu0 0.0
        %4948 = vmatpush1.msra.mxu0 0.0
        %4949 = vmatprep.subr.mxu0 0.0
        %4950 = vmatpush1.msra.mxu0 0.0
        %4951 = vmatprep.subr.mxu0 0.0
        %4952 = vmatpush1.msra.mxu0 0.0
        %4953 = vmatprep.subr.mxu0 0.0
        %4954 = vmatpush1.msra.mxu0 0.0
        %4955 = vmatprep.subr.mxu0 0.0
        %4956 = vmatpush1.msra.mxu0 0.0
        %4957 = vmatprep.subr.mxu0 0.0
        %4958 = vmatpush1.msra.mxu0 0.0
        %4959 = vmatprep.subr.mxu0 0.0
        %4960 = vmatpush1.msra.mxu0 0.0
        %4961 = vmatprep.subr.mxu0 0.0
        %4962 = vmatpush1.msra.mxu0 0.0
        %4963 = vmatprep.subr.mxu0 0.0
        %4964 = vmatpush1.msra.mxu0 0.0
        %4965 = vmatprep.subr.mxu0 0.0
        %4966 = vmatpush1.msra.mxu0 0.0
        %4967 = vmatprep.subr.mxu0 0.0
        %4968 = vmatpush1.msra.mxu0 0.0
        %4969 = vmatprep.subr.mxu0 0.0
        %4970 = vmatpush1.msra.mxu0 0.0
        %4971 = vmatprep.subr.mxu0 0.0
        %4972 = vmatpush1.msra.mxu0 0.0
        %4973 = vmatprep.subr.mxu0 0.0
        %4974 = vmatpush1.msra.mxu0 0.0
        %4975 = vmatprep.subr.mxu0 0.0
        %4976 = vmatpush1.msra.mxu0 0.0
        %4977 = vmatprep.subr.mxu0 0.0
        %4978 = vmatpush1.msra.mxu0 0.0
        %4979 = vmatprep.subr.mxu0 0.0
        %4980 = vmatpush1.msra.mxu0 0.0
        %4981 = vmatprep.subr.mxu0 0.0
        %4982 = vmatpush1.msra.mxu0 0.0
        %4983 = vmatprep.subr.mxu0 0.0
        %4984 = vmatpush1.msra.mxu0 0.0
        %4985 = vmatprep.subr.mxu0 0.0
        %4986 = vmatpush1.msra.mxu0 0.0
        %4987 = vmatprep.subr.mxu0 0.0
        %4988 = vmatpush1.msra.mxu0 0.0
        %4989 = vmatprep.subr.mxu0 0.0
        %4990 = vmatpush1.msra.mxu0 0.0
        %4991 = vmatprep.subr.mxu0 0.0
        %4992 = vmatpush1.msra.mxu0 0.0
        %4993 = vmatprep.subr.mxu0 0.0
        %4994 = vmatpush1.msra.mxu0 0.0
        %4995 = vmatprep.subr.mxu0 0.0
        %4996 = vmatpush1.msra.mxu0 0.0
        %4997 = vmatprep.subr.mxu0 0.0
        %4998 = vmatpush1.msra.mxu0 0.0
        %4999 = vmatprep.subr.mxu0 0.0
        %5000 = vmatpush1.msra.mxu0 0.0
        %5001 = vmatprep.subr.mxu0 0.0
        %5002 = vmatpush1.msra.mxu0 0.0
        %5003 = vmatprep.mubr.f32.mxu0 0.0
        %5004 = vmatmul.mubr.f32.gmra.mrb[0].mxu0 %v4928
        %v5005 = vpop.f32.mrb[0].mxu0
        %v5006 = vadd.f32 0.0, %v5005
        %v5007 = vpop.f32.mrb[0].mxu0
        %5008 = vmatprep.mubr.f32.mxu0 0.0
        %5009 = vmatmul.mubr.f32.gmra.mrb[0].mxu0 %v4931
        %v5010 = vpop.f32.mrb[0].mxu0
        %v5011 = vadd.f32 0.0, %v5010
        %v5012 = vpop.f32.mrb[0].mxu0
        %5013 = vmatprep.mubr.f32.mxu0 0.0
        %5014 = vmatmul.mubr.f32.gmra.mrb[0].mxu0 %v4934
        %v5015 = vpop.f32.mrb[0].mxu0
        %v5016 = vadd.f32 0.0, %v5015
        %v5017 = vpop.f32.mrb[0].mxu0
        %5018 = vmatprep.mubr.f32.mxu0 0.0
        %5019 = vmatmul.mubr.f32.gmra.mrb[0].mxu0 %v4937
        %v5020 = vpop.f32.mrb[0].mxu0
        %v5021 = vadd.f32 0.0, %v5020
        %v5022 = vpop.f32.mrb[0].mxu0
        %5023 = vdwg.mxu0
        %5024 = vmatprep.subr.mxu0 %v4901
        %5025 = vmatpush1.xpose.msra.mxu0 %v4900
        %5026 = vmatprep.subr.mxu0 0.0
        %5027 = vmatpush1.xpose.msra.mxu0 0.0
        %5028 = vmatprep.subr.mxu0 0.0
        %5029 = vmatpush1.xpose.msra.mxu0 0.0
        %5030 = vmatprep.subr.mxu0 0.0
        %5031 = vmatpush1.xpose.msra.mxu0 0.0
        %5032 = vmatprep.subr.mxu0 0.0
        %5033 = vmatpush1.xpose.msra.mxu0 0.0
        %5034 = vmatprep.subr.mxu0 0.0
        %5035 = vmatpush1.xpose.msra.mxu0 0.0
        %5036 = vmatprep.subr.mxu0 0.0
        %5037 = vmatpush1.xpose.msra.mxu0 0.0
        %5038 = vmatprep.subr.mxu0 0.0
        %5039 = vmatpush1.xpose.msra.mxu0 0.0
        %5040 = vmatprep.subr.mxu0 0.0
        %5041 = vmatpush1.xpose.msra.mxu0 0.0
        %5042 = vmatprep.subr.mxu0 0.0
        %5043 = vmatpush1.xpose.msra.mxu0 0.0
        %5044 = vmatprep.subr.mxu0 0.0
        %5045 = vmatpush1.xpose.msra.mxu0 0.0
        %5046 = vmatprep.subr.mxu0 0.0
        %5047 = vmatpush1.xpose.msra.mxu0 0.0
        %5048 = vmatprep.subr.mxu0 0.0
        %5049 = vmatpush1.xpose.msra.mxu0 0.0
        %5050 = vmatprep.subr.mxu0 0.0
        %5051 = vmatpush1.xpose.msra.mxu0 0.0
        %5052 = vmatprep.subr.mxu0 0.0
        %5053 = vmatpush1.xpose.msra.mxu0 0.0
        %5054 = vmatprep.subr.mxu0 0.0
        %5055 = vmatpush1.xpose.msra.mxu0 0.0
        %5056 = vmatprep.subr.mxu0 0.0
        %5057 = vmatpush1.xpose.msra.mxu0 0.0
        %5058 = vmatprep.subr.mxu0 0.0
        %5059 = vmatpush1.xpose.msra.mxu0 0.0
        %5060 = vmatprep.subr.mxu0 0.0
        %5061 = vmatpush1.xpose.msra.mxu0 0.0
        %5062 = vmatprep.subr.mxu0 0.0
        %5063 = vmatpush1.xpose.msra.mxu0 0.0
        %5064 = vmatprep.subr.mxu0 0.0
        %5065 = vmatpush1.xpose.msra.mxu0 0.0
        %5066 = vmatprep.subr.mxu0 0.0
        %5067 = vmatpush1.xpose.msra.mxu0 0.0
        %5068 = vmatprep.subr.mxu0 0.0
        %5069 = vmatpush1.xpose.msra.mxu0 0.0
        %5070 = vmatprep.subr.mxu0 0.0
        %5071 = vmatpush1.xpose.msra.mxu0 0.0
        %5072 = vmatprep.subr.mxu0 0.0
        %5073 = vmatpush1.xpose.msra.mxu0 0.0
        %5074 = vmatprep.subr.mxu0 0.0
        %5075 = vmatpush1.xpose.msra.mxu0 0.0
        %5076 = vmatprep.subr.mxu0 0.0
        %5077 = vmatpush1.xpose.msra.mxu0 0.0
        %5078 = vmatprep.subr.mxu0 0.0
        %5079 = vmatpush1.xpose.msra.mxu0 0.0
        %5080 = vmatprep.subr.mxu0 0.0
        %5081 = vmatpush1.xpose.msra.mxu0 0.0
        %5082 = vmatprep.subr.mxu0 0.0
        %5083 = vmatpush1.xpose.msra.mxu0 0.0
        %5084 = vmatprep.subr.mxu0 0.0
        %5085 = vmatpush1.xpose.msra.mxu0 0.0
        %5086 = vmatprep.subr.mxu0 0.0
        %5087 = vmatpush1.xpose.msra.mxu0 0.0
        %5088 = vmatprep.mubr.f32.mxu0 %v4904
        %5089 = vmatmul.mubr.f32.gmra.mrb[0].mxu0 %v4903
        %v5090 = vpop.f32.mrb[0].mxu0
        %v5091 = vadd.f32 %v5006, %v5090
        %v5092 = vpop.f32.mrb[0].mxu0
        %5093 = vmatprep.mubr.f32.mxu0 %v4907
        %5094 = vmatmul.mubr.f32.gmra.mrb[0].mxu0 %v4906
        %v5095 = vpop.f32.mrb[0].mxu0
        %v5096 = vadd.f32 %v5011, %v5095
        %v5097 = vpop.f32.mrb[0].mxu0
        %5098 = vmatprep.mubr.f32.mxu0 %v4910
        %5099 = vmatmul.mubr.f32.gmra.mrb[0].mxu0 %v4909
        %v5100 = vpop.f32.mrb[0].mxu0
        %v5101 = vadd.f32 %v5016, %v5100
        %v5102 = vpop.f32.mrb[0].mxu0
        %5103 = vmatprep.mubr.f32.mxu0 %v4913
        %5104 = vmatmul.mubr.f32.gmra.mrb[0].mxu0 %v4912
        %v5105 = vpop.f32.mrb[0].mxu0
        %v5106 = vadd.f32 %v5021, %v5105
        %v5107 = vpop.f32.mrb[0].mxu0
        %5108 = vdwg.mxu0
        %5110 = vset.pattern.permute.xlu0 0
        %5111 = vperm.xlu0 %5110, %v4916
        %v5112 = vpop.permute.xlu0 %5111
        %5115 = vset.pattern.permute.xlu0 0
        %5116 = vperm.xlu0 %5115, %v4917
        %v5117 = vpop.permute.xlu0 %5116
        %5120 = vset.pattern.permute.xlu0 0
        %5121 = vperm.xlu0 %5120, %v4918
        %v5122 = vpop.permute.xlu0 %5121
        %5125 = vset.pattern.permute.xlu0 0
        %5126 = vperm.xlu0 %5125, %v4919
        %v5127 = vpop.permute.xlu0 %5126
        %v5129 = vadd.f32 %v5091, %v5112
        %v5130 = vadd.f32 %v5096, %v5117
        %v5131 = vadd.f32 %v5101, %v5122
        %v5132 = vadd.f32 %v5106, %v5127
        %v5133 = vmax.f32 %v5129, 0.0
        %v5134 = vmax.f32 %v5130, 0.0
        %v5135 = vmax.f32 %v5131, 0.0
        %v5136 = vmax.f32 %v5132, 0.0
        %s5137 = scalar_lea.vmem %s397, 192
        %v5138 = vld [vmem:[%s5137] sm:$0xff]
        %v5139 = vld [vmem:[%s5137 + $0x8] sm:$0xff]
        %v5140 = vld [vmem:[%s5137 + $0x10] sm:$0xff]
        %v5141 = vld [vmem:[%s5137 + $0x18] sm:$0xff]
        %5143 = vset.pattern.permute.xlu0 0
        %5144 = vperm.xlu0 %5143, %v4920
        %v5145 = vpop.permute.xlu0 %5144
        %5148 = vset.pattern.permute.xlu0 0
        %5149 = vperm.xlu0 %5148, %v4921
        %v5150 = vpop.permute.xlu0 %5149
        %5153 = vset.pattern.permute.xlu0 0
        %5154 = vperm.xlu0 %5153, %v4922
        %v5155 = vpop.permute.xlu0 %5154
        %5158 = vset.pattern.permute.xlu0 0
        %5159 = vperm.xlu0 %5158, %v4923
        %v5160 = vpop.permute.xlu0 %5159
        %v5163 = vsel %vm2486, %v5138, 0
        %v5166 = vsel %vm2486, %v5139, 0
        %v5169 = vsel %vm2486, %v5140, 0
        %v5172 = vsel %vm2486, %v5141, 0
        %5174 = vmatprep.subr.mxu0 0.0
        %5175 = vmatpush1.msra.mxu0 %v5133
        %5176 = vmatprep.subr.mxu0 0.0
        %5177 = vmatpush1.msra.mxu0 %v5134
        %5178 = vmatprep.subr.mxu0 0.0
        %5179 = vmatpush1.msra.mxu0 %v5135
        %5180 = vmatprep.subr.mxu0 0.0
        %5181 = vmatpush1.msra.mxu0 %v5136
        %5182 = vmatprep.subr.mxu0 0.0
        %5183 = vmatpush1.msra.mxu0 0.0
        %5184 = vmatprep.subr.mxu0 0.0
        %5185 = vmatpush1.msra.mxu0 0.0
        %5186 = vmatprep.subr.mxu0 0.0
        %5187 = vmatpush1.msra.mxu0 0.0
        %5188 = vmatprep.subr.mxu0 0.0
        %5189 = vmatpush1.msra.mxu0 0.0
        %5190 = vmatprep.subr.mxu0 0.0
        %5191 = vmatpush1.msra.mxu0 0.0
        %5192 = vmatprep.subr.mxu0 0.0
        %5193 = vmatpush1.msra.mxu0 0.0
        %5194 = vmatprep.subr.mxu0 0.0
        %5195 = vmatpush1.msra.mxu0 0.0
        %5196 = vmatprep.subr.mxu0 0.0
        %5197 = vmatpush1.msra.mxu0 0.0
        %5198 = vmatprep.subr.mxu0 0.0
        %5199 = vmatpush1.msra.mxu0 0.0
        %5200 = vmatprep.subr.mxu0 0.0
        %5201 = vmatpush1.msra.mxu0 0.0
        %5202 = vmatprep.subr.mxu0 0.0
        %5203 = vmatpush1.msra.mxu0 0.0
        %5204 = vmatprep.subr.mxu0 0.0
        %5205 = vmatpush1.msra.mxu0 0.0
        %5206 = vmatprep.subr.mxu0 0.0
        %5207 = vmatpush1.msra.mxu0 0.0
        %5208 = vmatprep.subr.mxu0 0.0
        %5209 = vmatpush1.msra.mxu0 0.0
        %5210 = vmatprep.subr.mxu0 0.0
        %5211 = vmatpush1.msra.mxu0 0.0
        %5212 = vmatprep.subr.mxu0 0.0
        %5213 = vmatpush1.msra.mxu0 0.0
        %5214 = vmatprep.subr.mxu0 0.0
        %5215 = vmatpush1.msra.mxu0 0.0
        %5216 = vmatprep.subr.mxu0 0.0
        %5217 = vmatpush1.msra.mxu0 0.0
        %5218 = vmatprep.subr.mxu0 0.0
        %5219 = vmatpush1.msra.mxu0 0.0
        %5220 = vmatprep.subr.mxu0 0.0
        %5221 = vmatpush1.msra.mxu0 0.0
        %5222 = vmatprep.subr.mxu0 0.0
        %5223 = vmatpush1.msra.mxu0 0.0
        %5224 = vmatprep.subr.mxu0 0.0
        %5225 = vmatpush1.msra.mxu0 0.0
        %5226 = vmatprep.subr.mxu0 0.0
        %5227 = vmatpush1.msra.mxu0 0.0
        %5228 = vmatprep.subr.mxu0 0.0
        %5229 = vmatpush1.msra.mxu0 0.0
        %5230 = vmatprep.subr.mxu0 0.0
        %5231 = vmatpush1.msra.mxu0 0.0
        %5232 = vmatprep.subr.mxu0 0.0
        %5233 = vmatpush1.msra.mxu0 0.0
        %5234 = vmatprep.subr.mxu0 0.0
        %5235 = vmatpush1.msra.mxu0 0.0
        %5236 = vmatprep.subr.mxu0 0.0
        %5237 = vmatpush1.msra.mxu0 0.0
        %5238 = vmatprep.mubr.f32.mxu0 0.0
        %5239 = vmatmul.mubr.f32.gmra.mrb[0].mxu0 %v5163
        %v5240 = vpop.f32.mrb[0].mxu0
        %v5241 = vadd.f32 %v5145, %v5240
        %v5242 = vpop.f32.mrb[0].mxu0
        %5243 = vmatprep.mubr.f32.mxu0 0.0
        %5244 = vmatmul.mubr.f32.gmra.mrb[0].mxu0 %v5166
        %v5245 = vpop.f32.mrb[0].mxu0
        %v5246 = vadd.f32 %v5150, %v5245
        %v5247 = vpop.f32.mrb[0].mxu0
        %5248 = vmatprep.mubr.f32.mxu0 0.0
        %5249 = vmatmul.mubr.f32.gmra.mrb[0].mxu0 %v5169
        %v5250 = vpop.f32.mrb[0].mxu0
        %v5251 = vadd.f32 %v5155, %v5250
        %v5252 = vpop.f32.mrb[0].mxu0
        %5253 = vmatprep.mubr.f32.mxu0 0.0
        %5254 = vmatmul.mubr.f32.gmra.mrb[0].mxu0 %v5172
        %v5255 = vpop.f32.mrb[0].mxu0
        %v5256 = vadd.f32 %v5160, %v5255
        %v5257 = vpop.f32.mrb[0].mxu0
        %5258 = vdwg.mxu0
        %v5259 = vmax.f32 %v5241, 0.0
        %v5260 = vmax.f32 %v5246, 0.0
        %v5261 = vmax.f32 %v5251, 0.0
        %v5262 = vmax.f32 %v5256, 0.0
        %s5263 = scalar_lea.vmem %s403, 24
        %v5264 = vld [vmem:[%s5263] sm:$0xf]
        %5266 = vset.pattern.permute.xlu0 0
        %5267 = vperm.xlu0 %5266, %v4924
        %v5268 = vpop.permute.xlu0 %5267
        %v5271 = vsel %vm2486, %v5264, 0
        %5273 = vmatprep.subr.mxu0 0.0
        %5274 = vmatpush1.msra.mxu0 %v5259
        %5275 = vmatprep.subr.mxu0 0.0
        %5276 = vmatpush1.msra.mxu0 %v5260
        %5277 = vmatprep.subr.mxu0 0.0
        %5278 = vmatpush1.msra.mxu0 %v5261
        %5279 = vmatprep.subr.mxu0 0.0
        %5280 = vmatpush1.msra.mxu0 %v5262
        %5281 = vmatprep.subr.mxu0 0.0
        %5282 = vmatpush1.msra.mxu0 0.0
        %5283 = vmatprep.subr.mxu0 0.0
        %5284 = vmatpush1.msra.mxu0 0.0
        %5285 = vmatprep.subr.mxu0 0.0
        %5286 = vmatpush1.msra.mxu0 0.0
        %5287 = vmatprep.subr.mxu0 0.0
        %5288 = vmatpush1.msra.mxu0 0.0
        %5289 = vmatprep.subr.mxu0 0.0
        %5290 = vmatpush1.msra.mxu0 0.0
        %5291 = vmatprep.subr.mxu0 0.0
        %5292 = vmatpush1.msra.mxu0 0.0
        %5293 = vmatprep.subr.mxu0 0.0
        %5294 = vmatpush1.msra.mxu0 0.0
        %5295 = vmatprep.subr.mxu0 0.0
        %5296 = vmatpush1.msra.mxu0 0.0
        %5297 = vmatprep.subr.mxu0 0.0
        %5298 = vmatpush1.msra.mxu0 0.0
        %5299 = vmatprep.subr.mxu0 0.0
        %5300 = vmatpush1.msra.mxu0 0.0
        %5301 = vmatprep.subr.mxu0 0.0
        %5302 = vmatpush1.msra.mxu0 0.0
        %5303 = vmatprep.subr.mxu0 0.0
        %5304 = vmatpush1.msra.mxu0 0.0
        %5305 = vmatprep.subr.mxu0 0.0
        %5306 = vmatpush1.msra.mxu0 0.0
        %5307 = vmatprep.subr.mxu0 0.0
        %5308 = vmatpush1.msra.mxu0 0.0
        %5309 = vmatprep.subr.mxu0 0.0
        %5310 = vmatpush1.msra.mxu0 0.0
        %5311 = vmatprep.subr.mxu0 0.0
        %5312 = vmatpush1.msra.mxu0 0.0
        %5313 = vmatprep.subr.mxu0 0.0
        %5314 = vmatpush1.msra.mxu0 0.0
        %5315 = vmatprep.subr.mxu0 0.0
        %5316 = vmatpush1.msra.mxu0 0.0
        %5317 = vmatprep.subr.mxu0 0.0
        %5318 = vmatpush1.msra.mxu0 0.0
        %5319 = vmatprep.subr.mxu0 0.0
        %5320 = vmatpush1.msra.mxu0 0.0
        %5321 = vmatprep.subr.mxu0 0.0
        %5322 = vmatpush1.msra.mxu0 0.0
        %5323 = vmatprep.subr.mxu0 0.0
        %5324 = vmatpush1.msra.mxu0 0.0
        %5325 = vmatprep.subr.mxu0 0.0
        %5326 = vmatpush1.msra.mxu0 0.0
        %5327 = vmatprep.subr.mxu0 0.0
        %5328 = vmatpush1.msra.mxu0 0.0
        %5329 = vmatprep.subr.mxu0 0.0
        %5330 = vmatpush1.msra.mxu0 0.0
        %5331 = vmatprep.subr.mxu0 0.0
        %5332 = vmatpush1.msra.mxu0 0.0
        %5333 = vmatprep.subr.mxu0 0.0
        %5334 = vmatpush1.msra.mxu0 0.0
        %5335 = vmatprep.subr.mxu0 0.0
        %5336 = vmatpush1.msra.mxu0 0.0
        %5337 = vmatprep.mubr.f32.mxu0 0.0
        %5338 = vmatmul.mubr.f32.gmra.mrb[0].mxu0 %v5271
        %v5339 = vpop.f32.mrb[0].mxu0
        %v5340 = vadd.f32 %v5268, %v5339
        %v5341 = vpop.f32.mrb[0].mxu0
        %5342 = vdwg.mxu0
        %s5343 = scalar_lea.vmem %s416, 24
        %5344 = vst.msk [vmem:[%s5343] sm:$0xf] %vm2667, %v5340
        %s5345 = scalar_lea.vmem [#allocation2], 112
        %v5346 = vld [vmem:[%s5345] sm:$0xff]
        %v5347 = vld [vmem:[%s5345 + $0x8] sm:$0xff]
        %s5348 = scalar_lea.vmem %s321, 672 [#allocation3]
        %v5349 = vld [vmem:[%s5348] sm:$0xff]
        %v5350 = vld [vmem:[%s5348 + $0x8] sm:$0xff]
        %v5351 = vld [vmem:[%s5348 + $0x10] sm:$0xff]
        %v5352 = vld [vmem:[%s5348 + $0x18] sm:$0xff]
        %v5353 = vld [vmem:[%s5348 + $0x20] sm:$0xff]
        %v5354 = vld [vmem:[%s5348 + $0x28] sm:$0xff]
        %v5355 = vld [vmem:[%s5348 + $0x30] sm:$0xff]
        %v5356 = vld [vmem:[%s5348 + $0x38] sm:$0xff]
        %v5357 = vld [vmem:[%s5348 + $0x40] sm:$0xff]
        %v5358 = vld [vmem:[%s5348 + $0x48] sm:$0xff]
        %v5359 = vld [vmem:[%s5348 + $0x50] sm:$0xff]
        %v5360 = vld [vmem:[%s5348 + $0x58] sm:$0xff]
        %s5361 = scalar_lea.vmem %s410, 504
        %v5362 = vld [vmem:[%s5361] sm:$0xff]
        %v5363 = vld [vmem:[%s5361 + $0x8] sm:$0xff]
        %v5364 = vld [vmem:[%s5361 + $0x10] sm:$0xff]
        %v5365 = vld [vmem:[%s5361 + $0x18] sm:$0xff]
        %v5366 = vld [vmem:[%s5361 + $0x20] sm:$0xff]
        %v5367 = vld [vmem:[%s5361 + $0x28] sm:$0xff]
        %v5368 = vld [vmem:[%s5361 + $0x30] sm:$0xff]
        %v5369 = vld [vmem:[%s5361 + $0x38] sm:$0xff]
        %v5370 = vld [vmem:[%s5361 + $0x40] sm:$0xf]
        %s5371 = scalar_lea.vmem %s389, 56
        %v5372 = vld [vmem:[%s5371] sm:$0xff]
        %v5374 = vsel %vm2251, %v5351, 0
        %v5377 = vsel %vm2251, %v5354, 0
        %v5380 = vsel %vm2251, %v5357, 0
        %v5383 = vsel %vm2251, %v5360, 0
        %5385 = vmatprep.subr.mxu0 0.0
        %5386 = vmatpush1.msra.mxu0 %v5372
        %5387 = vmatprep.subr.mxu0 0.0
        %5388 = vmatpush1.msra.mxu0 0.0
        %5389 = vmatprep.subr.mxu0 0.0
        %5390 = vmatpush1.msra.mxu0 0.0
        %5391 = vmatprep.subr.mxu0 0.0
        %5392 = vmatpush1.msra.mxu0 0.0
        %5393 = vmatprep.subr.mxu0 0.0
        %5394 = vmatpush1.msra.mxu0 0.0
        %5395 = vmatprep.subr.mxu0 0.0
        %5396 = vmatpush1.msra.mxu0 0.0
        %5397 = vmatprep.subr.mxu0 0.0
        %5398 = vmatpush1.msra.mxu0 0.0
        %5399 = vmatprep.subr.mxu0 0.0
        %5400 = vmatpush1.msra.mxu0 0.0
        %5401 = vmatprep.subr.mxu0 0.0
        %5402 = vmatpush1.msra.mxu0 0.0
        %5403 = vmatprep.subr.mxu0 0.0
        %5404 = vmatpush1.msra.mxu0 0.0
        %5405 = vmatprep.subr.mxu0 0.0
        %5406 = vmatpush1.msra.mxu0 0.0
        %5407 = vmatprep.subr.mxu0 0.0
        %5408 = vmatpush1.msra.mxu0 0.0
        %5409 = vmatprep.subr.mxu0 0.0
        %5410 = vmatpush1.msra.mxu0 0.0
        %5411 = vmatprep.subr.mxu0 0.0
        %5412 = vmatpush1.msra.mxu0 0.0
        %5413 = vmatprep.subr.mxu0 0.0
        %5414 = vmatpush1.msra.mxu0 0.0
        %5415 = vmatprep.subr.mxu0 0.0
        %5416 = vmatpush1.msra.mxu0 0.0
        %5417 = vmatprep.subr.mxu0 0.0
        %5418 = vmatpush1.msra.mxu0 0.0
        %5419 = vmatprep.subr.mxu0 0.0
        %5420 = vmatpush1.msra.mxu0 0.0
        %5421 = vmatprep.subr.mxu0 0.0
        %5422 = vmatpush1.msra.mxu0 0.0
        %5423 = vmatprep.subr.mxu0 0.0
        %5424 = vmatpush1.msra.mxu0 0.0
        %5425 = vmatprep.subr.mxu0 0.0
        %5426 = vmatpush1.msra.mxu0 0.0
        %5427 = vmatprep.subr.mxu0 0.0
        %5428 = vmatpush1.msra.mxu0 0.0
        %5429 = vmatprep.subr.mxu0 0.0
        %5430 = vmatpush1.msra.mxu0 0.0
        %5431 = vmatprep.subr.mxu0 0.0
        %5432 = vmatpush1.msra.mxu0 0.0
        %5433 = vmatprep.subr.mxu0 0.0
        %5434 = vmatpush1.msra.mxu0 0.0
        %5435 = vmatprep.subr.mxu0 0.0
        %5436 = vmatpush1.msra.mxu0 0.0
        %5437 = vmatprep.subr.mxu0 0.0
        %5438 = vmatpush1.msra.mxu0 0.0
        %5439 = vmatprep.subr.mxu0 0.0
        %5440 = vmatpush1.msra.mxu0 0.0
        %5441 = vmatprep.subr.mxu0 0.0
        %5442 = vmatpush1.msra.mxu0 0.0
        %5443 = vmatprep.subr.mxu0 0.0
        %5444 = vmatpush1.msra.mxu0 0.0
        %5445 = vmatprep.subr.mxu0 0.0
        %5446 = vmatpush1.msra.mxu0 0.0
        %5447 = vmatprep.subr.mxu0 0.0
        %5448 = vmatpush1.msra.mxu0 0.0
        %5449 = vmatprep.mubr.f32.mxu0 0.0
        %5450 = vmatmul.mubr.f32.gmra.mrb[0].mxu0 %v5374
        %v5451 = vpop.f32.mrb[0].mxu0
        %v5452 = vadd.f32 0.0, %v5451
        %v5453 = vpop.f32.mrb[0].mxu0
        %5454 = vmatprep.mubr.f32.mxu0 0.0
        %5455 = vmatmul.mubr.f32.gmra.mrb[0].mxu0 %v5377
        %v5456 = vpop.f32.mrb[0].mxu0
        %v5457 = vadd.f32 0.0, %v5456
        %v5458 = vpop.f32.mrb[0].mxu0
        %5459 = vmatprep.mubr.f32.mxu0 0.0
        %5460 = vmatmul.mubr.f32.gmra.mrb[0].mxu0 %v5380
        %v5461 = vpop.f32.mrb[0].mxu0
        %v5462 = vadd.f32 0.0, %v5461
        %v5463 = vpop.f32.mrb[0].mxu0
        %5464 = vmatprep.mubr.f32.mxu0 0.0
        %5465 = vmatmul.mubr.f32.gmra.mrb[0].mxu0 %v5383
        %v5466 = vpop.f32.mrb[0].mxu0
        %v5467 = vadd.f32 0.0, %v5466
        %v5468 = vpop.f32.mrb[0].mxu0
        %5469 = vdwg.mxu0
        %5470 = vmatprep.subr.mxu0 %v5347
        %5471 = vmatpush1.xpose.msra.mxu0 %v5346
        %5472 = vmatprep.subr.mxu0 0.0
        %5473 = vmatpush1.xpose.msra.mxu0 0.0
        %5474 = vmatprep.subr.mxu0 0.0
        %5475 = vmatpush1.xpose.msra.mxu0 0.0
        %5476 = vmatprep.subr.mxu0 0.0
        %5477 = vmatpush1.xpose.msra.mxu0 0.0
        %5478 = vmatprep.subr.mxu0 0.0
        %5479 = vmatpush1.xpose.msra.mxu0 0.0
        %5480 = vmatprep.subr.mxu0 0.0
        %5481 = vmatpush1.xpose.msra.mxu0 0.0
        %5482 = vmatprep.subr.mxu0 0.0
        %5483 = vmatpush1.xpose.msra.mxu0 0.0
        %5484 = vmatprep.subr.mxu0 0.0
        %5485 = vmatpush1.xpose.msra.mxu0 0.0
        %5486 = vmatprep.subr.mxu0 0.0
        %5487 = vmatpush1.xpose.msra.mxu0 0.0
        %5488 = vmatprep.subr.mxu0 0.0
        %5489 = vmatpush1.xpose.msra.mxu0 0.0
        %5490 = vmatprep.subr.mxu0 0.0
        %5491 = vmatpush1.xpose.msra.mxu0 0.0
        %5492 = vmatprep.subr.mxu0 0.0
        %5493 = vmatpush1.xpose.msra.mxu0 0.0
        %5494 = vmatprep.subr.mxu0 0.0
        %5495 = vmatpush1.xpose.msra.mxu0 0.0
        %5496 = vmatprep.subr.mxu0 0.0
        %5497 = vmatpush1.xpose.msra.mxu0 0.0
        %5498 = vmatprep.subr.mxu0 0.0
        %5499 = vmatpush1.xpose.msra.mxu0 0.0
        %5500 = vmatprep.subr.mxu0 0.0
        %5501 = vmatpush1.xpose.msra.mxu0 0.0
        %5502 = vmatprep.subr.mxu0 0.0
        %5503 = vmatpush1.xpose.msra.mxu0 0.0
        %5504 = vmatprep.subr.mxu0 0.0
        %5505 = vmatpush1.xpose.msra.mxu0 0.0
        %5506 = vmatprep.subr.mxu0 0.0
        %5507 = vmatpush1.xpose.msra.mxu0 0.0
        %5508 = vmatprep.subr.mxu0 0.0
        %5509 = vmatpush1.xpose.msra.mxu0 0.0
        %5510 = vmatprep.subr.mxu0 0.0
        %5511 = vmatpush1.xpose.msra.mxu0 0.0
        %5512 = vmatprep.subr.mxu0 0.0
        %5513 = vmatpush1.xpose.msra.mxu0 0.0
        %5514 = vmatprep.subr.mxu0 0.0
        %5515 = vmatpush1.xpose.msra.mxu0 0.0
        %5516 = vmatprep.subr.mxu0 0.0
        %5517 = vmatpush1.xpose.msra.mxu0 0.0
        %5518 = vmatprep.subr.mxu0 0.0
        %5519 = vmatpush1.xpose.msra.mxu0 0.0
        %5520 = vmatprep.subr.mxu0 0.0
        %5521 = vmatpush1.xpose.msra.mxu0 0.0
        %5522 = vmatprep.subr.mxu0 0.0
        %5523 = vmatpush1.xpose.msra.mxu0 0.0
        %5524 = vmatprep.subr.mxu0 0.0
        %5525 = vmatpush1.xpose.msra.mxu0 0.0
        %5526 = vmatprep.subr.mxu0 0.0
        %5527 = vmatpush1.xpose.msra.mxu0 0.0
        %5528 = vmatprep.subr.mxu0 0.0
        %5529 = vmatpush1.xpose.msra.mxu0 0.0
        %5530 = vmatprep.subr.mxu0 0.0
        %5531 = vmatpush1.xpose.msra.mxu0 0.0
        %5532 = vmatprep.subr.mxu0 0.0
        %5533 = vmatpush1.xpose.msra.mxu0 0.0
        %5534 = vmatprep.mubr.f32.mxu0 %v5350
        %5535 = vmatmul.mubr.f32.gmra.mrb[0].mxu0 %v5349
        %v5536 = vpop.f32.mrb[0].mxu0
        %v5537 = vadd.f32 %v5452, %v5536
        %v5538 = vpop.f32.mrb[0].mxu0
        %5539 = vmatprep.mubr.f32.mxu0 %v5353
        %5540 = vmatmul.mubr.f32.gmra.mrb[0].mxu0 %v5352
        %v5541 = vpop.f32.mrb[0].mxu0
        %v5542 = vadd.f32 %v5457, %v5541
        %v5543 = vpop.f32.mrb[0].mxu0
        %5544 = vmatprep.mubr.f32.mxu0 %v5356
        %5545 = vmatmul.mubr.f32.gmra.mrb[0].mxu0 %v5355
        %v5546 = vpop.f32.mrb[0].mxu0
        %v5547 = vadd.f32 %v5462, %v5546
        %v5548 = vpop.f32.mrb[0].mxu0
        %5549 = vmatprep.mubr.f32.mxu0 %v5359
        %5550 = vmatmul.mubr.f32.gmra.mrb[0].mxu0 %v5358
        %v5551 = vpop.f32.mrb[0].mxu0
        %v5552 = vadd.f32 %v5467, %v5551
        %v5553 = vpop.f32.mrb[0].mxu0
        %5554 = vdwg.mxu0
        %5556 = vset.pattern.permute.xlu0 0
        %5557 = vperm.xlu0 %5556, %v5362
        %v5558 = vpop.permute.xlu0 %5557
        %5561 = vset.pattern.permute.xlu0 0
        %5562 = vperm.xlu0 %5561, %v5363
        %v5563 = vpop.permute.xlu0 %5562
        %5566 = vset.pattern.permute.xlu0 0
        %5567 = vperm.xlu0 %5566, %v5364
        %v5568 = vpop.permute.xlu0 %5567
        %5571 = vset.pattern.permute.xlu0 0
        %5572 = vperm.xlu0 %5571, %v5365
        %v5573 = vpop.permute.xlu0 %5572
        %v5575 = vadd.f32 %v5537, %v5558
        %v5576 = vadd.f32 %v5542, %v5563
        %v5577 = vadd.f32 %v5547, %v5568
        %v5578 = vadd.f32 %v5552, %v5573
        %v5579 = vmax.f32 %v5575, 0.0
        %v5580 = vmax.f32 %v5576, 0.0
        %v5581 = vmax.f32 %v5577, 0.0
        %v5582 = vmax.f32 %v5578, 0.0
        %s5583 = scalar_lea.vmem %s397, 224
        %v5584 = vld [vmem:[%s5583] sm:$0xff]
        %v5585 = vld [vmem:[%s5583 + $0x8] sm:$0xff]
        %v5586 = vld [vmem:[%s5583 + $0x10] sm:$0xff]
        %v5587 = vld [vmem:[%s5583 + $0x18] sm:$0xff]
        %5589 = vset.pattern.permute.xlu0 0
        %5590 = vperm.xlu0 %5589, %v5366
        %v5591 = vpop.permute.xlu0 %5590
        %5594 = vset.pattern.permute.xlu0 0
        %5595 = vperm.xlu0 %5594, %v5367
        %v5596 = vpop.permute.xlu0 %5595
        %5599 = vset.pattern.permute.xlu0 0
        %5600 = vperm.xlu0 %5599, %v5368
        %v5601 = vpop.permute.xlu0 %5600
        %5604 = vset.pattern.permute.xlu0 0
        %5605 = vperm.xlu0 %5604, %v5369
        %v5606 = vpop.permute.xlu0 %5605
        %v5609 = vsel %vm2486, %v5584, 0
        %v5612 = vsel %vm2486, %v5585, 0
        %v5615 = vsel %vm2486, %v5586, 0
        %v5618 = vsel %vm2486, %v5587, 0
        %5620 = vmatprep.subr.mxu0 0.0
        %5621 = vmatpush1.msra.mxu0 %v5579
        %5622 = vmatprep.subr.mxu0 0.0
        %5623 = vmatpush1.msra.mxu0 %v5580
        %5624 = vmatprep.subr.mxu0 0.0
        %5625 = vmatpush1.msra.mxu0 %v5581
        %5626 = vmatprep.subr.mxu0 0.0
        %5627 = vmatpush1.msra.mxu0 %v5582
        %5628 = vmatprep.subr.mxu0 0.0
        %5629 = vmatpush1.msra.mxu0 0.0
        %5630 = vmatprep.subr.mxu0 0.0
        %5631 = vmatpush1.msra.mxu0 0.0
        %5632 = vmatprep.subr.mxu0 0.0
        %5633 = vmatpush1.msra.mxu0 0.0
        %5634 = vmatprep.subr.mxu0 0.0
        %5635 = vmatpush1.msra.mxu0 0.0
        %5636 = vmatprep.subr.mxu0 0.0
        %5637 = vmatpush1.msra.mxu0 0.0
        %5638 = vmatprep.subr.mxu0 0.0
        %5639 = vmatpush1.msra.mxu0 0.0
        %5640 = vmatprep.subr.mxu0 0.0
        %5641 = vmatpush1.msra.mxu0 0.0
        %5642 = vmatprep.subr.mxu0 0.0
        %5643 = vmatpush1.msra.mxu0 0.0
        %5644 = vmatprep.subr.mxu0 0.0
        %5645 = vmatpush1.msra.mxu0 0.0
        %5646 = vmatprep.subr.mxu0 0.0
        %5647 = vmatpush1.msra.mxu0 0.0
        %5648 = vmatprep.subr.mxu0 0.0
        %5649 = vmatpush1.msra.mxu0 0.0
        %5650 = vmatprep.subr.mxu0 0.0
        %5651 = vmatpush1.msra.mxu0 0.0
        %5652 = vmatprep.subr.mxu0 0.0
        %5653 = vmatpush1.msra.mxu0 0.0
        %5654 = vmatprep.subr.mxu0 0.0
        %5655 = vmatpush1.msra.mxu0 0.0
        %5656 = vmatprep.subr.mxu0 0.0
        %5657 = vmatpush1.msra.mxu0 0.0
        %5658 = vmatprep.subr.mxu0 0.0
        %5659 = vmatpush1.msra.mxu0 0.0
        %5660 = vmatprep.subr.mxu0 0.0
        %5661 = vmatpush1.msra.mxu0 0.0
        %5662 = vmatprep.subr.mxu0 0.0
        %5663 = vmatpush1.msra.mxu0 0.0
        %5664 = vmatprep.subr.mxu0 0.0
        %5665 = vmatpush1.msra.mxu0 0.0
        %5666 = vmatprep.subr.mxu0 0.0
        %5667 = vmatpush1.msra.mxu0 0.0
        %5668 = vmatprep.subr.mxu0 0.0
        %5669 = vmatpush1.msra.mxu0 0.0
        %5670 = vmatprep.subr.mxu0 0.0
        %5671 = vmatpush1.msra.mxu0 0.0
        %5672 = vmatprep.subr.mxu0 0.0
        %5673 = vmatpush1.msra.mxu0 0.0
        %5674 = vmatprep.subr.mxu0 0.0
        %5675 = vmatpush1.msra.mxu0 0.0
        %5676 = vmatprep.subr.mxu0 0.0
        %5677 = vmatpush1.msra.mxu0 0.0
        %5678 = vmatprep.subr.mxu0 0.0
        %5679 = vmatpush1.msra.mxu0 0.0
        %5680 = vmatprep.subr.mxu0 0.0
        %5681 = vmatpush1.msra.mxu0 0.0
        %5682 = vmatprep.subr.mxu0 0.0
        %5683 = vmatpush1.msra.mxu0 0.0
        %5684 = vmatprep.mubr.f32.mxu0 0.0
        %5685 = vmatmul.mubr.f32.gmra.mrb[0].mxu0 %v5609
        %v5686 = vpop.f32.mrb[0].mxu0
        %v5687 = vadd.f32 %v5591, %v5686
        %v5688 = vpop.f32.mrb[0].mxu0
        %5689 = vmatprep.mubr.f32.mxu0 0.0
        %5690 = vmatmul.mubr.f32.gmra.mrb[0].mxu0 %v5612
        %v5691 = vpop.f32.mrb[0].mxu0
        %v5692 = vadd.f32 %v5596, %v5691
        %v5693 = vpop.f32.mrb[0].mxu0
        %5694 = vmatprep.mubr.f32.mxu0 0.0
        %5695 = vmatmul.mubr.f32.gmra.mrb[0].mxu0 %v5615
        %v5696 = vpop.f32.mrb[0].mxu0
        %v5697 = vadd.f32 %v5601, %v5696
        %v5698 = vpop.f32.mrb[0].mxu0
        %5699 = vmatprep.mubr.f32.mxu0 0.0
        %5700 = vmatmul.mubr.f32.gmra.mrb[0].mxu0 %v5618
        %v5701 = vpop.f32.mrb[0].mxu0
        %v5702 = vadd.f32 %v5606, %v5701
        %v5703 = vpop.f32.mrb[0].mxu0
        %5704 = vdwg.mxu0
        %v5705 = vmax.f32 %v5687, 0.0
        %v5706 = vmax.f32 %v5692, 0.0
        %v5707 = vmax.f32 %v5697, 0.0
        %v5708 = vmax.f32 %v5702, 0.0
        %s5709 = scalar_lea.vmem %s403, 28
        %v5710 = vld [vmem:[%s5709] sm:$0xf]
        %5712 = vset.pattern.permute.xlu0 0
        %5713 = vperm.xlu0 %5712, %v5370
        %v5714 = vpop.permute.xlu0 %5713
        %v5717 = vsel %vm2486, %v5710, 0
        %5719 = vmatprep.subr.mxu0 0.0
        %5720 = vmatpush1.msra.mxu0 %v5705
        %5721 = vmatprep.subr.mxu0 0.0
        %5722 = vmatpush1.msra.mxu0 %v5706
        %5723 = vmatprep.subr.mxu0 0.0
        %5724 = vmatpush1.msra.mxu0 %v5707
        %5725 = vmatprep.subr.mxu0 0.0
        %5726 = vmatpush1.msra.mxu0 %v5708
        %5727 = vmatprep.subr.mxu0 0.0
        %5728 = vmatpush1.msra.mxu0 0.0
        %5729 = vmatprep.subr.mxu0 0.0
        %5730 = vmatpush1.msra.mxu0 0.0
        %5731 = vmatprep.subr.mxu0 0.0
        %5732 = vmatpush1.msra.mxu0 0.0
        %5733 = vmatprep.subr.mxu0 0.0
        %5734 = vmatpush1.msra.mxu0 0.0
        %5735 = vmatprep.subr.mxu0 0.0
        %5736 = vmatpush1.msra.mxu0 0.0
        %5737 = vmatprep.subr.mxu0 0.0
        %5738 = vmatpush1.msra.mxu0 0.0
        %5739 = vmatprep.subr.mxu0 0.0
        %5740 = vmatpush1.msra.mxu0 0.0
        %5741 = vmatprep.subr.mxu0 0.0
        %5742 = vmatpush1.msra.mxu0 0.0
        %5743 = vmatprep.subr.mxu0 0.0
        %5744 = vmatpush1.msra.mxu0 0.0
        %5745 = vmatprep.subr.mxu0 0.0
        %5746 = vmatpush1.msra.mxu0 0.0
        %5747 = vmatprep.subr.mxu0 0.0
        %5748 = vmatpush1.msra.mxu0 0.0
        %5749 = vmatprep.subr.mxu0 0.0
        %5750 = vmatpush1.msra.mxu0 0.0
        %5751 = vmatprep.subr.mxu0 0.0
        %5752 = vmatpush1.msra.mxu0 0.0
        %5753 = vmatprep.subr.mxu0 0.0
        %5754 = vmatpush1.msra.mxu0 0.0
        %5755 = vmatprep.subr.mxu0 0.0
        %5756 = vmatpush1.msra.mxu0 0.0
        %5757 = vmatprep.subr.mxu0 0.0
        %5758 = vmatpush1.msra.mxu0 0.0
        %5759 = vmatprep.subr.mxu0 0.0
        %5760 = vmatpush1.msra.mxu0 0.0
        %5761 = vmatprep.subr.mxu0 0.0
        %5762 = vmatpush1.msra.mxu0 0.0
        %5763 = vmatprep.subr.mxu0 0.0
        %5764 = vmatpush1.msra.mxu0 0.0
        %5765 = vmatprep.subr.mxu0 0.0
        %5766 = vmatpush1.msra.mxu0 0.0
        %5767 = vmatprep.subr.mxu0 0.0
        %5768 = vmatpush1.msra.mxu0 0.0
        %5769 = vmatprep.subr.mxu0 0.0
        %5770 = vmatpush1.msra.mxu0 0.0
        %5771 = vmatprep.subr.mxu0 0.0
        %5772 = vmatpush1.msra.mxu0 0.0
        %5773 = vmatprep.subr.mxu0 0.0
        %5774 = vmatpush1.msra.mxu0 0.0
        %5775 = vmatprep.subr.mxu0 0.0
        %5776 = vmatpush1.msra.mxu0 0.0
        %5777 = vmatprep.subr.mxu0 0.0
        %5778 = vmatpush1.msra.mxu0 0.0
        %5779 = vmatprep.subr.mxu0 0.0
        %5780 = vmatpush1.msra.mxu0 0.0
        %5781 = vmatprep.subr.mxu0 0.0
        %5782 = vmatpush1.msra.mxu0 0.0
        %5783 = vmatprep.mubr.f32.mxu0 0.0
        %5784 = vmatmul.mubr.f32.gmra.mrb[0].mxu0 %v5717
        %v5785 = vpop.f32.mrb[0].mxu0
        %v5786 = vadd.f32 %v5714, %v5785
        %v5787 = vpop.f32.mrb[0].mxu0
        %5788 = vdwg.mxu0
        %s5789 = scalar_lea.vmem %s416, 28
        %5790 = vst.msk [vmem:[%s5789] sm:$0xf] %vm2667, %v5786
        %s5791 = smul.u32 8, %s21
        %p5792 = scmp.lt.s32.totalorder %s5791, 15
        %s5793 = scalar_select %p5792, %s5791, 15
        %s5794 = smul.addr %s5793, 4
        %s5795 = scalar_lea.vmem %s7, %s5794
        // Predicated region
        $region53: #{tpu_custom_call.1} parent=47 // pred_check
          %p5796 = pneg %p216
        $region54: #{tpu_custom_call.1} parent=47 // pred_check_branch
          %5798 = sbr.rel (%p5796) target = $region56
        $region55: #{tpu_custom_call.1} parent=47 // pred_region
          %s5799 = smul.u32 8, %s21
        $region56: #{tpu_custom_call.1} parent=47 // pred_fallthru
          _
      $region48: #{tpu_custom_call.1} parent=5 // pred_fallthru
        _
      %p5800 = scmp.le.s32.totalorder 2, %s16
      // Predicated region
      $region57: #{tpu_custom_call.1} parent=5 // pred_check
        %p5801 = pneg %p5800
      $region58: #{tpu_custom_call.1} parent=5 // pred_check_branch
        %5803 = sbr.rel (%p5801) target = $region60
      $region59: #{tpu_custom_call.1} parent=5 // pred_region
        %s5804 = ssub.s32 %s16, 2
        // Predicated region
        $region61: #{tpu_custom_call.1} parent=59 // pred_check
          %p5805 = pneg %p222
        $region62: #{tpu_custom_call.1} parent=59 // pred_check_branch
          %5807 = sbr.rel (%p5805) target = $region64
        $region63: #{tpu_custom_call.1} parent=59 // pred_region
          %s5808 = smul.u32 8, %s22
          %p5809 = scmp.lt.s32.totalorder %s5808, 15
          %s5810 = scalar_select %p5809, %s5808, 15
          %s5811 = smul.addr %s5810, 4
          %s5812 = scalar_lea.vmem %s7, %s5811
        $region64: #{tpu_custom_call.1} parent=59 // pred_fallthru
          _
      $region60: #{tpu_custom_call.1} parent=5 // pred_fallthru
        _
    $region6: #{tpu_custom_call.1} parent=1 // loop_footer
      %s20 = sadd.s32 1, %s16
    $region7: #{tpu_custom_call.1} parent=1 // loop_footer_branch
      %15 = sbr.rel target = $region3
    $region8: #{tpu_custom_call.1} parent=1 // loop_exit
      _
    %5813 = vsyncpa [#allocation4], 1
    %s5814 = scalar_lea.sflag [#allocation4], 1
    %5815 = vsyncpa %s5814, 1

</llo_original>
